<compile_context>
chip_gen: v5e
topology: v5e:2x2
jax: 0.10.0
libtpu: 0.0.40
codegen_flags: <defaults>
</compile_context>

<pallas_src>
import math
import functools

import jax
import jax.numpy as jnp
import numpy as np
from jax.experimental import pallas as pl
from jax.experimental.pallas import tpu as pltpu


QKV_PAD = 128   # lane-aligned column stride for the fused Q/K/V projection
OUT_PAD = 128   # lane-dense fused output-head width


# ----------------------------- Pallas kernel -------------------------------
def planner_gpt_kernel(
    s0_ref, s1_ref,                  # (M, half) f32, (M, ns1) bf16
    bias_ref,                        # (SB, SB) f32 additive causal bias
    enc_w_ref, enc_b_ref,            # (ns1, half) bf16, (1, half) f32
    pos_ref,                         # (M, E) f32  -- pos emb tiled over batch block
    ln1_w_ref, ln1_b_ref,            # (L, 1, E) f32
    wqkv_ref, bqkv_ref,              # (L, E, 3*QKV_PAD) bf16, (L, 1, 3*QKV_PAD) f32
    wo_ref, bo_ref,                  # (L, QKV_PAD, E) bf16, (L, 1, E) f32
    ln2_w_ref, ln2_b_ref,            # (L, 1, E) f32
    w1_ref, b1_ref, w2_ref, b2_ref,  # (L, E, 4E) bf16, (L, 1, 4E) f32, (L, 4E, E) bf16, (L, 1, E) f32
    lnf_w_ref, lnf_b_ref,            # (1, E) f32
    hw_ref, hb_ref,                  # (E, OUT_PAD) bf16, (1, OUT_PAD) f32  (fused heads)
    out_ref,                         # (M, OUT_PAD) f32
    *, n_layer, n_head, n_embd,
):
    M = s0_ref.shape[0]              # Bb * T rows per grid step
    E = n_embd
    hd = E // n_head
    SB = bias_ref.shape[0]           # attention sub-block rows
    n_sub = M // SB
    scale = 1.0 / math.sqrt(hd)
    f32 = jnp.float32
    bf16 = jnp.bfloat16

    # ---- token embedding: concat(raw_half, tanh(s1 @ Wenc + benc)) + pos ----
    enc = jnp.tanh(
        jnp.dot(s1_ref[...], enc_w_ref[...], preferred_element_type=f32)
        + enc_b_ref[...])
    x = jnp.concatenate([s0_ref[...], enc], axis=-1) + pos_ref[...]   # (M, E) f32

    def layer_norm(v, w, b):
        mu = jnp.mean(v, axis=-1, keepdims=True)
        var = jnp.mean((v - mu) ** 2, axis=-1, keepdims=True)
        return (v - mu) * jax.lax.rsqrt(var + 1e-5) * w + b

    # per-head lane masks over the QKV_PAD channel lanes (1 vreg each, hoisted)
    lane = jax.lax.broadcasted_iota(jnp.int32, (1, QKV_PAD), 1)
    head_masks = [((lane >= h * hd) & (lane < (h + 1) * hd)).astype(f32)
                  for h in range(n_head)]
    bias = bias_ref[...]                                              # (SB, SB)

    for l in range(n_layer):
        # ---- causal multi-head self-attention ------------------------------
        h_in = layer_norm(x, ln1_w_ref[l], ln1_b_ref[l])
        qkv = jnp.dot(h_in.astype(bf16), wqkv_ref[l],
                      preferred_element_type=f32) + bqkv_ref[l]       # (M, 3*128)
        # full-vreg-column slices: no lane relayout
        q = qkv[:, 0:QKV_PAD].astype(bf16)
        k = qkv[:, QKV_PAD:2 * QKV_PAD]
        v = qkv[:, 2 * QKV_PAD:3 * QKV_PAD]

        y_parts = []
        for sb in range(n_sub):
            r0, r1 = sb * SB, (sb + 1) * SB
            q_sb = q[r0:r1]
            k_sb = k[r0:r1]
            v_sb = v[r0:r1]
            y_sb = jnp.zeros((SB, QKV_PAD), f32)
            for h in range(n_head):
                # lane-masking K/V restricts the contraction / output to head
                # h's channels, so the matmuls stay full-width on the MXU.
                kh = (k_sb * head_masks[h]).astype(bf16)
                vh = (v_sb * head_masks[h]).astype(bf16)
                s = jax.lax.dot_general(
                    q_sb, kh, (((1,), (1,)), ((), ())),
                    preferred_element_type=f32) * scale + bias        # (SB, SB) f32
                s = jnp.exp(s - jnp.max(s, axis=-1, keepdims=True))   # p overwrites s
                denom = jnp.sum(s, axis=-1, keepdims=True)
                p = (s * pl.reciprocal(denom, approx=True)).astype(bf16)
                y_sb = y_sb + jnp.dot(p, vh, preferred_element_type=f32)
            y_parts.append(y_sb)
        y = y_parts[0] if n_sub == 1 else jnp.concatenate(y_parts, axis=0)

        # wo is row-padded to QKV_PAD: no lane slice of y needed
        x = x + jnp.dot(y.astype(bf16), wo_ref[l],
                        preferred_element_type=f32) + bo_ref[l]

        # ---- MLP: Linear -> GELU(tanh approx) -> Linear ---------------------
        m_in = layer_norm(x, ln2_w_ref[l], ln2_b_ref[l])
        hmid = jnp.dot(m_in.astype(bf16), w1_ref[l],
                       preferred_element_type=f32) + b1_ref[l]
        hmid = jax.nn.gelu(hmid, approximate=True)
        x = x + jnp.dot(hmid.astype(bf16), w2_ref[l],
                        preferred_element_type=f32) + b2_ref[l]

    # ---- final layernorm + fused output heads (one lane-dense store) --------
    x = layer_norm(x, lnf_w_ref[...], lnf_b_ref[...])
    out_ref[...] = (jnp.dot(x.astype(bf16), hw_ref[...],
                            preferred_element_type=f32) + hb_ref[...])


# ------------------------------- wrapper ------------------------------------
def planner_gpt_forward(states, params, *, n_layer, n_head, n_embd,
                        num_states1, num_skills,
                        block_rows=128, attn_rows=128):
    B, T, _ = states.shape
    half = n_embd // 2
    bf16 = jnp.bfloat16

    # Block enough batch elements per grid step to get ~block_rows rows.
    bb = max(1, block_rows // T)
    nsteps = -(-B // bb)
    # v7x has 2 TensorCores; keep the parallel grid-step count even.
    if nsteps > 1 and nsteps % 2 == 1:
        nsteps += 1
    b_pad = nsteps * bb
    if b_pad != B:
        states = jnp.pad(states, ((0, b_pad - B), (0, 0), (0, 0)))
    M = bb * T

    # Attention sub-block size: multiple of T, divides M (exact because batch
    # elements never span a sub-block).
    SB = min(attn_rows, M)
    if SB % T != 0 or M % SB != 0:
        SB = M

    # Lane-aligned input halves (no sub-lane slicing inside the kernel).
    s0 = states[..., :half].reshape(b_pad * T, half).astype(jnp.float32)
    s1 = states[..., half:half + num_states1].reshape(
        b_pad * T, num_states1).astype(bf16)

    # Precomputed additive causal bias for one sub-block (0 / -1e30).
    rid = jnp.arange(SB)
    same = (rid[:, None] // T) == (rid[None, :] // T)
    causal = (rid[:, None] % T) >= (rid[None, :] % T)
    bias = jnp.where(same & causal, 0.0, -1e30).astype(jnp.float32)

    # Positional embedding tiled over the batch block (layout plumbing).
    pos_tiled = jnp.tile(params["pos"][0, :T, :], (bb, 1)).astype(jnp.float32)

    L = n_layer
    # Fused, lane-padded QKV projection (Q/K/V each start on a 128-lane boundary).
    wqkv = jnp.zeros((L, n_embd, 3 * QKV_PAD), jnp.float32)
    wqkv = wqkv.at[:, :, 0:n_embd].set(params["wq"])
    wqkv = wqkv.at[:, :, QKV_PAD:QKV_PAD + n_embd].set(params["wk"])
    wqkv = wqkv.at[:, :, 2 * QKV_PAD:2 * QKV_PAD + n_embd].set(params["wv"])
    wqkv = wqkv.astype(bf16)
    bqkv = jnp.zeros((L, 1, 3 * QKV_PAD), jnp.float32)
    bqkv = bqkv.at[:, :, 0:n_embd].set(params["bq"])
    bqkv = bqkv.at[:, :, QKV_PAD:QKV_PAD + n_embd].set(params["bk"])
    bqkv = bqkv.at[:, :, 2 * QKV_PAD:2 * QKV_PAD + n_embd].set(params["bv"])

    # Row-padded attention output projection (zero rows are free on the MXU).
    wo = jnp.zeros((L, QKV_PAD, n_embd), jnp.float32)
    wo = wo.at[:, :n_embd, :].set(params["wo"]).astype(bf16)

    # Fused + lane-padded output heads -> single lane-dense 128-wide store.
    hw = jnp.zeros((n_embd, OUT_PAD), jnp.float32)
    hw = hw.at[:, :num_skills].set(params["h1w"])
    hw = hw.at[:, num_skills:num_skills + 4].set(params["h2w"])
    hw = hw.at[:, num_skills + 4:num_skills + 10].set(params["h3w"])
    hw = hw.astype(bf16)
    hb = jnp.zeros((1, OUT_PAD), jnp.float32)
    hb = hb.at[:, :num_skills].set(params["h1b"])
    hb = hb.at[:, num_skills:num_skills + 4].set(params["h2b"])
    hb = hb.at[:, num_skills + 4:num_skills + 10].set(params["h3b"])

    param_vals = [
        bias,
        params["enc_w"].astype(bf16), params["enc_b"], pos_tiled,
        params["ln1_w"], params["ln1_b"],
        wqkv, bqkv, wo, params["bo"],
        params["ln2_w"], params["ln2_b"],
        params["w1"].astype(bf16), params["b1"],
        params["w2"].astype(bf16), params["b2"],
        params["lnf_w"], params["lnf_b"],
        hw, hb,
    ]

    def full_spec(shape):
        nd = len(shape)
        return pl.BlockSpec(shape, lambda i, _nd=nd: (0,) * _nd)

    kernel = functools.partial(
        planner_gpt_kernel,
        n_layer=n_layer, n_head=n_head, n_embd=n_embd)

    fused = pl.pallas_call(
        kernel,
        out_shape=jax.ShapeDtypeStruct((b_pad * T, OUT_PAD), jnp.float32),
        grid=(nsteps,),
        in_specs=[pl.BlockSpec((M, half), lambda i: (i, 0)),
                  pl.BlockSpec((M, num_states1), lambda i: (i, 0))]
                 + [full_spec(p.shape) for p in param_vals],
        out_specs=pl.BlockSpec((M, OUT_PAD), lambda i: (i, 0)),
        compiler_params=pltpu.CompilerParams(
            dimension_semantics=("parallel",),
            vmem_limit_bytes=32 * 1024 * 1024),
    )(s0, s1, *param_vals)

    fused = fused.reshape(b_pad, T, OUT_PAD)[:B]
    out1 = fused[..., :num_skills]
    out2 = fused[..., num_skills:num_skills + 10]
    return out1, out2


# --------------------------- pure-JAX reference ------------------------------
def planner_gpt_reference(states, params, *, n_layer, n_head, n_embd, num_states1):
    half = n_embd // 2
    hd = n_embd // n_head
    B, T, _ = states.shape

    s0 = states[..., :half]
    s1 = states[..., half:half + num_states1]
    enc = jnp.tanh(s1 @ params["enc_w"] + params["enc_b"])
    x = jnp.concatenate([s0, enc], axis=-1) + params["pos"][:, :T]

    def ln(v, w, b):
        mu = v.mean(-1, keepdims=True)
        var = ((v - mu) ** 2).mean(-1, keepdims=True)
        return (v - mu) * jax.lax.rsqrt(var + 1e-5) * w + b

    mask = jnp.tril(jnp.ones((T, T), dtype=bool))
    for l in range(n_layer):
        h_in = ln(x, params["ln1_w"][l], params["ln1_b"][l])
        q = (h_in @ params["wq"][l] + params["bq"][l]).reshape(B, T, n_head, hd).transpose(0, 2, 1, 3)
        k = (h_in @ params["wk"][l] + params["bk"][l]).reshape(B, T, n_head, hd).transpose(0, 2, 1, 3)
        v = (h_in @ params["wv"][l] + params["bv"][l]).reshape(B, T, n_head, hd).transpose(0, 2, 1, 3)
        att = (q @ jnp.swapaxes(k, -1, -2)) / math.sqrt(hd)
        att = jnp.where(mask, att, -jnp.inf)
        att = jax.nn.softmax(att, axis=-1)
        y = (att @ v).transpose(0, 2, 1, 3).reshape(B, T, n_embd)
        x = x + (y @ params["wo"][l] + params["bo"][l])
        m_in = ln(x, params["ln2_w"][l], params["ln2_b"][l])
        hmid = jax.nn.gelu(m_in @ params["w1"][l] + params["b1"][l], approximate=False)
        x = x + (hmid @ params["w2"][l] + params["b2"][l])

    x = ln(x, params["lnf_w"], params["lnf_b"])
    o1 = x @ params["h1w"] + params["h1b"]
    o2 = jnp.concatenate([x @ params["h2w"] + params["h2b"],
                          x @ params["h3w"] + params["h3b"]], axis=-1)
    return o1, o2


# --------------------------------- main --------------------------------------
if __name__ == "__main__":
    # small config consistent with the module; B chosen so batch blocking
    # produces a multi-step parallel grid (2 steps of 16 batch elems each).
    B, T = 32, 8
    n_embd, n_head, n_layer = 32, 4, 2
    num_states1 = 16          # config.num_states = (1, 16)  -> ModuleList branch
    num_skills = 8
    half = n_embd // 2
    d_in = half + num_states1

    key = jax.random.PRNGKey(0)
    ks = iter(jax.random.split(key, 32))

    def w(shape, k):
        return (0.02 * jax.random.normal(k, shape)).astype(jnp.float32)

    params = {
        "enc_w": w((num_states1, half), next(ks)),
        "enc_b": jnp.zeros((1, half), jnp.float32),
        "pos":   w((1, T, n_embd), next(ks)),
        "ln1_w": jnp.ones((n_layer, 1, n_embd), jnp.float32),
        "ln1_b": jnp.zeros((n_layer, 1, n_embd), jnp.float32),
        "wq": w((n_layer, n_embd, n_embd), next(ks)),
        "bq": jnp.zeros((n_layer, 1, n_embd), jnp.float32),
        "wk": w((n_layer, n_embd, n_embd), next(ks)),
        "bk": jnp.zeros((n_layer, 1, n_embd), jnp.float32),
        "wv": w((n_layer, n_embd, n_embd), next(ks)),
        "bv": jnp.zeros((n_layer, 1, n_embd), jnp.float32),
        "wo": w((n_layer, n_embd, n_embd), next(ks)),
        "bo": jnp.zeros((n_layer, 1, n_embd), jnp.float32),
        "ln2_w": jnp.ones((n_layer, 1, n_embd), jnp.float32),
        "ln2_b": jnp.zeros((n_layer, 1, n_embd), jnp.float32),
        "w1": w((n_layer, n_embd, 4 * n_embd), next(ks)),
        "b1": jnp.zeros((n_layer, 1, 4 * n_embd), jnp.float32),
        "w2": w((n_layer, 4 * n_embd, n_embd), next(ks)),
        "b2": jnp.zeros((n_layer, 1, n_embd), jnp.float32),
        "lnf_w": jnp.ones((1, n_embd), jnp.float32),
        "lnf_b": jnp.zeros((1, n_embd), jnp.float32),
        "h1w": w((n_embd, num_skills), next(ks)),
        "h1b": jnp.zeros((1, num_skills), jnp.float32),
        "h2w": w((n_embd, 4), next(ks)),
        "h2b": jnp.zeros((1, 4), jnp.float32),
        "h3w": w((n_embd, 6), next(ks)),
        "h3b": jnp.zeros((1, 6), jnp.float32),
    }

    states = jax.random.normal(next(ks), (B, T, d_in), dtype=jnp.float32)

    out1, out2 = planner_gpt_forward(
        states, params,
        n_layer=n_layer, n_head=n_head, n_embd=n_embd,
        num_states1=num_states1, num_skills=num_skills,
        block_rows=128, attn_rows=128)
    jax.block_until_ready((out1, out2))

    r1, r2 = planner_gpt_reference(
        states, params,
        n_layer=n_layer, n_head=n_head, n_embd=n_embd, num_states1=num_states1)

    assert out1.shape == (B, T, num_skills) and out2.shape == (B, T, 10)
    np.testing.assert_allclose(np.asarray(out1), np.asarray(r1), rtol=2e-2, atol=2e-2)
    np.testing.assert_allclose(np.asarray(out2), np.asarray(r2), rtol=2e-2, atol=2e-2)

    print("KERNEL_OK")
</pallas_src>

<mosaic_0001>
module attributes {stable_mosaic.version = 11 : i64} {
  func.func @planner_gpt_kernel(%arg0: i32, %arg1: memref<128x16xf32, #tpu.memory_space<vmem>>, %arg2: memref<128x16xbf16, #tpu.memory_space<vmem>>, %arg3: memref<128x128xf32, #tpu.memory_space<vmem>>, %arg4: memref<16x16xbf16, #tpu.memory_space<vmem>>, %arg5: memref<1x16xf32, #tpu.memory_space<vmem>>, %arg6: memref<128x32xf32, #tpu.memory_space<vmem>>, %arg7: memref<2x1x32xf32, #tpu.memory_space<vmem>>, %arg8: memref<2x1x32xf32, #tpu.memory_space<vmem>>, %arg9: memref<2x32x384xbf16, #tpu.memory_space<vmem>>, %arg10: memref<2x1x384xf32, #tpu.memory_space<vmem>>, %arg11: memref<2x128x32xbf16, #tpu.memory_space<vmem>>, %arg12: memref<2x1x32xf32, #tpu.memory_space<vmem>>, %arg13: memref<2x1x32xf32, #tpu.memory_space<vmem>>, %arg14: memref<2x1x32xf32, #tpu.memory_space<vmem>>, %arg15: memref<2x32x128xbf16, #tpu.memory_space<vmem>>, %arg16: memref<2x1x128xf32, #tpu.memory_space<vmem>>, %arg17: memref<2x128x32xbf16, #tpu.memory_space<vmem>>, %arg18: memref<2x1x32xf32, #tpu.memory_space<vmem>>, %arg19: memref<1x32xf32, #tpu.memory_space<vmem>>, %arg20: memref<1x32xf32, #tpu.memory_space<vmem>>, %arg21: memref<32x128xbf16, #tpu.memory_space<vmem>>, %arg22: memref<1x128xf32, #tpu.memory_space<vmem>>, %arg23: memref<128x128xf32, #tpu.memory_space<vmem>>) attributes {dimension_semantics = [#tpu.dimension_semantics<parallel>], iteration_bounds = array<i64: 2>, scalar_prefetch = 0 : i64, scratch_operands = 0 : i64, tpu.core_type = #tpu.core_type<tc>, window_params = [{transform_indices = @transform_0, window_bounds = array<i64: 128, 16>}, {transform_indices = @transform_1, window_bounds = array<i64: 128, 16>}, {pipeline_mode = #tpu.pipeline_mode<synchronous>, transform_indices = @transform_2, window_bounds = array<i64: 128, 128>}, {pipeline_mode = #tpu.pipeline_mode<synchronous>, transform_indices = @transform_3, window_bounds = array<i64: 16, 16>}, {pipeline_mode = #tpu.pipeline_mode<synchronous>, transform_indices = @transform_4, window_bounds = array<i64: 1, 16>}, {pipeline_mode = #tpu.pipeline_mode<synchronous>, transform_indices = @transform_5, window_bounds = array<i64: 128, 32>}, {pipeline_mode = #tpu.pipeline_mode<synchronous>, transform_indices = @transform_6, window_bounds = array<i64: 2, 1, 32>}, {pipeline_mode = #tpu.pipeline_mode<synchronous>, transform_indices = @transform_7, window_bounds = array<i64: 2, 1, 32>}, {pipeline_mode = #tpu.pipeline_mode<synchronous>, transform_indices = @transform_8, window_bounds = array<i64: 2, 32, 384>}, {pipeline_mode = #tpu.pipeline_mode<synchronous>, transform_indices = @transform_9, window_bounds = array<i64: 2, 1, 384>}, {pipeline_mode = #tpu.pipeline_mode<synchronous>, transform_indices = @transform_10, window_bounds = array<i64: 2, 128, 32>}, {pipeline_mode = #tpu.pipeline_mode<synchronous>, transform_indices = @transform_11, window_bounds = array<i64: 2, 1, 32>}, {pipeline_mode = #tpu.pipeline_mode<synchronous>, transform_indices = @transform_12, window_bounds = array<i64: 2, 1, 32>}, {pipeline_mode = #tpu.pipeline_mode<synchronous>, transform_indices = @transform_13, window_bounds = array<i64: 2, 1, 32>}, {pipeline_mode = #tpu.pipeline_mode<synchronous>, transform_indices = @transform_14, window_bounds = array<i64: 2, 32, 128>}, {pipeline_mode = #tpu.pipeline_mode<synchronous>, transform_indices = @transform_15, window_bounds = array<i64: 2, 1, 128>}, {pipeline_mode = #tpu.pipeline_mode<synchronous>, transform_indices = @transform_16, window_bounds = array<i64: 2, 128, 32>}, {pipeline_mode = #tpu.pipeline_mode<synchronous>, transform_indices = @transform_17, window_bounds = array<i64: 2, 1, 32>}, {pipeline_mode = #tpu.pipeline_mode<synchronous>, transform_indices = @transform_18, window_bounds = array<i64: 1, 32>}, {pipeline_mode = #tpu.pipeline_mode<synchronous>, transform_indices = @transform_19, window_bounds = array<i64: 1, 32>}, {pipeline_mode = #tpu.pipeline_mode<synchronous>, transform_indices = @transform_20, window_bounds = array<i64: 32, 128>}, {pipeline_mode = #tpu.pipeline_mode<synchronous>, transform_indices = @transform_21, window_bounds = array<i64: 1, 128>}, {transform_indices = @transform_22, window_bounds = array<i64: 128, 128>}]} {
    %c0 = arith.constant 0 : index
    %c0_0 = arith.constant 0 : index
    %0 = vector.load %arg2[%c0, %c0_0] : memref<128x16xbf16, #tpu.memory_space<vmem>>, vector<128x16xbf16>
    %c0_1 = arith.constant 0 : index
    %c0_2 = arith.constant 0 : index
    %1 = vector.load %arg4[%c0_1, %c0_2] : memref<16x16xbf16, #tpu.memory_space<vmem>>, vector<16x16xbf16>
    %cst = arith.constant dense<0.000000e+00> : vector<128x16xf32>
    %2 = tpu.matmul %0, %1, %cst {dimension_numbers = #tpu.dot_dimension_numbers<[1], [0], [0], [1], [0, 0, 1, 1], [], []>} : vector<128x16xbf16>, vector<16x16xbf16>, vector<128x16xf32> -> vector<128x16xf32>
    %c0_3 = arith.constant 0 : index
    %c0_4 = arith.constant 0 : index
    %3 = vector.load %arg5[%c0_3, %c0_4] : memref<1x16xf32, #tpu.memory_space<vmem>>, vector<1x16xf32>
    %4 = vector.broadcast %3 : vector<1x16xf32> to vector<128x16xf32>
    %5 = arith.addf %2, %4 : vector<128x16xf32>
    %6 = math.tanh %5 : vector<128x16xf32>
    %c0_5 = arith.constant 0 : index
    %c0_6 = arith.constant 0 : index
    %7 = vector.load %arg1[%c0_5, %c0_6] : memref<128x16xf32, #tpu.memory_space<vmem>>, vector<128x16xf32>
    %8 = tpu.concatenate %7, %6 in 1 : vector<128x16xf32>, vector<128x16xf32> -> vector<128x32xf32>
    %c0_7 = arith.constant 0 : index
    %c0_8 = arith.constant 0 : index
    %9 = vector.load %arg6[%c0_7, %c0_8] : memref<128x32xf32, #tpu.memory_space<vmem>>, vector<128x32xf32>
    %10 = arith.addf %8, %9 : vector<128x32xf32>
    %11 = tpu.iota {dimensions = array<i32: 1>} : vector<1x128xi32>
    %c0_i32 = arith.constant 0 : i32
    %12 = vector.broadcast %c0_i32 : i32 to vector<1x128xi32>
    %13 = arith.cmpi sge, %11, %12 : vector<1x128xi32>
    %c8_i32 = arith.constant 8 : i32
    %14 = vector.broadcast %c8_i32 : i32 to vector<1x128xi32>
    %15 = arith.cmpi slt, %11, %14 : vector<1x128xi32>
    %16 = arith.andi %13, %15 : vector<1x128xi1>
    %17 = arith.extui %16 : vector<1x128xi1> to vector<1x128xi32>
    %18 = arith.sitofp %17 : vector<1x128xi32> to vector<1x128xf32>
    %c8_i32_9 = arith.constant 8 : i32
    %19 = vector.broadcast %c8_i32_9 : i32 to vector<1x128xi32>
    %20 = arith.cmpi sge, %11, %19 : vector<1x128xi32>
    %c16_i32 = arith.constant 16 : i32
    %21 = vector.broadcast %c16_i32 : i32 to vector<1x128xi32>
    %22 = arith.cmpi slt, %11, %21 : vector<1x128xi32>
    %23 = arith.andi %20, %22 : vector<1x128xi1>
    %24 = arith.extui %23 : vector<1x128xi1> to vector<1x128xi32>
    %25 = arith.sitofp %24 : vector<1x128xi32> to vector<1x128xf32>
    %c16_i32_10 = arith.constant 16 : i32
    %26 = vector.broadcast %c16_i32_10 : i32 to vector<1x128xi32>
    %27 = arith.cmpi sge, %11, %26 : vector<1x128xi32>
    %c24_i32 = arith.constant 24 : i32
    %28 = vector.broadcast %c24_i32 : i32 to vector<1x128xi32>
    %29 = arith.cmpi slt, %11, %28 : vector<1x128xi32>
    %30 = arith.andi %27, %29 : vector<1x128xi1>
    %31 = arith.extui %30 : vector<1x128xi1> to vector<1x128xi32>
    %32 = arith.sitofp %31 : vector<1x128xi32> to vector<1x128xf32>
    %c24_i32_11 = arith.constant 24 : i32
    %33 = vector.broadcast %c24_i32_11 : i32 to vector<1x128xi32>
    %34 = arith.cmpi sge, %11, %33 : vector<1x128xi32>
    %c32_i32 = arith.constant 32 : i32
    %35 = vector.broadcast %c32_i32 : i32 to vector<1x128xi32>
    %36 = arith.cmpi slt, %11, %35 : vector<1x128xi32>
    %37 = arith.andi %34, %36 : vector<1x128xi1>
    %38 = arith.extui %37 : vector<1x128xi1> to vector<1x128xi32>
    %39 = arith.sitofp %38 : vector<1x128xi32> to vector<1x128xf32>
    %c0_12 = arith.constant 0 : index
    %c0_13 = arith.constant 0 : index
    %40 = vector.load %arg3[%c0_12, %c0_13] : memref<128x128xf32, #tpu.memory_space<vmem>>, vector<128x128xf32>
    %c0_14 = arith.constant 0 : index
    %c0_15 = arith.constant 0 : index
    %c0_16 = arith.constant 0 : index
    %41 = vector.load %arg7[%c0_14, %c0_15, %c0_16] : memref<2x1x32xf32, #tpu.memory_space<vmem>>, vector<1x1x32xf32>
    %42 = vector.shape_cast %41 : vector<1x1x32xf32> to vector<1x32xf32>
    %c0_17 = arith.constant 0 : index
    %c0_18 = arith.constant 0 : index
    %c0_19 = arith.constant 0 : index
    %43 = vector.load %arg8[%c0_17, %c0_18, %c0_19] : memref<2x1x32xf32, #tpu.memory_space<vmem>>, vector<1x1x32xf32>
    %44 = vector.shape_cast %43 : vector<1x1x32xf32> to vector<1x32xf32>
    %cst_20 = arith.constant dense<0.000000e+00> : vector<128xf32>
    %45 = vector.multi_reduction <add>, %10, %cst_20 [1] : vector<128x32xf32> to vector<128xf32>
    %46 = vector.shape_cast %45 : vector<128xf32> to vector<128x1xf32>
    %cst_21 = arith.constant 3.200000e+01 : f32
    %47 = vector.broadcast %cst_21 : f32 to vector<128x1xf32>
    %48 = arith.divf %46, %47 : vector<128x1xf32>
    %49 = vector.broadcast %48 : vector<128x1xf32> to vector<128x32xf32>
    %50 = arith.subf %10, %49 : vector<128x32xf32>
    %51 = arith.mulf %50, %50 : vector<128x32xf32>
    %cst_22 = arith.constant dense<0.000000e+00> : vector<128xf32>
    %52 = vector.multi_reduction <add>, %51, %cst_22 [1] : vector<128x32xf32> to vector<128xf32>
    %53 = vector.shape_cast %52 : vector<128xf32> to vector<128x1xf32>
    %cst_23 = arith.constant 3.200000e+01 : f32
    %54 = vector.broadcast %cst_23 : f32 to vector<128x1xf32>
    %55 = arith.divf %53, %54 : vector<128x1xf32>
    %56 = vector.broadcast %48 : vector<128x1xf32> to vector<128x32xf32>
    %57 = arith.subf %10, %56 : vector<128x32xf32>
    %cst_24 = arith.constant 9.99999974E-6 : f32
    %58 = vector.broadcast %cst_24 : f32 to vector<128x1xf32>
    %59 = arith.addf %55, %58 : vector<128x1xf32>
    %60 = math.rsqrt %59 : vector<128x1xf32>
    %61 = vector.broadcast %60 : vector<128x1xf32> to vector<128x32xf32>
    %62 = arith.mulf %57, %61 : vector<128x32xf32>
    %63 = vector.broadcast %42 : vector<1x32xf32> to vector<128x32xf32>
    %64 = arith.mulf %62, %63 : vector<128x32xf32>
    %65 = vector.broadcast %44 : vector<1x32xf32> to vector<128x32xf32>
    %66 = arith.addf %64, %65 : vector<128x32xf32>
    %67 = arith.truncf %66 : vector<128x32xf32> to vector<128x32xbf16>
    %c0_25 = arith.constant 0 : index
    %c0_26 = arith.constant 0 : index
    %c0_27 = arith.constant 0 : index
    %68 = vector.load %arg9[%c0_25, %c0_26, %c0_27] : memref<2x32x384xbf16, #tpu.memory_space<vmem>>, vector<1x32x384xbf16>
    %69 = vector.shape_cast %68 : vector<1x32x384xbf16> to vector<32x384xbf16>
    %cst_28 = arith.constant dense<0.000000e+00> : vector<128x384xf32>
    %70 = tpu.matmul %67, %69, %cst_28 {dimension_numbers = #tpu.dot_dimension_numbers<[1], [0], [0], [1], [0, 0, 1, 1], [], []>} : vector<128x32xbf16>, vector<32x384xbf16>, vector<128x384xf32> -> vector<128x384xf32>
    %c0_29 = arith.constant 0 : index
    %c0_30 = arith.constant 0 : index
    %c0_31 = arith.constant 0 : index
    %71 = vector.load %arg10[%c0_29, %c0_30, %c0_31] : memref<2x1x384xf32, #tpu.memory_space<vmem>>, vector<1x1x384xf32>
    %72 = vector.shape_cast %71 : vector<1x1x384xf32> to vector<1x384xf32>
    %73 = vector.broadcast %72 : vector<1x384xf32> to vector<128x384xf32>
    %74 = arith.addf %70, %73 : vector<128x384xf32>
    %75 = vector.extract_strided_slice %74 {offsets = [0, 0], sizes = [128, 128], strides = [1, 1]} : vector<128x384xf32> to vector<128x128xf32>
    %76 = arith.truncf %75 : vector<128x128xf32> to vector<128x128xbf16>
    %77 = vector.extract_strided_slice %74 {offsets = [0, 128], sizes = [128, 128], strides = [1, 1]} : vector<128x384xf32> to vector<128x128xf32>
    %78 = vector.extract_strided_slice %74 {offsets = [0, 256], sizes = [128, 128], strides = [1, 1]} : vector<128x384xf32> to vector<128x128xf32>
    %cst_32 = arith.constant 0.000000e+00 : f32
    %79 = vector.broadcast %cst_32 : f32 to vector<128x128xf32>
    %80 = vector.broadcast %18 : vector<1x128xf32> to vector<128x128xf32>
    %81 = arith.mulf %77, %80 : vector<128x128xf32>
    %82 = arith.truncf %81 : vector<128x128xf32> to vector<128x128xbf16>
    %83 = vector.broadcast %18 : vector<1x128xf32> to vector<128x128xf32>
    %84 = arith.mulf %78, %83 : vector<128x128xf32>
    %85 = arith.truncf %84 : vector<128x128xf32> to vector<128x128xbf16>
    %cst_33 = arith.constant dense<0.000000e+00> : vector<128x128xf32>
    %86 = tpu.matmul %76, %82, %cst_33 {dimension_numbers = #tpu.dot_dimension_numbers<[1], [1], [0], [0], [0, 0, 1, 0], [], []>} : vector<128x128xbf16>, vector<128x128xbf16>, vector<128x128xf32> -> vector<128x128xf32>
    %cst_34 = arith.constant 0.353553385 : f32
    %87 = vector.broadcast %cst_34 : f32 to vector<128x128xf32>
    %88 = arith.mulf %86, %87 : vector<128x128xf32>
    %89 = arith.addf %88, %40 : vector<128x128xf32>
    %cst_35 = arith.constant dense<0xFF800000> : vector<128xf32>
    %90 = vector.multi_reduction <maximumf>, %89, %cst_35 [1] : vector<128x128xf32> to vector<128xf32>
    %91 = vector.shape_cast %90 : vector<128xf32> to vector<128x1xf32>
    %92 = vector.broadcast %91 : vector<128x1xf32> to vector<128x128xf32>
    %93 = arith.subf %89, %92 : vector<128x128xf32>
    %94 = math.exp %93 : vector<128x128xf32>
    %cst_36 = arith.constant dense<0.000000e+00> : vector<128xf32>
    %95 = vector.multi_reduction <add>, %94, %cst_36 [1] : vector<128x128xf32> to vector<128xf32>
    %96 = vector.shape_cast %95 : vector<128xf32> to vector<128x1xf32>
    %97 = tpu.reciprocal %96 {approx = true} : vector<128x1xf32> -> vector<128x1xf32>
    %98 = vector.broadcast %97 : vector<128x1xf32> to vector<128x128xf32>
    %99 = arith.mulf %94, %98 : vector<128x128xf32>
    %100 = arith.truncf %99 : vector<128x128xf32> to vector<128x128xbf16>
    %cst_37 = arith.constant dense<0.000000e+00> : vector<128x128xf32>
    %101 = tpu.matmul %100, %85, %cst_37 {dimension_numbers = #tpu.dot_dimension_numbers<[1], [0], [0], [1], [0, 0, 1, 1], [], []>} : vector<128x128xbf16>, vector<128x128xbf16>, vector<128x128xf32> -> vector<128x128xf32>
    %102 = arith.addf %79, %101 : vector<128x128xf32>
    %103 = vector.broadcast %25 : vector<1x128xf32> to vector<128x128xf32>
    %104 = arith.mulf %77, %103 : vector<128x128xf32>
    %105 = arith.truncf %104 : vector<128x128xf32> to vector<128x128xbf16>
    %106 = vector.broadcast %25 : vector<1x128xf32> to vector<128x128xf32>
    %107 = arith.mulf %78, %106 : vector<128x128xf32>
    %108 = arith.truncf %107 : vector<128x128xf32> to vector<128x128xbf16>
    %cst_38 = arith.constant dense<0.000000e+00> : vector<128x128xf32>
    %109 = tpu.matmul %76, %105, %cst_38 {dimension_numbers = #tpu.dot_dimension_numbers<[1], [1], [0], [0], [0, 0, 1, 0], [], []>} : vector<128x128xbf16>, vector<128x128xbf16>, vector<128x128xf32> -> vector<128x128xf32>
    %cst_39 = arith.constant 0.353553385 : f32
    %110 = vector.broadcast %cst_39 : f32 to vector<128x128xf32>
    %111 = arith.mulf %109, %110 : vector<128x128xf32>
    %112 = arith.addf %111, %40 : vector<128x128xf32>
    %cst_40 = arith.constant dense<0xFF800000> : vector<128xf32>
    %113 = vector.multi_reduction <maximumf>, %112, %cst_40 [1] : vector<128x128xf32> to vector<128xf32>
    %114 = vector.shape_cast %113 : vector<128xf32> to vector<128x1xf32>
    %115 = vector.broadcast %114 : vector<128x1xf32> to vector<128x128xf32>
    %116 = arith.subf %112, %115 : vector<128x128xf32>
    %117 = math.exp %116 : vector<128x128xf32>
    %cst_41 = arith.constant dense<0.000000e+00> : vector<128xf32>
    %118 = vector.multi_reduction <add>, %117, %cst_41 [1] : vector<128x128xf32> to vector<128xf32>
    %119 = vector.shape_cast %118 : vector<128xf32> to vector<128x1xf32>
    %120 = tpu.reciprocal %119 {approx = true} : vector<128x1xf32> -> vector<128x1xf32>
    %121 = vector.broadcast %120 : vector<128x1xf32> to vector<128x128xf32>
    %122 = arith.mulf %117, %121 : vector<128x128xf32>
    %123 = arith.truncf %122 : vector<128x128xf32> to vector<128x128xbf16>
    %cst_42 = arith.constant dense<0.000000e+00> : vector<128x128xf32>
    %124 = tpu.matmul %123, %108, %cst_42 {dimension_numbers = #tpu.dot_dimension_numbers<[1], [0], [0], [1], [0, 0, 1, 1], [], []>} : vector<128x128xbf16>, vector<128x128xbf16>, vector<128x128xf32> -> vector<128x128xf32>
    %125 = arith.addf %102, %124 : vector<128x128xf32>
    %126 = vector.broadcast %32 : vector<1x128xf32> to vector<128x128xf32>
    %127 = arith.mulf %77, %126 : vector<128x128xf32>
    %128 = arith.truncf %127 : vector<128x128xf32> to vector<128x128xbf16>
    %129 = vector.broadcast %32 : vector<1x128xf32> to vector<128x128xf32>
    %130 = arith.mulf %78, %129 : vector<128x128xf32>
    %131 = arith.truncf %130 : vector<128x128xf32> to vector<128x128xbf16>
    %cst_43 = arith.constant dense<0.000000e+00> : vector<128x128xf32>
    %132 = tpu.matmul %76, %128, %cst_43 {dimension_numbers = #tpu.dot_dimension_numbers<[1], [1], [0], [0], [0, 0, 1, 0], [], []>} : vector<128x128xbf16>, vector<128x128xbf16>, vector<128x128xf32> -> vector<128x128xf32>
    %cst_44 = arith.constant 0.353553385 : f32
    %133 = vector.broadcast %cst_44 : f32 to vector<128x128xf32>
    %134 = arith.mulf %132, %133 : vector<128x128xf32>
    %135 = arith.addf %134, %40 : vector<128x128xf32>
    %cst_45 = arith.constant dense<0xFF800000> : vector<128xf32>
    %136 = vector.multi_reduction <maximumf>, %135, %cst_45 [1] : vector<128x128xf32> to vector<128xf32>
    %137 = vector.shape_cast %136 : vector<128xf32> to vector<128x1xf32>
    %138 = vector.broadcast %137 : vector<128x1xf32> to vector<128x128xf32>
    %139 = arith.subf %135, %138 : vector<128x128xf32>
    %140 = math.exp %139 : vector<128x128xf32>
    %cst_46 = arith.constant dense<0.000000e+00> : vector<128xf32>
    %141 = vector.multi_reduction <add>, %140, %cst_46 [1] : vector<128x128xf32> to vector<128xf32>
    %142 = vector.shape_cast %141 : vector<128xf32> to vector<128x1xf32>
    %143 = tpu.reciprocal %142 {approx = true} : vector<128x1xf32> -> vector<128x1xf32>
    %144 = vector.broadcast %143 : vector<128x1xf32> to vector<128x128xf32>
    %145 = arith.mulf %140, %144 : vector<128x128xf32>
    %146 = arith.truncf %145 : vector<128x128xf32> to vector<128x128xbf16>
    %cst_47 = arith.constant dense<0.000000e+00> : vector<128x128xf32>
    %147 = tpu.matmul %146, %131, %cst_47 {dimension_numbers = #tpu.dot_dimension_numbers<[1], [0], [0], [1], [0, 0, 1, 1], [], []>} : vector<128x128xbf16>, vector<128x128xbf16>, vector<128x128xf32> -> vector<128x128xf32>
    %148 = arith.addf %125, %147 : vector<128x128xf32>
    %149 = vector.broadcast %39 : vector<1x128xf32> to vector<128x128xf32>
    %150 = arith.mulf %77, %149 : vector<128x128xf32>
    %151 = arith.truncf %150 : vector<128x128xf32> to vector<128x128xbf16>
    %152 = vector.broadcast %39 : vector<1x128xf32> to vector<128x128xf32>
    %153 = arith.mulf %78, %152 : vector<128x128xf32>
    %154 = arith.truncf %153 : vector<128x128xf32> to vector<128x128xbf16>
    %cst_48 = arith.constant dense<0.000000e+00> : vector<128x128xf32>
    %155 = tpu.matmul %76, %151, %cst_48 {dimension_numbers = #tpu.dot_dimension_numbers<[1], [1], [0], [0], [0, 0, 1, 0], [], []>} : vector<128x128xbf16>, vector<128x128xbf16>, vector<128x128xf32> -> vector<128x128xf32>
    %cst_49 = arith.constant 0.353553385 : f32
    %156 = vector.broadcast %cst_49 : f32 to vector<128x128xf32>
    %157 = arith.mulf %155, %156 : vector<128x128xf32>
    %158 = arith.addf %157, %40 : vector<128x128xf32>
    %cst_50 = arith.constant dense<0xFF800000> : vector<128xf32>
    %159 = vector.multi_reduction <maximumf>, %158, %cst_50 [1] : vector<128x128xf32> to vector<128xf32>
    %160 = vector.shape_cast %159 : vector<128xf32> to vector<128x1xf32>
    %161 = vector.broadcast %160 : vector<128x1xf32> to vector<128x128xf32>
    %162 = arith.subf %158, %161 : vector<128x128xf32>
    %163 = math.exp %162 : vector<128x128xf32>
    %cst_51 = arith.constant dense<0.000000e+00> : vector<128xf32>
    %164 = vector.multi_reduction <add>, %163, %cst_51 [1] : vector<128x128xf32> to vector<128xf32>
    %165 = vector.shape_cast %164 : vector<128xf32> to vector<128x1xf32>
    %166 = tpu.reciprocal %165 {approx = true} : vector<128x1xf32> -> vector<128x1xf32>
    %167 = vector.broadcast %166 : vector<128x1xf32> to vector<128x128xf32>
    %168 = arith.mulf %163, %167 : vector<128x128xf32>
    %169 = arith.truncf %168 : vector<128x128xf32> to vector<128x128xbf16>
    %cst_52 = arith.constant dense<0.000000e+00> : vector<128x128xf32>
    %170 = tpu.matmul %169, %154, %cst_52 {dimension_numbers = #tpu.dot_dimension_numbers<[1], [0], [0], [1], [0, 0, 1, 1], [], []>} : vector<128x128xbf16>, vector<128x128xbf16>, vector<128x128xf32> -> vector<128x128xf32>
    %171 = arith.addf %148, %170 : vector<128x128xf32>
    %172 = arith.truncf %171 : vector<128x128xf32> to vector<128x128xbf16>
    %c0_53 = arith.constant 0 : index
    %c0_54 = arith.constant 0 : index
    %c0_55 = arith.constant 0 : index
    %173 = vector.load %arg11[%c0_53, %c0_54, %c0_55] : memref<2x128x32xbf16, #tpu.memory_space<vmem>>, vector<1x128x32xbf16>
    %174 = vector.shape_cast %173 : vector<1x128x32xbf16> to vector<128x32xbf16>
    %cst_56 = arith.constant dense<0.000000e+00> : vector<128x32xf32>
    %175 = tpu.matmul %172, %174, %cst_56 {dimension_numbers = #tpu.dot_dimension_numbers<[1], [0], [0], [1], [0, 0, 1, 1], [], []>} : vector<128x128xbf16>, vector<128x32xbf16>, vector<128x32xf32> -> vector<128x32xf32>
    %176 = arith.addf %10, %175 : vector<128x32xf32>
    %c0_57 = arith.constant 0 : index
    %c0_58 = arith.constant 0 : index
    %c0_59 = arith.constant 0 : index
    %177 = vector.load %arg12[%c0_57, %c0_58, %c0_59] : memref<2x1x32xf32, #tpu.memory_space<vmem>>, vector<1x1x32xf32>
    %178 = vector.shape_cast %177 : vector<1x1x32xf32> to vector<1x32xf32>
    %179 = vector.broadcast %178 : vector<1x32xf32> to vector<128x32xf32>
    %180 = arith.addf %176, %179 : vector<128x32xf32>
    %c0_60 = arith.constant 0 : index
    %c0_61 = arith.constant 0 : index
    %c0_62 = arith.constant 0 : index
    %181 = vector.load %arg13[%c0_60, %c0_61, %c0_62] : memref<2x1x32xf32, #tpu.memory_space<vmem>>, vector<1x1x32xf32>
    %182 = vector.shape_cast %181 : vector<1x1x32xf32> to vector<1x32xf32>
    %c0_63 = arith.constant 0 : index
    %c0_64 = arith.constant 0 : index
    %c0_65 = arith.constant 0 : index
    %183 = vector.load %arg14[%c0_63, %c0_64, %c0_65] : memref<2x1x32xf32, #tpu.memory_space<vmem>>, vector<1x1x32xf32>
    %184 = vector.shape_cast %183 : vector<1x1x32xf32> to vector<1x32xf32>
    %cst_66 = arith.constant dense<0.000000e+00> : vector<128xf32>
    %185 = vector.multi_reduction <add>, %180, %cst_66 [1] : vector<128x32xf32> to vector<128xf32>
    %186 = vector.shape_cast %185 : vector<128xf32> to vector<128x1xf32>
    %cst_67 = arith.constant 3.200000e+01 : f32
    %187 = vector.broadcast %cst_67 : f32 to vector<128x1xf32>
    %188 = arith.divf %186, %187 : vector<128x1xf32>
    %189 = vector.broadcast %188 : vector<128x1xf32> to vector<128x32xf32>
    %190 = arith.subf %180, %189 : vector<128x32xf32>
    %191 = arith.mulf %190, %190 : vector<128x32xf32>
    %cst_68 = arith.constant dense<0.000000e+00> : vector<128xf32>
    %192 = vector.multi_reduction <add>, %191, %cst_68 [1] : vector<128x32xf32> to vector<128xf32>
    %193 = vector.shape_cast %192 : vector<128xf32> to vector<128x1xf32>
    %cst_69 = arith.constant 3.200000e+01 : f32
    %194 = vector.broadcast %cst_69 : f32 to vector<128x1xf32>
    %195 = arith.divf %193, %194 : vector<128x1xf32>
    %196 = vector.broadcast %188 : vector<128x1xf32> to vector<128x32xf32>
    %197 = arith.subf %180, %196 : vector<128x32xf32>
    %cst_70 = arith.constant 9.99999974E-6 : f32
    %198 = vector.broadcast %cst_70 : f32 to vector<128x1xf32>
    %199 = arith.addf %195, %198 : vector<128x1xf32>
    %200 = math.rsqrt %199 : vector<128x1xf32>
    %201 = vector.broadcast %200 : vector<128x1xf32> to vector<128x32xf32>
    %202 = arith.mulf %197, %201 : vector<128x32xf32>
    %203 = vector.broadcast %182 : vector<1x32xf32> to vector<128x32xf32>
    %204 = arith.mulf %202, %203 : vector<128x32xf32>
    %205 = vector.broadcast %184 : vector<1x32xf32> to vector<128x32xf32>
    %206 = arith.addf %204, %205 : vector<128x32xf32>
    %207 = arith.truncf %206 : vector<128x32xf32> to vector<128x32xbf16>
    %c0_71 = arith.constant 0 : index
    %c0_72 = arith.constant 0 : index
    %c0_73 = arith.constant 0 : index
    %208 = vector.load %arg15[%c0_71, %c0_72, %c0_73] : memref<2x32x128xbf16, #tpu.memory_space<vmem>>, vector<1x32x128xbf16>
    %209 = vector.shape_cast %208 : vector<1x32x128xbf16> to vector<32x128xbf16>
    %cst_74 = arith.constant dense<0.000000e+00> : vector<128x128xf32>
    %210 = tpu.matmul %207, %209, %cst_74 {dimension_numbers = #tpu.dot_dimension_numbers<[1], [0], [0], [1], [0, 0, 1, 1], [], []>} : vector<128x32xbf16>, vector<32x128xbf16>, vector<128x128xf32> -> vector<128x128xf32>
    %c0_75 = arith.constant 0 : index
    %c0_76 = arith.constant 0 : index
    %c0_77 = arith.constant 0 : index
    %211 = vector.load %arg16[%c0_75, %c0_76, %c0_77] : memref<2x1x128xf32, #tpu.memory_space<vmem>>, vector<1x1x128xf32>
    %212 = vector.shape_cast %211 : vector<1x1x128xf32> to vector<1x128xf32>
    %213 = vector.broadcast %212 : vector<1x128xf32> to vector<128x128xf32>
    %214 = arith.addf %210, %213 : vector<128x128xf32>
    %215 = arith.mulf %214, %214 : vector<128x128xf32>
    %216 = arith.mulf %214, %215 : vector<128x128xf32>
    %cst_78 = arith.constant 4.471500e-02 : f32
    %217 = vector.broadcast %cst_78 : f32 to vector<128x128xf32>
    %218 = arith.mulf %217, %216 : vector<128x128xf32>
    %219 = arith.addf %214, %218 : vector<128x128xf32>
    %cst_79 = arith.constant 0.797884583 : f32
    %220 = vector.broadcast %cst_79 : f32 to vector<128x128xf32>
    %221 = arith.mulf %220, %219 : vector<128x128xf32>
    %222 = math.tanh %221 : vector<128x128xf32>
    %cst_80 = arith.constant 1.000000e+00 : f32
    %223 = vector.broadcast %cst_80 : f32 to vector<128x128xf32>
    %224 = arith.addf %223, %222 : vector<128x128xf32>
    %cst_81 = arith.constant 5.000000e-01 : f32
    %225 = vector.broadcast %cst_81 : f32 to vector<128x128xf32>
    %226 = arith.mulf %225, %224 : vector<128x128xf32>
    %227 = arith.mulf %214, %226 : vector<128x128xf32>
    %228 = arith.truncf %227 : vector<128x128xf32> to vector<128x128xbf16>
    %c0_82 = arith.constant 0 : index
    %c0_83 = arith.constant 0 : index
    %c0_84 = arith.constant 0 : index
    %229 = vector.load %arg17[%c0_82, %c0_83, %c0_84] : memref<2x128x32xbf16, #tpu.memory_space<vmem>>, vector<1x128x32xbf16>
    %230 = vector.shape_cast %229 : vector<1x128x32xbf16> to vector<128x32xbf16>
    %cst_85 = arith.constant dense<0.000000e+00> : vector<128x32xf32>
    %231 = tpu.matmul %228, %230, %cst_85 {dimension_numbers = #tpu.dot_dimension_numbers<[1], [0], [0], [1], [0, 0, 1, 1], [], []>} : vector<128x128xbf16>, vector<128x32xbf16>, vector<128x32xf32> -> vector<128x32xf32>
    %232 = arith.addf %180, %231 : vector<128x32xf32>
    %c0_86 = arith.constant 0 : index
    %c0_87 = arith.constant 0 : index
    %c0_88 = arith.constant 0 : index
    %233 = vector.load %arg18[%c0_86, %c0_87, %c0_88] : memref<2x1x32xf32, #tpu.memory_space<vmem>>, vector<1x1x32xf32>
    %234 = vector.shape_cast %233 : vector<1x1x32xf32> to vector<1x32xf32>
    %235 = vector.broadcast %234 : vector<1x32xf32> to vector<128x32xf32>
    %236 = arith.addf %232, %235 : vector<128x32xf32>
    %c1 = arith.constant 1 : index
    %c0_89 = arith.constant 0 : index
    %c0_90 = arith.constant 0 : index
    %237 = vector.load %arg7[%c1, %c0_89, %c0_90] : memref<2x1x32xf32, #tpu.memory_space<vmem>>, vector<1x1x32xf32>
    %238 = vector.shape_cast %237 : vector<1x1x32xf32> to vector<1x32xf32>
    %c1_91 = arith.constant 1 : index
    %c0_92 = arith.constant 0 : index
    %c0_93 = arith.constant 0 : index
    %239 = vector.load %arg8[%c1_91, %c0_92, %c0_93] : memref<2x1x32xf32, #tpu.memory_space<vmem>>, vector<1x1x32xf32>
    %240 = vector.shape_cast %239 : vector<1x1x32xf32> to vector<1x32xf32>
    %cst_94 = arith.constant dense<0.000000e+00> : vector<128xf32>
    %241 = vector.multi_reduction <add>, %236, %cst_94 [1] : vector<128x32xf32> to vector<128xf32>
    %242 = vector.shape_cast %241 : vector<128xf32> to vector<128x1xf32>
    %cst_95 = arith.constant 3.200000e+01 : f32
    %243 = vector.broadcast %cst_95 : f32 to vector<128x1xf32>
    %244 = arith.divf %242, %243 : vector<128x1xf32>
    %245 = vector.broadcast %244 : vector<128x1xf32> to vector<128x32xf32>
    %246 = arith.subf %236, %245 : vector<128x32xf32>
    %247 = arith.mulf %246, %246 : vector<128x32xf32>
    %cst_96 = arith.constant dense<0.000000e+00> : vector<128xf32>
    %248 = vector.multi_reduction <add>, %247, %cst_96 [1] : vector<128x32xf32> to vector<128xf32>
    %249 = vector.shape_cast %248 : vector<128xf32> to vector<128x1xf32>
    %cst_97 = arith.constant 3.200000e+01 : f32
    %250 = vector.broadcast %cst_97 : f32 to vector<128x1xf32>
    %251 = arith.divf %249, %250 : vector<128x1xf32>
    %252 = vector.broadcast %244 : vector<128x1xf32> to vector<128x32xf32>
    %253 = arith.subf %236, %252 : vector<128x32xf32>
    %cst_98 = arith.constant 9.99999974E-6 : f32
    %254 = vector.broadcast %cst_98 : f32 to vector<128x1xf32>
    %255 = arith.addf %251, %254 : vector<128x1xf32>
    %256 = math.rsqrt %255 : vector<128x1xf32>
    %257 = vector.broadcast %256 : vector<128x1xf32> to vector<128x32xf32>
    %258 = arith.mulf %253, %257 : vector<128x32xf32>
    %259 = vector.broadcast %238 : vector<1x32xf32> to vector<128x32xf32>
    %260 = arith.mulf %258, %259 : vector<128x32xf32>
    %261 = vector.broadcast %240 : vector<1x32xf32> to vector<128x32xf32>
    %262 = arith.addf %260, %261 : vector<128x32xf32>
    %263 = arith.truncf %262 : vector<128x32xf32> to vector<128x32xbf16>
    %c1_99 = arith.constant 1 : index
    %c0_100 = arith.constant 0 : index
    %c0_101 = arith.constant 0 : index
    %264 = vector.load %arg9[%c1_99, %c0_100, %c0_101] : memref<2x32x384xbf16, #tpu.memory_space<vmem>>, vector<1x32x384xbf16>
    %265 = vector.shape_cast %264 : vector<1x32x384xbf16> to vector<32x384xbf16>
    %cst_102 = arith.constant dense<0.000000e+00> : vector<128x384xf32>
    %266 = tpu.matmul %263, %265, %cst_102 {dimension_numbers = #tpu.dot_dimension_numbers<[1], [0], [0], [1], [0, 0, 1, 1], [], []>} : vector<128x32xbf16>, vector<32x384xbf16>, vector<128x384xf32> -> vector<128x384xf32>
    %c1_103 = arith.constant 1 : index
    %c0_104 = arith.constant 0 : index
    %c0_105 = arith.constant 0 : index
    %267 = vector.load %arg10[%c1_103, %c0_104, %c0_105] : memref<2x1x384xf32, #tpu.memory_space<vmem>>, vector<1x1x384xf32>
    %268 = vector.shape_cast %267 : vector<1x1x384xf32> to vector<1x384xf32>
    %269 = vector.broadcast %268 : vector<1x384xf32> to vector<128x384xf32>
    %270 = arith.addf %266, %269 : vector<128x384xf32>
    %271 = vector.extract_strided_slice %270 {offsets = [0, 0], sizes = [128, 128], strides = [1, 1]} : vector<128x384xf32> to vector<128x128xf32>
    %272 = arith.truncf %271 : vector<128x128xf32> to vector<128x128xbf16>
    %273 = vector.extract_strided_slice %270 {offsets = [0, 128], sizes = [128, 128], strides = [1, 1]} : vector<128x384xf32> to vector<128x128xf32>
    %274 = vector.extract_strided_slice %270 {offsets = [0, 256], sizes = [128, 128], strides = [1, 1]} : vector<128x384xf32> to vector<128x128xf32>
    %cst_106 = arith.constant 0.000000e+00 : f32
    %275 = vector.broadcast %cst_106 : f32 to vector<128x128xf32>
    %276 = vector.broadcast %18 : vector<1x128xf32> to vector<128x128xf32>
    %277 = arith.mulf %273, %276 : vector<128x128xf32>
    %278 = arith.truncf %277 : vector<128x128xf32> to vector<128x128xbf16>
    %279 = vector.broadcast %18 : vector<1x128xf32> to vector<128x128xf32>
    %280 = arith.mulf %274, %279 : vector<128x128xf32>
    %281 = arith.truncf %280 : vector<128x128xf32> to vector<128x128xbf16>
    %cst_107 = arith.constant dense<0.000000e+00> : vector<128x128xf32>
    %282 = tpu.matmul %272, %278, %cst_107 {dimension_numbers = #tpu.dot_dimension_numbers<[1], [1], [0], [0], [0, 0, 1, 0], [], []>} : vector<128x128xbf16>, vector<128x128xbf16>, vector<128x128xf32> -> vector<128x128xf32>
    %cst_108 = arith.constant 0.353553385 : f32
    %283 = vector.broadcast %cst_108 : f32 to vector<128x128xf32>
    %284 = arith.mulf %282, %283 : vector<128x128xf32>
    %285 = arith.addf %284, %40 : vector<128x128xf32>
    %cst_109 = arith.constant dense<0xFF800000> : vector<128xf32>
    %286 = vector.multi_reduction <maximumf>, %285, %cst_109 [1] : vector<128x128xf32> to vector<128xf32>
    %287 = vector.shape_cast %286 : vector<128xf32> to vector<128x1xf32>
    %288 = vector.broadcast %287 : vector<128x1xf32> to vector<128x128xf32>
    %289 = arith.subf %285, %288 : vector<128x128xf32>
    %290 = math.exp %289 : vector<128x128xf32>
    %cst_110 = arith.constant dense<0.000000e+00> : vector<128xf32>
    %291 = vector.multi_reduction <add>, %290, %cst_110 [1] : vector<128x128xf32> to vector<128xf32>
    %292 = vector.shape_cast %291 : vector<128xf32> to vector<128x1xf32>
    %293 = tpu.reciprocal %292 {approx = true} : vector<128x1xf32> -> vector<128x1xf32>
    %294 = vector.broadcast %293 : vector<128x1xf32> to vector<128x128xf32>
    %295 = arith.mulf %290, %294 : vector<128x128xf32>
    %296 = arith.truncf %295 : vector<128x128xf32> to vector<128x128xbf16>
    %cst_111 = arith.constant dense<0.000000e+00> : vector<128x128xf32>
    %297 = tpu.matmul %296, %281, %cst_111 {dimension_numbers = #tpu.dot_dimension_numbers<[1], [0], [0], [1], [0, 0, 1, 1], [], []>} : vector<128x128xbf16>, vector<128x128xbf16>, vector<128x128xf32> -> vector<128x128xf32>
    %298 = arith.addf %275, %297 : vector<128x128xf32>
    %299 = vector.broadcast %25 : vector<1x128xf32> to vector<128x128xf32>
    %300 = arith.mulf %273, %299 : vector<128x128xf32>
    %301 = arith.truncf %300 : vector<128x128xf32> to vector<128x128xbf16>
    %302 = vector.broadcast %25 : vector<1x128xf32> to vector<128x128xf32>
    %303 = arith.mulf %274, %302 : vector<128x128xf32>
    %304 = arith.truncf %303 : vector<128x128xf32> to vector<128x128xbf16>
    %cst_112 = arith.constant dense<0.000000e+00> : vector<128x128xf32>
    %305 = tpu.matmul %272, %301, %cst_112 {dimension_numbers = #tpu.dot_dimension_numbers<[1], [1], [0], [0], [0, 0, 1, 0], [], []>} : vector<128x128xbf16>, vector<128x128xbf16>, vector<128x128xf32> -> vector<128x128xf32>
    %cst_113 = arith.constant 0.353553385 : f32
    %306 = vector.broadcast %cst_113 : f32 to vector<128x128xf32>
    %307 = arith.mulf %305, %306 : vector<128x128xf32>
    %308 = arith.addf %307, %40 : vector<128x128xf32>
    %cst_114 = arith.constant dense<0xFF800000> : vector<128xf32>
    %309 = vector.multi_reduction <maximumf>, %308, %cst_114 [1] : vector<128x128xf32> to vector<128xf32>
    %310 = vector.shape_cast %309 : vector<128xf32> to vector<128x1xf32>
    %311 = vector.broadcast %310 : vector<128x1xf32> to vector<128x128xf32>
    %312 = arith.subf %308, %311 : vector<128x128xf32>
    %313 = math.exp %312 : vector<128x128xf32>
    %cst_115 = arith.constant dense<0.000000e+00> : vector<128xf32>
    %314 = vector.multi_reduction <add>, %313, %cst_115 [1] : vector<128x128xf32> to vector<128xf32>
    %315 = vector.shape_cast %314 : vector<128xf32> to vector<128x1xf32>
    %316 = tpu.reciprocal %315 {approx = true} : vector<128x1xf32> -> vector<128x1xf32>
    %317 = vector.broadcast %316 : vector<128x1xf32> to vector<128x128xf32>
    %318 = arith.mulf %313, %317 : vector<128x128xf32>
    %319 = arith.truncf %318 : vector<128x128xf32> to vector<128x128xbf16>
    %cst_116 = arith.constant dense<0.000000e+00> : vector<128x128xf32>
    %320 = tpu.matmul %319, %304, %cst_116 {dimension_numbers = #tpu.dot_dimension_numbers<[1], [0], [0], [1], [0, 0, 1, 1], [], []>} : vector<128x128xbf16>, vector<128x128xbf16>, vector<128x128xf32> -> vector<128x128xf32>
    %321 = arith.addf %298, %320 : vector<128x128xf32>
    %322 = vector.broadcast %32 : vector<1x128xf32> to vector<128x128xf32>
    %323 = arith.mulf %273, %322 : vector<128x128xf32>
    %324 = arith.truncf %323 : vector<128x128xf32> to vector<128x128xbf16>
    %325 = vector.broadcast %32 : vector<1x128xf32> to vector<128x128xf32>
    %326 = arith.mulf %274, %325 : vector<128x128xf32>
    %327 = arith.truncf %326 : vector<128x128xf32> to vector<128x128xbf16>
    %cst_117 = arith.constant dense<0.000000e+00> : vector<128x128xf32>
    %328 = tpu.matmul %272, %324, %cst_117 {dimension_numbers = #tpu.dot_dimension_numbers<[1], [1], [0], [0], [0, 0, 1, 0], [], []>} : vector<128x128xbf16>, vector<128x128xbf16>, vector<128x128xf32> -> vector<128x128xf32>
    %cst_118 = arith.constant 0.353553385 : f32
    %329 = vector.broadcast %cst_118 : f32 to vector<128x128xf32>
    %330 = arith.mulf %328, %329 : vector<128x128xf32>
    %331 = arith.addf %330, %40 : vector<128x128xf32>
    %cst_119 = arith.constant dense<0xFF800000> : vector<128xf32>
    %332 = vector.multi_reduction <maximumf>, %331, %cst_119 [1] : vector<128x128xf32> to vector<128xf32>
    %333 = vector.shape_cast %332 : vector<128xf32> to vector<128x1xf32>
    %334 = vector.broadcast %333 : vector<128x1xf32> to vector<128x128xf32>
    %335 = arith.subf %331, %334 : vector<128x128xf32>
    %336 = math.exp %335 : vector<128x128xf32>
    %cst_120 = arith.constant dense<0.000000e+00> : vector<128xf32>
    %337 = vector.multi_reduction <add>, %336, %cst_120 [1] : vector<128x128xf32> to vector<128xf32>
    %338 = vector.shape_cast %337 : vector<128xf32> to vector<128x1xf32>
    %339 = tpu.reciprocal %338 {approx = true} : vector<128x1xf32> -> vector<128x1xf32>
    %340 = vector.broadcast %339 : vector<128x1xf32> to vector<128x128xf32>
    %341 = arith.mulf %336, %340 : vector<128x128xf32>
    %342 = arith.truncf %341 : vector<128x128xf32> to vector<128x128xbf16>
    %cst_121 = arith.constant dense<0.000000e+00> : vector<128x128xf32>
    %343 = tpu.matmul %342, %327, %cst_121 {dimension_numbers = #tpu.dot_dimension_numbers<[1], [0], [0], [1], [0, 0, 1, 1], [], []>} : vector<128x128xbf16>, vector<128x128xbf16>, vector<128x128xf32> -> vector<128x128xf32>
    %344 = arith.addf %321, %343 : vector<128x128xf32>
    %345 = vector.broadcast %39 : vector<1x128xf32> to vector<128x128xf32>
    %346 = arith.mulf %273, %345 : vector<128x128xf32>
    %347 = arith.truncf %346 : vector<128x128xf32> to vector<128x128xbf16>
    %348 = vector.broadcast %39 : vector<1x128xf32> to vector<128x128xf32>
    %349 = arith.mulf %274, %348 : vector<128x128xf32>
    %350 = arith.truncf %349 : vector<128x128xf32> to vector<128x128xbf16>
    %cst_122 = arith.constant dense<0.000000e+00> : vector<128x128xf32>
    %351 = tpu.matmul %272, %347, %cst_122 {dimension_numbers = #tpu.dot_dimension_numbers<[1], [1], [0], [0], [0, 0, 1, 0], [], []>} : vector<128x128xbf16>, vector<128x128xbf16>, vector<128x128xf32> -> vector<128x128xf32>
    %cst_123 = arith.constant 0.353553385 : f32
    %352 = vector.broadcast %cst_123 : f32 to vector<128x128xf32>
    %353 = arith.mulf %351, %352 : vector<128x128xf32>
    %354 = arith.addf %353, %40 : vector<128x128xf32>
    %cst_124 = arith.constant dense<0xFF800000> : vector<128xf32>
    %355 = vector.multi_reduction <maximumf>, %354, %cst_124 [1] : vector<128x128xf32> to vector<128xf32>
    %356 = vector.shape_cast %355 : vector<128xf32> to vector<128x1xf32>
    %357 = vector.broadcast %356 : vector<128x1xf32> to vector<128x128xf32>
    %358 = arith.subf %354, %357 : vector<128x128xf32>
    %359 = math.exp %358 : vector<128x128xf32>
    %cst_125 = arith.constant dense<0.000000e+00> : vector<128xf32>
    %360 = vector.multi_reduction <add>, %359, %cst_125 [1] : vector<128x128xf32> to vector<128xf32>
    %361 = vector.shape_cast %360 : vector<128xf32> to vector<128x1xf32>
    %362 = tpu.reciprocal %361 {approx = true} : vector<128x1xf32> -> vector<128x1xf32>
    %363 = vector.broadcast %362 : vector<128x1xf32> to vector<128x128xf32>
    %364 = arith.mulf %359, %363 : vector<128x128xf32>
    %365 = arith.truncf %364 : vector<128x128xf32> to vector<128x128xbf16>
    %cst_126 = arith.constant dense<0.000000e+00> : vector<128x128xf32>
    %366 = tpu.matmul %365, %350, %cst_126 {dimension_numbers = #tpu.dot_dimension_numbers<[1], [0], [0], [1], [0, 0, 1, 1], [], []>} : vector<128x128xbf16>, vector<128x128xbf16>, vector<128x128xf32> -> vector<128x128xf32>
    %367 = arith.addf %344, %366 : vector<128x128xf32>
    %368 = arith.truncf %367 : vector<128x128xf32> to vector<128x128xbf16>
    %c1_127 = arith.constant 1 : index
    %c0_128 = arith.constant 0 : index
    %c0_129 = arith.constant 0 : index
    %369 = vector.load %arg11[%c1_127, %c0_128, %c0_129] : memref<2x128x32xbf16, #tpu.memory_space<vmem>>, vector<1x128x32xbf16>
    %370 = vector.shape_cast %369 : vector<1x128x32xbf16> to vector<128x32xbf16>
    %cst_130 = arith.constant dense<0.000000e+00> : vector<128x32xf32>
    %371 = tpu.matmul %368, %370, %cst_130 {dimension_numbers = #tpu.dot_dimension_numbers<[1], [0], [0], [1], [0, 0, 1, 1], [], []>} : vector<128x128xbf16>, vector<128x32xbf16>, vector<128x32xf32> -> vector<128x32xf32>
    %372 = arith.addf %236, %371 : vector<128x32xf32>
    %c1_131 = arith.constant 1 : index
    %c0_132 = arith.constant 0 : index
    %c0_133 = arith.constant 0 : index
    %373 = vector.load %arg12[%c1_131, %c0_132, %c0_133] : memref<2x1x32xf32, #tpu.memory_space<vmem>>, vector<1x1x32xf32>
    %374 = vector.shape_cast %373 : vector<1x1x32xf32> to vector<1x32xf32>
    %375 = vector.broadcast %374 : vector<1x32xf32> to vector<128x32xf32>
    %376 = arith.addf %372, %375 : vector<128x32xf32>
    %c1_134 = arith.constant 1 : index
    %c0_135 = arith.constant 0 : index
    %c0_136 = arith.constant 0 : index
    %377 = vector.load %arg13[%c1_134, %c0_135, %c0_136] : memref<2x1x32xf32, #tpu.memory_space<vmem>>, vector<1x1x32xf32>
    %378 = vector.shape_cast %377 : vector<1x1x32xf32> to vector<1x32xf32>
    %c1_137 = arith.constant 1 : index
    %c0_138 = arith.constant 0 : index
    %c0_139 = arith.constant 0 : index
    %379 = vector.load %arg14[%c1_137, %c0_138, %c0_139] : memref<2x1x32xf32, #tpu.memory_space<vmem>>, vector<1x1x32xf32>
    %380 = vector.shape_cast %379 : vector<1x1x32xf32> to vector<1x32xf32>
    %cst_140 = arith.constant dense<0.000000e+00> : vector<128xf32>
    %381 = vector.multi_reduction <add>, %376, %cst_140 [1] : vector<128x32xf32> to vector<128xf32>
    %382 = vector.shape_cast %381 : vector<128xf32> to vector<128x1xf32>
    %cst_141 = arith.constant 3.200000e+01 : f32
    %383 = vector.broadcast %cst_141 : f32 to vector<128x1xf32>
    %384 = arith.divf %382, %383 : vector<128x1xf32>
    %385 = vector.broadcast %384 : vector<128x1xf32> to vector<128x32xf32>
    %386 = arith.subf %376, %385 : vector<128x32xf32>
    %387 = arith.mulf %386, %386 : vector<128x32xf32>
    %cst_142 = arith.constant dense<0.000000e+00> : vector<128xf32>
    %388 = vector.multi_reduction <add>, %387, %cst_142 [1] : vector<128x32xf32> to vector<128xf32>
    %389 = vector.shape_cast %388 : vector<128xf32> to vector<128x1xf32>
    %cst_143 = arith.constant 3.200000e+01 : f32
    %390 = vector.broadcast %cst_143 : f32 to vector<128x1xf32>
    %391 = arith.divf %389, %390 : vector<128x1xf32>
    %392 = vector.broadcast %384 : vector<128x1xf32> to vector<128x32xf32>
    %393 = arith.subf %376, %392 : vector<128x32xf32>
    %cst_144 = arith.constant 9.99999974E-6 : f32
    %394 = vector.broadcast %cst_144 : f32 to vector<128x1xf32>
    %395 = arith.addf %391, %394 : vector<128x1xf32>
    %396 = math.rsqrt %395 : vector<128x1xf32>
    %397 = vector.broadcast %396 : vector<128x1xf32> to vector<128x32xf32>
    %398 = arith.mulf %393, %397 : vector<128x32xf32>
    %399 = vector.broadcast %378 : vector<1x32xf32> to vector<128x32xf32>
    %400 = arith.mulf %398, %399 : vector<128x32xf32>
    %401 = vector.broadcast %380 : vector<1x32xf32> to vector<128x32xf32>
    %402 = arith.addf %400, %401 : vector<128x32xf32>
    %403 = arith.truncf %402 : vector<128x32xf32> to vector<128x32xbf16>
    %c1_145 = arith.constant 1 : index
    %c0_146 = arith.constant 0 : index
    %c0_147 = arith.constant 0 : index
    %404 = vector.load %arg15[%c1_145, %c0_146, %c0_147] : memref<2x32x128xbf16, #tpu.memory_space<vmem>>, vector<1x32x128xbf16>
    %405 = vector.shape_cast %404 : vector<1x32x128xbf16> to vector<32x128xbf16>
    %cst_148 = arith.constant dense<0.000000e+00> : vector<128x128xf32>
    %406 = tpu.matmul %403, %405, %cst_148 {dimension_numbers = #tpu.dot_dimension_numbers<[1], [0], [0], [1], [0, 0, 1, 1], [], []>} : vector<128x32xbf16>, vector<32x128xbf16>, vector<128x128xf32> -> vector<128x128xf32>
    %c1_149 = arith.constant 1 : index
    %c0_150 = arith.constant 0 : index
    %c0_151 = arith.constant 0 : index
    %407 = vector.load %arg16[%c1_149, %c0_150, %c0_151] : memref<2x1x128xf32, #tpu.memory_space<vmem>>, vector<1x1x128xf32>
    %408 = vector.shape_cast %407 : vector<1x1x128xf32> to vector<1x128xf32>
    %409 = vector.broadcast %408 : vector<1x128xf32> to vector<128x128xf32>
    %410 = arith.addf %406, %409 : vector<128x128xf32>
    %411 = arith.mulf %410, %410 : vector<128x128xf32>
    %412 = arith.mulf %410, %411 : vector<128x128xf32>
    %cst_152 = arith.constant 4.471500e-02 : f32
    %413 = vector.broadcast %cst_152 : f32 to vector<128x128xf32>
    %414 = arith.mulf %413, %412 : vector<128x128xf32>
    %415 = arith.addf %410, %414 : vector<128x128xf32>
    %cst_153 = arith.constant 0.797884583 : f32
    %416 = vector.broadcast %cst_153 : f32 to vector<128x128xf32>
    %417 = arith.mulf %416, %415 : vector<128x128xf32>
    %418 = math.tanh %417 : vector<128x128xf32>
    %cst_154 = arith.constant 1.000000e+00 : f32
    %419 = vector.broadcast %cst_154 : f32 to vector<128x128xf32>
    %420 = arith.addf %419, %418 : vector<128x128xf32>
    %cst_155 = arith.constant 5.000000e-01 : f32
    %421 = vector.broadcast %cst_155 : f32 to vector<128x128xf32>
    %422 = arith.mulf %421, %420 : vector<128x128xf32>
    %423 = arith.mulf %410, %422 : vector<128x128xf32>
    %424 = arith.truncf %423 : vector<128x128xf32> to vector<128x128xbf16>
    %c1_156 = arith.constant 1 : index
    %c0_157 = arith.constant 0 : index
    %c0_158 = arith.constant 0 : index
    %425 = vector.load %arg17[%c1_156, %c0_157, %c0_158] : memref<2x128x32xbf16, #tpu.memory_space<vmem>>, vector<1x128x32xbf16>
    %426 = vector.shape_cast %425 : vector<1x128x32xbf16> to vector<128x32xbf16>
    %cst_159 = arith.constant dense<0.000000e+00> : vector<128x32xf32>
    %427 = tpu.matmul %424, %426, %cst_159 {dimension_numbers = #tpu.dot_dimension_numbers<[1], [0], [0], [1], [0, 0, 1, 1], [], []>} : vector<128x128xbf16>, vector<128x32xbf16>, vector<128x32xf32> -> vector<128x32xf32>
    %428 = arith.addf %376, %427 : vector<128x32xf32>
    %c1_160 = arith.constant 1 : index
    %c0_161 = arith.constant 0 : index
    %c0_162 = arith.constant 0 : index
    %429 = vector.load %arg18[%c1_160, %c0_161, %c0_162] : memref<2x1x32xf32, #tpu.memory_space<vmem>>, vector<1x1x32xf32>
    %430 = vector.shape_cast %429 : vector<1x1x32xf32> to vector<1x32xf32>
    %431 = vector.broadcast %430 : vector<1x32xf32> to vector<128x32xf32>
    %432 = arith.addf %428, %431 : vector<128x32xf32>
    %c0_163 = arith.constant 0 : index
    %c0_164 = arith.constant 0 : index
    %433 = vector.load %arg19[%c0_163, %c0_164] : memref<1x32xf32, #tpu.memory_space<vmem>>, vector<1x32xf32>
    %c0_165 = arith.constant 0 : index
    %c0_166 = arith.constant 0 : index
    %434 = vector.load %arg20[%c0_165, %c0_166] : memref<1x32xf32, #tpu.memory_space<vmem>>, vector<1x32xf32>
    %cst_167 = arith.constant dense<0.000000e+00> : vector<128xf32>
    %435 = vector.multi_reduction <add>, %432, %cst_167 [1] : vector<128x32xf32> to vector<128xf32>
    %436 = vector.shape_cast %435 : vector<128xf32> to vector<128x1xf32>
    %cst_168 = arith.constant 3.200000e+01 : f32
    %437 = vector.broadcast %cst_168 : f32 to vector<128x1xf32>
    %438 = arith.divf %436, %437 : vector<128x1xf32>
    %439 = vector.broadcast %438 : vector<128x1xf32> to vector<128x32xf32>
    %440 = arith.subf %432, %439 : vector<128x32xf32>
    %441 = arith.mulf %440, %440 : vector<128x32xf32>
    %cst_169 = arith.constant dense<0.000000e+00> : vector<128xf32>
    %442 = vector.multi_reduction <add>, %441, %cst_169 [1] : vector<128x32xf32> to vector<128xf32>
    %443 = vector.shape_cast %442 : vector<128xf32> to vector<128x1xf32>
    %cst_170 = arith.constant 3.200000e+01 : f32
    %444 = vector.broadcast %cst_170 : f32 to vector<128x1xf32>
    %445 = arith.divf %443, %444 : vector<128x1xf32>
    %446 = vector.broadcast %438 : vector<128x1xf32> to vector<128x32xf32>
    %447 = arith.subf %432, %446 : vector<128x32xf32>
    %cst_171 = arith.constant 9.99999974E-6 : f32
    %448 = vector.broadcast %cst_171 : f32 to vector<128x1xf32>
    %449 = arith.addf %445, %448 : vector<128x1xf32>
    %450 = math.rsqrt %449 : vector<128x1xf32>
    %451 = vector.broadcast %450 : vector<128x1xf32> to vector<128x32xf32>
    %452 = arith.mulf %447, %451 : vector<128x32xf32>
    %453 = vector.broadcast %433 : vector<1x32xf32> to vector<128x32xf32>
    %454 = arith.mulf %452, %453 : vector<128x32xf32>
    %455 = vector.broadcast %434 : vector<1x32xf32> to vector<128x32xf32>
    %456 = arith.addf %454, %455 : vector<128x32xf32>
    %457 = arith.truncf %456 : vector<128x32xf32> to vector<128x32xbf16>
    %c0_172 = arith.constant 0 : index
    %c0_173 = arith.constant 0 : index
    %458 = vector.load %arg21[%c0_172, %c0_173] : memref<32x128xbf16, #tpu.memory_space<vmem>>, vector<32x128xbf16>
    %cst_174 = arith.constant dense<0.000000e+00> : vector<128x128xf32>
    %459 = tpu.matmul %457, %458, %cst_174 {dimension_numbers = #tpu.dot_dimension_numbers<[1], [0], [0], [1], [0, 0, 1, 1], [], []>} : vector<128x32xbf16>, vector<32x128xbf16>, vector<128x128xf32> -> vector<128x128xf32>
    %c0_175 = arith.constant 0 : index
    %c0_176 = arith.constant 0 : index
    %460 = vector.load %arg22[%c0_175, %c0_176] : memref<1x128xf32, #tpu.memory_space<vmem>>, vector<1x128xf32>
    %461 = vector.broadcast %460 : vector<1x128xf32> to vector<128x128xf32>
    %462 = arith.addf %459, %461 : vector<128x128xf32>
    %c0_177 = arith.constant 0 : index
    %c0_178 = arith.constant 0 : index
    %463 = vector.load %arg23[%c0_177, %c0_178] : memref<128x128xf32, #tpu.memory_space<vmem>>, vector<128x128xf32>
    tpu.vector_store %arg23[%c0_177, %c0_178], %462 {strides = array<i32>} : memref<128x128xf32, #tpu.memory_space<vmem>>, vector<128x128xf32>,
    return
  }
  func.func @transform_0(%arg0: i32) -> (i32, i32) {
    %c0_i32 = arith.constant 0 : i32
    %c0_i32_0 = arith.constant 0 : i32
    return %arg0, %c0_i32 : i32, i32
  }
  func.func @transform_1(%arg0: i32) -> (i32, i32) {
    %c0_i32 = arith.constant 0 : i32
    %c0_i32_0 = arith.constant 0 : i32
    return %arg0, %c0_i32 : i32, i32
  }
  func.func @transform_2(%arg0: i32) -> (i32, i32) {
    %c0_i32 = arith.constant 0 : i32
    %c0_i32_0 = arith.constant 0 : i32
    %c0_i32_1 = arith.constant 0 : i32
    return %c0_i32, %c0_i32_0 : i32, i32
  }
  func.func @transform_3(%arg0: i32) -> (i32, i32) {
    %c0_i32 = arith.constant 0 : i32
    %c0_i32_0 = arith.constant 0 : i32
    %c0_i32_1 = arith.constant 0 : i32
    return %c0_i32, %c0_i32_0 : i32, i32
  }
  func.func @transform_4(%arg0: i32) -> (i32, i32) {
    %c0_i32 = arith.constant 0 : i32
    %c0_i32_0 = arith.constant 0 : i32
    %c0_i32_1 = arith.constant 0 : i32
    return %c0_i32, %c0_i32_0 : i32, i32
  }
  func.func @transform_5(%arg0: i32) -> (i32, i32) {
    %c0_i32 = arith.constant 0 : i32
    %c0_i32_0 = arith.constant 0 : i32
    %c0_i32_1 = arith.constant 0 : i32
    return %c0_i32, %c0_i32_0 : i32, i32
  }
  func.func @transform_6(%arg0: i32) -> (i32, i32, i32) {
    %c0_i32 = arith.constant 0 : i32
    %c0_i32_0 = arith.constant 0 : i32
    %c0_i32_1 = arith.constant 0 : i32
    %c0_i32_2 = arith.constant 0 : i32
    return %c0_i32, %c0_i32_0, %c0_i32_1 : i32, i32, i32
  }
  func.func @transform_7(%arg0: i32) -> (i32, i32, i32) {
    %c0_i32 = arith.constant 0 : i32
    %c0_i32_0 = arith.constant 0 : i32
    %c0_i32_1 = arith.constant 0 : i32
    %c0_i32_2 = arith.constant 0 : i32
    return %c0_i32, %c0_i32_0, %c0_i32_1 : i32, i32, i32
  }
  func.func @transform_8(%arg0: i32) -> (i32, i32, i32) {
    %c0_i32 = arith.constant 0 : i32
    %c0_i32_0 = arith.constant 0 : i32
    %c0_i32_1 = arith.constant 0 : i32
    %c0_i32_2 = arith.constant 0 : i32
    return %c0_i32, %c0_i32_0, %c0_i32_1 : i32, i32, i32
  }
  func.func @transform_9(%arg0: i32) -> (i32, i32, i32) {
    %c0_i32 = arith.constant 0 : i32
    %c0_i32_0 = arith.constant 0 : i32
    %c0_i32_1 = arith.constant 0 : i32
    %c0_i32_2 = arith.constant 0 : i32
    return %c0_i32, %c0_i32_0, %c0_i32_1 : i32, i32, i32
  }
  func.func @transform_10(%arg0: i32) -> (i32, i32, i32) {
    %c0_i32 = arith.constant 0 : i32
    %c0_i32_0 = arith.constant 0 : i32
    %c0_i32_1 = arith.constant 0 : i32
    %c0_i32_2 = arith.constant 0 : i32
    return %c0_i32, %c0_i32_0, %c0_i32_1 : i32, i32, i32
  }
  func.func @transform_11(%arg0: i32) -> (i32, i32, i32) {
    %c0_i32 = arith.constant 0 : i32
    %c0_i32_0 = arith.constant 0 : i32
    %c0_i32_1 = arith.constant 0 : i32
    %c0_i32_2 = arith.constant 0 : i32
    return %c0_i32, %c0_i32_0, %c0_i32_1 : i32, i32, i32
  }
  func.func @transform_12(%arg0: i32) -> (i32, i32, i32) {
    %c0_i32 = arith.constant 0 : i32
    %c0_i32_0 = arith.constant 0 : i32
    %c0_i32_1 = arith.constant 0 : i32
    %c0_i32_2 = arith.constant 0 : i32
    return %c0_i32, %c0_i32_0, %c0_i32_1 : i32, i32, i32
  }
  func.func @transform_13(%arg0: i32) -> (i32, i32, i32) {
    %c0_i32 = arith.constant 0 : i32
    %c0_i32_0 = arith.constant 0 : i32
    %c0_i32_1 = arith.constant 0 : i32
    %c0_i32_2 = arith.constant 0 : i32
    return %c0_i32, %c0_i32_0, %c0_i32_1 : i32, i32, i32
  }
  func.func @transform_14(%arg0: i32) -> (i32, i32, i32) {
    %c0_i32 = arith.constant 0 : i32
    %c0_i32_0 = arith.constant 0 : i32
    %c0_i32_1 = arith.constant 0 : i32
    %c0_i32_2 = arith.constant 0 : i32
    return %c0_i32, %c0_i32_0, %c0_i32_1 : i32, i32, i32
  }
  func.func @transform_15(%arg0: i32) -> (i32, i32, i32) {
    %c0_i32 = arith.constant 0 : i32
    %c0_i32_0 = arith.constant 0 : i32
    %c0_i32_1 = arith.constant 0 : i32
    %c0_i32_2 = arith.constant 0 : i32
    return %c0_i32, %c0_i32_0, %c0_i32_1 : i32, i32, i32
  }
  func.func @transform_16(%arg0: i32) -> (i32, i32, i32) {
    %c0_i32 = arith.constant 0 : i32
    %c0_i32_0 = arith.constant 0 : i32
    %c0_i32_1 = arith.constant 0 : i32
    %c0_i32_2 = arith.constant 0 : i32
    return %c0_i32, %c0_i32_0, %c0_i32_1 : i32, i32, i32
  }
  func.func @transform_17(%arg0: i32) -> (i32, i32, i32) {
    %c0_i32 = arith.constant 0 : i32
    %c0_i32_0 = arith.constant 0 : i32
    %c0_i32_1 = arith.constant 0 : i32
    %c0_i32_2 = arith.constant 0 : i32
    return %c0_i32, %c0_i32_0, %c0_i32_1 : i32, i32, i32
  }
  func.func @transform_18(%arg0: i32) -> (i32, i32) {
    %c0_i32 = arith.constant 0 : i32
    %c0_i32_0 = arith.constant 0 : i32
    %c0_i32_1 = arith.constant 0 : i32
    return %c0_i32, %c0_i32_0 : i32, i32
  }
  func.func @transform_19(%arg0: i32) -> (i32, i32) {
    %c0_i32 = arith.constant 0 : i32
    %c0_i32_0 = arith.constant 0 : i32
    %c0_i32_1 = arith.constant 0 : i32
    return %c0_i32, %c0_i32_0 : i32, i32
  }
  func.func @transform_20(%arg0: i32) -> (i32, i32) {
    %c0_i32 = arith.constant 0 : i32
    %c0_i32_0 = arith.constant 0 : i32
    %c0_i32_1 = arith.constant 0 : i32
    return %c0_i32, %c0_i32_0 : i32, i32
  }
  func.func @transform_21(%arg0: i32) -> (i32, i32) {
    %c0_i32 = arith.constant 0 : i32
    %c0_i32_0 = arith.constant 0 : i32
    %c0_i32_1 = arith.constant 0 : i32
    return %c0_i32, %c0_i32_0 : i32, i32
  }
  func.func @transform_22(%arg0: i32) -> (i32, i32) {
    %c0_i32 = arith.constant 0 : i32
    %c0_i32_0 = arith.constant 0 : i32
    return %arg0, %c0_i32 : i32, i32
  }
}

</mosaic_0001>

<llo_original>
// kernel: tpu_custom_call.1
$region0: #{tpu_custom_call.1}
  #allocation0 [shape = 'u32[]', space=smem, size = 0x4, offset = 0x4, fixed_abs, tag = 'smem constant byte address 0x4 - core index']
  #allocation1 [shape = 'u32[72,128]{1,0:T(1,128)}', space=vmem, size = 0x9000, scoped, tag = 'internal scratch']
  %s0 = inlined_call_operand.vmem [shape: f32[256,16], index: 0, kind: input, shape index: {}]
  %s1 = inlined_call_operand.vmem [shape: bf16[256,16], index: 1, kind: input, shape index: {}]
  %s2 = inlined_call_operand.vmem [shape: f32[128,128], index: 2, kind: input, shape index: {}]
  %s3 = inlined_call_operand.vmem [shape: bf16[16,16], index: 3, kind: input, shape index: {}]
  %s4 = inlined_call_operand.vmem [shape: f32[1,16], index: 4, kind: input, shape index: {}]
  %s5 = inlined_call_operand.vmem [shape: f32[128,32], index: 5, kind: input, shape index: {}]
  %s6 = inlined_call_operand.vmem [shape: f32[2,1,32], index: 6, kind: input, shape index: {}]
  %s7 = inlined_call_operand.vmem [shape: f32[2,1,32], index: 7, kind: input, shape index: {}]
  %s8 = inlined_call_operand.vmem [shape: bf16[2,32,384], index: 8, kind: input, shape index: {}]
  %s9 = inlined_call_operand.vmem [shape: f32[2,1,384], index: 9, kind: input, shape index: {}]
  %s10 = inlined_call_operand.vmem [shape: bf16[2,128,32], index: 10, kind: input, shape index: {}]
  %s11 = inlined_call_operand.vmem [shape: f32[2,1,32], index: 11, kind: input, shape index: {}]
  %s12 = inlined_call_operand.vmem [shape: f32[2,1,32], index: 12, kind: input, shape index: {}]
  %s13 = inlined_call_operand.vmem [shape: f32[2,1,32], index: 13, kind: input, shape index: {}]
  %s14 = inlined_call_operand.vmem [shape: bf16[2,32,128], index: 14, kind: input, shape index: {}]
  %s15 = inlined_call_operand.vmem [shape: f32[2,1,128], index: 15, kind: input, shape index: {}]
  %s16 = inlined_call_operand.vmem [shape: bf16[2,128,32], index: 16, kind: input, shape index: {}]
  %s17 = inlined_call_operand.vmem [shape: f32[2,1,32], index: 17, kind: input, shape index: {}]
  %s18 = inlined_call_operand.vmem [shape: f32[1,32], index: 18, kind: input, shape index: {}]
  %s19 = inlined_call_operand.vmem [shape: f32[1,32], index: 19, kind: input, shape index: {}]
  %s20 = inlined_call_operand.vmem [shape: bf16[32,128], index: 20, kind: input, shape index: {}]
  %s21 = inlined_call_operand.vmem [shape: f32[1,128], index: 21, kind: input, shape index: {}]
  %s22 = inlined_call_operand.hbm [shape: f32[256,128], index: 22, kind: output, shape index: {}]
  %s23 = sld [smem:[#allocation0]]
  $region121: #{tpu_custom_call.1} parent=0
    _
  %s25 = ssub.s32 1, %s23
  %s26 = scalar_select 0, %s25, %s23
  $region1: #{tpu_custom_call.1} parent=0
    #allocation2 [shape = 'u8[131072]{0}', space=vmem, size = 0x20000, scoped, tag = 'output window, operand 0']
    #allocation3 [shape = 's32[2]{0}', space=sflag, size = 0x8, scoped, tag = 'scoped memory for tpu_custom_call.1']
    %27 = vsyncpa [#allocation3], 0
    %s28 = scalar_lea.sflag [#allocation3], 1
    %29 = vsyncpa %s28, 0
    loop: start=0, step=1, limit=4
    $region2: #{tpu_custom_call.1} parent=1 // loop_pre_header
      _
    $region3: #{tpu_custom_call.1} parent=1 // loop_header
      %s31 = sphi 0, %s35
      %p32 = scmp.ge.s32.totalorder %s31, 4
      %s41 = sphi 0, %s43
      %s44 = sphi 0, %s41
      %s45 = sphi 0, %s44
      %s61 = sphi 0, %s45
      %s67 = sphi 0, %s69
      %s70 = sphi 0, %s67
      %s71 = sphi 0, %s70
      %s87 = sphi 0, %s71
      %s91 = sphi 0, %s91
      %s93 = sphi 0, %s91
      %s94 = sphi 0, %s93
      %s108 = sphi 0, %s94
      %s112 = sphi 0, %s112
      %s114 = sphi 0, %s112
      %s115 = sphi 0, %s114
      %s129 = sphi 0, %s115
      %s133 = sphi 0, %s133
      %s135 = sphi 0, %s133
      %s136 = sphi 0, %s135
      %s150 = sphi 0, %s136
      %s154 = sphi 0, %s154
      %s156 = sphi 0, %s154
      %s157 = sphi 0, %s156
      %s171 = sphi 0, %s157
      %s175 = sphi 0, %s175
      %s177 = sphi 0, %s175
      %s178 = sphi 0, %s177
      %s192 = sphi 0, %s178
      %s196 = sphi 0, %s196
      %s198 = sphi 0, %s196
      %s199 = sphi 0, %s198
      %s213 = sphi 0, %s199
      %s217 = sphi 0, %s217
      %s219 = sphi 0, %s217
      %s220 = sphi 0, %s219
      %s234 = sphi 0, %s220
      %s238 = sphi 0, %s238
      %s240 = sphi 0, %s238
      %s241 = sphi 0, %s240
      %s255 = sphi 0, %s241
      %s259 = sphi 0, %s259
      %s261 = sphi 0, %s259
      %s262 = sphi 0, %s261
      %s276 = sphi 0, %s262
      %s280 = sphi 0, %s280
      %s282 = sphi 0, %s280
      %s283 = sphi 0, %s282
      %s297 = sphi 0, %s283
      %s301 = sphi 0, %s301
      %s303 = sphi 0, %s301
      %s304 = sphi 0, %s303
      %s318 = sphi 0, %s304
      %s322 = sphi 0, %s322
      %s324 = sphi 0, %s322
      %s325 = sphi 0, %s324
      %s339 = sphi 0, %s325
      %s343 = sphi 0, %s343
      %s345 = sphi 0, %s343
      %s346 = sphi 0, %s345
      %s360 = sphi 0, %s346
      %s364 = sphi 0, %s364
      %s366 = sphi 0, %s364
      %s367 = sphi 0, %s366
      %s381 = sphi 0, %s367
      %s385 = sphi 0, %s385
      %s387 = sphi 0, %s385
      %s388 = sphi 0, %s387
      %s402 = sphi 0, %s388
      %s406 = sphi 0, %s406
      %s408 = sphi 0, %s406
      %s409 = sphi 0, %s408
      %s423 = sphi 0, %s409
      %s427 = sphi 0, %s427
      %s429 = sphi 0, %s427
      %s430 = sphi 0, %s429
      %s444 = sphi 0, %s430
      %s448 = sphi 0, %s448
      %s450 = sphi 0, %s448
      %s451 = sphi 0, %s450
      %s465 = sphi 0, %s451
      %s469 = sphi 0, %s469
      %s471 = sphi 0, %s469
      %s472 = sphi 0, %s471
      %s486 = sphi 0, %s472
      %s490 = sphi 0, %s490
      %s492 = sphi 0, %s490
      %s493 = sphi 0, %s492
      %s507 = sphi 0, %s493
      %s513 = sphi 0, %s515
      %s516 = sphi 0, %s513
      %s517 = sphi 0, %s516
      %s533 = sphi 0, %s517
    $region4: #{tpu_custom_call.1} parent=1 // loop_header_branch
      %34 = sbr.rel (%p32) target = $region8
    $region5: #{tpu_custom_call.1} parent=1 // loop_body
      %s36 = ssub.s32 %s31, 1
      %s37 = ssub.s32 %s31, 2
      %s38 = sadd.s32 %s31, 1
      %s39 = ssub.s32 %s31, %s38
      %p40 = scmp.eq.s32.totalorder %s39, 0
      %s42 = sadd.s32 %s41, 1
      %s43 = scalar_select %p40, %s41, %s42
      %p46 = pneg %p40
      %p47 = scmp.eq.s32.totalorder %s31, 1
      %p48 = por %p46, %p47
      %p49 = scmp.ne.s32.totalorder %s41, %s44
      %p50 = scmp.eq.s32.totalorder %s31, 0
      %p51 = por %p49, %p50
      %p52 = scmp.ne.s32.totalorder %s41, %s44
      %p53 = scmp.eq.s32.totalorder %s36, 1
      %p54 = por %p52, %p53
      %p55 = scmp.ne.s32.totalorder %s44, %s45
      %p56 = scmp.eq.s32.totalorder %s36, 0
      %p57 = por %p55, %p56
      %p58 = scmp.ne.s32.totalorder %s44, %s45
      %p59 = scmp.eq.s32.totalorder %s37, 1
      %p60 = por %p58, %p59
      %p62 = scmp.ne.s32.totalorder %s45, %s61
      %p63 = scmp.eq.s32.totalorder %s37, 0
      %p64 = por %p62, %p63
      %s65 = ssub.s32 %s31, %s38
      %p66 = scmp.eq.s32.totalorder %s65, 0
      %s68 = sadd.s32 %s67, 1
      %s69 = scalar_select %p66, %s67, %s68
      %p72 = pneg %p66
      %p73 = scmp.eq.s32.totalorder %s31, 1
      %p74 = por %p72, %p73
      %p75 = scmp.ne.s32.totalorder %s67, %s70
      %p76 = scmp.eq.s32.totalorder %s31, 0
      %p77 = por %p75, %p76
      %p78 = scmp.ne.s32.totalorder %s67, %s70
      %p79 = scmp.eq.s32.totalorder %s36, 1
      %p80 = por %p78, %p79
      %p81 = scmp.ne.s32.totalorder %s70, %s71
      %p82 = scmp.eq.s32.totalorder %s36, 0
      %p83 = por %p81, %p82
      %p84 = scmp.ne.s32.totalorder %s70, %s71
      %p85 = scmp.eq.s32.totalorder %s37, 1
      %p86 = por %p84, %p85
      %p88 = scmp.ne.s32.totalorder %s71, %s87
      %p89 = scmp.eq.s32.totalorder %s37, 0
      %p90 = por %p88, %p89
      %s92 = sadd.s32 %s91, 1
      %p95 = scmp.eq.s32.totalorder %s31, 1
      %p96 = scmp.ne.s32.totalorder %s91, %s93
      %p97 = scmp.eq.s32.totalorder %s31, 0
      %p98 = por %p96, %p97
      %p99 = scmp.ne.s32.totalorder %s91, %s93
      %p100 = scmp.eq.s32.totalorder %s36, 1
      %p101 = por %p99, %p100
      %p102 = scmp.ne.s32.totalorder %s93, %s94
      %p103 = scmp.eq.s32.totalorder %s36, 0
      %p104 = por %p102, %p103
      %p105 = scmp.ne.s32.totalorder %s93, %s94
      %p106 = scmp.eq.s32.totalorder %s37, 1
      %p107 = por %p105, %p106
      %p109 = scmp.ne.s32.totalorder %s94, %s108
      %p110 = scmp.eq.s32.totalorder %s37, 0
      %p111 = por %p109, %p110
      %s113 = sadd.s32 %s112, 1
      %p116 = scmp.eq.s32.totalorder %s31, 1
      %p117 = scmp.ne.s32.totalorder %s112, %s114
      %p118 = scmp.eq.s32.totalorder %s31, 0
      %p119 = por %p117, %p118
      %p120 = scmp.ne.s32.totalorder %s112, %s114
      %p121 = scmp.eq.s32.totalorder %s36, 1
      %p122 = por %p120, %p121
      %p123 = scmp.ne.s32.totalorder %s114, %s115
      %p124 = scmp.eq.s32.totalorder %s36, 0
      %p125 = por %p123, %p124
      %p126 = scmp.ne.s32.totalorder %s114, %s115
      %p127 = scmp.eq.s32.totalorder %s37, 1
      %p128 = por %p126, %p127
      %p130 = scmp.ne.s32.totalorder %s115, %s129
      %p131 = scmp.eq.s32.totalorder %s37, 0
      %p132 = por %p130, %p131
      %s134 = sadd.s32 %s133, 1
      %p137 = scmp.eq.s32.totalorder %s31, 1
      %p138 = scmp.ne.s32.totalorder %s133, %s135
      %p139 = scmp.eq.s32.totalorder %s31, 0
      %p140 = por %p138, %p139
      %p141 = scmp.ne.s32.totalorder %s133, %s135
      %p142 = scmp.eq.s32.totalorder %s36, 1
      %p143 = por %p141, %p142
      %p144 = scmp.ne.s32.totalorder %s135, %s136
      %p145 = scmp.eq.s32.totalorder %s36, 0
      %p146 = por %p144, %p145
      %p147 = scmp.ne.s32.totalorder %s135, %s136
      %p148 = scmp.eq.s32.totalorder %s37, 1
      %p149 = por %p147, %p148
      %p151 = scmp.ne.s32.totalorder %s136, %s150
      %p152 = scmp.eq.s32.totalorder %s37, 0
      %p153 = por %p151, %p152
      %s155 = sadd.s32 %s154, 1
      %p158 = scmp.eq.s32.totalorder %s31, 1
      %p159 = scmp.ne.s32.totalorder %s154, %s156
      %p160 = scmp.eq.s32.totalorder %s31, 0
      %p161 = por %p159, %p160
      %p162 = scmp.ne.s32.totalorder %s154, %s156
      %p163 = scmp.eq.s32.totalorder %s36, 1
      %p164 = por %p162, %p163
      %p165 = scmp.ne.s32.totalorder %s156, %s157
      %p166 = scmp.eq.s32.totalorder %s36, 0
      %p167 = por %p165, %p166
      %p168 = scmp.ne.s32.totalorder %s156, %s157
      %p169 = scmp.eq.s32.totalorder %s37, 1
      %p170 = por %p168, %p169
      %p172 = scmp.ne.s32.totalorder %s157, %s171
      %p173 = scmp.eq.s32.totalorder %s37, 0
      %p174 = por %p172, %p173
      %s176 = sadd.s32 %s175, 1
      %p179 = scmp.eq.s32.totalorder %s31, 1
      %p180 = scmp.ne.s32.totalorder %s175, %s177
      %p181 = scmp.eq.s32.totalorder %s31, 0
      %p182 = por %p180, %p181
      %p183 = scmp.ne.s32.totalorder %s175, %s177
      %p184 = scmp.eq.s32.totalorder %s36, 1
      %p185 = por %p183, %p184
      %p186 = scmp.ne.s32.totalorder %s177, %s178
      %p187 = scmp.eq.s32.totalorder %s36, 0
      %p188 = por %p186, %p187
      %p189 = scmp.ne.s32.totalorder %s177, %s178
      %p190 = scmp.eq.s32.totalorder %s37, 1
      %p191 = por %p189, %p190
      %p193 = scmp.ne.s32.totalorder %s178, %s192
      %p194 = scmp.eq.s32.totalorder %s37, 0
      %p195 = por %p193, %p194
      %s197 = sadd.s32 %s196, 1
      %p200 = scmp.eq.s32.totalorder %s31, 1
      %p201 = scmp.ne.s32.totalorder %s196, %s198
      %p202 = scmp.eq.s32.totalorder %s31, 0
      %p203 = por %p201, %p202
      %p204 = scmp.ne.s32.totalorder %s196, %s198
      %p205 = scmp.eq.s32.totalorder %s36, 1
      %p206 = por %p204, %p205
      %p207 = scmp.ne.s32.totalorder %s198, %s199
      %p208 = scmp.eq.s32.totalorder %s36, 0
      %p209 = por %p207, %p208
      %p210 = scmp.ne.s32.totalorder %s198, %s199
      %p211 = scmp.eq.s32.totalorder %s37, 1
      %p212 = por %p210, %p211
      %p214 = scmp.ne.s32.totalorder %s199, %s213
      %p215 = scmp.eq.s32.totalorder %s37, 0
      %p216 = por %p214, %p215
      %s218 = sadd.s32 %s217, 1
      %p221 = scmp.eq.s32.totalorder %s31, 1
      %p222 = scmp.ne.s32.totalorder %s217, %s219
      %p223 = scmp.eq.s32.totalorder %s31, 0
      %p224 = por %p222, %p223
      %p225 = scmp.ne.s32.totalorder %s217, %s219
      %p226 = scmp.eq.s32.totalorder %s36, 1
      %p227 = por %p225, %p226
      %p228 = scmp.ne.s32.totalorder %s219, %s220
      %p229 = scmp.eq.s32.totalorder %s36, 0
      %p230 = por %p228, %p229
      %p231 = scmp.ne.s32.totalorder %s219, %s220
      %p232 = scmp.eq.s32.totalorder %s37, 1
      %p233 = por %p231, %p232
      %p235 = scmp.ne.s32.totalorder %s220, %s234
      %p236 = scmp.eq.s32.totalorder %s37, 0
      %p237 = por %p235, %p236
      %s239 = sadd.s32 %s238, 1
      %p242 = scmp.eq.s32.totalorder %s31, 1
      %p243 = scmp.ne.s32.totalorder %s238, %s240
      %p244 = scmp.eq.s32.totalorder %s31, 0
      %p245 = por %p243, %p244
      %p246 = scmp.ne.s32.totalorder %s238, %s240
      %p247 = scmp.eq.s32.totalorder %s36, 1
      %p248 = por %p246, %p247
      %p249 = scmp.ne.s32.totalorder %s240, %s241
      %p250 = scmp.eq.s32.totalorder %s36, 0
      %p251 = por %p249, %p250
      %p252 = scmp.ne.s32.totalorder %s240, %s241
      %p253 = scmp.eq.s32.totalorder %s37, 1
      %p254 = por %p252, %p253
      %p256 = scmp.ne.s32.totalorder %s241, %s255
      %p257 = scmp.eq.s32.totalorder %s37, 0
      %p258 = por %p256, %p257
      %s260 = sadd.s32 %s259, 1
      %p263 = scmp.eq.s32.totalorder %s31, 1
      %p264 = scmp.ne.s32.totalorder %s259, %s261
      %p265 = scmp.eq.s32.totalorder %s31, 0
      %p266 = por %p264, %p265
      %p267 = scmp.ne.s32.totalorder %s259, %s261
      %p268 = scmp.eq.s32.totalorder %s36, 1
      %p269 = por %p267, %p268
      %p270 = scmp.ne.s32.totalorder %s261, %s262
      %p271 = scmp.eq.s32.totalorder %s36, 0
      %p272 = por %p270, %p271
      %p273 = scmp.ne.s32.totalorder %s261, %s262
      %p274 = scmp.eq.s32.totalorder %s37, 1
      %p275 = por %p273, %p274
      %p277 = scmp.ne.s32.totalorder %s262, %s276
      %p278 = scmp.eq.s32.totalorder %s37, 0
      %p279 = por %p277, %p278
      %s281 = sadd.s32 %s280, 1
      %p284 = scmp.eq.s32.totalorder %s31, 1
      %p285 = scmp.ne.s32.totalorder %s280, %s282
      %p286 = scmp.eq.s32.totalorder %s31, 0
      %p287 = por %p285, %p286
      %p288 = scmp.ne.s32.totalorder %s280, %s282
      %p289 = scmp.eq.s32.totalorder %s36, 1
      %p290 = por %p288, %p289
      %p291 = scmp.ne.s32.totalorder %s282, %s283
      %p292 = scmp.eq.s32.totalorder %s36, 0
      %p293 = por %p291, %p292
      %p294 = scmp.ne.s32.totalorder %s282, %s283
      %p295 = scmp.eq.s32.totalorder %s37, 1
      %p296 = por %p294, %p295
      %p298 = scmp.ne.s32.totalorder %s283, %s297
      %p299 = scmp.eq.s32.totalorder %s37, 0
      %p300 = por %p298, %p299
      %s302 = sadd.s32 %s301, 1
      %p305 = scmp.eq.s32.totalorder %s31, 1
      %p306 = scmp.ne.s32.totalorder %s301, %s303
      %p307 = scmp.eq.s32.totalorder %s31, 0
      %p308 = por %p306, %p307
      %p309 = scmp.ne.s32.totalorder %s301, %s303
      %p310 = scmp.eq.s32.totalorder %s36, 1
      %p311 = por %p309, %p310
      %p312 = scmp.ne.s32.totalorder %s303, %s304
      %p313 = scmp.eq.s32.totalorder %s36, 0
      %p314 = por %p312, %p313
      %p315 = scmp.ne.s32.totalorder %s303, %s304
      %p316 = scmp.eq.s32.totalorder %s37, 1
      %p317 = por %p315, %p316
      %p319 = scmp.ne.s32.totalorder %s304, %s318
      %p320 = scmp.eq.s32.totalorder %s37, 0
      %p321 = por %p319, %p320
      %s323 = sadd.s32 %s322, 1
      %p326 = scmp.eq.s32.totalorder %s31, 1
      %p327 = scmp.ne.s32.totalorder %s322, %s324
      %p328 = scmp.eq.s32.totalorder %s31, 0
      %p329 = por %p327, %p328
      %p330 = scmp.ne.s32.totalorder %s322, %s324
      %p331 = scmp.eq.s32.totalorder %s36, 1
      %p332 = por %p330, %p331
      %p333 = scmp.ne.s32.totalorder %s324, %s325
      %p334 = scmp.eq.s32.totalorder %s36, 0
      %p335 = por %p333, %p334
      %p336 = scmp.ne.s32.totalorder %s324, %s325
      %p337 = scmp.eq.s32.totalorder %s37, 1
      %p338 = por %p336, %p337
      %p340 = scmp.ne.s32.totalorder %s325, %s339
      %p341 = scmp.eq.s32.totalorder %s37, 0
      %p342 = por %p340, %p341
      %s344 = sadd.s32 %s343, 1
      %p347 = scmp.eq.s32.totalorder %s31, 1
      %p348 = scmp.ne.s32.totalorder %s343, %s345
      %p349 = scmp.eq.s32.totalorder %s31, 0
      %p350 = por %p348, %p349
      %p351 = scmp.ne.s32.totalorder %s343, %s345
      %p352 = scmp.eq.s32.totalorder %s36, 1
      %p353 = por %p351, %p352
      %p354 = scmp.ne.s32.totalorder %s345, %s346
      %p355 = scmp.eq.s32.totalorder %s36, 0
      %p356 = por %p354, %p355
      %p357 = scmp.ne.s32.totalorder %s345, %s346
      %p358 = scmp.eq.s32.totalorder %s37, 1
      %p359 = por %p357, %p358
      %p361 = scmp.ne.s32.totalorder %s346, %s360
      %p362 = scmp.eq.s32.totalorder %s37, 0
      %p363 = por %p361, %p362
      %s365 = sadd.s32 %s364, 1
      %p368 = scmp.eq.s32.totalorder %s31, 1
      %p369 = scmp.ne.s32.totalorder %s364, %s366
      %p370 = scmp.eq.s32.totalorder %s31, 0
      %p371 = por %p369, %p370
      %p372 = scmp.ne.s32.totalorder %s364, %s366
      %p373 = scmp.eq.s32.totalorder %s36, 1
      %p374 = por %p372, %p373
      %p375 = scmp.ne.s32.totalorder %s366, %s367
      %p376 = scmp.eq.s32.totalorder %s36, 0
      %p377 = por %p375, %p376
      %p378 = scmp.ne.s32.totalorder %s366, %s367
      %p379 = scmp.eq.s32.totalorder %s37, 1
      %p380 = por %p378, %p379
      %p382 = scmp.ne.s32.totalorder %s367, %s381
      %p383 = scmp.eq.s32.totalorder %s37, 0
      %p384 = por %p382, %p383
      %s386 = sadd.s32 %s385, 1
      %p389 = scmp.eq.s32.totalorder %s31, 1
      %p390 = scmp.ne.s32.totalorder %s385, %s387
      %p391 = scmp.eq.s32.totalorder %s31, 0
      %p392 = por %p390, %p391
      %p393 = scmp.ne.s32.totalorder %s385, %s387
      %p394 = scmp.eq.s32.totalorder %s36, 1
      %p395 = por %p393, %p394
      %p396 = scmp.ne.s32.totalorder %s387, %s388
      %p397 = scmp.eq.s32.totalorder %s36, 0
      %p398 = por %p396, %p397
      %p399 = scmp.ne.s32.totalorder %s387, %s388
      %p400 = scmp.eq.s32.totalorder %s37, 1
      %p401 = por %p399, %p400
      %p403 = scmp.ne.s32.totalorder %s388, %s402
      %p404 = scmp.eq.s32.totalorder %s37, 0
      %p405 = por %p403, %p404
      %s407 = sadd.s32 %s406, 1
      %p410 = scmp.eq.s32.totalorder %s31, 1
      %p411 = scmp.ne.s32.totalorder %s406, %s408
      %p412 = scmp.eq.s32.totalorder %s31, 0
      %p413 = por %p411, %p412
      %p414 = scmp.ne.s32.totalorder %s406, %s408
      %p415 = scmp.eq.s32.totalorder %s36, 1
      %p416 = por %p414, %p415
      %p417 = scmp.ne.s32.totalorder %s408, %s409
      %p418 = scmp.eq.s32.totalorder %s36, 0
      %p419 = por %p417, %p418
      %p420 = scmp.ne.s32.totalorder %s408, %s409
      %p421 = scmp.eq.s32.totalorder %s37, 1
      %p422 = por %p420, %p421
      %p424 = scmp.ne.s32.totalorder %s409, %s423
      %p425 = scmp.eq.s32.totalorder %s37, 0
      %p426 = por %p424, %p425
      %s428 = sadd.s32 %s427, 1
      %p431 = scmp.eq.s32.totalorder %s31, 1
      %p432 = scmp.ne.s32.totalorder %s427, %s429
      %p433 = scmp.eq.s32.totalorder %s31, 0
      %p434 = por %p432, %p433
      %p435 = scmp.ne.s32.totalorder %s427, %s429
      %p436 = scmp.eq.s32.totalorder %s36, 1
      %p437 = por %p435, %p436
      %p438 = scmp.ne.s32.totalorder %s429, %s430
      %p439 = scmp.eq.s32.totalorder %s36, 0
      %p440 = por %p438, %p439
      %p441 = scmp.ne.s32.totalorder %s429, %s430
      %p442 = scmp.eq.s32.totalorder %s37, 1
      %p443 = por %p441, %p442
      %p445 = scmp.ne.s32.totalorder %s430, %s444
      %p446 = scmp.eq.s32.totalorder %s37, 0
      %p447 = por %p445, %p446
      %s449 = sadd.s32 %s448, 1
      %p452 = scmp.eq.s32.totalorder %s31, 1
      %p453 = scmp.ne.s32.totalorder %s448, %s450
      %p454 = scmp.eq.s32.totalorder %s31, 0
      %p455 = por %p453, %p454
      %p456 = scmp.ne.s32.totalorder %s448, %s450
      %p457 = scmp.eq.s32.totalorder %s36, 1
      %p458 = por %p456, %p457
      %p459 = scmp.ne.s32.totalorder %s450, %s451
      %p460 = scmp.eq.s32.totalorder %s36, 0
      %p461 = por %p459, %p460
      %p462 = scmp.ne.s32.totalorder %s450, %s451
      %p463 = scmp.eq.s32.totalorder %s37, 1
      %p464 = por %p462, %p463
      %p466 = scmp.ne.s32.totalorder %s451, %s465
      %p467 = scmp.eq.s32.totalorder %s37, 0
      %p468 = por %p466, %p467
      %s470 = sadd.s32 %s469, 1
      %p473 = scmp.eq.s32.totalorder %s31, 1
      %p474 = scmp.ne.s32.totalorder %s469, %s471
      %p475 = scmp.eq.s32.totalorder %s31, 0
      %p476 = por %p474, %p475
      %p477 = scmp.ne.s32.totalorder %s469, %s471
      %p478 = scmp.eq.s32.totalorder %s36, 1
      %p479 = por %p477, %p478
      %p480 = scmp.ne.s32.totalorder %s471, %s472
      %p481 = scmp.eq.s32.totalorder %s36, 0
      %p482 = por %p480, %p481
      %p483 = scmp.ne.s32.totalorder %s471, %s472
      %p484 = scmp.eq.s32.totalorder %s37, 1
      %p485 = por %p483, %p484
      %p487 = scmp.ne.s32.totalorder %s472, %s486
      %p488 = scmp.eq.s32.totalorder %s37, 0
      %p489 = por %p487, %p488
      %s491 = sadd.s32 %s490, 1
      %p494 = scmp.eq.s32.totalorder %s31, 1
      %p495 = scmp.ne.s32.totalorder %s490, %s492
      %p496 = scmp.eq.s32.totalorder %s31, 0
      %p497 = por %p495, %p496
      %p498 = scmp.ne.s32.totalorder %s490, %s492
      %p499 = scmp.eq.s32.totalorder %s36, 1
      %p500 = por %p498, %p499
      %p501 = scmp.ne.s32.totalorder %s492, %s493
      %p502 = scmp.eq.s32.totalorder %s36, 0
      %p503 = por %p501, %p502
      %p504 = scmp.ne.s32.totalorder %s492, %s493
      %p505 = scmp.eq.s32.totalorder %s37, 1
      %p506 = por %p504, %p505
      %p508 = scmp.ne.s32.totalorder %s493, %s507
      %p509 = scmp.eq.s32.totalorder %s37, 0
      %p510 = por %p508, %p509
      %s511 = ssub.s32 %s31, %s38
      %p512 = scmp.eq.s32.totalorder %s511, 0
      %s514 = sadd.s32 %s513, 1
      %s515 = scalar_select %p512, %s513, %s514
      %p518 = pneg %p512
      %p519 = scmp.eq.s32.totalorder %s31, 1
      %p520 = por %p518, %p519
      %p521 = scmp.ne.s32.totalorder %s513, %s516
      %p522 = scmp.eq.s32.totalorder %s31, 0
      %p523 = por %p521, %p522
      %p524 = scmp.ne.s32.totalorder %s513, %s516
      %p525 = scmp.eq.s32.totalorder %s36, 1
      %p526 = por %p524, %p525
      %p527 = scmp.ne.s32.totalorder %s516, %s517
      %p528 = scmp.eq.s32.totalorder %s36, 0
      %p529 = por %p527, %p528
      %p530 = scmp.ne.s32.totalorder %s516, %s517
      %p531 = scmp.eq.s32.totalorder %s37, 1
      %p532 = por %p530, %p531
      %p534 = scmp.ne.s32.totalorder %s517, %s533
      %p535 = scmp.eq.s32.totalorder %s37, 0
      %p536 = por %p534, %p535
      %p537 = scmp.le.s32.totalorder 1, %s31
      %p538 = scmp.lt.s32.totalorder %s31, 3
      %p539 = pnand %p537, %p538
      %p540 = pneg %p539
      // Predicated region
      $region9: #{tpu_custom_call.1} parent=5 // pred_check
        _
      $region10: #{tpu_custom_call.1} parent=5 // pred_check_branch
        %542 = sbr.rel (%p539) target = $region12
      $region11: #{tpu_custom_call.1} parent=5 // pred_region
        %s543 = ssub.s32 %s31, 1
        // Predicated region
        $region13: #{tpu_custom_call.1} parent=11 // pred_check
          %p544 = pneg %p104
        $region14: #{tpu_custom_call.1} parent=11 // pred_check_branch
          %546 = sbr.rel (%p544) target = $region16
        $region15: #{tpu_custom_call.1} parent=11 // pred_region
          _
        $region16: #{tpu_custom_call.1} parent=11 // pred_fallthru
          _
        // Predicated region
        $region17: #{tpu_custom_call.1} parent=11 // pred_check
          %p547 = pneg %p125
        $region18: #{tpu_custom_call.1} parent=11 // pred_check_branch
          %549 = sbr.rel (%p547) target = $region20
        $region19: #{tpu_custom_call.1} parent=11 // pred_region
          _
        $region20: #{tpu_custom_call.1} parent=11 // pred_fallthru
          _
        // Predicated region
        $region21: #{tpu_custom_call.1} parent=11 // pred_check
          %p550 = pneg %p146
        $region22: #{tpu_custom_call.1} parent=11 // pred_check_branch
          %552 = sbr.rel (%p550) target = $region24
        $region23: #{tpu_custom_call.1} parent=11 // pred_region
          _
        $region24: #{tpu_custom_call.1} parent=11 // pred_fallthru
          _
        // Predicated region
        $region25: #{tpu_custom_call.1} parent=11 // pred_check
          %p553 = pneg %p167
        $region26: #{tpu_custom_call.1} parent=11 // pred_check_branch
          %555 = sbr.rel (%p553) target = $region28
        $region27: #{tpu_custom_call.1} parent=11 // pred_region
          _
        $region28: #{tpu_custom_call.1} parent=11 // pred_fallthru
          _
        // Predicated region
        $region29: #{tpu_custom_call.1} parent=11 // pred_check
          %p556 = pneg %p188
        $region30: #{tpu_custom_call.1} parent=11 // pred_check_branch
          %558 = sbr.rel (%p556) target = $region32
        $region31: #{tpu_custom_call.1} parent=11 // pred_region
          _
        $region32: #{tpu_custom_call.1} parent=11 // pred_fallthru
          _
        // Predicated region
        $region33: #{tpu_custom_call.1} parent=11 // pred_check
          %p559 = pneg %p209
        $region34: #{tpu_custom_call.1} parent=11 // pred_check_branch
          %561 = sbr.rel (%p559) target = $region36
        $region35: #{tpu_custom_call.1} parent=11 // pred_region
          _
        $region36: #{tpu_custom_call.1} parent=11 // pred_fallthru
          _
        // Predicated region
        $region37: #{tpu_custom_call.1} parent=11 // pred_check
          %p562 = pneg %p230
        $region38: #{tpu_custom_call.1} parent=11 // pred_check_branch
          %564 = sbr.rel (%p562) target = $region40
        $region39: #{tpu_custom_call.1} parent=11 // pred_region
          _
        $region40: #{tpu_custom_call.1} parent=11 // pred_fallthru
          _
        // Predicated region
        $region41: #{tpu_custom_call.1} parent=11 // pred_check
          %p565 = pneg %p251
        $region42: #{tpu_custom_call.1} parent=11 // pred_check_branch
          %567 = sbr.rel (%p565) target = $region44
        $region43: #{tpu_custom_call.1} parent=11 // pred_region
          _
        $region44: #{tpu_custom_call.1} parent=11 // pred_fallthru
          _
        // Predicated region
        $region45: #{tpu_custom_call.1} parent=11 // pred_check
          %p568 = pneg %p272
        $region46: #{tpu_custom_call.1} parent=11 // pred_check_branch
          %570 = sbr.rel (%p568) target = $region48
        $region47: #{tpu_custom_call.1} parent=11 // pred_region
          _
        $region48: #{tpu_custom_call.1} parent=11 // pred_fallthru
          _
        // Predicated region
        $region49: #{tpu_custom_call.1} parent=11 // pred_check
          %p571 = pneg %p293
        $region50: #{tpu_custom_call.1} parent=11 // pred_check_branch
          %573 = sbr.rel (%p571) target = $region52
        $region51: #{tpu_custom_call.1} parent=11 // pred_region
          _
        $region52: #{tpu_custom_call.1} parent=11 // pred_fallthru
          _
        // Predicated region
        $region53: #{tpu_custom_call.1} parent=11 // pred_check
          %p574 = pneg %p314
        $region54: #{tpu_custom_call.1} parent=11 // pred_check_branch
          %576 = sbr.rel (%p574) target = $region56
        $region55: #{tpu_custom_call.1} parent=11 // pred_region
          _
        $region56: #{tpu_custom_call.1} parent=11 // pred_fallthru
          _
        // Predicated region
        $region57: #{tpu_custom_call.1} parent=11 // pred_check
          %p577 = pneg %p335
        $region58: #{tpu_custom_call.1} parent=11 // pred_check_branch
          %579 = sbr.rel (%p577) target = $region60
        $region59: #{tpu_custom_call.1} parent=11 // pred_region
          _
        $region60: #{tpu_custom_call.1} parent=11 // pred_fallthru
          _
        // Predicated region
        $region61: #{tpu_custom_call.1} parent=11 // pred_check
          %p580 = pneg %p356
        $region62: #{tpu_custom_call.1} parent=11 // pred_check_branch
          %582 = sbr.rel (%p580) target = $region64
        $region63: #{tpu_custom_call.1} parent=11 // pred_region
          _
        $region64: #{tpu_custom_call.1} parent=11 // pred_fallthru
          _
        // Predicated region
        $region65: #{tpu_custom_call.1} parent=11 // pred_check
          %p583 = pneg %p377
        $region66: #{tpu_custom_call.1} parent=11 // pred_check_branch
          %585 = sbr.rel (%p583) target = $region68
        $region67: #{tpu_custom_call.1} parent=11 // pred_region
          _
        $region68: #{tpu_custom_call.1} parent=11 // pred_fallthru
          _
        // Predicated region
        $region69: #{tpu_custom_call.1} parent=11 // pred_check
          %p586 = pneg %p398
        $region70: #{tpu_custom_call.1} parent=11 // pred_check_branch
          %588 = sbr.rel (%p586) target = $region72
        $region71: #{tpu_custom_call.1} parent=11 // pred_region
          _
        $region72: #{tpu_custom_call.1} parent=11 // pred_fallthru
          _
        // Predicated region
        $region73: #{tpu_custom_call.1} parent=11 // pred_check
          %p589 = pneg %p419
        $region74: #{tpu_custom_call.1} parent=11 // pred_check_branch
          %591 = sbr.rel (%p589) target = $region76
        $region75: #{tpu_custom_call.1} parent=11 // pred_region
          _
        $region76: #{tpu_custom_call.1} parent=11 // pred_fallthru
          _
        // Predicated region
        $region77: #{tpu_custom_call.1} parent=11 // pred_check
          %p592 = pneg %p440
        $region78: #{tpu_custom_call.1} parent=11 // pred_check_branch
          %594 = sbr.rel (%p592) target = $region80
        $region79: #{tpu_custom_call.1} parent=11 // pred_region
          _
        $region80: #{tpu_custom_call.1} parent=11 // pred_fallthru
          _
        // Predicated region
        $region81: #{tpu_custom_call.1} parent=11 // pred_check
          %p595 = pneg %p461
        $region82: #{tpu_custom_call.1} parent=11 // pred_check_branch
          %597 = sbr.rel (%p595) target = $region84
        $region83: #{tpu_custom_call.1} parent=11 // pred_region
          _
        $region84: #{tpu_custom_call.1} parent=11 // pred_fallthru
          _
        // Predicated region
        $region85: #{tpu_custom_call.1} parent=11 // pred_check
          %p598 = pneg %p482
        $region86: #{tpu_custom_call.1} parent=11 // pred_check_branch
          %600 = sbr.rel (%p598) target = $region88
        $region87: #{tpu_custom_call.1} parent=11 // pred_region
          _
        $region88: #{tpu_custom_call.1} parent=11 // pred_fallthru
          _
        // Predicated region
        $region89: #{tpu_custom_call.1} parent=11 // pred_check
          %p601 = pneg %p503
        $region90: #{tpu_custom_call.1} parent=11 // pred_check_branch
          %603 = sbr.rel (%p601) target = $region92
        $region91: #{tpu_custom_call.1} parent=11 // pred_region
          _
        $region92: #{tpu_custom_call.1} parent=11 // pred_fallthru
          _
      $region12: #{tpu_custom_call.1} parent=5 // pred_fallthru
        _
      %p604 = scmp.lt.s32.totalorder %s31, 2
      // Predicated region
      $region93: #{tpu_custom_call.1} parent=5 // pred_check
        %p605 = pneg %p604
      $region94: #{tpu_custom_call.1} parent=5 // pred_check_branch
        %607 = sbr.rel (%p605) target = $region96
      $region95: #{tpu_custom_call.1} parent=5 // pred_region
        // Predicated region
        $region97: #{tpu_custom_call.1} parent=95 // pred_check
          %p608 = pneg %p51
        $region98: #{tpu_custom_call.1} parent=95 // pred_check_branch
          %610 = sbr.rel (%p608) target = $region100
        $region99: #{tpu_custom_call.1} parent=95 // pred_region
          %s611 = smul.u32 16, %s31
          %p612 = scmp.lt.s32.totalorder %s611, 31
          %s613 = scalar_select %p612, %s611, 31
          %s614 = smul.addr %s613, 8
          %s615 = scalar_lea.vmem %s0, %s614
          %s616 = smul.u32 16, %s31
        $region100: #{tpu_custom_call.1} parent=95 // pred_fallthru
          _
        // Predicated region
        $region101: #{tpu_custom_call.1} parent=95 // pred_check
          %p617 = pneg %p77
        $region102: #{tpu_custom_call.1} parent=95 // pred_check_branch
          %619 = sbr.rel (%p617) target = $region104
        $region103: #{tpu_custom_call.1} parent=95 // pred_region
          %s620 = smul.u32 16, %s31
          %p621 = scmp.lt.s32.totalorder %s620, 31
          %s622 = scalar_select %p621, %s620, 31
          %s623 = smul.addr %s622, 4
          %s624 = scalar_lea.vmem %s1, %s623
          %s625 = smul.u32 16, %s31
        $region104: #{tpu_custom_call.1} parent=95 // pred_fallthru
          _
      $region96: #{tpu_custom_call.1} parent=5 // pred_fallthru
        _
      %p626 = scmp.le.s32.totalorder 1, %s31
      %p627 = scmp.lt.s32.totalorder %s31, 3
      %p628 = pnand %p626, %p627
      %p629 = pneg %p628
      // Predicated region
      $region105: #{tpu_custom_call.1} parent=5 // pred_check
        _
      $region106: #{tpu_custom_call.1} parent=5 // pred_check_branch
        %631 = sbr.rel (%p628) target = $region108
      $region107: #{tpu_custom_call.1} parent=5 // pred_region
        %s632 = ssub.s32 %s31, 1
        %s633 = smul.u32 16, %s36
        %p634 = scmp.lt.s32.totalorder %s633, 31
        %s635 = scalar_select %p634, %s633, 31
        %s636 = smul.addr %s635, 8
        %s637 = scalar_lea.vmem %s0, %s636
        %p638 = pneg %p57
        %p639 = pneg %p54
        %s640 = smul.u32 16, %s36
        %p641 = scmp.lt.s32.totalorder %s640, 31
        %s642 = scalar_select %p641, %s640, 31
        %s643 = smul.addr %s642, 4
        %s644 = scalar_lea.vmem %s1, %s643
        %p645 = pneg %p83
        %p646 = pneg %p80
        %p647 = pneg %p104
        %p648 = pneg %p101
        %p649 = pneg %p125
        %p650 = pneg %p122
        %p651 = pneg %p146
        %p652 = pneg %p143
        %p653 = pneg %p167
        %p654 = pneg %p164
        %p655 = pneg %p188
        %p656 = pneg %p185
        %p657 = pneg %p209
        %p658 = pneg %p206
        %p659 = pneg %p230
        %p660 = pneg %p227
        %p661 = pneg %p251
        %p662 = pneg %p248
        %p663 = pneg %p272
        %p664 = pneg %p269
        %p665 = pneg %p293
        %p666 = pneg %p290
        %p667 = pneg %p314
        %p668 = pneg %p311
        %p669 = pneg %p335
        %p670 = pneg %p332
        %p671 = pneg %p356
        %p672 = pneg %p353
        %p673 = pneg %p377
        %p674 = pneg %p374
        %p675 = pneg %p398
        %p676 = pneg %p395
        %p677 = pneg %p419
        %p678 = pneg %p416
        %p679 = pneg %p440
        %p680 = pneg %p437
        %p681 = pneg %p461
        %p682 = pneg %p458
        %p683 = pneg %p482
        %p684 = pneg %p479
        %p685 = pneg %p503
        %p686 = pneg %p500
        %p687 = pneg %p529
        %p688 = pneg %p526
        %s689 = sand.u32 %s516, 1
        %s690 = scalar_lea.sflag [#allocation3], %s689
        %s691 = sand.u32 %s516, 1
        %s692 = smul.addr %s691, 128
        %s693 = scalar_lea.vmem [#allocation2], %s692
        %s694 = smul.u32 16, %s36
        %p695 = scmp.lt.s32.totalorder %s694, 31
        %s696 = scalar_select %p695, %s694, 31
        %s697 = smul.addr %s696, 8
        %s698 = scalar_lea.vmem %s0, %s697
        %s699 = smul.u32 16, %s36
        %s700 = smul.u32 16, %s36
        %p701 = scmp.lt.s32.totalorder %s700, 31
        %s702 = scalar_select %p701, %s700, 31
        %s703 = smul.addr %s702, 4
        %s704 = scalar_lea.vmem %s1, %s703
        %s705 = smul.u32 16, %s36
        %s706 = smul.u32 16, %s36
        %v708 = vld [vmem:[%s704] sm:$0xf]
        %v709 = vld [vmem:[%s704 + $0x4] sm:$0xf]
        %v710 = vld [vmem:[%s704 + $0x8] sm:$0xf]
        %v711 = vld [vmem:[%s704 + $0xc] sm:$0xf]
        %v712 = vld [vmem:[%s704 + $0x10] sm:$0xf]
        %v713 = vld [vmem:[%s704 + $0x14] sm:$0xf]
        %v714 = vld [vmem:[%s704 + $0x18] sm:$0xf]
        %v715 = vld [vmem:[%s704 + $0x1c] sm:$0xf]
        %v716 = vld [vmem:[%s704 + $0x20] sm:$0xf]
        %v717 = vld [vmem:[%s704 + $0x24] sm:$0xf]
        %v718 = vld [vmem:[%s704 + $0x28] sm:$0xf]
        %v719 = vld [vmem:[%s704 + $0x2c] sm:$0xf]
        %v720 = vld [vmem:[%s704 + $0x30] sm:$0xf]
        %v721 = vld [vmem:[%s704 + $0x34] sm:$0xf]
        %v722 = vld [vmem:[%s704 + $0x38] sm:$0xf]
        %v723 = vld [vmem:[%s704 + $0x3c] sm:$0xf]
        %v724 = vld [vmem:[%s3] sm:$0xf]
        %v725 = vld [vmem:[%s3 + $0x4] sm:$0xf]
        %v726 = vld [vmem:[%s4] sm:$0x1]
        %v728 = vperm.slane %v726, 0
        %v746 = vunpack.c.l.b16 %v708
        %v747 = vunpack.c.l.b16 %v709
        %v748 = vunpack.c.l.b16 %v710
        %v749 = vunpack.c.l.b16 %v711
        %v750 = vunpack.c.l.b16 %v712
        %v751 = vunpack.c.l.b16 %v713
        %v752 = vunpack.c.l.b16 %v714
        %v753 = vunpack.c.l.b16 %v715
        %v754 = vunpack.c.l.b16 %v716
        %v755 = vunpack.c.l.b16 %v717
        %v756 = vunpack.c.l.b16 %v718
        %v757 = vunpack.c.l.b16 %v719
        %v758 = vunpack.c.l.b16 %v720
        %v759 = vunpack.c.l.b16 %v721
        %v760 = vunpack.c.l.b16 %v722
        %v761 = vunpack.c.l.b16 %v723
        %v762 = vpack.c.b16 %v747, %v746
        %v763 = vpack.c.b16 %v749, %v748
        %v764 = vpack.c.b16 %v751, %v750
        %v765 = vpack.c.b16 %v753, %v752
        %v766 = vpack.c.b16 %v755, %v754
        %v767 = vpack.c.b16 %v757, %v756
        %v768 = vpack.c.b16 %v759, %v758
        %v769 = vpack.c.b16 %v761, %v760
        %v772 = vunpack.c.l.b16 %v724
        %v773 = vunpack.c.l.b16 %v725
        %v774 = vpack.c.b16 %v773, %v772
        %vm776 = vcmask 130048
        %v778 = vsel %vm776, %v762, 0
        %v781 = vsel %vm776, %v763, 0
        %v784 = vsel %vm776, %v764, 0
        %v787 = vsel %vm776, %v765, 0
        %v790 = vsel %vm776, %v766, 0
        %v793 = vsel %vm776, %v767, 0
        %v796 = vsel %vm776, %v768, 0
        %v799 = vsel %vm776, %v769, 0
        %801 = vmatpush.bf16.msra.mxu0 0
        %802 = vmatpush.bf16.msra.mxu0 0
        %803 = vmatpush.bf16.msra.mxu0 0
        %804 = vmatpush.bf16.msra.mxu0 0
        %805 = vmatpush.bf16.msra.mxu0 0
        %806 = vmatpush.bf16.msra.mxu0 0
        %807 = vmatpush.bf16.msra.mxu0 0
        %808 = vmatpush.bf16.msra.mxu0 %v774
        %809 = vmatmul.bf16.gmra.mxu0 %v778
        %v810 = vpop.f32.mrf.mxu0
        %v811 = vadd.f32 %v728, %v810
        %v812 = vpop.f32.mrf.mxu0
        %v813 = vadd.f32 %v728, %v812
        %814 = vmatmul.bf16.gmra.mxu0 %v781
        %v815 = vpop.f32.mrf.mxu0
        %v816 = vadd.f32 %v728, %v815
        %v817 = vpop.f32.mrf.mxu0
        %v818 = vadd.f32 %v728, %v817
        %819 = vmatmul.bf16.gmra.mxu0 %v784
        %v820 = vpop.f32.mrf.mxu0
        %v821 = vadd.f32 %v728, %v820
        %v822 = vpop.f32.mrf.mxu0
        %v823 = vadd.f32 %v728, %v822
        %824 = vmatmul.bf16.gmra.mxu0 %v787
        %v825 = vpop.f32.mrf.mxu0
        %v826 = vadd.f32 %v728, %v825
        %v827 = vpop.f32.mrf.mxu0
        %v828 = vadd.f32 %v728, %v827
        %829 = vmatmul.bf16.gmra.mxu0 %v790
        %v830 = vpop.f32.mrf.mxu0
        %v831 = vadd.f32 %v728, %v830
        %v832 = vpop.f32.mrf.mxu0
        %v833 = vadd.f32 %v728, %v832
        %834 = vmatmul.bf16.gmra.mxu0 %v793
        %v835 = vpop.f32.mrf.mxu0
        %v836 = vadd.f32 %v728, %v835
        %v837 = vpop.f32.mrf.mxu0
        %v838 = vadd.f32 %v728, %v837
        %839 = vmatmul.bf16.gmra.mxu0 %v796
        %v840 = vpop.f32.mrf.mxu0
        %v841 = vadd.f32 %v728, %v840
        %v842 = vpop.f32.mrf.mxu0
        %v843 = vadd.f32 %v728, %v842
        %844 = vmatmul.bf16.gmra.mxu0 %v799
        %v845 = vpop.f32.mrf.mxu0
        %v846 = vadd.f32 %v728, %v845
        %v847 = vpop.f32.mrf.mxu0
        %v848 = vadd.f32 %v728, %v847
        %849 = vdwg.mxu0
        %v850 = vtanh.pop %v811
        %v851 = vtanh.pop %v813
        %v852 = vtanh.pop %v816
        %v853 = vtanh.pop %v818
        %v854 = vtanh.pop %v821
        %v855 = vtanh.pop %v823
        %v856 = vtanh.pop %v826
        %v857 = vtanh.pop %v828
        %v858 = vtanh.pop %v831
        %v859 = vtanh.pop %v833
        %v860 = vtanh.pop %v836
        %v861 = vtanh.pop %v838
        %v862 = vtanh.pop %v841
        %v863 = vtanh.pop %v843
        %v864 = vtanh.pop %v846
        %v865 = vtanh.pop %v848
        %v866 = vld [vmem:[%s698] sm:$0xff]
        %v867 = vld [vmem:[%s698 + $0x8] sm:$0xff]
        %v868 = vld [vmem:[%s698 + $0x10] sm:$0xff]
        %v869 = vld [vmem:[%s698 + $0x18] sm:$0xff]
        %v870 = vld [vmem:[%s698 + $0x20] sm:$0xff]
        %v871 = vld [vmem:[%s698 + $0x28] sm:$0xff]
        %v872 = vld [vmem:[%s698 + $0x30] sm:$0xff]
        %v873 = vld [vmem:[%s698 + $0x38] sm:$0xff]
        %v874 = vld [vmem:[%s698 + $0x40] sm:$0xff]
        %v875 = vld [vmem:[%s698 + $0x48] sm:$0xff]
        %v876 = vld [vmem:[%s698 + $0x50] sm:$0xff]
        %v877 = vld [vmem:[%s698 + $0x58] sm:$0xff]
        %v878 = vld [vmem:[%s698 + $0x60] sm:$0xff]
        %v879 = vld [vmem:[%s698 + $0x68] sm:$0xff]
        %v880 = vld [vmem:[%s698 + $0x70] sm:$0xff]
        %v881 = vld [vmem:[%s698 + $0x78] sm:$0xff]
        %898 = vrot.lane.b32.xlu0 %v850, 16
        %v899 = vpop.permute.xlu0 %898
        %900 = vrot.lane.b32.xlu0 %v851, 16
        %v901 = vpop.permute.xlu0 %900
        %902 = vrot.lane.b32.xlu0 %v852, 16
        %v903 = vpop.permute.xlu0 %902
        %904 = vrot.lane.b32.xlu0 %v853, 16
        %v905 = vpop.permute.xlu0 %904
        %906 = vrot.lane.b32.xlu0 %v854, 16
        %v907 = vpop.permute.xlu0 %906
        %908 = vrot.lane.b32.xlu0 %v855, 16
        %v909 = vpop.permute.xlu0 %908
        %910 = vrot.lane.b32.xlu0 %v856, 16
        %v911 = vpop.permute.xlu0 %910
        %912 = vrot.lane.b32.xlu0 %v857, 16
        %v913 = vpop.permute.xlu0 %912
        %914 = vrot.lane.b32.xlu0 %v858, 16
        %v915 = vpop.permute.xlu0 %914
        %916 = vrot.lane.b32.xlu0 %v859, 16
        %v917 = vpop.permute.xlu0 %916
        %918 = vrot.lane.b32.xlu0 %v860, 16
        %v919 = vpop.permute.xlu0 %918
        %920 = vrot.lane.b32.xlu0 %v861, 16
        %v921 = vpop.permute.xlu0 %920
        %922 = vrot.lane.b32.xlu0 %v862, 16
        %v923 = vpop.permute.xlu0 %922
        %924 = vrot.lane.b32.xlu0 %v863, 16
        %v925 = vpop.permute.xlu0 %924
        %926 = vrot.lane.b32.xlu0 %v864, 16
        %v927 = vpop.permute.xlu0 %926
        %928 = vrot.lane.b32.xlu0 %v865, 16
        %v929 = vpop.permute.xlu0 %928
        %v946 = vsel %vm776, %v866, %v899
        %v947 = vsel %vm776, %v867, %v901
        %v948 = vsel %vm776, %v868, %v903
        %v949 = vsel %vm776, %v869, %v905
        %v950 = vsel %vm776, %v870, %v907
        %v951 = vsel %vm776, %v871, %v909
        %v952 = vsel %vm776, %v872, %v911
        %v953 = vsel %vm776, %v873, %v913
        %v954 = vsel %vm776, %v874, %v915
        %v955 = vsel %vm776, %v875, %v917
        %v956 = vsel %vm776, %v876, %v919
        %v957 = vsel %vm776, %v877, %v921
        %v958 = vsel %vm776, %v878, %v923
        %v959 = vsel %vm776, %v879, %v925
        %v960 = vsel %vm776, %v880, %v927
        %v961 = vsel %vm776, %v881, %v929
        %v962 = vld [vmem:[%s5] sm:$0xff]
        %v963 = vld [vmem:[%s5 + $0x8] sm:$0xff]
        %v964 = vld [vmem:[%s5 + $0x10] sm:$0xff]
        %v965 = vld [vmem:[%s5 + $0x18] sm:$0xff]
        %v966 = vld [vmem:[%s5 + $0x20] sm:$0xff]
        %v967 = vld [vmem:[%s5 + $0x28] sm:$0xff]
        %v968 = vld [vmem:[%s5 + $0x30] sm:$0xff]
        %v969 = vld [vmem:[%s5 + $0x38] sm:$0xff]
        %v970 = vld [vmem:[%s5 + $0x40] sm:$0xff]
        %v971 = vld [vmem:[%s5 + $0x48] sm:$0xff]
        %v972 = vld [vmem:[%s5 + $0x50] sm:$0xff]
        %v973 = vld [vmem:[%s5 + $0x58] sm:$0xff]
        %v974 = vld [vmem:[%s5 + $0x60] sm:$0xff]
        %v975 = vld [vmem:[%s5 + $0x68] sm:$0xff]
        %v976 = vld [vmem:[%s5 + $0x70] sm:$0xff]
        %v977 = vld [vmem:[%s5 + $0x78] sm:$0xff]
        %v978 = vadd.f32 %v946, %v962
        %v979 = vadd.f32 %v947, %v963
        %v980 = vadd.f32 %v948, %v964
        %v981 = vadd.f32 %v949, %v965
        %v982 = vadd.f32 %v950, %v966
        %v983 = vadd.f32 %v951, %v967
        %v984 = vadd.f32 %v952, %v968
        %v985 = vadd.f32 %v953, %v969
        %v986 = vadd.f32 %v954, %v970
        %v987 = vadd.f32 %v955, %v971
        %v988 = vadd.f32 %v956, %v972
        %v989 = vadd.f32 %v957, %v973
        %v990 = vadd.f32 %v958, %v974
        %v991 = vadd.f32 %v959, %v975
        %v992 = vadd.f32 %v960, %v976
        %v993 = vadd.f32 %v961, %v977
        %v994 = vlaneseq
        %v995 = vand.u32 %v994, 127
        %vm996 = vcmp.ge.s32.totalorder %v995, 0
        %vm997 = vcmp.lt.s32.totalorder %v995, 8
        %vm998 = vmand %vm996, %vm997
        %v999 = vsel %vm998, 1, 0
        %v1000 = vcvt.s32.f32 %v999
        %vm1001 = vcmp.ge.s32.totalorder %v995, 8
        %vm1002 = vcmp.lt.s32.totalorder %v995, 16
        %vm1003 = vmand %vm1001, %vm1002
        %v1004 = vsel %vm1003, 1, 0
        %v1005 = vcvt.s32.f32 %v1004
        %vm1006 = vcmp.ge.s32.totalorder %v995, 16
        %vm1007 = vcmp.lt.s32.totalorder %v995, 24
        %vm1008 = vmand %vm1006, %vm1007
        %v1009 = vsel %vm1008, 1, 0
        %v1010 = vcvt.s32.f32 %v1009
        %vm1011 = vcmp.ge.s32.totalorder %v995, 24
        %vm1012 = vcmp.lt.s32.totalorder %v995, 32
        %vm1013 = vmand %vm1011, %vm1012
        %v1014 = vsel %vm1013, 1, 0
        %v1015 = vcvt.s32.f32 %v1014
        %v1016 = vld [vmem:[%s2] sm:$0xff]
        %v1017 = vld [vmem:[%s2 + $0x8] sm:$0xff]
        %v1018 = vld [vmem:[%s2 + $0x10] sm:$0xff]
        %v1019 = vld [vmem:[%s2 + $0x18] sm:$0xff]
        %v1020 = vld [vmem:[%s2 + $0x20] sm:$0xff]
        %v1021 = vld [vmem:[%s2 + $0x28] sm:$0xff]
        %v1022 = vld [vmem:[%s2 + $0x30] sm:$0xff]
        %v1023 = vld [vmem:[%s2 + $0x38] sm:$0xff]
        %v1024 = vld [vmem:[%s2 + $0x40] sm:$0xff]
        %v1025 = vld [vmem:[%s2 + $0x48] sm:$0xff]
        %v1026 = vld [vmem:[%s2 + $0x50] sm:$0xff]
        %v1027 = vld [vmem:[%s2 + $0x58] sm:$0xff]
        %v1028 = vld [vmem:[%s2 + $0x60] sm:$0xff]
        %v1029 = vld [vmem:[%s2 + $0x68] sm:$0xff]
        %v1030 = vld [vmem:[%s2 + $0x70] sm:$0xff]
        %v1031 = vld [vmem:[%s2 + $0x78] sm:$0xff]
        %v1032 = vld [vmem:[%s6] sm:$0x1]
        %v1033 = vld [vmem:[%s7] sm:$0x1]
        %vm1034 = vcmask 261120
        %v1035 = vsel %vm1034, %v978, 0.0
        %1036 = vadd.xlane.f32.xlu0 %v1035
        %v1037 = vpop.xlane.xlu0 %1036
        %v1038 = vsel %vm1034, %v979, 0.0
        %1039 = vadd.xlane.f32.xlu0 %v1038
        %v1040 = vpop.xlane.xlu0 %1039
        %v1041 = vsel %vm1034, %v980, 0.0
        %1042 = vadd.xlane.f32.xlu0 %v1041
        %v1043 = vpop.xlane.xlu0 %1042
        %v1044 = vsel %vm1034, %v981, 0.0
        %1045 = vadd.xlane.f32.xlu0 %v1044
        %v1046 = vpop.xlane.xlu0 %1045
        %v1047 = vsel %vm1034, %v982, 0.0
        %1048 = vadd.xlane.f32.xlu0 %v1047
        %v1049 = vpop.xlane.xlu0 %1048
        %v1050 = vsel %vm1034, %v983, 0.0
        %1051 = vadd.xlane.f32.xlu0 %v1050
        %v1052 = vpop.xlane.xlu0 %1051
        %v1053 = vsel %vm1034, %v984, 0.0
        %1054 = vadd.xlane.f32.xlu0 %v1053
        %v1055 = vpop.xlane.xlu0 %1054
        %v1056 = vsel %vm1034, %v985, 0.0
        %1057 = vadd.xlane.f32.xlu0 %v1056
        %v1058 = vpop.xlane.xlu0 %1057
        %v1059 = vsel %vm1034, %v986, 0.0
        %1060 = vadd.xlane.f32.xlu0 %v1059
        %v1061 = vpop.xlane.xlu0 %1060
        %v1062 = vsel %vm1034, %v987, 0.0
        %1063 = vadd.xlane.f32.xlu0 %v1062
        %v1064 = vpop.xlane.xlu0 %1063
        %v1065 = vsel %vm1034, %v988, 0.0
        %1066 = vadd.xlane.f32.xlu0 %v1065
        %v1067 = vpop.xlane.xlu0 %1066
        %v1068 = vsel %vm1034, %v989, 0.0
        %1069 = vadd.xlane.f32.xlu0 %v1068
        %v1070 = vpop.xlane.xlu0 %1069
        %v1071 = vsel %vm1034, %v990, 0.0
        %1072 = vadd.xlane.f32.xlu0 %v1071
        %v1073 = vpop.xlane.xlu0 %1072
        %v1074 = vsel %vm1034, %v991, 0.0
        %1075 = vadd.xlane.f32.xlu0 %v1074
        %v1076 = vpop.xlane.xlu0 %1075
        %v1077 = vsel %vm1034, %v992, 0.0
        %1078 = vadd.xlane.f32.xlu0 %v1077
        %v1079 = vpop.xlane.xlu0 %1078
        %v1080 = vsel %vm1034, %v993, 0.0
        %1081 = vadd.xlane.f32.xlu0 %v1080
        %v1082 = vpop.xlane.xlu0 %1081
        %v1083 = vrcp.pop 32.0
        %v1084 = vmul.f32 32.0, %v1083
        %v1085 = vsub.f32 1.0, %v1084
        %v1086 = vmul.f32 %v1083, %v1085
        %v1087 = vadd.f32 %v1083, %v1086
        %vm1088 = vweird.f32 %v1083
        %v1089 = vsel %vm1088, %v1083, %v1087
        %v1090 = vmul.f32 %v1037, %v1089
        %v1091 = vmul.f32 %v1040, %v1089
        %v1092 = vmul.f32 %v1043, %v1089
        %v1093 = vmul.f32 %v1046, %v1089
        %v1094 = vmul.f32 %v1049, %v1089
        %v1095 = vmul.f32 %v1052, %v1089
        %v1096 = vmul.f32 %v1055, %v1089
        %v1097 = vmul.f32 %v1058, %v1089
        %v1098 = vmul.f32 %v1061, %v1089
        %v1099 = vmul.f32 %v1064, %v1089
        %v1100 = vmul.f32 %v1067, %v1089
        %v1101 = vmul.f32 %v1070, %v1089
        %v1102 = vmul.f32 %v1073, %v1089
        %v1103 = vmul.f32 %v1076, %v1089
        %v1104 = vmul.f32 %v1079, %v1089
        %v1105 = vmul.f32 %v1082, %v1089
        %v1106 = vsub.f32 %v978, %v1090
        %v1107 = vsub.f32 %v979, %v1091
        %v1108 = vsub.f32 %v980, %v1092
        %v1109 = vsub.f32 %v981, %v1093
        %v1110 = vsub.f32 %v982, %v1094
        %v1111 = vsub.f32 %v983, %v1095
        %v1112 = vsub.f32 %v984, %v1096
        %v1113 = vsub.f32 %v985, %v1097
        %v1114 = vsub.f32 %v986, %v1098
        %v1115 = vsub.f32 %v987, %v1099
        %v1116 = vsub.f32 %v988, %v1100
        %v1117 = vsub.f32 %v989, %v1101
        %v1118 = vsub.f32 %v990, %v1102
        %v1119 = vsub.f32 %v991, %v1103
        %v1120 = vsub.f32 %v992, %v1104
        %v1121 = vsub.f32 %v993, %v1105
        %v1122 = vmul.f32 %v1106, %v1106
        %v1123 = vmul.f32 %v1107, %v1107
        %v1124 = vmul.f32 %v1108, %v1108
        %v1125 = vmul.f32 %v1109, %v1109
        %v1126 = vmul.f32 %v1110, %v1110
        %v1127 = vmul.f32 %v1111, %v1111
        %v1128 = vmul.f32 %v1112, %v1112
        %v1129 = vmul.f32 %v1113, %v1113
        %v1130 = vmul.f32 %v1114, %v1114
        %v1131 = vmul.f32 %v1115, %v1115
        %v1132 = vmul.f32 %v1116, %v1116
        %v1133 = vmul.f32 %v1117, %v1117
        %v1134 = vmul.f32 %v1118, %v1118
        %v1135 = vmul.f32 %v1119, %v1119
        %v1136 = vmul.f32 %v1120, %v1120
        %v1137 = vmul.f32 %v1121, %v1121
        %v1138 = vsel %vm1034, %v1122, 0.0
        %1139 = vadd.xlane.f32.xlu0 %v1138
        %v1140 = vpop.xlane.xlu0 %1139
        %v1141 = vsel %vm1034, %v1123, 0.0
        %1142 = vadd.xlane.f32.xlu0 %v1141
        %v1143 = vpop.xlane.xlu0 %1142
        %v1144 = vsel %vm1034, %v1124, 0.0
        %1145 = vadd.xlane.f32.xlu0 %v1144
        %v1146 = vpop.xlane.xlu0 %1145
        %v1147 = vsel %vm1034, %v1125, 0.0
        %1148 = vadd.xlane.f32.xlu0 %v1147
        %v1149 = vpop.xlane.xlu0 %1148
        %v1150 = vsel %vm1034, %v1126, 0.0
        %1151 = vadd.xlane.f32.xlu0 %v1150
        %v1152 = vpop.xlane.xlu0 %1151
        %v1153 = vsel %vm1034, %v1127, 0.0
        %1154 = vadd.xlane.f32.xlu0 %v1153
        %v1155 = vpop.xlane.xlu0 %1154
        %v1156 = vsel %vm1034, %v1128, 0.0
        %1157 = vadd.xlane.f32.xlu0 %v1156
        %v1158 = vpop.xlane.xlu0 %1157
        %v1159 = vsel %vm1034, %v1129, 0.0
        %1160 = vadd.xlane.f32.xlu0 %v1159
        %v1161 = vpop.xlane.xlu0 %1160
        %v1162 = vsel %vm1034, %v1130, 0.0
        %1163 = vadd.xlane.f32.xlu0 %v1162
        %v1164 = vpop.xlane.xlu0 %1163
        %v1165 = vsel %vm1034, %v1131, 0.0
        %1166 = vadd.xlane.f32.xlu0 %v1165
        %v1167 = vpop.xlane.xlu0 %1166
        %v1168 = vsel %vm1034, %v1132, 0.0
        %1169 = vadd.xlane.f32.xlu0 %v1168
        %v1170 = vpop.xlane.xlu0 %1169
        %v1171 = vsel %vm1034, %v1133, 0.0
        %1172 = vadd.xlane.f32.xlu0 %v1171
        %v1173 = vpop.xlane.xlu0 %1172
        %v1174 = vsel %vm1034, %v1134, 0.0
        %1175 = vadd.xlane.f32.xlu0 %v1174
        %v1176 = vpop.xlane.xlu0 %1175
        %v1177 = vsel %vm1034, %v1135, 0.0
        %1178 = vadd.xlane.f32.xlu0 %v1177
        %v1179 = vpop.xlane.xlu0 %1178
        %v1180 = vsel %vm1034, %v1136, 0.0
        %1181 = vadd.xlane.f32.xlu0 %v1180
        %v1182 = vpop.xlane.xlu0 %1181
        %v1183 = vsel %vm1034, %v1137, 0.0
        %1184 = vadd.xlane.f32.xlu0 %v1183
        %v1185 = vpop.xlane.xlu0 %1184
        %v1186 = vmul.f32 %v1140, %v1089
        %v1187 = vmul.f32 %v1143, %v1089
        %v1188 = vmul.f32 %v1146, %v1089
        %v1189 = vmul.f32 %v1149, %v1089
        %v1190 = vmul.f32 %v1152, %v1089
        %v1191 = vmul.f32 %v1155, %v1089
        %v1192 = vmul.f32 %v1158, %v1089
        %v1193 = vmul.f32 %v1161, %v1089
        %v1194 = vmul.f32 %v1164, %v1089
        %v1195 = vmul.f32 %v1167, %v1089
        %v1196 = vmul.f32 %v1170, %v1089
        %v1197 = vmul.f32 %v1173, %v1089
        %v1198 = vmul.f32 %v1176, %v1089
        %v1199 = vmul.f32 %v1179, %v1089
        %v1200 = vmul.f32 %v1182, %v1089
        %v1201 = vmul.f32 %v1185, %v1089
        %v1202 = vadd.f32 %v1186, 1e-05
        %v1203 = vadd.f32 %v1187, 1e-05
        %v1204 = vadd.f32 %v1188, 1e-05
        %v1205 = vadd.f32 %v1189, 1e-05
        %v1206 = vadd.f32 %v1190, 1e-05
        %v1207 = vadd.f32 %v1191, 1e-05
        %v1208 = vadd.f32 %v1192, 1e-05
        %v1209 = vadd.f32 %v1193, 1e-05
        %v1210 = vadd.f32 %v1194, 1e-05
        %v1211 = vadd.f32 %v1195, 1e-05
        %v1212 = vadd.f32 %v1196, 1e-05
        %v1213 = vadd.f32 %v1197, 1e-05
        %v1214 = vadd.f32 %v1198, 1e-05
        %v1215 = vadd.f32 %v1199, 1e-05
        %v1216 = vadd.f32 %v1200, 1e-05
        %v1217 = vadd.f32 %v1201, 1e-05
        %v1218 = vrsqrt.pop %v1202
        %v1219 = vmul.f32 %v1218, %v1202
        %v1220 = vmul.f32 %v1219, %v1218
        %v1221 = vmul.f32 0.5, %v1220
        %v1222 = vsub.f32 1.5, %v1221
        %v1223 = vmul.f32 %v1218, %v1222
        %vm1224 = vweird.f32 %v1202
        %vm1225 = vweird.f32 %v1218
        %vm1226 = vmor %vm1224, %vm1225
        %v1227 = vsel %vm1226, %v1218, %v1223
        %v1228 = vrsqrt.pop %v1203
        %v1229 = vmul.f32 %v1228, %v1203
        %v1230 = vmul.f32 %v1229, %v1228
        %v1231 = vmul.f32 0.5, %v1230
        %v1232 = vsub.f32 1.5, %v1231
        %v1233 = vmul.f32 %v1228, %v1232
        %vm1234 = vweird.f32 %v1203
        %vm1235 = vweird.f32 %v1228
        %vm1236 = vmor %vm1234, %vm1235
        %v1237 = vsel %vm1236, %v1228, %v1233
        %v1238 = vrsqrt.pop %v1204
        %v1239 = vmul.f32 %v1238, %v1204
        %v1240 = vmul.f32 %v1239, %v1238
        %v1241 = vmul.f32 0.5, %v1240
        %v1242 = vsub.f32 1.5, %v1241
        %v1243 = vmul.f32 %v1238, %v1242
        %vm1244 = vweird.f32 %v1204
        %vm1245 = vweird.f32 %v1238
        %vm1246 = vmor %vm1244, %vm1245
        %v1247 = vsel %vm1246, %v1238, %v1243
        %v1248 = vrsqrt.pop %v1205
        %v1249 = vmul.f32 %v1248, %v1205
        %v1250 = vmul.f32 %v1249, %v1248
        %v1251 = vmul.f32 0.5, %v1250
        %v1252 = vsub.f32 1.5, %v1251
        %v1253 = vmul.f32 %v1248, %v1252
        %vm1254 = vweird.f32 %v1205
        %vm1255 = vweird.f32 %v1248
        %vm1256 = vmor %vm1254, %vm1255
        %v1257 = vsel %vm1256, %v1248, %v1253
        %v1258 = vrsqrt.pop %v1206
        %v1259 = vmul.f32 %v1258, %v1206
        %v1260 = vmul.f32 %v1259, %v1258
        %v1261 = vmul.f32 0.5, %v1260
        %v1262 = vsub.f32 1.5, %v1261
        %v1263 = vmul.f32 %v1258, %v1262
        %vm1264 = vweird.f32 %v1206
        %vm1265 = vweird.f32 %v1258
        %vm1266 = vmor %vm1264, %vm1265
        %v1267 = vsel %vm1266, %v1258, %v1263
        %v1268 = vrsqrt.pop %v1207
        %v1269 = vmul.f32 %v1268, %v1207
        %v1270 = vmul.f32 %v1269, %v1268
        %v1271 = vmul.f32 0.5, %v1270
        %v1272 = vsub.f32 1.5, %v1271
        %v1273 = vmul.f32 %v1268, %v1272
        %vm1274 = vweird.f32 %v1207
        %vm1275 = vweird.f32 %v1268
        %vm1276 = vmor %vm1274, %vm1275
        %v1277 = vsel %vm1276, %v1268, %v1273
        %v1278 = vrsqrt.pop %v1208
        %v1279 = vmul.f32 %v1278, %v1208
        %v1280 = vmul.f32 %v1279, %v1278
        %v1281 = vmul.f32 0.5, %v1280
        %v1282 = vsub.f32 1.5, %v1281
        %v1283 = vmul.f32 %v1278, %v1282
        %vm1284 = vweird.f32 %v1208
        %vm1285 = vweird.f32 %v1278
        %vm1286 = vmor %vm1284, %vm1285
        %v1287 = vsel %vm1286, %v1278, %v1283
        %v1288 = vrsqrt.pop %v1209
        %v1289 = vmul.f32 %v1288, %v1209
        %v1290 = vmul.f32 %v1289, %v1288
        %v1291 = vmul.f32 0.5, %v1290
        %v1292 = vsub.f32 1.5, %v1291
        %v1293 = vmul.f32 %v1288, %v1292
        %vm1294 = vweird.f32 %v1209
        %vm1295 = vweird.f32 %v1288
        %vm1296 = vmor %vm1294, %vm1295
        %v1297 = vsel %vm1296, %v1288, %v1293
        %v1298 = vrsqrt.pop %v1210
        %v1299 = vmul.f32 %v1298, %v1210
        %v1300 = vmul.f32 %v1299, %v1298
        %v1301 = vmul.f32 0.5, %v1300
        %v1302 = vsub.f32 1.5, %v1301
        %v1303 = vmul.f32 %v1298, %v1302
        %vm1304 = vweird.f32 %v1210
        %vm1305 = vweird.f32 %v1298
        %vm1306 = vmor %vm1304, %vm1305
        %v1307 = vsel %vm1306, %v1298, %v1303
        %v1308 = vrsqrt.pop %v1211
        %v1309 = vmul.f32 %v1308, %v1211
        %v1310 = vmul.f32 %v1309, %v1308
        %v1311 = vmul.f32 0.5, %v1310
        %v1312 = vsub.f32 1.5, %v1311
        %v1313 = vmul.f32 %v1308, %v1312
        %vm1314 = vweird.f32 %v1211
        %vm1315 = vweird.f32 %v1308
        %vm1316 = vmor %vm1314, %vm1315
        %v1317 = vsel %vm1316, %v1308, %v1313
        %v1318 = vrsqrt.pop %v1212
        %v1319 = vmul.f32 %v1318, %v1212
        %v1320 = vmul.f32 %v1319, %v1318
        %v1321 = vmul.f32 0.5, %v1320
        %v1322 = vsub.f32 1.5, %v1321
        %v1323 = vmul.f32 %v1318, %v1322
        %vm1324 = vweird.f32 %v1212
        %vm1325 = vweird.f32 %v1318
        %vm1326 = vmor %vm1324, %vm1325
        %v1327 = vsel %vm1326, %v1318, %v1323
        %v1328 = vrsqrt.pop %v1213
        %v1329 = vmul.f32 %v1328, %v1213
        %v1330 = vmul.f32 %v1329, %v1328
        %v1331 = vmul.f32 0.5, %v1330
        %v1332 = vsub.f32 1.5, %v1331
        %v1333 = vmul.f32 %v1328, %v1332
        %vm1334 = vweird.f32 %v1213
        %vm1335 = vweird.f32 %v1328
        %vm1336 = vmor %vm1334, %vm1335
        %v1337 = vsel %vm1336, %v1328, %v1333
        %v1338 = vrsqrt.pop %v1214
        %v1339 = vmul.f32 %v1338, %v1214
        %v1340 = vmul.f32 %v1339, %v1338
        %v1341 = vmul.f32 0.5, %v1340
        %v1342 = vsub.f32 1.5, %v1341
        %v1343 = vmul.f32 %v1338, %v1342
        %vm1344 = vweird.f32 %v1214
        %vm1345 = vweird.f32 %v1338
        %vm1346 = vmor %vm1344, %vm1345
        %v1347 = vsel %vm1346, %v1338, %v1343
        %v1348 = vrsqrt.pop %v1215
        %v1349 = vmul.f32 %v1348, %v1215
        %v1350 = vmul.f32 %v1349, %v1348
        %v1351 = vmul.f32 0.5, %v1350
        %v1352 = vsub.f32 1.5, %v1351
        %v1353 = vmul.f32 %v1348, %v1352
        %vm1354 = vweird.f32 %v1215
        %vm1355 = vweird.f32 %v1348
        %vm1356 = vmor %vm1354, %vm1355
        %v1357 = vsel %vm1356, %v1348, %v1353
        %v1358 = vrsqrt.pop %v1216
        %v1359 = vmul.f32 %v1358, %v1216
        %v1360 = vmul.f32 %v1359, %v1358
        %v1361 = vmul.f32 0.5, %v1360
        %v1362 = vsub.f32 1.5, %v1361
        %v1363 = vmul.f32 %v1358, %v1362
        %vm1364 = vweird.f32 %v1216
        %vm1365 = vweird.f32 %v1358
        %vm1366 = vmor %vm1364, %vm1365
        %v1367 = vsel %vm1366, %v1358, %v1363
        %v1368 = vrsqrt.pop %v1217
        %v1369 = vmul.f32 %v1368, %v1217
        %v1370 = vmul.f32 %v1369, %v1368
        %v1371 = vmul.f32 0.5, %v1370
        %v1372 = vsub.f32 1.5, %v1371
        %v1373 = vmul.f32 %v1368, %v1372
        %vm1374 = vweird.f32 %v1217
        %vm1375 = vweird.f32 %v1368
        %vm1376 = vmor %vm1374, %vm1375
        %v1377 = vsel %vm1376, %v1368, %v1373
        %v1378 = vmul.f32 %v1106, %v1227
        %v1379 = vmul.f32 %v1107, %v1237
        %v1380 = vmul.f32 %v1108, %v1247
        %v1381 = vmul.f32 %v1109, %v1257
        %v1382 = vmul.f32 %v1110, %v1267
        %v1383 = vmul.f32 %v1111, %v1277
        %v1384 = vmul.f32 %v1112, %v1287
        %v1385 = vmul.f32 %v1113, %v1297
        %v1386 = vmul.f32 %v1114, %v1307
        %v1387 = vmul.f32 %v1115, %v1317
        %v1388 = vmul.f32 %v1116, %v1327
        %v1389 = vmul.f32 %v1117, %v1337
        %v1390 = vmul.f32 %v1118, %v1347
        %v1391 = vmul.f32 %v1119, %v1357
        %v1392 = vmul.f32 %v1120, %v1367
        %v1393 = vmul.f32 %v1121, %v1377
        %v1395 = vperm.slane %v1032, 0
        %v1397 = vmul.f32 %v1378, %v1395
        %v1398 = vmul.f32 %v1379, %v1395
        %v1399 = vmul.f32 %v1380, %v1395
        %v1400 = vmul.f32 %v1381, %v1395
        %v1401 = vmul.f32 %v1382, %v1395
        %v1402 = vmul.f32 %v1383, %v1395
        %v1403 = vmul.f32 %v1384, %v1395
        %v1404 = vmul.f32 %v1385, %v1395
        %v1405 = vmul.f32 %v1386, %v1395
        %v1406 = vmul.f32 %v1387, %v1395
        %v1407 = vmul.f32 %v1388, %v1395
        %v1408 = vmul.f32 %v1389, %v1395
        %v1409 = vmul.f32 %v1390, %v1395
        %v1410 = vmul.f32 %v1391, %v1395
        %v1411 = vmul.f32 %v1392, %v1395
        %v1412 = vmul.f32 %v1393, %v1395
        %v1414 = vperm.slane %v1033, 0
        %v1416 = vadd.f32 %v1397, %v1414
        %v1417 = vadd.f32 %v1398, %v1414
        %v1418 = vadd.f32 %v1399, %v1414
        %v1419 = vadd.f32 %v1400, %v1414
        %v1420 = vadd.f32 %v1401, %v1414
        %v1421 = vadd.f32 %v1402, %v1414
        %v1422 = vadd.f32 %v1403, %v1414
        %v1423 = vadd.f32 %v1404, %v1414
        %v1424 = vadd.f32 %v1405, %v1414
        %v1425 = vadd.f32 %v1406, %v1414
        %v1426 = vadd.f32 %v1407, %v1414
        %v1427 = vadd.f32 %v1408, %v1414
        %v1428 = vadd.f32 %v1409, %v1414
        %v1429 = vadd.f32 %v1410, %v1414
        %v1430 = vadd.f32 %v1411, %v1414
        %v1431 = vadd.f32 %v1412, %v1414
        %v1432 = vpack.c.bf16 %v1417, %v1416
        %v1433 = vpack.c.bf16 %v1419, %v1418
        %v1434 = vpack.c.bf16 %v1421, %v1420
        %v1435 = vpack.c.bf16 %v1423, %v1422
        %v1436 = vpack.c.bf16 %v1425, %v1424
        %v1437 = vpack.c.bf16 %v1427, %v1426
        %v1438 = vpack.c.bf16 %v1429, %v1428
        %v1439 = vpack.c.bf16 %v1431, %v1430
        %v1440 = vld [vmem:[%s8] sm:$0xff]
        %v1441 = vld [vmem:[%s8 + $0x8] sm:$0xf]
        %v1442 = vld [vmem:[%s8 + $0xc] sm:$0xff]
        %v1443 = vld [vmem:[%s8 + $0x14] sm:$0xf]
        %v1444 = vld [vmem:[%s8 + $0x18] sm:$0xff]
        %v1445 = vld [vmem:[%s8 + $0x20] sm:$0xf]
        %v1446 = vld [vmem:[%s8 + $0x24] sm:$0xff]
        %v1447 = vld [vmem:[%s8 + $0x2c] sm:$0xf]
        %v1448 = vld [vmem:[%s9] sm:$0x7]
        %v1450 = vperm.slane %v1448, 0
        %v1451 = vperm.slane %v1448, 1
        %v1452 = vperm.slane %v1448, 2
        %v1464 = vunpack.c.l.b16 %v1440
        %v1465 = vunpack.c.h.b16 %v1440
        %v1466 = vunpack.c.l.b16 %v1441
        %v1467 = vunpack.c.l.b16 %v1442
        %v1468 = vunpack.c.h.b16 %v1442
        %v1469 = vunpack.c.l.b16 %v1443
        %v1470 = vunpack.c.l.b16 %v1444
        %v1471 = vunpack.c.h.b16 %v1444
        %v1472 = vunpack.c.l.b16 %v1445
        %v1473 = vunpack.c.l.b16 %v1446
        %v1474 = vunpack.c.h.b16 %v1446
        %v1475 = vunpack.c.l.b16 %v1447
        %v1476 = vpack.c.b16 %v1467, %v1464
        %v1477 = vpack.c.b16 %v1468, %v1465
        %v1478 = vpack.c.b16 %v1469, %v1466
        %v1479 = vpack.c.b16 %v1473, %v1470
        %v1480 = vpack.c.b16 %v1474, %v1471
        %v1481 = vpack.c.b16 %v1475, %v1472
        %v1489 = vsel %vm1034, %v1432, 0
        %v1492 = vsel %vm1034, %v1433, 0
        %v1495 = vsel %vm1034, %v1434, 0
        %v1498 = vsel %vm1034, %v1435, 0
        %v1501 = vsel %vm1034, %v1436, 0
        %v1504 = vsel %vm1034, %v1437, 0
        %v1507 = vsel %vm1034, %v1438, 0
        %v1510 = vsel %vm1034, %v1439, 0
        %1512 = vmatpush.bf16.msra.mxu0 0
        %1513 = vmatpush.bf16.msra.mxu0 0
        %1514 = vmatpush.bf16.msra.mxu0 0
        %1515 = vmatpush.bf16.msra.mxu0 0
        %1516 = vmatpush.bf16.msra.mxu0 0
        %1517 = vmatpush.bf16.msra.mxu0 0
        %1518 = vmatpush.bf16.msra.mxu0 %v1479
        %1519 = vmatpush.bf16.msra.mxu0 %v1476
        %1520 = vmatmul.bf16.gmra.mxu0 %v1489
        %v1521 = vpop.f32.mrf.mxu0
        %v1522 = vadd.f32 %v1450, %v1521
        %v1523 = vpop.f32.mrf.mxu0
        %v1524 = vadd.f32 %v1450, %v1523
        %1525 = vmatmul.bf16.gmra.mxu0 %v1492
        %v1526 = vpop.f32.mrf.mxu0
        %v1527 = vadd.f32 %v1450, %v1526
        %v1528 = vpop.f32.mrf.mxu0
        %v1529 = vadd.f32 %v1450, %v1528
        %1530 = vmatmul.bf16.gmra.mxu0 %v1495
        %v1531 = vpop.f32.mrf.mxu0
        %v1532 = vadd.f32 %v1450, %v1531
        %v1533 = vpop.f32.mrf.mxu0
        %v1534 = vadd.f32 %v1450, %v1533
        %1535 = vmatmul.bf16.gmra.mxu0 %v1498
        %v1536 = vpop.f32.mrf.mxu0
        %v1537 = vadd.f32 %v1450, %v1536
        %v1538 = vpop.f32.mrf.mxu0
        %v1539 = vadd.f32 %v1450, %v1538
        %1540 = vmatmul.bf16.gmra.mxu0 %v1501
        %v1541 = vpop.f32.mrf.mxu0
        %v1542 = vadd.f32 %v1450, %v1541
        %v1543 = vpop.f32.mrf.mxu0
        %v1544 = vadd.f32 %v1450, %v1543
        %1545 = vmatmul.bf16.gmra.mxu0 %v1504
        %v1546 = vpop.f32.mrf.mxu0
        %v1547 = vadd.f32 %v1450, %v1546
        %v1548 = vpop.f32.mrf.mxu0
        %v1549 = vadd.f32 %v1450, %v1548
        %1550 = vmatmul.bf16.gmra.mxu0 %v1507
        %v1551 = vpop.f32.mrf.mxu0
        %v1552 = vadd.f32 %v1450, %v1551
        %v1553 = vpop.f32.mrf.mxu0
        %v1554 = vadd.f32 %v1450, %v1553
        %1555 = vmatmul.bf16.gmra.mxu0 %v1510
        %v1556 = vpop.f32.mrf.mxu0
        %v1557 = vadd.f32 %v1450, %v1556
        %v1558 = vpop.f32.mrf.mxu0
        %v1559 = vadd.f32 %v1450, %v1558
        %1560 = vdwg.mxu0
        %1561 = vmatpush.bf16.msra.mxu0 0
        %1562 = vmatpush.bf16.msra.mxu0 0
        %1563 = vmatpush.bf16.msra.mxu0 0
        %1564 = vmatpush.bf16.msra.mxu0 0
        %1565 = vmatpush.bf16.msra.mxu0 0
        %1566 = vmatpush.bf16.msra.mxu0 0
        %1567 = vmatpush.bf16.msra.mxu0 %v1480
        %1568 = vmatpush.bf16.msra.mxu0 %v1477
        %1569 = vmatmul.bf16.gmra.mxu0 %v1489
        %v1570 = vpop.f32.mrf.mxu0
        %v1571 = vadd.f32 %v1451, %v1570
        %v1572 = vpop.f32.mrf.mxu0
        %v1573 = vadd.f32 %v1451, %v1572
        %1574 = vmatmul.bf16.gmra.mxu0 %v1492
        %v1575 = vpop.f32.mrf.mxu0
        %v1576 = vadd.f32 %v1451, %v1575
        %v1577 = vpop.f32.mrf.mxu0
        %v1578 = vadd.f32 %v1451, %v1577
        %1579 = vmatmul.bf16.gmra.mxu0 %v1495
        %v1580 = vpop.f32.mrf.mxu0
        %v1581 = vadd.f32 %v1451, %v1580
        %v1582 = vpop.f32.mrf.mxu0
        %v1583 = vadd.f32 %v1451, %v1582
        %1584 = vmatmul.bf16.gmra.mxu0 %v1498
        %v1585 = vpop.f32.mrf.mxu0
        %v1586 = vadd.f32 %v1451, %v1585
        %v1587 = vpop.f32.mrf.mxu0
        %v1588 = vadd.f32 %v1451, %v1587
        %1589 = vmatmul.bf16.gmra.mxu0 %v1501
        %v1590 = vpop.f32.mrf.mxu0
        %v1591 = vadd.f32 %v1451, %v1590
        %v1592 = vpop.f32.mrf.mxu0
        %v1593 = vadd.f32 %v1451, %v1592
        %1594 = vmatmul.bf16.gmra.mxu0 %v1504
        %v1595 = vpop.f32.mrf.mxu0
        %v1596 = vadd.f32 %v1451, %v1595
        %v1597 = vpop.f32.mrf.mxu0
        %v1598 = vadd.f32 %v1451, %v1597
        %1599 = vmatmul.bf16.gmra.mxu0 %v1507
        %v1600 = vpop.f32.mrf.mxu0
        %v1601 = vadd.f32 %v1451, %v1600
        %v1602 = vpop.f32.mrf.mxu0
        %v1603 = vadd.f32 %v1451, %v1602
        %1604 = vmatmul.bf16.gmra.mxu0 %v1510
        %v1605 = vpop.f32.mrf.mxu0
        %v1606 = vadd.f32 %v1451, %v1605
        %v1607 = vpop.f32.mrf.mxu0
        %v1608 = vadd.f32 %v1451, %v1607
        %1609 = vdwg.mxu0
        %1610 = vmatpush.bf16.msra.mxu0 0
        %1611 = vmatpush.bf16.msra.mxu0 0
        %1612 = vmatpush.bf16.msra.mxu0 0
        %1613 = vmatpush.bf16.msra.mxu0 0
        %1614 = vmatpush.bf16.msra.mxu0 0
        %1615 = vmatpush.bf16.msra.mxu0 0
        %1616 = vmatpush.bf16.msra.mxu0 %v1481
        %1617 = vmatpush.bf16.msra.mxu0 %v1478
        %1618 = vmatmul.bf16.gmra.mxu0 %v1489
        %v1619 = vpop.f32.mrf.mxu0
        %v1620 = vadd.f32 %v1452, %v1619
        %v1621 = vpop.f32.mrf.mxu0
        %v1622 = vadd.f32 %v1452, %v1621
        %1623 = vmatmul.bf16.gmra.mxu0 %v1492
        %v1624 = vpop.f32.mrf.mxu0
        %v1625 = vadd.f32 %v1452, %v1624
        %v1626 = vpop.f32.mrf.mxu0
        %v1627 = vadd.f32 %v1452, %v1626
        %1628 = vmatmul.bf16.gmra.mxu0 %v1495
        %v1629 = vpop.f32.mrf.mxu0
        %v1630 = vadd.f32 %v1452, %v1629
        %v1631 = vpop.f32.mrf.mxu0
        %v1632 = vadd.f32 %v1452, %v1631
        %1633 = vmatmul.bf16.gmra.mxu0 %v1498
        %v1634 = vpop.f32.mrf.mxu0
        %v1635 = vadd.f32 %v1452, %v1634
        %v1636 = vpop.f32.mrf.mxu0
        %v1637 = vadd.f32 %v1452, %v1636
        %1638 = vmatmul.bf16.gmra.mxu0 %v1501
        %v1639 = vpop.f32.mrf.mxu0
        %v1640 = vadd.f32 %v1452, %v1639
        %v1641 = vpop.f32.mrf.mxu0
        %v1642 = vadd.f32 %v1452, %v1641
        %1643 = vmatmul.bf16.gmra.mxu0 %v1504
        %v1644 = vpop.f32.mrf.mxu0
        %v1645 = vadd.f32 %v1452, %v1644
        %v1646 = vpop.f32.mrf.mxu0
        %v1647 = vadd.f32 %v1452, %v1646
        %1648 = vmatmul.bf16.gmra.mxu0 %v1507
        %v1649 = vpop.f32.mrf.mxu0
        %v1650 = vadd.f32 %v1452, %v1649
        %v1651 = vpop.f32.mrf.mxu0
        %v1652 = vadd.f32 %v1452, %v1651
        %1653 = vmatmul.bf16.gmra.mxu0 %v1510
        %v1654 = vpop.f32.mrf.mxu0
        %v1655 = vadd.f32 %v1452, %v1654
        %v1656 = vpop.f32.mrf.mxu0
        %v1657 = vadd.f32 %v1452, %v1656
        %1658 = vdwg.mxu0
        %v1659 = vpack.c.bf16 %v1524, %v1522
        %v1660 = vpack.c.bf16 %v1529, %v1527
        %v1661 = vpack.c.bf16 %v1534, %v1532
        %v1662 = vpack.c.bf16 %v1539, %v1537
        %v1663 = vpack.c.bf16 %v1544, %v1542
        %v1664 = vpack.c.bf16 %v1549, %v1547
        %v1665 = vpack.c.bf16 %v1554, %v1552
        %v1666 = vpack.c.bf16 %v1559, %v1557
        %v1667 = vmul.f32 %v1571, %v1000
        %v1668 = vmul.f32 %v1573, %v1000
        %v1669 = vmul.f32 %v1576, %v1000
        %v1670 = vmul.f32 %v1578, %v1000
        %v1671 = vmul.f32 %v1581, %v1000
        %v1672 = vmul.f32 %v1583, %v1000
        %v1673 = vmul.f32 %v1586, %v1000
        %v1674 = vmul.f32 %v1588, %v1000
        %v1675 = vmul.f32 %v1591, %v1000
        %v1676 = vmul.f32 %v1593, %v1000
        %v1677 = vmul.f32 %v1596, %v1000
        %v1678 = vmul.f32 %v1598, %v1000
        %v1679 = vmul.f32 %v1601, %v1000
        %v1680 = vmul.f32 %v1603, %v1000
        %v1681 = vmul.f32 %v1606, %v1000
        %v1682 = vmul.f32 %v1608, %v1000
        %v1683 = vpack.c.bf16 %v1668, %v1667
        %v1684 = vpack.c.bf16 %v1670, %v1669
        %v1685 = vpack.c.bf16 %v1672, %v1671
        %v1686 = vpack.c.bf16 %v1674, %v1673
        %v1687 = vpack.c.bf16 %v1676, %v1675
        %v1688 = vpack.c.bf16 %v1678, %v1677
        %v1689 = vpack.c.bf16 %v1680, %v1679
        %v1690 = vpack.c.bf16 %v1682, %v1681
        %v1691 = vmul.f32 %v1620, %v1000
        %v1692 = vmul.f32 %v1622, %v1000
        %v1693 = vmul.f32 %v1625, %v1000
        %v1694 = vmul.f32 %v1627, %v1000
        %v1695 = vmul.f32 %v1630, %v1000
        %v1696 = vmul.f32 %v1632, %v1000
        %v1697 = vmul.f32 %v1635, %v1000
        %v1698 = vmul.f32 %v1637, %v1000
        %v1699 = vmul.f32 %v1640, %v1000
        %v1700 = vmul.f32 %v1642, %v1000
        %v1701 = vmul.f32 %v1645, %v1000
        %v1702 = vmul.f32 %v1647, %v1000
        %v1703 = vmul.f32 %v1650, %v1000
        %v1704 = vmul.f32 %v1652, %v1000
        %v1705 = vmul.f32 %v1655, %v1000
        %v1706 = vmul.f32 %v1657, %v1000
        %v1707 = vpack.c.bf16 %v1692, %v1691
        %v1708 = vpack.c.bf16 %v1694, %v1693
        %v1709 = vpack.c.bf16 %v1696, %v1695
        %v1710 = vpack.c.bf16 %v1698, %v1697
        %v1711 = vpack.c.bf16 %v1700, %v1699
        %v1712 = vpack.c.bf16 %v1702, %v1701
        %v1713 = vpack.c.bf16 %v1704, %v1703
        %v1714 = vpack.c.bf16 %v1706, %v1705
        %1715 = vmatpush.bf16.xpose.msra.mxu0 %v1690
        %1716 = vmatpush.bf16.xpose.msra.mxu0 %v1689
        %1717 = vmatpush.bf16.xpose.msra.mxu0 %v1688
        %1718 = vmatpush.bf16.xpose.msra.mxu0 %v1687
        %1719 = vmatpush.bf16.xpose.msra.mxu0 %v1686
        %1720 = vmatpush.bf16.xpose.msra.mxu0 %v1685
        %1721 = vmatpush.bf16.xpose.msra.mxu0 %v1684
        %1722 = vmatpush.bf16.xpose.msra.mxu0 %v1683
        %1723 = vmatmul.bf16.gmra.mxu0 %v1659
        %v1724 = vpop.f32.mrf.mxu0
        %v1725 = vadd.f32 0.0, %v1724
        %v1726 = vpop.f32.mrf.mxu0
        %v1727 = vadd.f32 0.0, %v1726
        %1728 = vmatmul.bf16.gmra.mxu0 %v1660
        %v1729 = vpop.f32.mrf.mxu0
        %v1730 = vadd.f32 0.0, %v1729
        %v1731 = vpop.f32.mrf.mxu0
        %v1732 = vadd.f32 0.0, %v1731
        %1733 = vmatmul.bf16.gmra.mxu0 %v1661
        %v1734 = vpop.f32.mrf.mxu0
        %v1735 = vadd.f32 0.0, %v1734
        %v1736 = vpop.f32.mrf.mxu0
        %v1737 = vadd.f32 0.0, %v1736
        %1738 = vmatmul.bf16.gmra.mxu0 %v1662
        %v1739 = vpop.f32.mrf.mxu0
        %v1740 = vadd.f32 0.0, %v1739
        %v1741 = vpop.f32.mrf.mxu0
        %v1742 = vadd.f32 0.0, %v1741
        %1743 = vmatmul.bf16.gmra.mxu0 %v1663
        %v1744 = vpop.f32.mrf.mxu0
        %v1745 = vadd.f32 0.0, %v1744
        %v1746 = vpop.f32.mrf.mxu0
        %v1747 = vadd.f32 0.0, %v1746
        %1748 = vmatmul.bf16.gmra.mxu0 %v1664
        %v1749 = vpop.f32.mrf.mxu0
        %v1750 = vadd.f32 0.0, %v1749
        %v1751 = vpop.f32.mrf.mxu0
        %v1752 = vadd.f32 0.0, %v1751
        %1753 = vmatmul.bf16.gmra.mxu0 %v1665
        %v1754 = vpop.f32.mrf.mxu0
        %v1755 = vadd.f32 0.0, %v1754
        %v1756 = vpop.f32.mrf.mxu0
        %v1757 = vadd.f32 0.0, %v1756
        %1758 = vmatmul.bf16.gmra.mxu0 %v1666
        %v1759 = vpop.f32.mrf.mxu0
        %v1760 = vadd.f32 0.0, %v1759
        %v1761 = vpop.f32.mrf.mxu0
        %v1762 = vadd.f32 0.0, %v1761
        %1763 = vdwg.mxu0
        %v1764 = vmul.f32 %v1725, 0.35355338
        %v1765 = vmul.f32 %v1727, 0.35355338
        %v1766 = vmul.f32 %v1730, 0.35355338
        %v1767 = vmul.f32 %v1732, 0.35355338
        %v1768 = vmul.f32 %v1735, 0.35355338
        %v1769 = vmul.f32 %v1737, 0.35355338
        %v1770 = vmul.f32 %v1740, 0.35355338
        %v1771 = vmul.f32 %v1742, 0.35355338
        %v1772 = vmul.f32 %v1745, 0.35355338
        %v1773 = vmul.f32 %v1747, 0.35355338
        %v1774 = vmul.f32 %v1750, 0.35355338
        %v1775 = vmul.f32 %v1752, 0.35355338
        %v1776 = vmul.f32 %v1755, 0.35355338
        %v1777 = vmul.f32 %v1757, 0.35355338
        %v1778 = vmul.f32 %v1760, 0.35355338
        %v1779 = vmul.f32 %v1762, 0.35355338
        %v1780 = vadd.f32 %v1764, %v1016
        %v1781 = vadd.f32 %v1765, %v1017
        %v1782 = vadd.f32 %v1766, %v1018
        %v1783 = vadd.f32 %v1767, %v1019
        %v1784 = vadd.f32 %v1768, %v1020
        %v1785 = vadd.f32 %v1769, %v1021
        %v1786 = vadd.f32 %v1770, %v1022
        %v1787 = vadd.f32 %v1771, %v1023
        %v1788 = vadd.f32 %v1772, %v1024
        %v1789 = vadd.f32 %v1773, %v1025
        %v1790 = vadd.f32 %v1774, %v1026
        %v1791 = vadd.f32 %v1775, %v1027
        %v1792 = vadd.f32 %v1776, %v1028
        %v1793 = vadd.f32 %v1777, %v1029
        %v1794 = vadd.f32 %v1778, %v1030
        %v1795 = vadd.f32 %v1779, %v1031
        %1796 = vmax.xlane.f32.xlu0 %v1780
        %v1797 = vpop.xlane.xlu0 %1796
        %1798 = vmax.xlane.f32.xlu0 %v1781
        %v1799 = vpop.xlane.xlu0 %1798
        %1800 = vmax.xlane.f32.xlu0 %v1782
        %v1801 = vpop.xlane.xlu0 %1800
        %1802 = vmax.xlane.f32.xlu0 %v1783
        %v1803 = vpop.xlane.xlu0 %1802
        %1804 = vmax.xlane.f32.xlu0 %v1784
        %v1805 = vpop.xlane.xlu0 %1804
        %1806 = vmax.xlane.f32.xlu0 %v1785
        %v1807 = vpop.xlane.xlu0 %1806
        %1808 = vmax.xlane.f32.xlu0 %v1786
        %v1809 = vpop.xlane.xlu0 %1808
        %1810 = vmax.xlane.f32.xlu0 %v1787
        %v1811 = vpop.xlane.xlu0 %1810
        %1812 = vmax.xlane.f32.xlu0 %v1788
        %v1813 = vpop.xlane.xlu0 %1812
        %1814 = vmax.xlane.f32.xlu0 %v1789
        %v1815 = vpop.xlane.xlu0 %1814
        %1816 = vmax.xlane.f32.xlu0 %v1790
        %v1817 = vpop.xlane.xlu0 %1816
        %1818 = vmax.xlane.f32.xlu0 %v1791
        %v1819 = vpop.xlane.xlu0 %1818
        %1820 = vmax.xlane.f32.xlu0 %v1792
        %v1821 = vpop.xlane.xlu0 %1820
        %1822 = vmax.xlane.f32.xlu0 %v1793
        %v1823 = vpop.xlane.xlu0 %1822
        %1824 = vmax.xlane.f32.xlu0 %v1794
        %v1825 = vpop.xlane.xlu0 %1824
        %1826 = vmax.xlane.f32.xlu0 %v1795
        %v1827 = vpop.xlane.xlu0 %1826
        %v1828 = vsub.f32 %v1780, %v1797
        %v1829 = vsub.f32 %v1781, %v1799
        %v1830 = vsub.f32 %v1782, %v1801
        %v1831 = vsub.f32 %v1783, %v1803
        %v1832 = vsub.f32 %v1784, %v1805
        %v1833 = vsub.f32 %v1785, %v1807
        %v1834 = vsub.f32 %v1786, %v1809
        %v1835 = vsub.f32 %v1787, %v1811
        %v1836 = vsub.f32 %v1788, %v1813
        %v1837 = vsub.f32 %v1789, %v1815
        %v1838 = vsub.f32 %v1790, %v1817
        %v1839 = vsub.f32 %v1791, %v1819
        %v1840 = vsub.f32 %v1792, %v1821
        %v1841 = vsub.f32 %v1793, %v1823
        %v1842 = vsub.f32 %v1794, %v1825
        %v1843 = vsub.f32 %v1795, %v1827
        %v1844 = vmul.f32 %v1828, 1.442695
        %v1845 = vpow.pop %v1844
        %v1846 = vmul.f32 %v1829, 1.442695
        %v1847 = vpow.pop %v1846
        %v1848 = vmul.f32 %v1830, 1.442695
        %v1849 = vpow.pop %v1848
        %v1850 = vmul.f32 %v1831, 1.442695
        %v1851 = vpow.pop %v1850
        %v1852 = vmul.f32 %v1832, 1.442695
        %v1853 = vpow.pop %v1852
        %v1854 = vmul.f32 %v1833, 1.442695
        %v1855 = vpow.pop %v1854
        %v1856 = vmul.f32 %v1834, 1.442695
        %v1857 = vpow.pop %v1856
        %v1858 = vmul.f32 %v1835, 1.442695
        %v1859 = vpow.pop %v1858
        %v1860 = vmul.f32 %v1836, 1.442695
        %v1861 = vpow.pop %v1860
        %v1862 = vmul.f32 %v1837, 1.442695
        %v1863 = vpow.pop %v1862
        %v1864 = vmul.f32 %v1838, 1.442695
        %v1865 = vpow.pop %v1864
        %v1866 = vmul.f32 %v1839, 1.442695
        %v1867 = vpow.pop %v1866
        %v1868 = vmul.f32 %v1840, 1.442695
        %v1869 = vpow.pop %v1868
        %v1870 = vmul.f32 %v1841, 1.442695
        %v1871 = vpow.pop %v1870
        %v1872 = vmul.f32 %v1842, 1.442695
        %v1873 = vpow.pop %v1872
        %v1874 = vmul.f32 %v1843, 1.442695
        %v1875 = vpow.pop %v1874
        %1876 = vadd.xlane.f32.xlu0 %v1845
        %v1877 = vpop.xlane.xlu0 %1876
        %1878 = vadd.xlane.f32.xlu0 %v1847
        %v1879 = vpop.xlane.xlu0 %1878
        %1880 = vadd.xlane.f32.xlu0 %v1849
        %v1881 = vpop.xlane.xlu0 %1880
        %1882 = vadd.xlane.f32.xlu0 %v1851
        %v1883 = vpop.xlane.xlu0 %1882
        %1884 = vadd.xlane.f32.xlu0 %v1853
        %v1885 = vpop.xlane.xlu0 %1884
        %1886 = vadd.xlane.f32.xlu0 %v1855
        %v1887 = vpop.xlane.xlu0 %1886
        %1888 = vadd.xlane.f32.xlu0 %v1857
        %v1889 = vpop.xlane.xlu0 %1888
        %1890 = vadd.xlane.f32.xlu0 %v1859
        %v1891 = vpop.xlane.xlu0 %1890
        %1892 = vadd.xlane.f32.xlu0 %v1861
        %v1893 = vpop.xlane.xlu0 %1892
        %1894 = vadd.xlane.f32.xlu0 %v1863
        %v1895 = vpop.xlane.xlu0 %1894
        %1896 = vadd.xlane.f32.xlu0 %v1865
        %v1897 = vpop.xlane.xlu0 %1896
        %1898 = vadd.xlane.f32.xlu0 %v1867
        %v1899 = vpop.xlane.xlu0 %1898
        %1900 = vadd.xlane.f32.xlu0 %v1869
        %v1901 = vpop.xlane.xlu0 %1900
        %1902 = vadd.xlane.f32.xlu0 %v1871
        %v1903 = vpop.xlane.xlu0 %1902
        %1904 = vadd.xlane.f32.xlu0 %v1873
        %v1905 = vpop.xlane.xlu0 %1904
        %1906 = vadd.xlane.f32.xlu0 %v1875
        %v1907 = vpop.xlane.xlu0 %1906
        %v1908 = vrcp.pop %v1877
        %v1909 = vrcp.pop %v1879
        %v1910 = vrcp.pop %v1881
        %v1911 = vrcp.pop %v1883
        %v1912 = vrcp.pop %v1885
        %v1913 = vrcp.pop %v1887
        %v1914 = vrcp.pop %v1889
        %v1915 = vrcp.pop %v1891
        %v1916 = vrcp.pop %v1893
        %v1917 = vrcp.pop %v1895
        %v1918 = vrcp.pop %v1897
        %v1919 = vrcp.pop %v1899
        %v1920 = vrcp.pop %v1901
        %v1921 = vrcp.pop %v1903
        %v1922 = vrcp.pop %v1905
        %v1923 = vrcp.pop %v1907
        %v1924 = vmul.f32 %v1845, %v1908
        %v1925 = vmul.f32 %v1847, %v1909
        %v1926 = vmul.f32 %v1849, %v1910
        %v1927 = vmul.f32 %v1851, %v1911
        %v1928 = vmul.f32 %v1853, %v1912
        %v1929 = vmul.f32 %v1855, %v1913
        %v1930 = vmul.f32 %v1857, %v1914
        %v1931 = vmul.f32 %v1859, %v1915
        %v1932 = vmul.f32 %v1861, %v1916
        %v1933 = vmul.f32 %v1863, %v1917
        %v1934 = vmul.f32 %v1865, %v1918
        %v1935 = vmul.f32 %v1867, %v1919
        %v1936 = vmul.f32 %v1869, %v1920
        %v1937 = vmul.f32 %v1871, %v1921
        %v1938 = vmul.f32 %v1873, %v1922
        %v1939 = vmul.f32 %v1875, %v1923
        %v1940 = vpack.c.bf16 %v1925, %v1924
        %v1941 = vpack.c.bf16 %v1927, %v1926
        %v1942 = vpack.c.bf16 %v1929, %v1928
        %v1943 = vpack.c.bf16 %v1931, %v1930
        %v1944 = vpack.c.bf16 %v1933, %v1932
        %v1945 = vpack.c.bf16 %v1935, %v1934
        %v1946 = vpack.c.bf16 %v1937, %v1936
        %v1947 = vpack.c.bf16 %v1939, %v1938
        %v1948 = vmul.f32 %v1571, %v1005
        %v1949 = vmul.f32 %v1573, %v1005
        %v1950 = vmul.f32 %v1576, %v1005
        %v1951 = vmul.f32 %v1578, %v1005
        %v1952 = vmul.f32 %v1581, %v1005
        %v1953 = vmul.f32 %v1583, %v1005
        %v1954 = vmul.f32 %v1586, %v1005
        %v1955 = vmul.f32 %v1588, %v1005
        %v1956 = vmul.f32 %v1591, %v1005
        %v1957 = vmul.f32 %v1593, %v1005
        %v1958 = vmul.f32 %v1596, %v1005
        %v1959 = vmul.f32 %v1598, %v1005
        %v1960 = vmul.f32 %v1601, %v1005
        %v1961 = vmul.f32 %v1603, %v1005
        %v1962 = vmul.f32 %v1606, %v1005
        %v1963 = vmul.f32 %v1608, %v1005
        %v1964 = vpack.c.bf16 %v1949, %v1948
        %v1965 = vpack.c.bf16 %v1951, %v1950
        %v1966 = vpack.c.bf16 %v1953, %v1952
        %v1967 = vpack.c.bf16 %v1955, %v1954
        %v1968 = vpack.c.bf16 %v1957, %v1956
        %v1969 = vpack.c.bf16 %v1959, %v1958
        %v1970 = vpack.c.bf16 %v1961, %v1960
        %v1971 = vpack.c.bf16 %v1963, %v1962
        %v1972 = vmul.f32 %v1620, %v1005
        %v1973 = vmul.f32 %v1622, %v1005
        %v1974 = vmul.f32 %v1625, %v1005
        %v1975 = vmul.f32 %v1627, %v1005
        %v1976 = vmul.f32 %v1630, %v1005
        %v1977 = vmul.f32 %v1632, %v1005
        %v1978 = vmul.f32 %v1635, %v1005
        %v1979 = vmul.f32 %v1637, %v1005
        %v1980 = vmul.f32 %v1640, %v1005
        %v1981 = vmul.f32 %v1642, %v1005
        %v1982 = vmul.f32 %v1645, %v1005
        %v1983 = vmul.f32 %v1647, %v1005
        %v1984 = vmul.f32 %v1650, %v1005
        %v1985 = vmul.f32 %v1652, %v1005
        %v1986 = vmul.f32 %v1655, %v1005
        %v1987 = vmul.f32 %v1657, %v1005
        %v1988 = vpack.c.bf16 %v1973, %v1972
        %v1989 = vpack.c.bf16 %v1975, %v1974
        %v1990 = vpack.c.bf16 %v1977, %v1976
        %v1991 = vpack.c.bf16 %v1979, %v1978
        %v1992 = vpack.c.bf16 %v1981, %v1980
        %v1993 = vpack.c.bf16 %v1983, %v1982
        %v1994 = vpack.c.bf16 %v1985, %v1984
        %v1995 = vpack.c.bf16 %v1987, %v1986
        %1996 = vmatpush.bf16.xpose.msra.mxu0 %v1971
        %1997 = vmatpush.bf16.xpose.msra.mxu0 %v1970
        %1998 = vmatpush.bf16.xpose.msra.mxu0 %v1969
        %1999 = vmatpush.bf16.xpose.msra.mxu0 %v1968
        %2000 = vmatpush.bf16.xpose.msra.mxu0 %v1967
        %2001 = vmatpush.bf16.xpose.msra.mxu0 %v1966
        %2002 = vmatpush.bf16.xpose.msra.mxu0 %v1965
        %2003 = vmatpush.bf16.xpose.msra.mxu0 %v1964
        %2004 = vmatmul.bf16.gmra.mxu0 %v1659
        %v2005 = vpop.f32.mrf.mxu0
        %v2006 = vadd.f32 0.0, %v2005
        %v2007 = vpop.f32.mrf.mxu0
        %v2008 = vadd.f32 0.0, %v2007
        %2009 = vmatmul.bf16.gmra.mxu0 %v1660
        %v2010 = vpop.f32.mrf.mxu0
        %v2011 = vadd.f32 0.0, %v2010
        %v2012 = vpop.f32.mrf.mxu0
        %v2013 = vadd.f32 0.0, %v2012
        %2014 = vmatmul.bf16.gmra.mxu0 %v1661
        %v2015 = vpop.f32.mrf.mxu0
        %v2016 = vadd.f32 0.0, %v2015
        %v2017 = vpop.f32.mrf.mxu0
        %v2018 = vadd.f32 0.0, %v2017
        %2019 = vmatmul.bf16.gmra.mxu0 %v1662
        %v2020 = vpop.f32.mrf.mxu0
        %v2021 = vadd.f32 0.0, %v2020
        %v2022 = vpop.f32.mrf.mxu0
        %v2023 = vadd.f32 0.0, %v2022
        %2024 = vmatmul.bf16.gmra.mxu0 %v1663
        %v2025 = vpop.f32.mrf.mxu0
        %v2026 = vadd.f32 0.0, %v2025
        %v2027 = vpop.f32.mrf.mxu0
        %v2028 = vadd.f32 0.0, %v2027
        %2029 = vmatmul.bf16.gmra.mxu0 %v1664
        %v2030 = vpop.f32.mrf.mxu0
        %v2031 = vadd.f32 0.0, %v2030
        %v2032 = vpop.f32.mrf.mxu0
        %v2033 = vadd.f32 0.0, %v2032
        %2034 = vmatmul.bf16.gmra.mxu0 %v1665
        %v2035 = vpop.f32.mrf.mxu0
        %v2036 = vadd.f32 0.0, %v2035
        %v2037 = vpop.f32.mrf.mxu0
        %v2038 = vadd.f32 0.0, %v2037
        %2039 = vmatmul.bf16.gmra.mxu0 %v1666
        %v2040 = vpop.f32.mrf.mxu0
        %v2041 = vadd.f32 0.0, %v2040
        %v2042 = vpop.f32.mrf.mxu0
        %v2043 = vadd.f32 0.0, %v2042
        %2044 = vdwg.mxu0
        %v2045 = vmul.f32 %v2006, 0.35355338
        %v2046 = vmul.f32 %v2008, 0.35355338
        %v2047 = vmul.f32 %v2011, 0.35355338
        %v2048 = vmul.f32 %v2013, 0.35355338
        %v2049 = vmul.f32 %v2016, 0.35355338
        %v2050 = vmul.f32 %v2018, 0.35355338
        %v2051 = vmul.f32 %v2021, 0.35355338
        %v2052 = vmul.f32 %v2023, 0.35355338
        %v2053 = vmul.f32 %v2026, 0.35355338
        %v2054 = vmul.f32 %v2028, 0.35355338
        %v2055 = vmul.f32 %v2031, 0.35355338
        %v2056 = vmul.f32 %v2033, 0.35355338
        %v2057 = vmul.f32 %v2036, 0.35355338
        %v2058 = vmul.f32 %v2038, 0.35355338
        %v2059 = vmul.f32 %v2041, 0.35355338
        %v2060 = vmul.f32 %v2043, 0.35355338
        %v2061 = vadd.f32 %v2045, %v1016
        %v2062 = vadd.f32 %v2046, %v1017
        %v2063 = vadd.f32 %v2047, %v1018
        %v2064 = vadd.f32 %v2048, %v1019
        %v2065 = vadd.f32 %v2049, %v1020
        %v2066 = vadd.f32 %v2050, %v1021
        %v2067 = vadd.f32 %v2051, %v1022
        %v2068 = vadd.f32 %v2052, %v1023
        %v2069 = vadd.f32 %v2053, %v1024
        %v2070 = vadd.f32 %v2054, %v1025
        %v2071 = vadd.f32 %v2055, %v1026
        %v2072 = vadd.f32 %v2056, %v1027
        %v2073 = vadd.f32 %v2057, %v1028
        %v2074 = vadd.f32 %v2058, %v1029
        %v2075 = vadd.f32 %v2059, %v1030
        %v2076 = vadd.f32 %v2060, %v1031
        %2077 = vmax.xlane.f32.xlu0 %v2061
        %v2078 = vpop.xlane.xlu0 %2077
        %2079 = vmax.xlane.f32.xlu0 %v2062
        %v2080 = vpop.xlane.xlu0 %2079
        %2081 = vmax.xlane.f32.xlu0 %v2063
        %v2082 = vpop.xlane.xlu0 %2081
        %2083 = vmax.xlane.f32.xlu0 %v2064
        %v2084 = vpop.xlane.xlu0 %2083
        %2085 = vmax.xlane.f32.xlu0 %v2065
        %v2086 = vpop.xlane.xlu0 %2085
        %2087 = vmax.xlane.f32.xlu0 %v2066
        %v2088 = vpop.xlane.xlu0 %2087
        %2089 = vmax.xlane.f32.xlu0 %v2067
        %v2090 = vpop.xlane.xlu0 %2089
        %2091 = vmax.xlane.f32.xlu0 %v2068
        %v2092 = vpop.xlane.xlu0 %2091
        %2093 = vmax.xlane.f32.xlu0 %v2069
        %v2094 = vpop.xlane.xlu0 %2093
        %2095 = vmax.xlane.f32.xlu0 %v2070
        %v2096 = vpop.xlane.xlu0 %2095
        %2097 = vmax.xlane.f32.xlu0 %v2071
        %v2098 = vpop.xlane.xlu0 %2097
        %2099 = vmax.xlane.f32.xlu0 %v2072
        %v2100 = vpop.xlane.xlu0 %2099
        %2101 = vmax.xlane.f32.xlu0 %v2073
        %v2102 = vpop.xlane.xlu0 %2101
        %2103 = vmax.xlane.f32.xlu0 %v2074
        %v2104 = vpop.xlane.xlu0 %2103
        %2105 = vmax.xlane.f32.xlu0 %v2075
        %v2106 = vpop.xlane.xlu0 %2105
        %2107 = vmax.xlane.f32.xlu0 %v2076
        %v2108 = vpop.xlane.xlu0 %2107
        %v2109 = vsub.f32 %v2061, %v2078
        %v2110 = vsub.f32 %v2062, %v2080
        %v2111 = vsub.f32 %v2063, %v2082
        %v2112 = vsub.f32 %v2064, %v2084
        %v2113 = vsub.f32 %v2065, %v2086
        %v2114 = vsub.f32 %v2066, %v2088
        %v2115 = vsub.f32 %v2067, %v2090
        %v2116 = vsub.f32 %v2068, %v2092
        %v2117 = vsub.f32 %v2069, %v2094
        %v2118 = vsub.f32 %v2070, %v2096
        %v2119 = vsub.f32 %v2071, %v2098
        %v2120 = vsub.f32 %v2072, %v2100
        %v2121 = vsub.f32 %v2073, %v2102
        %v2122 = vsub.f32 %v2074, %v2104
        %v2123 = vsub.f32 %v2075, %v2106
        %v2124 = vsub.f32 %v2076, %v2108
        %v2125 = vmul.f32 %v2109, 1.442695
        %v2126 = vpow.pop %v2125
        %v2127 = vmul.f32 %v2110, 1.442695
        %v2128 = vpow.pop %v2127
        %v2129 = vmul.f32 %v2111, 1.442695
        %v2130 = vpow.pop %v2129
        %v2131 = vmul.f32 %v2112, 1.442695
        %v2132 = vpow.pop %v2131
        %v2133 = vmul.f32 %v2113, 1.442695
        %v2134 = vpow.pop %v2133
        %v2135 = vmul.f32 %v2114, 1.442695
        %v2136 = vpow.pop %v2135
        %v2137 = vmul.f32 %v2115, 1.442695
        %v2138 = vpow.pop %v2137
        %v2139 = vmul.f32 %v2116, 1.442695
        %v2140 = vpow.pop %v2139
        %v2141 = vmul.f32 %v2117, 1.442695
        %v2142 = vpow.pop %v2141
        %v2143 = vmul.f32 %v2118, 1.442695
        %v2144 = vpow.pop %v2143
        %v2145 = vmul.f32 %v2119, 1.442695
        %v2146 = vpow.pop %v2145
        %v2147 = vmul.f32 %v2120, 1.442695
        %v2148 = vpow.pop %v2147
        %v2149 = vmul.f32 %v2121, 1.442695
        %v2150 = vpow.pop %v2149
        %v2151 = vmul.f32 %v2122, 1.442695
        %v2152 = vpow.pop %v2151
        %v2153 = vmul.f32 %v2123, 1.442695
        %v2154 = vpow.pop %v2153
        %v2155 = vmul.f32 %v2124, 1.442695
        %v2156 = vpow.pop %v2155
        %2157 = vadd.xlane.f32.xlu0 %v2126
        %v2158 = vpop.xlane.xlu0 %2157
        %2159 = vadd.xlane.f32.xlu0 %v2128
        %v2160 = vpop.xlane.xlu0 %2159
        %2161 = vadd.xlane.f32.xlu0 %v2130
        %v2162 = vpop.xlane.xlu0 %2161
        %2163 = vadd.xlane.f32.xlu0 %v2132
        %v2164 = vpop.xlane.xlu0 %2163
        %2165 = vadd.xlane.f32.xlu0 %v2134
        %v2166 = vpop.xlane.xlu0 %2165
        %2167 = vadd.xlane.f32.xlu0 %v2136
        %v2168 = vpop.xlane.xlu0 %2167
        %2169 = vadd.xlane.f32.xlu0 %v2138
        %v2170 = vpop.xlane.xlu0 %2169
        %2171 = vadd.xlane.f32.xlu0 %v2140
        %v2172 = vpop.xlane.xlu0 %2171
        %2173 = vadd.xlane.f32.xlu0 %v2142
        %v2174 = vpop.xlane.xlu0 %2173
        %2175 = vadd.xlane.f32.xlu0 %v2144
        %v2176 = vpop.xlane.xlu0 %2175
        %2177 = vadd.xlane.f32.xlu0 %v2146
        %v2178 = vpop.xlane.xlu0 %2177
        %2179 = vadd.xlane.f32.xlu0 %v2148
        %v2180 = vpop.xlane.xlu0 %2179
        %2181 = vadd.xlane.f32.xlu0 %v2150
        %v2182 = vpop.xlane.xlu0 %2181
        %2183 = vadd.xlane.f32.xlu0 %v2152
        %v2184 = vpop.xlane.xlu0 %2183
        %2185 = vadd.xlane.f32.xlu0 %v2154
        %v2186 = vpop.xlane.xlu0 %2185
        %2187 = vadd.xlane.f32.xlu0 %v2156
        %v2188 = vpop.xlane.xlu0 %2187
        %v2189 = vrcp.pop %v2158
        %v2190 = vrcp.pop %v2160
        %v2191 = vrcp.pop %v2162
        %v2192 = vrcp.pop %v2164
        %v2193 = vrcp.pop %v2166
        %v2194 = vrcp.pop %v2168
        %v2195 = vrcp.pop %v2170
        %v2196 = vrcp.pop %v2172
        %v2197 = vrcp.pop %v2174
        %v2198 = vrcp.pop %v2176
        %v2199 = vrcp.pop %v2178
        %v2200 = vrcp.pop %v2180
        %v2201 = vrcp.pop %v2182
        %v2202 = vrcp.pop %v2184
        %v2203 = vrcp.pop %v2186
        %v2204 = vrcp.pop %v2188
        %v2205 = vmul.f32 %v2126, %v2189
        %v2206 = vmul.f32 %v2128, %v2190
        %v2207 = vmul.f32 %v2130, %v2191
        %v2208 = vmul.f32 %v2132, %v2192
        %v2209 = vmul.f32 %v2134, %v2193
        %v2210 = vmul.f32 %v2136, %v2194
        %v2211 = vmul.f32 %v2138, %v2195
        %v2212 = vmul.f32 %v2140, %v2196
        %v2213 = vmul.f32 %v2142, %v2197
        %v2214 = vmul.f32 %v2144, %v2198
        %v2215 = vmul.f32 %v2146, %v2199
        %v2216 = vmul.f32 %v2148, %v2200
        %v2217 = vmul.f32 %v2150, %v2201
        %v2218 = vmul.f32 %v2152, %v2202
        %v2219 = vmul.f32 %v2154, %v2203
        %v2220 = vmul.f32 %v2156, %v2204
        %v2221 = vpack.c.bf16 %v2206, %v2205
        %v2222 = vpack.c.bf16 %v2208, %v2207
        %v2223 = vpack.c.bf16 %v2210, %v2209
        %v2224 = vpack.c.bf16 %v2212, %v2211
        %v2225 = vpack.c.bf16 %v2214, %v2213
        %v2226 = vpack.c.bf16 %v2216, %v2215
        %v2227 = vpack.c.bf16 %v2218, %v2217
        %v2228 = vpack.c.bf16 %v2220, %v2219
        %2229 = vmatpush.bf16.msra.mxu0 %v1995
        %2230 = vmatpush.bf16.msra.mxu0 %v1994
        %2231 = vmatpush.bf16.msra.mxu0 %v1993
        %2232 = vmatpush.bf16.msra.mxu0 %v1992
        %2233 = vmatpush.bf16.msra.mxu0 %v1991
        %2234 = vmatpush.bf16.msra.mxu0 %v1990
        %2235 = vmatpush.bf16.msra.mxu0 %v1989
        %2236 = vmatpush.bf16.msra.mxu0 %v1988
        %2237 = vmatmul.bf16.gmra.mxu0 %v2221
        %v2238 = vpop.f32.mrf.mxu0
        %v2239 = vadd.f32 0.0, %v2238
        %v2240 = vpop.f32.mrf.mxu0
        %v2241 = vadd.f32 0.0, %v2240
        %2242 = vmatmul.bf16.gmra.mxu0 %v2222
        %v2243 = vpop.f32.mrf.mxu0
        %v2244 = vadd.f32 0.0, %v2243
        %v2245 = vpop.f32.mrf.mxu0
        %v2246 = vadd.f32 0.0, %v2245
        %2247 = vmatmul.bf16.gmra.mxu0 %v2223
        %v2248 = vpop.f32.mrf.mxu0
        %v2249 = vadd.f32 0.0, %v2248
        %v2250 = vpop.f32.mrf.mxu0
        %v2251 = vadd.f32 0.0, %v2250
        %2252 = vmatmul.bf16.gmra.mxu0 %v2224
        %v2253 = vpop.f32.mrf.mxu0
        %v2254 = vadd.f32 0.0, %v2253
        %v2255 = vpop.f32.mrf.mxu0
        %v2256 = vadd.f32 0.0, %v2255
        %2257 = vmatmul.bf16.gmra.mxu0 %v2225
        %v2258 = vpop.f32.mrf.mxu0
        %v2259 = vadd.f32 0.0, %v2258
        %v2260 = vpop.f32.mrf.mxu0
        %v2261 = vadd.f32 0.0, %v2260
        %2262 = vmatmul.bf16.gmra.mxu0 %v2226
        %v2263 = vpop.f32.mrf.mxu0
        %v2264 = vadd.f32 0.0, %v2263
        %v2265 = vpop.f32.mrf.mxu0
        %v2266 = vadd.f32 0.0, %v2265
        %2267 = vmatmul.bf16.gmra.mxu0 %v2227
        %v2268 = vpop.f32.mrf.mxu0
        %v2269 = vadd.f32 0.0, %v2268
        %v2270 = vpop.f32.mrf.mxu0
        %v2271 = vadd.f32 0.0, %v2270
        %2272 = vmatmul.bf16.gmra.mxu0 %v2228
        %v2273 = vpop.f32.mrf.mxu0
        %v2274 = vadd.f32 0.0, %v2273
        %v2275 = vpop.f32.mrf.mxu0
        %v2276 = vadd.f32 0.0, %v2275
        %2277 = vdwg.mxu0
        %2278 = vmatpush.bf16.msra.mxu0 %v1714
        %2279 = vmatpush.bf16.msra.mxu0 %v1713
        %2280 = vmatpush.bf16.msra.mxu0 %v1712
        %2281 = vmatpush.bf16.msra.mxu0 %v1711
        %2282 = vmatpush.bf16.msra.mxu0 %v1710
        %2283 = vmatpush.bf16.msra.mxu0 %v1709
        %2284 = vmatpush.bf16.msra.mxu0 %v1708
        %2285 = vmatpush.bf16.msra.mxu0 %v1707
        %2286 = vmatmul.bf16.gmra.mxu0 %v1940
        %v2287 = vpop.f32.mrf.mxu0
        %v2288 = vadd.f32 %v2239, %v2287
        %v2289 = vpop.f32.mrf.mxu0
        %v2290 = vadd.f32 %v2241, %v2289
        %2291 = vmatmul.bf16.gmra.mxu0 %v1941
        %v2292 = vpop.f32.mrf.mxu0
        %v2293 = vadd.f32 %v2244, %v2292
        %v2294 = vpop.f32.mrf.mxu0
        %v2295 = vadd.f32 %v2246, %v2294
        %2296 = vmatmul.bf16.gmra.mxu0 %v1942
        %v2297 = vpop.f32.mrf.mxu0
        %v2298 = vadd.f32 %v2249, %v2297
        %v2299 = vpop.f32.mrf.mxu0
        %v2300 = vadd.f32 %v2251, %v2299
        %2301 = vmatmul.bf16.gmra.mxu0 %v1943
        %v2302 = vpop.f32.mrf.mxu0
        %v2303 = vadd.f32 %v2254, %v2302
        %v2304 = vpop.f32.mrf.mxu0
        %v2305 = vadd.f32 %v2256, %v2304
        %2306 = vmatmul.bf16.gmra.mxu0 %v1944
        %v2307 = vpop.f32.mrf.mxu0
        %v2308 = vadd.f32 %v2259, %v2307
        %v2309 = vpop.f32.mrf.mxu0
        %v2310 = vadd.f32 %v2261, %v2309
        %2311 = vmatmul.bf16.gmra.mxu0 %v1945
        %v2312 = vpop.f32.mrf.mxu0
        %v2313 = vadd.f32 %v2264, %v2312
        %v2314 = vpop.f32.mrf.mxu0
        %v2315 = vadd.f32 %v2266, %v2314
        %2316 = vmatmul.bf16.gmra.mxu0 %v1946
        %v2317 = vpop.f32.mrf.mxu0
        %v2318 = vadd.f32 %v2269, %v2317
        %v2319 = vpop.f32.mrf.mxu0
        %v2320 = vadd.f32 %v2271, %v2319
        %2321 = vmatmul.bf16.gmra.mxu0 %v1947
        %v2322 = vpop.f32.mrf.mxu0
        %v2323 = vadd.f32 %v2274, %v2322
        %v2324 = vpop.f32.mrf.mxu0
        %v2325 = vadd.f32 %v2276, %v2324
        %2326 = vdwg.mxu0
        %v2327 = vmul.f32 %v1571, %v1010
        %v2328 = vmul.f32 %v1573, %v1010
        %v2329 = vmul.f32 %v1576, %v1010
        %v2330 = vmul.f32 %v1578, %v1010
        %v2331 = vmul.f32 %v1581, %v1010
        %v2332 = vmul.f32 %v1583, %v1010
        %v2333 = vmul.f32 %v1586, %v1010
        %v2334 = vmul.f32 %v1588, %v1010
        %v2335 = vmul.f32 %v1591, %v1010
        %v2336 = vmul.f32 %v1593, %v1010
        %v2337 = vmul.f32 %v1596, %v1010
        %v2338 = vmul.f32 %v1598, %v1010
        %v2339 = vmul.f32 %v1601, %v1010
        %v2340 = vmul.f32 %v1603, %v1010
        %v2341 = vmul.f32 %v1606, %v1010
        %v2342 = vmul.f32 %v1608, %v1010
        %v2343 = vpack.c.bf16 %v2328, %v2327
        %v2344 = vpack.c.bf16 %v2330, %v2329
        %v2345 = vpack.c.bf16 %v2332, %v2331
        %v2346 = vpack.c.bf16 %v2334, %v2333
        %v2347 = vpack.c.bf16 %v2336, %v2335
        %v2348 = vpack.c.bf16 %v2338, %v2337
        %v2349 = vpack.c.bf16 %v2340, %v2339
        %v2350 = vpack.c.bf16 %v2342, %v2341
        %v2351 = vmul.f32 %v1620, %v1010
        %v2352 = vmul.f32 %v1622, %v1010
        %v2353 = vmul.f32 %v1625, %v1010
        %v2354 = vmul.f32 %v1627, %v1010
        %v2355 = vmul.f32 %v1630, %v1010
        %v2356 = vmul.f32 %v1632, %v1010
        %v2357 = vmul.f32 %v1635, %v1010
        %v2358 = vmul.f32 %v1637, %v1010
        %v2359 = vmul.f32 %v1640, %v1010
        %v2360 = vmul.f32 %v1642, %v1010
        %v2361 = vmul.f32 %v1645, %v1010
        %v2362 = vmul.f32 %v1647, %v1010
        %v2363 = vmul.f32 %v1650, %v1010
        %v2364 = vmul.f32 %v1652, %v1010
        %v2365 = vmul.f32 %v1655, %v1010
        %v2366 = vmul.f32 %v1657, %v1010
        %v2367 = vpack.c.bf16 %v2352, %v2351
        %v2368 = vpack.c.bf16 %v2354, %v2353
        %v2369 = vpack.c.bf16 %v2356, %v2355
        %v2370 = vpack.c.bf16 %v2358, %v2357
        %v2371 = vpack.c.bf16 %v2360, %v2359
        %v2372 = vpack.c.bf16 %v2362, %v2361
        %v2373 = vpack.c.bf16 %v2364, %v2363
        %v2374 = vpack.c.bf16 %v2366, %v2365
        %2375 = vmatpush.bf16.xpose.msra.mxu0 %v2350
        %2376 = vmatpush.bf16.xpose.msra.mxu0 %v2349
        %2377 = vmatpush.bf16.xpose.msra.mxu0 %v2348
        %2378 = vmatpush.bf16.xpose.msra.mxu0 %v2347
        %2379 = vmatpush.bf16.xpose.msra.mxu0 %v2346
        %2380 = vmatpush.bf16.xpose.msra.mxu0 %v2345
        %2381 = vmatpush.bf16.xpose.msra.mxu0 %v2344
        %2382 = vmatpush.bf16.xpose.msra.mxu0 %v2343
        %2383 = vmatmul.bf16.gmra.mxu0 %v1659
        %v2384 = vpop.f32.mrf.mxu0
        %v2385 = vadd.f32 0.0, %v2384
        %v2386 = vpop.f32.mrf.mxu0
        %v2387 = vadd.f32 0.0, %v2386
        %2388 = vmatmul.bf16.gmra.mxu0 %v1660
        %v2389 = vpop.f32.mrf.mxu0
        %v2390 = vadd.f32 0.0, %v2389
        %v2391 = vpop.f32.mrf.mxu0
        %v2392 = vadd.f32 0.0, %v2391
        %2393 = vmatmul.bf16.gmra.mxu0 %v1661
        %v2394 = vpop.f32.mrf.mxu0
        %v2395 = vadd.f32 0.0, %v2394
        %v2396 = vpop.f32.mrf.mxu0
        %v2397 = vadd.f32 0.0, %v2396
        %2398 = vmatmul.bf16.gmra.mxu0 %v1662
        %v2399 = vpop.f32.mrf.mxu0
        %v2400 = vadd.f32 0.0, %v2399
        %v2401 = vpop.f32.mrf.mxu0
        %v2402 = vadd.f32 0.0, %v2401
        %2403 = vmatmul.bf16.gmra.mxu0 %v1663
        %v2404 = vpop.f32.mrf.mxu0
        %v2405 = vadd.f32 0.0, %v2404
        %v2406 = vpop.f32.mrf.mxu0
        %v2407 = vadd.f32 0.0, %v2406
        %2408 = vmatmul.bf16.gmra.mxu0 %v1664
        %v2409 = vpop.f32.mrf.mxu0
        %v2410 = vadd.f32 0.0, %v2409
        %v2411 = vpop.f32.mrf.mxu0
        %v2412 = vadd.f32 0.0, %v2411
        %2413 = vmatmul.bf16.gmra.mxu0 %v1665
        %v2414 = vpop.f32.mrf.mxu0
        %v2415 = vadd.f32 0.0, %v2414
        %v2416 = vpop.f32.mrf.mxu0
        %v2417 = vadd.f32 0.0, %v2416
        %2418 = vmatmul.bf16.gmra.mxu0 %v1666
        %v2419 = vpop.f32.mrf.mxu0
        %v2420 = vadd.f32 0.0, %v2419
        %v2421 = vpop.f32.mrf.mxu0
        %v2422 = vadd.f32 0.0, %v2421
        %2423 = vdwg.mxu0
        %v2424 = vmul.f32 %v2385, 0.35355338
        %v2425 = vmul.f32 %v2387, 0.35355338
        %v2426 = vmul.f32 %v2390, 0.35355338
        %v2427 = vmul.f32 %v2392, 0.35355338
        %v2428 = vmul.f32 %v2395, 0.35355338
        %v2429 = vmul.f32 %v2397, 0.35355338
        %v2430 = vmul.f32 %v2400, 0.35355338
        %v2431 = vmul.f32 %v2402, 0.35355338
        %v2432 = vmul.f32 %v2405, 0.35355338
        %v2433 = vmul.f32 %v2407, 0.35355338
        %v2434 = vmul.f32 %v2410, 0.35355338
        %v2435 = vmul.f32 %v2412, 0.35355338
        %v2436 = vmul.f32 %v2415, 0.35355338
        %v2437 = vmul.f32 %v2417, 0.35355338
        %v2438 = vmul.f32 %v2420, 0.35355338
        %v2439 = vmul.f32 %v2422, 0.35355338
        %v2440 = vadd.f32 %v2424, %v1016
        %v2441 = vadd.f32 %v2425, %v1017
        %v2442 = vadd.f32 %v2426, %v1018
        %v2443 = vadd.f32 %v2427, %v1019
        %v2444 = vadd.f32 %v2428, %v1020
        %v2445 = vadd.f32 %v2429, %v1021
        %v2446 = vadd.f32 %v2430, %v1022
        %v2447 = vadd.f32 %v2431, %v1023
        %v2448 = vadd.f32 %v2432, %v1024
        %v2449 = vadd.f32 %v2433, %v1025
        %v2450 = vadd.f32 %v2434, %v1026
        %v2451 = vadd.f32 %v2435, %v1027
        %v2452 = vadd.f32 %v2436, %v1028
        %v2453 = vadd.f32 %v2437, %v1029
        %v2454 = vadd.f32 %v2438, %v1030
        %v2455 = vadd.f32 %v2439, %v1031
        %2456 = vmax.xlane.f32.xlu0 %v2440
        %v2457 = vpop.xlane.xlu0 %2456
        %2458 = vmax.xlane.f32.xlu0 %v2441
        %v2459 = vpop.xlane.xlu0 %2458
        %2460 = vmax.xlane.f32.xlu0 %v2442
        %v2461 = vpop.xlane.xlu0 %2460
        %2462 = vmax.xlane.f32.xlu0 %v2443
        %v2463 = vpop.xlane.xlu0 %2462
        %2464 = vmax.xlane.f32.xlu0 %v2444
        %v2465 = vpop.xlane.xlu0 %2464
        %2466 = vmax.xlane.f32.xlu0 %v2445
        %v2467 = vpop.xlane.xlu0 %2466
        %2468 = vmax.xlane.f32.xlu0 %v2446
        %v2469 = vpop.xlane.xlu0 %2468
        %2470 = vmax.xlane.f32.xlu0 %v2447
        %v2471 = vpop.xlane.xlu0 %2470
        %2472 = vmax.xlane.f32.xlu0 %v2448
        %v2473 = vpop.xlane.xlu0 %2472
        %2474 = vmax.xlane.f32.xlu0 %v2449
        %v2475 = vpop.xlane.xlu0 %2474
        %2476 = vmax.xlane.f32.xlu0 %v2450
        %v2477 = vpop.xlane.xlu0 %2476
        %2478 = vmax.xlane.f32.xlu0 %v2451
        %v2479 = vpop.xlane.xlu0 %2478
        %2480 = vmax.xlane.f32.xlu0 %v2452
        %v2481 = vpop.xlane.xlu0 %2480
        %2482 = vmax.xlane.f32.xlu0 %v2453
        %v2483 = vpop.xlane.xlu0 %2482
        %2484 = vmax.xlane.f32.xlu0 %v2454
        %v2485 = vpop.xlane.xlu0 %2484
        %2486 = vmax.xlane.f32.xlu0 %v2455
        %v2487 = vpop.xlane.xlu0 %2486
        %v2488 = vsub.f32 %v2440, %v2457
        %v2489 = vsub.f32 %v2441, %v2459
        %v2490 = vsub.f32 %v2442, %v2461
        %v2491 = vsub.f32 %v2443, %v2463
        %v2492 = vsub.f32 %v2444, %v2465
        %v2493 = vsub.f32 %v2445, %v2467
        %v2494 = vsub.f32 %v2446, %v2469
        %v2495 = vsub.f32 %v2447, %v2471
        %v2496 = vsub.f32 %v2448, %v2473
        %v2497 = vsub.f32 %v2449, %v2475
        %v2498 = vsub.f32 %v2450, %v2477
        %v2499 = vsub.f32 %v2451, %v2479
        %v2500 = vsub.f32 %v2452, %v2481
        %v2501 = vsub.f32 %v2453, %v2483
        %v2502 = vsub.f32 %v2454, %v2485
        %v2503 = vsub.f32 %v2455, %v2487
        %v2504 = vmul.f32 %v2488, 1.442695
        %v2505 = vpow.pop %v2504
        %v2506 = vmul.f32 %v2489, 1.442695
        %v2507 = vpow.pop %v2506
        %v2508 = vmul.f32 %v2490, 1.442695
        %v2509 = vpow.pop %v2508
        %v2510 = vmul.f32 %v2491, 1.442695
        %v2511 = vpow.pop %v2510
        %v2512 = vmul.f32 %v2492, 1.442695
        %v2513 = vpow.pop %v2512
        %v2514 = vmul.f32 %v2493, 1.442695
        %v2515 = vpow.pop %v2514
        %v2516 = vmul.f32 %v2494, 1.442695
        %v2517 = vpow.pop %v2516
        %v2518 = vmul.f32 %v2495, 1.442695
        %v2519 = vpow.pop %v2518
        %v2520 = vmul.f32 %v2496, 1.442695
        %v2521 = vpow.pop %v2520
        %v2522 = vmul.f32 %v2497, 1.442695
        %v2523 = vpow.pop %v2522
        %v2524 = vmul.f32 %v2498, 1.442695
        %v2525 = vpow.pop %v2524
        %v2526 = vmul.f32 %v2499, 1.442695
        %v2527 = vpow.pop %v2526
        %v2528 = vmul.f32 %v2500, 1.442695
        %v2529 = vpow.pop %v2528
        %v2530 = vmul.f32 %v2501, 1.442695
        %v2531 = vpow.pop %v2530
        %v2532 = vmul.f32 %v2502, 1.442695
        %v2533 = vpow.pop %v2532
        %v2534 = vmul.f32 %v2503, 1.442695
        %v2535 = vpow.pop %v2534
        %2536 = vadd.xlane.f32.xlu0 %v2505
        %v2537 = vpop.xlane.xlu0 %2536
        %2538 = vadd.xlane.f32.xlu0 %v2507
        %v2539 = vpop.xlane.xlu0 %2538
        %2540 = vadd.xlane.f32.xlu0 %v2509
        %v2541 = vpop.xlane.xlu0 %2540
        %2542 = vadd.xlane.f32.xlu0 %v2511
        %v2543 = vpop.xlane.xlu0 %2542
        %2544 = vadd.xlane.f32.xlu0 %v2513
        %v2545 = vpop.xlane.xlu0 %2544
        %2546 = vadd.xlane.f32.xlu0 %v2515
        %v2547 = vpop.xlane.xlu0 %2546
        %2548 = vadd.xlane.f32.xlu0 %v2517
        %v2549 = vpop.xlane.xlu0 %2548
        %2550 = vadd.xlane.f32.xlu0 %v2519
        %v2551 = vpop.xlane.xlu0 %2550
        %2552 = vadd.xlane.f32.xlu0 %v2521
        %v2553 = vpop.xlane.xlu0 %2552
        %2554 = vadd.xlane.f32.xlu0 %v2523
        %v2555 = vpop.xlane.xlu0 %2554
        %2556 = vadd.xlane.f32.xlu0 %v2525
        %v2557 = vpop.xlane.xlu0 %2556
        %2558 = vadd.xlane.f32.xlu0 %v2527
        %v2559 = vpop.xlane.xlu0 %2558
        %2560 = vadd.xlane.f32.xlu0 %v2529
        %v2561 = vpop.xlane.xlu0 %2560
        %2562 = vadd.xlane.f32.xlu0 %v2531
        %v2563 = vpop.xlane.xlu0 %2562
        %2564 = vadd.xlane.f32.xlu0 %v2533
        %v2565 = vpop.xlane.xlu0 %2564
        %2566 = vadd.xlane.f32.xlu0 %v2535
        %v2567 = vpop.xlane.xlu0 %2566
        %v2568 = vrcp.pop %v2537
        %v2569 = vrcp.pop %v2539
        %v2570 = vrcp.pop %v2541
        %v2571 = vrcp.pop %v2543
        %v2572 = vrcp.pop %v2545
        %v2573 = vrcp.pop %v2547
        %v2574 = vrcp.pop %v2549
        %v2575 = vrcp.pop %v2551
        %v2576 = vrcp.pop %v2553
        %v2577 = vrcp.pop %v2555
        %v2578 = vrcp.pop %v2557
        %v2579 = vrcp.pop %v2559
        %v2580 = vrcp.pop %v2561
        %v2581 = vrcp.pop %v2563
        %v2582 = vrcp.pop %v2565
        %v2583 = vrcp.pop %v2567
        %v2584 = vmul.f32 %v2505, %v2568
        %v2585 = vmul.f32 %v2507, %v2569
        %v2586 = vmul.f32 %v2509, %v2570
        %v2587 = vmul.f32 %v2511, %v2571
        %v2588 = vmul.f32 %v2513, %v2572
        %v2589 = vmul.f32 %v2515, %v2573
        %v2590 = vmul.f32 %v2517, %v2574
        %v2591 = vmul.f32 %v2519, %v2575
        %v2592 = vmul.f32 %v2521, %v2576
        %v2593 = vmul.f32 %v2523, %v2577
        %v2594 = vmul.f32 %v2525, %v2578
        %v2595 = vmul.f32 %v2527, %v2579
        %v2596 = vmul.f32 %v2529, %v2580
        %v2597 = vmul.f32 %v2531, %v2581
        %v2598 = vmul.f32 %v2533, %v2582
        %v2599 = vmul.f32 %v2535, %v2583
        %v2600 = vpack.c.bf16 %v2585, %v2584
        %v2601 = vpack.c.bf16 %v2587, %v2586
        %v2602 = vpack.c.bf16 %v2589, %v2588
        %v2603 = vpack.c.bf16 %v2591, %v2590
        %v2604 = vpack.c.bf16 %v2593, %v2592
        %v2605 = vpack.c.bf16 %v2595, %v2594
        %v2606 = vpack.c.bf16 %v2597, %v2596
        %v2607 = vpack.c.bf16 %v2599, %v2598
        %2608 = vmatpush.bf16.msra.mxu0 %v2374
        %2609 = vmatpush.bf16.msra.mxu0 %v2373
        %2610 = vmatpush.bf16.msra.mxu0 %v2372
        %2611 = vmatpush.bf16.msra.mxu0 %v2371
        %2612 = vmatpush.bf16.msra.mxu0 %v2370
        %2613 = vmatpush.bf16.msra.mxu0 %v2369
        %2614 = vmatpush.bf16.msra.mxu0 %v2368
        %2615 = vmatpush.bf16.msra.mxu0 %v2367
        %2616 = vmatmul.bf16.gmra.mxu0 %v2600
        %v2617 = vpop.f32.mrf.mxu0
        %v2618 = vadd.f32 0.0, %v2617
        %v2619 = vpop.f32.mrf.mxu0
        %v2620 = vadd.f32 0.0, %v2619
        %2621 = vmatmul.bf16.gmra.mxu0 %v2601
        %v2622 = vpop.f32.mrf.mxu0
        %v2623 = vadd.f32 0.0, %v2622
        %v2624 = vpop.f32.mrf.mxu0
        %v2625 = vadd.f32 0.0, %v2624
        %2626 = vmatmul.bf16.gmra.mxu0 %v2602
        %v2627 = vpop.f32.mrf.mxu0
        %v2628 = vadd.f32 0.0, %v2627
        %v2629 = vpop.f32.mrf.mxu0
        %v2630 = vadd.f32 0.0, %v2629
        %2631 = vmatmul.bf16.gmra.mxu0 %v2603
        %v2632 = vpop.f32.mrf.mxu0
        %v2633 = vadd.f32 0.0, %v2632
        %v2634 = vpop.f32.mrf.mxu0
        %v2635 = vadd.f32 0.0, %v2634
        %2636 = vmatmul.bf16.gmra.mxu0 %v2604
        %v2637 = vpop.f32.mrf.mxu0
        %v2638 = vadd.f32 0.0, %v2637
        %v2639 = vpop.f32.mrf.mxu0
        %v2640 = vadd.f32 0.0, %v2639
        %2641 = vmatmul.bf16.gmra.mxu0 %v2605
        %v2642 = vpop.f32.mrf.mxu0
        %v2643 = vadd.f32 0.0, %v2642
        %v2644 = vpop.f32.mrf.mxu0
        %v2645 = vadd.f32 0.0, %v2644
        %2646 = vmatmul.bf16.gmra.mxu0 %v2606
        %v2647 = vpop.f32.mrf.mxu0
        %v2648 = vadd.f32 0.0, %v2647
        %v2649 = vpop.f32.mrf.mxu0
        %v2650 = vadd.f32 0.0, %v2649
        %2651 = vmatmul.bf16.gmra.mxu0 %v2607
        %v2652 = vpop.f32.mrf.mxu0
        %v2653 = vadd.f32 0.0, %v2652
        %v2654 = vpop.f32.mrf.mxu0
        %v2655 = vadd.f32 0.0, %v2654
        %2656 = vdwg.mxu0
        %v2657 = vadd.f32 %v2288, %v2618
        %v2658 = vadd.f32 %v2290, %v2620
        %v2659 = vadd.f32 %v2293, %v2623
        %v2660 = vadd.f32 %v2295, %v2625
        %v2661 = vadd.f32 %v2298, %v2628
        %v2662 = vadd.f32 %v2300, %v2630
        %v2663 = vadd.f32 %v2303, %v2633
        %v2664 = vadd.f32 %v2305, %v2635
        %v2665 = vadd.f32 %v2308, %v2638
        %v2666 = vadd.f32 %v2310, %v2640
        %v2667 = vadd.f32 %v2313, %v2643
        %v2668 = vadd.f32 %v2315, %v2645
        %v2669 = vadd.f32 %v2318, %v2648
        %v2670 = vadd.f32 %v2320, %v2650
        %v2671 = vadd.f32 %v2323, %v2653
        %v2672 = vadd.f32 %v2325, %v2655
        %v2673 = vmul.f32 %v1571, %v1015
        %v2674 = vmul.f32 %v1573, %v1015
        %v2675 = vmul.f32 %v1576, %v1015
        %v2676 = vmul.f32 %v1578, %v1015
        %v2677 = vmul.f32 %v1581, %v1015
        %v2678 = vmul.f32 %v1583, %v1015
        %v2679 = vmul.f32 %v1586, %v1015
        %v2680 = vmul.f32 %v1588, %v1015
        %v2681 = vmul.f32 %v1591, %v1015
        %v2682 = vmul.f32 %v1593, %v1015
        %v2683 = vmul.f32 %v1596, %v1015
        %v2684 = vmul.f32 %v1598, %v1015
        %v2685 = vmul.f32 %v1601, %v1015
        %v2686 = vmul.f32 %v1603, %v1015
        %v2687 = vmul.f32 %v1606, %v1015
        %v2688 = vmul.f32 %v1608, %v1015
        %v2689 = vpack.c.bf16 %v2674, %v2673
        %v2690 = vpack.c.bf16 %v2676, %v2675
        %v2691 = vpack.c.bf16 %v2678, %v2677
        %v2692 = vpack.c.bf16 %v2680, %v2679
        %v2693 = vpack.c.bf16 %v2682, %v2681
        %v2694 = vpack.c.bf16 %v2684, %v2683
        %v2695 = vpack.c.bf16 %v2686, %v2685
        %v2696 = vpack.c.bf16 %v2688, %v2687
        %v2697 = vmul.f32 %v1620, %v1015
        %v2698 = vmul.f32 %v1622, %v1015
        %v2699 = vmul.f32 %v1625, %v1015
        %v2700 = vmul.f32 %v1627, %v1015
        %v2701 = vmul.f32 %v1630, %v1015
        %v2702 = vmul.f32 %v1632, %v1015
        %v2703 = vmul.f32 %v1635, %v1015
        %v2704 = vmul.f32 %v1637, %v1015
        %v2705 = vmul.f32 %v1640, %v1015
        %v2706 = vmul.f32 %v1642, %v1015
        %v2707 = vmul.f32 %v1645, %v1015
        %v2708 = vmul.f32 %v1647, %v1015
        %v2709 = vmul.f32 %v1650, %v1015
        %v2710 = vmul.f32 %v1652, %v1015
        %v2711 = vmul.f32 %v1655, %v1015
        %v2712 = vmul.f32 %v1657, %v1015
        %v2713 = vpack.c.bf16 %v2698, %v2697
        %v2714 = vpack.c.bf16 %v2700, %v2699
        %v2715 = vpack.c.bf16 %v2702, %v2701
        %v2716 = vpack.c.bf16 %v2704, %v2703
        %v2717 = vpack.c.bf16 %v2706, %v2705
        %v2718 = vpack.c.bf16 %v2708, %v2707
        %v2719 = vpack.c.bf16 %v2710, %v2709
        %v2720 = vpack.c.bf16 %v2712, %v2711
        %2721 = vmatpush.bf16.xpose.msra.mxu0 %v2696
        %2722 = vmatpush.bf16.xpose.msra.mxu0 %v2695
        %2723 = vmatpush.bf16.xpose.msra.mxu0 %v2694
        %2724 = vmatpush.bf16.xpose.msra.mxu0 %v2693
        %2725 = vmatpush.bf16.xpose.msra.mxu0 %v2692
        %2726 = vmatpush.bf16.xpose.msra.mxu0 %v2691
        %2727 = vmatpush.bf16.xpose.msra.mxu0 %v2690
        %2728 = vmatpush.bf16.xpose.msra.mxu0 %v2689
        %2729 = vmatmul.bf16.gmra.mxu0 %v1659
        %v2730 = vpop.f32.mrf.mxu0
        %v2731 = vadd.f32 0.0, %v2730
        %v2732 = vpop.f32.mrf.mxu0
        %v2733 = vadd.f32 0.0, %v2732
        %2734 = vmatmul.bf16.gmra.mxu0 %v1660
        %v2735 = vpop.f32.mrf.mxu0
        %v2736 = vadd.f32 0.0, %v2735
        %v2737 = vpop.f32.mrf.mxu0
        %v2738 = vadd.f32 0.0, %v2737
        %2739 = vmatmul.bf16.gmra.mxu0 %v1661
        %v2740 = vpop.f32.mrf.mxu0
        %v2741 = vadd.f32 0.0, %v2740
        %v2742 = vpop.f32.mrf.mxu0
        %v2743 = vadd.f32 0.0, %v2742
        %2744 = vmatmul.bf16.gmra.mxu0 %v1662
        %v2745 = vpop.f32.mrf.mxu0
        %v2746 = vadd.f32 0.0, %v2745
        %v2747 = vpop.f32.mrf.mxu0
        %v2748 = vadd.f32 0.0, %v2747
        %2749 = vmatmul.bf16.gmra.mxu0 %v1663
        %v2750 = vpop.f32.mrf.mxu0
        %v2751 = vadd.f32 0.0, %v2750
        %v2752 = vpop.f32.mrf.mxu0
        %v2753 = vadd.f32 0.0, %v2752
        %2754 = vmatmul.bf16.gmra.mxu0 %v1664
        %v2755 = vpop.f32.mrf.mxu0
        %v2756 = vadd.f32 0.0, %v2755
        %v2757 = vpop.f32.mrf.mxu0
        %v2758 = vadd.f32 0.0, %v2757
        %2759 = vmatmul.bf16.gmra.mxu0 %v1665
        %v2760 = vpop.f32.mrf.mxu0
        %v2761 = vadd.f32 0.0, %v2760
        %v2762 = vpop.f32.mrf.mxu0
        %v2763 = vadd.f32 0.0, %v2762
        %2764 = vmatmul.bf16.gmra.mxu0 %v1666
        %v2765 = vpop.f32.mrf.mxu0
        %v2766 = vadd.f32 0.0, %v2765
        %v2767 = vpop.f32.mrf.mxu0
        %v2768 = vadd.f32 0.0, %v2767
        %2769 = vdwg.mxu0
        %v2770 = vmul.f32 %v2731, 0.35355338
        %v2771 = vmul.f32 %v2733, 0.35355338
        %v2772 = vmul.f32 %v2736, 0.35355338
        %v2773 = vmul.f32 %v2738, 0.35355338
        %v2774 = vmul.f32 %v2741, 0.35355338
        %v2775 = vmul.f32 %v2743, 0.35355338
        %v2776 = vmul.f32 %v2746, 0.35355338
        %v2777 = vmul.f32 %v2748, 0.35355338
        %v2778 = vmul.f32 %v2751, 0.35355338
        %v2779 = vmul.f32 %v2753, 0.35355338
        %v2780 = vmul.f32 %v2756, 0.35355338
        %v2781 = vmul.f32 %v2758, 0.35355338
        %v2782 = vmul.f32 %v2761, 0.35355338
        %v2783 = vmul.f32 %v2763, 0.35355338
        %v2784 = vmul.f32 %v2766, 0.35355338
        %v2785 = vmul.f32 %v2768, 0.35355338
        %v2786 = vadd.f32 %v2770, %v1016
        %v2787 = vadd.f32 %v2771, %v1017
        %v2788 = vadd.f32 %v2772, %v1018
        %v2789 = vadd.f32 %v2773, %v1019
        %v2790 = vadd.f32 %v2774, %v1020
        %v2791 = vadd.f32 %v2775, %v1021
        %v2792 = vadd.f32 %v2776, %v1022
        %v2793 = vadd.f32 %v2777, %v1023
        %v2794 = vadd.f32 %v2778, %v1024
        %v2795 = vadd.f32 %v2779, %v1025
        %v2796 = vadd.f32 %v2780, %v1026
        %v2797 = vadd.f32 %v2781, %v1027
        %v2798 = vadd.f32 %v2782, %v1028
        %v2799 = vadd.f32 %v2783, %v1029
        %v2800 = vadd.f32 %v2784, %v1030
        %v2801 = vadd.f32 %v2785, %v1031
        %2802 = vmax.xlane.f32.xlu0 %v2786
        %v2803 = vpop.xlane.xlu0 %2802
        %2804 = vmax.xlane.f32.xlu0 %v2787
        %v2805 = vpop.xlane.xlu0 %2804
        %2806 = vmax.xlane.f32.xlu0 %v2788
        %v2807 = vpop.xlane.xlu0 %2806
        %2808 = vmax.xlane.f32.xlu0 %v2789
        %v2809 = vpop.xlane.xlu0 %2808
        %2810 = vmax.xlane.f32.xlu0 %v2790
        %v2811 = vpop.xlane.xlu0 %2810
        %2812 = vmax.xlane.f32.xlu0 %v2791
        %v2813 = vpop.xlane.xlu0 %2812
        %2814 = vmax.xlane.f32.xlu0 %v2792
        %v2815 = vpop.xlane.xlu0 %2814
        %2816 = vmax.xlane.f32.xlu0 %v2793
        %v2817 = vpop.xlane.xlu0 %2816
        %2818 = vmax.xlane.f32.xlu0 %v2794
        %v2819 = vpop.xlane.xlu0 %2818
        %2820 = vmax.xlane.f32.xlu0 %v2795
        %v2821 = vpop.xlane.xlu0 %2820
        %2822 = vmax.xlane.f32.xlu0 %v2796
        %v2823 = vpop.xlane.xlu0 %2822
        %2824 = vmax.xlane.f32.xlu0 %v2797
        %v2825 = vpop.xlane.xlu0 %2824
        %2826 = vmax.xlane.f32.xlu0 %v2798
        %v2827 = vpop.xlane.xlu0 %2826
        %2828 = vmax.xlane.f32.xlu0 %v2799
        %v2829 = vpop.xlane.xlu0 %2828
        %2830 = vmax.xlane.f32.xlu0 %v2800
        %v2831 = vpop.xlane.xlu0 %2830
        %2832 = vmax.xlane.f32.xlu0 %v2801
        %v2833 = vpop.xlane.xlu0 %2832
        %v2834 = vsub.f32 %v2786, %v2803
        %v2835 = vsub.f32 %v2787, %v2805
        %v2836 = vsub.f32 %v2788, %v2807
        %v2837 = vsub.f32 %v2789, %v2809
        %v2838 = vsub.f32 %v2790, %v2811
        %v2839 = vsub.f32 %v2791, %v2813
        %v2840 = vsub.f32 %v2792, %v2815
        %v2841 = vsub.f32 %v2793, %v2817
        %v2842 = vsub.f32 %v2794, %v2819
        %v2843 = vsub.f32 %v2795, %v2821
        %v2844 = vsub.f32 %v2796, %v2823
        %v2845 = vsub.f32 %v2797, %v2825
        %v2846 = vsub.f32 %v2798, %v2827
        %v2847 = vsub.f32 %v2799, %v2829
        %v2848 = vsub.f32 %v2800, %v2831
        %v2849 = vsub.f32 %v2801, %v2833
        %v2850 = vmul.f32 %v2834, 1.442695
        %v2851 = vpow.pop %v2850
        %v2852 = vmul.f32 %v2835, 1.442695
        %v2853 = vpow.pop %v2852
        %v2854 = vmul.f32 %v2836, 1.442695
        %v2855 = vpow.pop %v2854
        %v2856 = vmul.f32 %v2837, 1.442695
        %v2857 = vpow.pop %v2856
        %v2858 = vmul.f32 %v2838, 1.442695
        %v2859 = vpow.pop %v2858
        %v2860 = vmul.f32 %v2839, 1.442695
        %v2861 = vpow.pop %v2860
        %v2862 = vmul.f32 %v2840, 1.442695
        %v2863 = vpow.pop %v2862
        %v2864 = vmul.f32 %v2841, 1.442695
        %v2865 = vpow.pop %v2864
        %v2866 = vmul.f32 %v2842, 1.442695
        %v2867 = vpow.pop %v2866
        %v2868 = vmul.f32 %v2843, 1.442695
        %v2869 = vpow.pop %v2868
        %v2870 = vmul.f32 %v2844, 1.442695
        %v2871 = vpow.pop %v2870
        %v2872 = vmul.f32 %v2845, 1.442695
        %v2873 = vpow.pop %v2872
        %v2874 = vmul.f32 %v2846, 1.442695
        %v2875 = vpow.pop %v2874
        %v2876 = vmul.f32 %v2847, 1.442695
        %v2877 = vpow.pop %v2876
        %v2878 = vmul.f32 %v2848, 1.442695
        %v2879 = vpow.pop %v2878
        %v2880 = vmul.f32 %v2849, 1.442695
        %v2881 = vpow.pop %v2880
        %2882 = vadd.xlane.f32.xlu0 %v2851
        %v2883 = vpop.xlane.xlu0 %2882
        %2884 = vadd.xlane.f32.xlu0 %v2853
        %v2885 = vpop.xlane.xlu0 %2884
        %2886 = vadd.xlane.f32.xlu0 %v2855
        %v2887 = vpop.xlane.xlu0 %2886
        %2888 = vadd.xlane.f32.xlu0 %v2857
        %v2889 = vpop.xlane.xlu0 %2888
        %2890 = vadd.xlane.f32.xlu0 %v2859
        %v2891 = vpop.xlane.xlu0 %2890
        %2892 = vadd.xlane.f32.xlu0 %v2861
        %v2893 = vpop.xlane.xlu0 %2892
        %2894 = vadd.xlane.f32.xlu0 %v2863
        %v2895 = vpop.xlane.xlu0 %2894
        %2896 = vadd.xlane.f32.xlu0 %v2865
        %v2897 = vpop.xlane.xlu0 %2896
        %2898 = vadd.xlane.f32.xlu0 %v2867
        %v2899 = vpop.xlane.xlu0 %2898
        %2900 = vadd.xlane.f32.xlu0 %v2869
        %v2901 = vpop.xlane.xlu0 %2900
        %2902 = vadd.xlane.f32.xlu0 %v2871
        %v2903 = vpop.xlane.xlu0 %2902
        %2904 = vadd.xlane.f32.xlu0 %v2873
        %v2905 = vpop.xlane.xlu0 %2904
        %2906 = vadd.xlane.f32.xlu0 %v2875
        %v2907 = vpop.xlane.xlu0 %2906
        %2908 = vadd.xlane.f32.xlu0 %v2877
        %v2909 = vpop.xlane.xlu0 %2908
        %2910 = vadd.xlane.f32.xlu0 %v2879
        %v2911 = vpop.xlane.xlu0 %2910
        %2912 = vadd.xlane.f32.xlu0 %v2881
        %v2913 = vpop.xlane.xlu0 %2912
        %v2914 = vrcp.pop %v2883
        %v2915 = vrcp.pop %v2885
        %v2916 = vrcp.pop %v2887
        %v2917 = vrcp.pop %v2889
        %v2918 = vrcp.pop %v2891
        %v2919 = vrcp.pop %v2893
        %v2920 = vrcp.pop %v2895
        %v2921 = vrcp.pop %v2897
        %v2922 = vrcp.pop %v2899
        %v2923 = vrcp.pop %v2901
        %v2924 = vrcp.pop %v2903
        %v2925 = vrcp.pop %v2905
        %v2926 = vrcp.pop %v2907
        %v2927 = vrcp.pop %v2909
        %v2928 = vrcp.pop %v2911
        %v2929 = vrcp.pop %v2913
        %v2930 = vmul.f32 %v2851, %v2914
        %v2931 = vmul.f32 %v2853, %v2915
        %v2932 = vmul.f32 %v2855, %v2916
        %v2933 = vmul.f32 %v2857, %v2917
        %v2934 = vmul.f32 %v2859, %v2918
        %v2935 = vmul.f32 %v2861, %v2919
        %v2936 = vmul.f32 %v2863, %v2920
        %v2937 = vmul.f32 %v2865, %v2921
        %v2938 = vmul.f32 %v2867, %v2922
        %v2939 = vmul.f32 %v2869, %v2923
        %v2940 = vmul.f32 %v2871, %v2924
        %v2941 = vmul.f32 %v2873, %v2925
        %v2942 = vmul.f32 %v2875, %v2926
        %v2943 = vmul.f32 %v2877, %v2927
        %v2944 = vmul.f32 %v2879, %v2928
        %v2945 = vmul.f32 %v2881, %v2929
        %v2946 = vpack.c.bf16 %v2931, %v2930
        %v2947 = vpack.c.bf16 %v2933, %v2932
        %v2948 = vpack.c.bf16 %v2935, %v2934
        %v2949 = vpack.c.bf16 %v2937, %v2936
        %v2950 = vpack.c.bf16 %v2939, %v2938
        %v2951 = vpack.c.bf16 %v2941, %v2940
        %v2952 = vpack.c.bf16 %v2943, %v2942
        %v2953 = vpack.c.bf16 %v2945, %v2944
        %2954 = vmatpush.bf16.msra.mxu0 %v2720
        %2955 = vmatpush.bf16.msra.mxu0 %v2719
        %2956 = vmatpush.bf16.msra.mxu0 %v2718
        %2957 = vmatpush.bf16.msra.mxu0 %v2717
        %2958 = vmatpush.bf16.msra.mxu0 %v2716
        %2959 = vmatpush.bf16.msra.mxu0 %v2715
        %2960 = vmatpush.bf16.msra.mxu0 %v2714
        %2961 = vmatpush.bf16.msra.mxu0 %v2713
        %2962 = vmatmul.bf16.gmra.mxu0 %v2946
        %v2963 = vpop.f32.mrf.mxu0
        %v2964 = vadd.f32 0.0, %v2963
        %v2965 = vpop.f32.mrf.mxu0
        %v2966 = vadd.f32 0.0, %v2965
        %2967 = vmatmul.bf16.gmra.mxu0 %v2947
        %v2968 = vpop.f32.mrf.mxu0
        %v2969 = vadd.f32 0.0, %v2968
        %v2970 = vpop.f32.mrf.mxu0
        %v2971 = vadd.f32 0.0, %v2970
        %2972 = vmatmul.bf16.gmra.mxu0 %v2948
        %v2973 = vpop.f32.mrf.mxu0
        %v2974 = vadd.f32 0.0, %v2973
        %v2975 = vpop.f32.mrf.mxu0
        %v2976 = vadd.f32 0.0, %v2975
        %2977 = vmatmul.bf16.gmra.mxu0 %v2949
        %v2978 = vpop.f32.mrf.mxu0
        %v2979 = vadd.f32 0.0, %v2978
        %v2980 = vpop.f32.mrf.mxu0
        %v2981 = vadd.f32 0.0, %v2980
        %2982 = vmatmul.bf16.gmra.mxu0 %v2950
        %v2983 = vpop.f32.mrf.mxu0
        %v2984 = vadd.f32 0.0, %v2983
        %v2985 = vpop.f32.mrf.mxu0
        %v2986 = vadd.f32 0.0, %v2985
        %2987 = vmatmul.bf16.gmra.mxu0 %v2951
        %v2988 = vpop.f32.mrf.mxu0
        %v2989 = vadd.f32 0.0, %v2988
        %v2990 = vpop.f32.mrf.mxu0
        %v2991 = vadd.f32 0.0, %v2990
        %2992 = vmatmul.bf16.gmra.mxu0 %v2952
        %v2993 = vpop.f32.mrf.mxu0
        %v2994 = vadd.f32 0.0, %v2993
        %v2995 = vpop.f32.mrf.mxu0
        %v2996 = vadd.f32 0.0, %v2995
        %2997 = vmatmul.bf16.gmra.mxu0 %v2953
        %v2998 = vpop.f32.mrf.mxu0
        %v2999 = vadd.f32 0.0, %v2998
        %v3000 = vpop.f32.mrf.mxu0
        %v3001 = vadd.f32 0.0, %v3000
        %3002 = vdwg.mxu0
        %v3003 = vadd.f32 %v2657, %v2964
        %v3004 = vadd.f32 %v2658, %v2966
        %v3005 = vadd.f32 %v2659, %v2969
        %v3006 = vadd.f32 %v2660, %v2971
        %v3007 = vadd.f32 %v2661, %v2974
        %v3008 = vadd.f32 %v2662, %v2976
        %v3009 = vadd.f32 %v2663, %v2979
        %v3010 = vadd.f32 %v2664, %v2981
        %v3011 = vadd.f32 %v2665, %v2984
        %v3012 = vadd.f32 %v2666, %v2986
        %v3013 = vadd.f32 %v2667, %v2989
        %v3014 = vadd.f32 %v2668, %v2991
        %v3015 = vadd.f32 %v2669, %v2994
        %v3016 = vadd.f32 %v2670, %v2996
        %v3017 = vadd.f32 %v2671, %v2999
        %v3018 = vadd.f32 %v2672, %v3001
        %v3019 = vpack.c.bf16 %v3004, %v3003
        %v3020 = vpack.c.bf16 %v3006, %v3005
        %v3021 = vpack.c.bf16 %v3008, %v3007
        %v3022 = vpack.c.bf16 %v3010, %v3009
        %v3023 = vpack.c.bf16 %v3012, %v3011
        %v3024 = vpack.c.bf16 %v3014, %v3013
        %v3025 = vpack.c.bf16 %v3016, %v3015
        %v3026 = vpack.c.bf16 %v3018, %v3017
        %v3027 = vld [vmem:[%s10] sm:$0xf]
        %v3028 = vld [vmem:[%s10 + $0x4] sm:$0xf]
        %v3029 = vld [vmem:[%s10 + $0x8] sm:$0xf]
        %v3030 = vld [vmem:[%s10 + $0xc] sm:$0xf]
        %v3031 = vld [vmem:[%s10 + $0x10] sm:$0xf]
        %v3032 = vld [vmem:[%s10 + $0x14] sm:$0xf]
        %v3033 = vld [vmem:[%s10 + $0x18] sm:$0xf]
        %v3034 = vld [vmem:[%s10 + $0x1c] sm:$0xf]
        %v3035 = vld [vmem:[%s10 + $0x20] sm:$0xf]
        %v3036 = vld [vmem:[%s10 + $0x24] sm:$0xf]
        %v3037 = vld [vmem:[%s10 + $0x28] sm:$0xf]
        %v3038 = vld [vmem:[%s10 + $0x2c] sm:$0xf]
        %v3039 = vld [vmem:[%s10 + $0x30] sm:$0xf]
        %v3040 = vld [vmem:[%s10 + $0x34] sm:$0xf]
        %v3041 = vld [vmem:[%s10 + $0x38] sm:$0xf]
        %v3042 = vld [vmem:[%s10 + $0x3c] sm:$0xf]
        %v3059 = vunpack.c.l.b16 %v3027
        %v3060 = vunpack.c.l.b16 %v3028
        %v3061 = vunpack.c.l.b16 %v3029
        %v3062 = vunpack.c.l.b16 %v3030
        %v3063 = vunpack.c.l.b16 %v3031
        %v3064 = vunpack.c.l.b16 %v3032
        %v3065 = vunpack.c.l.b16 %v3033
        %v3066 = vunpack.c.l.b16 %v3034
        %v3067 = vunpack.c.l.b16 %v3035
        %v3068 = vunpack.c.l.b16 %v3036
        %v3069 = vunpack.c.l.b16 %v3037
        %v3070 = vunpack.c.l.b16 %v3038
        %v3071 = vunpack.c.l.b16 %v3039
        %v3072 = vunpack.c.l.b16 %v3040
        %v3073 = vunpack.c.l.b16 %v3041
        %v3074 = vunpack.c.l.b16 %v3042
        %v3075 = vpack.c.b16 %v3060, %v3059
        %v3076 = vpack.c.b16 %v3062, %v3061
        %v3077 = vpack.c.b16 %v3064, %v3063
        %v3078 = vpack.c.b16 %v3066, %v3065
        %v3079 = vpack.c.b16 %v3068, %v3067
        %v3080 = vpack.c.b16 %v3070, %v3069
        %v3081 = vpack.c.b16 %v3072, %v3071
        %v3082 = vpack.c.b16 %v3074, %v3073
        %3091 = vmatpush.bf16.msra.mxu0 %v3082
        %3092 = vmatpush.bf16.msra.mxu0 %v3081
        %3093 = vmatpush.bf16.msra.mxu0 %v3080
        %3094 = vmatpush.bf16.msra.mxu0 %v3079
        %3095 = vmatpush.bf16.msra.mxu0 %v3078
        %3096 = vmatpush.bf16.msra.mxu0 %v3077
        %3097 = vmatpush.bf16.msra.mxu0 %v3076
        %3098 = vmatpush.bf16.msra.mxu0 %v3075
        %3099 = vmatmul.bf16.gmra.mxu0 %v3019
        %v3100 = vpop.f32.mrf.mxu0
        %v3101 = vadd.f32 0.0, %v3100
        %v3102 = vpop.f32.mrf.mxu0
        %v3103 = vadd.f32 0.0, %v3102
        %3104 = vmatmul.bf16.gmra.mxu0 %v3020
        %v3105 = vpop.f32.mrf.mxu0
        %v3106 = vadd.f32 0.0, %v3105
        %v3107 = vpop.f32.mrf.mxu0
        %v3108 = vadd.f32 0.0, %v3107
        %3109 = vmatmul.bf16.gmra.mxu0 %v3021
        %v3110 = vpop.f32.mrf.mxu0
        %v3111 = vadd.f32 0.0, %v3110
        %v3112 = vpop.f32.mrf.mxu0
        %v3113 = vadd.f32 0.0, %v3112
        %3114 = vmatmul.bf16.gmra.mxu0 %v3022
        %v3115 = vpop.f32.mrf.mxu0
        %v3116 = vadd.f32 0.0, %v3115
        %v3117 = vpop.f32.mrf.mxu0
        %v3118 = vadd.f32 0.0, %v3117
        %3119 = vmatmul.bf16.gmra.mxu0 %v3023
        %v3120 = vpop.f32.mrf.mxu0
        %v3121 = vadd.f32 0.0, %v3120
        %v3122 = vpop.f32.mrf.mxu0
        %v3123 = vadd.f32 0.0, %v3122
        %3124 = vmatmul.bf16.gmra.mxu0 %v3024
        %v3125 = vpop.f32.mrf.mxu0
        %v3126 = vadd.f32 0.0, %v3125
        %v3127 = vpop.f32.mrf.mxu0
        %v3128 = vadd.f32 0.0, %v3127
        %3129 = vmatmul.bf16.gmra.mxu0 %v3025
        %v3130 = vpop.f32.mrf.mxu0
        %v3131 = vadd.f32 0.0, %v3130
        %v3132 = vpop.f32.mrf.mxu0
        %v3133 = vadd.f32 0.0, %v3132
        %3134 = vmatmul.bf16.gmra.mxu0 %v3026
        %v3135 = vpop.f32.mrf.mxu0
        %v3136 = vadd.f32 0.0, %v3135
        %v3137 = vpop.f32.mrf.mxu0
        %v3138 = vadd.f32 0.0, %v3137
        %3139 = vdwg.mxu0
        %v3140 = vadd.f32 %v978, %v3101
        %v3141 = vadd.f32 %v979, %v3103
        %v3142 = vadd.f32 %v980, %v3106
        %v3143 = vadd.f32 %v981, %v3108
        %v3144 = vadd.f32 %v982, %v3111
        %v3145 = vadd.f32 %v983, %v3113
        %v3146 = vadd.f32 %v984, %v3116
        %v3147 = vadd.f32 %v985, %v3118
        %v3148 = vadd.f32 %v986, %v3121
        %v3149 = vadd.f32 %v987, %v3123
        %v3150 = vadd.f32 %v988, %v3126
        %v3151 = vadd.f32 %v989, %v3128
        %v3152 = vadd.f32 %v990, %v3131
        %v3153 = vadd.f32 %v991, %v3133
        %v3154 = vadd.f32 %v992, %v3136
        %v3155 = vadd.f32 %v993, %v3138
        %v3156 = vld [vmem:[%s11] sm:$0x1]
        %v3158 = vperm.slane %v3156, 0
        %v3160 = vadd.f32 %v3140, %v3158
        %v3161 = vadd.f32 %v3141, %v3158
        %v3162 = vadd.f32 %v3142, %v3158
        %v3163 = vadd.f32 %v3143, %v3158
        %v3164 = vadd.f32 %v3144, %v3158
        %v3165 = vadd.f32 %v3145, %v3158
        %v3166 = vadd.f32 %v3146, %v3158
        %v3167 = vadd.f32 %v3147, %v3158
        %v3168 = vadd.f32 %v3148, %v3158
        %v3169 = vadd.f32 %v3149, %v3158
        %v3170 = vadd.f32 %v3150, %v3158
        %v3171 = vadd.f32 %v3151, %v3158
        %v3172 = vadd.f32 %v3152, %v3158
        %v3173 = vadd.f32 %v3153, %v3158
        %v3174 = vadd.f32 %v3154, %v3158
        %v3175 = vadd.f32 %v3155, %v3158
        %v3176 = vld [vmem:[%s12] sm:$0x1]
        %v3177 = vld [vmem:[%s13] sm:$0x1]
        %v3178 = vsel %vm1034, %v3160, 0.0
        %3179 = vadd.xlane.f32.xlu0 %v3178
        %v3180 = vpop.xlane.xlu0 %3179
        %v3181 = vsel %vm1034, %v3161, 0.0
        %3182 = vadd.xlane.f32.xlu0 %v3181
        %v3183 = vpop.xlane.xlu0 %3182
        %v3184 = vsel %vm1034, %v3162, 0.0
        %3185 = vadd.xlane.f32.xlu0 %v3184
        %v3186 = vpop.xlane.xlu0 %3185
        %v3187 = vsel %vm1034, %v3163, 0.0
        %3188 = vadd.xlane.f32.xlu0 %v3187
        %v3189 = vpop.xlane.xlu0 %3188
        %v3190 = vsel %vm1034, %v3164, 0.0
        %3191 = vadd.xlane.f32.xlu0 %v3190
        %v3192 = vpop.xlane.xlu0 %3191
        %v3193 = vsel %vm1034, %v3165, 0.0
        %3194 = vadd.xlane.f32.xlu0 %v3193
        %v3195 = vpop.xlane.xlu0 %3194
        %v3196 = vsel %vm1034, %v3166, 0.0
        %3197 = vadd.xlane.f32.xlu0 %v3196
        %v3198 = vpop.xlane.xlu0 %3197
        %v3199 = vsel %vm1034, %v3167, 0.0
        %3200 = vadd.xlane.f32.xlu0 %v3199
        %v3201 = vpop.xlane.xlu0 %3200
        %v3202 = vsel %vm1034, %v3168, 0.0
        %3203 = vadd.xlane.f32.xlu0 %v3202
        %v3204 = vpop.xlane.xlu0 %3203
        %v3205 = vsel %vm1034, %v3169, 0.0
        %3206 = vadd.xlane.f32.xlu0 %v3205
        %v3207 = vpop.xlane.xlu0 %3206
        %v3208 = vsel %vm1034, %v3170, 0.0
        %3209 = vadd.xlane.f32.xlu0 %v3208
        %v3210 = vpop.xlane.xlu0 %3209
        %v3211 = vsel %vm1034, %v3171, 0.0
        %3212 = vadd.xlane.f32.xlu0 %v3211
        %v3213 = vpop.xlane.xlu0 %3212
        %v3214 = vsel %vm1034, %v3172, 0.0
        %3215 = vadd.xlane.f32.xlu0 %v3214
        %v3216 = vpop.xlane.xlu0 %3215
        %v3217 = vsel %vm1034, %v3173, 0.0
        %3218 = vadd.xlane.f32.xlu0 %v3217
        %v3219 = vpop.xlane.xlu0 %3218
        %v3220 = vsel %vm1034, %v3174, 0.0
        %3221 = vadd.xlane.f32.xlu0 %v3220
        %v3222 = vpop.xlane.xlu0 %3221
        %v3223 = vsel %vm1034, %v3175, 0.0
        %3224 = vadd.xlane.f32.xlu0 %v3223
        %v3225 = vpop.xlane.xlu0 %3224
        %v3226 = vmul.f32 %v3180, %v1089
        %v3227 = vmul.f32 %v3183, %v1089
        %v3228 = vmul.f32 %v3186, %v1089
        %v3229 = vmul.f32 %v3189, %v1089
        %v3230 = vmul.f32 %v3192, %v1089
        %v3231 = vmul.f32 %v3195, %v1089
        %v3232 = vmul.f32 %v3198, %v1089
        %v3233 = vmul.f32 %v3201, %v1089
        %v3234 = vmul.f32 %v3204, %v1089
        %v3235 = vmul.f32 %v3207, %v1089
        %v3236 = vmul.f32 %v3210, %v1089
        %v3237 = vmul.f32 %v3213, %v1089
        %v3238 = vmul.f32 %v3216, %v1089
        %v3239 = vmul.f32 %v3219, %v1089
        %v3240 = vmul.f32 %v3222, %v1089
        %v3241 = vmul.f32 %v3225, %v1089
        %v3242 = vsub.f32 %v3160, %v3226
        %v3243 = vsub.f32 %v3161, %v3227
        %v3244 = vsub.f32 %v3162, %v3228
        %v3245 = vsub.f32 %v3163, %v3229
        %v3246 = vsub.f32 %v3164, %v3230
        %v3247 = vsub.f32 %v3165, %v3231
        %v3248 = vsub.f32 %v3166, %v3232
        %v3249 = vsub.f32 %v3167, %v3233
        %v3250 = vsub.f32 %v3168, %v3234
        %v3251 = vsub.f32 %v3169, %v3235
        %v3252 = vsub.f32 %v3170, %v3236
        %v3253 = vsub.f32 %v3171, %v3237
        %v3254 = vsub.f32 %v3172, %v3238
        %v3255 = vsub.f32 %v3173, %v3239
        %v3256 = vsub.f32 %v3174, %v3240
        %v3257 = vsub.f32 %v3175, %v3241
        %v3258 = vmul.f32 %v3242, %v3242
        %v3259 = vmul.f32 %v3243, %v3243
        %v3260 = vmul.f32 %v3244, %v3244
        %v3261 = vmul.f32 %v3245, %v3245
        %v3262 = vmul.f32 %v3246, %v3246
        %v3263 = vmul.f32 %v3247, %v3247
        %v3264 = vmul.f32 %v3248, %v3248
        %v3265 = vmul.f32 %v3249, %v3249
        %v3266 = vmul.f32 %v3250, %v3250
        %v3267 = vmul.f32 %v3251, %v3251
        %v3268 = vmul.f32 %v3252, %v3252
        %v3269 = vmul.f32 %v3253, %v3253
        %v3270 = vmul.f32 %v3254, %v3254
        %v3271 = vmul.f32 %v3255, %v3255
        %v3272 = vmul.f32 %v3256, %v3256
        %v3273 = vmul.f32 %v3257, %v3257
        %v3274 = vsel %vm1034, %v3258, 0.0
        %3275 = vadd.xlane.f32.xlu0 %v3274
        %v3276 = vpop.xlane.xlu0 %3275
        %v3277 = vsel %vm1034, %v3259, 0.0
        %3278 = vadd.xlane.f32.xlu0 %v3277
        %v3279 = vpop.xlane.xlu0 %3278
        %v3280 = vsel %vm1034, %v3260, 0.0
        %3281 = vadd.xlane.f32.xlu0 %v3280
        %v3282 = vpop.xlane.xlu0 %3281
        %v3283 = vsel %vm1034, %v3261, 0.0
        %3284 = vadd.xlane.f32.xlu0 %v3283
        %v3285 = vpop.xlane.xlu0 %3284
        %v3286 = vsel %vm1034, %v3262, 0.0
        %3287 = vadd.xlane.f32.xlu0 %v3286
        %v3288 = vpop.xlane.xlu0 %3287
        %v3289 = vsel %vm1034, %v3263, 0.0
        %3290 = vadd.xlane.f32.xlu0 %v3289
        %v3291 = vpop.xlane.xlu0 %3290
        %v3292 = vsel %vm1034, %v3264, 0.0
        %3293 = vadd.xlane.f32.xlu0 %v3292
        %v3294 = vpop.xlane.xlu0 %3293
        %v3295 = vsel %vm1034, %v3265, 0.0
        %3296 = vadd.xlane.f32.xlu0 %v3295
        %v3297 = vpop.xlane.xlu0 %3296
        %v3298 = vsel %vm1034, %v3266, 0.0
        %3299 = vadd.xlane.f32.xlu0 %v3298
        %v3300 = vpop.xlane.xlu0 %3299
        %v3301 = vsel %vm1034, %v3267, 0.0
        %3302 = vadd.xlane.f32.xlu0 %v3301
        %v3303 = vpop.xlane.xlu0 %3302
        %v3304 = vsel %vm1034, %v3268, 0.0
        %3305 = vadd.xlane.f32.xlu0 %v3304
        %v3306 = vpop.xlane.xlu0 %3305
        %v3307 = vsel %vm1034, %v3269, 0.0
        %3308 = vadd.xlane.f32.xlu0 %v3307
        %v3309 = vpop.xlane.xlu0 %3308
        %v3310 = vsel %vm1034, %v3270, 0.0
        %3311 = vadd.xlane.f32.xlu0 %v3310
        %v3312 = vpop.xlane.xlu0 %3311
        %v3313 = vsel %vm1034, %v3271, 0.0
        %3314 = vadd.xlane.f32.xlu0 %v3313
        %v3315 = vpop.xlane.xlu0 %3314
        %v3316 = vsel %vm1034, %v3272, 0.0
        %3317 = vadd.xlane.f32.xlu0 %v3316
        %v3318 = vpop.xlane.xlu0 %3317
        %v3319 = vsel %vm1034, %v3273, 0.0
        %3320 = vadd.xlane.f32.xlu0 %v3319
        %v3321 = vpop.xlane.xlu0 %3320
        %v3322 = vmul.f32 %v3276, %v1089
        %v3323 = vmul.f32 %v3279, %v1089
        %v3324 = vmul.f32 %v3282, %v1089
        %v3325 = vmul.f32 %v3285, %v1089
        %v3326 = vmul.f32 %v3288, %v1089
        %v3327 = vmul.f32 %v3291, %v1089
        %v3328 = vmul.f32 %v3294, %v1089
        %v3329 = vmul.f32 %v3297, %v1089
        %v3330 = vmul.f32 %v3300, %v1089
        %v3331 = vmul.f32 %v3303, %v1089
        %v3332 = vmul.f32 %v3306, %v1089
        %v3333 = vmul.f32 %v3309, %v1089
        %v3334 = vmul.f32 %v3312, %v1089
        %v3335 = vmul.f32 %v3315, %v1089
        %v3336 = vmul.f32 %v3318, %v1089
        %v3337 = vmul.f32 %v3321, %v1089
        %v3338 = vadd.f32 %v3322, 1e-05
        %v3339 = vadd.f32 %v3323, 1e-05
        %v3340 = vadd.f32 %v3324, 1e-05
        %v3341 = vadd.f32 %v3325, 1e-05
        %v3342 = vadd.f32 %v3326, 1e-05
        %v3343 = vadd.f32 %v3327, 1e-05
        %v3344 = vadd.f32 %v3328, 1e-05
        %v3345 = vadd.f32 %v3329, 1e-05
        %v3346 = vadd.f32 %v3330, 1e-05
        %v3347 = vadd.f32 %v3331, 1e-05
        %v3348 = vadd.f32 %v3332, 1e-05
        %v3349 = vadd.f32 %v3333, 1e-05
        %v3350 = vadd.f32 %v3334, 1e-05
        %v3351 = vadd.f32 %v3335, 1e-05
        %v3352 = vadd.f32 %v3336, 1e-05
        %v3353 = vadd.f32 %v3337, 1e-05
        %v3354 = vrsqrt.pop %v3338
        %v3355 = vmul.f32 %v3354, %v3338
        %v3356 = vmul.f32 %v3355, %v3354
        %v3357 = vmul.f32 0.5, %v3356
        %v3358 = vsub.f32 1.5, %v3357
        %v3359 = vmul.f32 %v3354, %v3358
        %vm3360 = vweird.f32 %v3338
        %vm3361 = vweird.f32 %v3354
        %vm3362 = vmor %vm3360, %vm3361
        %v3363 = vsel %vm3362, %v3354, %v3359
        %v3364 = vrsqrt.pop %v3339
        %v3365 = vmul.f32 %v3364, %v3339
        %v3366 = vmul.f32 %v3365, %v3364
        %v3367 = vmul.f32 0.5, %v3366
        %v3368 = vsub.f32 1.5, %v3367
        %v3369 = vmul.f32 %v3364, %v3368
        %vm3370 = vweird.f32 %v3339
        %vm3371 = vweird.f32 %v3364
        %vm3372 = vmor %vm3370, %vm3371
        %v3373 = vsel %vm3372, %v3364, %v3369
        %v3374 = vrsqrt.pop %v3340
        %v3375 = vmul.f32 %v3374, %v3340
        %v3376 = vmul.f32 %v3375, %v3374
        %v3377 = vmul.f32 0.5, %v3376
        %v3378 = vsub.f32 1.5, %v3377
        %v3379 = vmul.f32 %v3374, %v3378
        %vm3380 = vweird.f32 %v3340
        %vm3381 = vweird.f32 %v3374
        %vm3382 = vmor %vm3380, %vm3381
        %v3383 = vsel %vm3382, %v3374, %v3379
        %v3384 = vrsqrt.pop %v3341
        %v3385 = vmul.f32 %v3384, %v3341
        %v3386 = vmul.f32 %v3385, %v3384
        %v3387 = vmul.f32 0.5, %v3386
        %v3388 = vsub.f32 1.5, %v3387
        %v3389 = vmul.f32 %v3384, %v3388
        %vm3390 = vweird.f32 %v3341
        %vm3391 = vweird.f32 %v3384
        %vm3392 = vmor %vm3390, %vm3391
        %v3393 = vsel %vm3392, %v3384, %v3389
        %v3394 = vrsqrt.pop %v3342
        %v3395 = vmul.f32 %v3394, %v3342
        %v3396 = vmul.f32 %v3395, %v3394
        %v3397 = vmul.f32 0.5, %v3396
        %v3398 = vsub.f32 1.5, %v3397
        %v3399 = vmul.f32 %v3394, %v3398
        %vm3400 = vweird.f32 %v3342
        %vm3401 = vweird.f32 %v3394
        %vm3402 = vmor %vm3400, %vm3401
        %v3403 = vsel %vm3402, %v3394, %v3399
        %v3404 = vrsqrt.pop %v3343
        %v3405 = vmul.f32 %v3404, %v3343
        %v3406 = vmul.f32 %v3405, %v3404
        %v3407 = vmul.f32 0.5, %v3406
        %v3408 = vsub.f32 1.5, %v3407
        %v3409 = vmul.f32 %v3404, %v3408
        %vm3410 = vweird.f32 %v3343
        %vm3411 = vweird.f32 %v3404
        %vm3412 = vmor %vm3410, %vm3411
        %v3413 = vsel %vm3412, %v3404, %v3409
        %v3414 = vrsqrt.pop %v3344
        %v3415 = vmul.f32 %v3414, %v3344
        %v3416 = vmul.f32 %v3415, %v3414
        %v3417 = vmul.f32 0.5, %v3416
        %v3418 = vsub.f32 1.5, %v3417
        %v3419 = vmul.f32 %v3414, %v3418
        %vm3420 = vweird.f32 %v3344
        %vm3421 = vweird.f32 %v3414
        %vm3422 = vmor %vm3420, %vm3421
        %v3423 = vsel %vm3422, %v3414, %v3419
        %v3424 = vrsqrt.pop %v3345
        %v3425 = vmul.f32 %v3424, %v3345
        %v3426 = vmul.f32 %v3425, %v3424
        %v3427 = vmul.f32 0.5, %v3426
        %v3428 = vsub.f32 1.5, %v3427
        %v3429 = vmul.f32 %v3424, %v3428
        %vm3430 = vweird.f32 %v3345
        %vm3431 = vweird.f32 %v3424
        %vm3432 = vmor %vm3430, %vm3431
        %v3433 = vsel %vm3432, %v3424, %v3429
        %v3434 = vrsqrt.pop %v3346
        %v3435 = vmul.f32 %v3434, %v3346
        %v3436 = vmul.f32 %v3435, %v3434
        %v3437 = vmul.f32 0.5, %v3436
        %v3438 = vsub.f32 1.5, %v3437
        %v3439 = vmul.f32 %v3434, %v3438
        %vm3440 = vweird.f32 %v3346
        %vm3441 = vweird.f32 %v3434
        %vm3442 = vmor %vm3440, %vm3441
        %v3443 = vsel %vm3442, %v3434, %v3439
        %v3444 = vrsqrt.pop %v3347
        %v3445 = vmul.f32 %v3444, %v3347
        %v3446 = vmul.f32 %v3445, %v3444
        %v3447 = vmul.f32 0.5, %v3446
        %v3448 = vsub.f32 1.5, %v3447
        %v3449 = vmul.f32 %v3444, %v3448
        %vm3450 = vweird.f32 %v3347
        %vm3451 = vweird.f32 %v3444
        %vm3452 = vmor %vm3450, %vm3451
        %v3453 = vsel %vm3452, %v3444, %v3449
        %v3454 = vrsqrt.pop %v3348
        %v3455 = vmul.f32 %v3454, %v3348
        %v3456 = vmul.f32 %v3455, %v3454
        %v3457 = vmul.f32 0.5, %v3456
        %v3458 = vsub.f32 1.5, %v3457
        %v3459 = vmul.f32 %v3454, %v3458
        %vm3460 = vweird.f32 %v3348
        %vm3461 = vweird.f32 %v3454
        %vm3462 = vmor %vm3460, %vm3461
        %v3463 = vsel %vm3462, %v3454, %v3459
        %v3464 = vrsqrt.pop %v3349
        %v3465 = vmul.f32 %v3464, %v3349
        %v3466 = vmul.f32 %v3465, %v3464
        %v3467 = vmul.f32 0.5, %v3466
        %v3468 = vsub.f32 1.5, %v3467
        %v3469 = vmul.f32 %v3464, %v3468
        %vm3470 = vweird.f32 %v3349
        %vm3471 = vweird.f32 %v3464
        %vm3472 = vmor %vm3470, %vm3471
        %v3473 = vsel %vm3472, %v3464, %v3469
        %v3474 = vrsqrt.pop %v3350
        %v3475 = vmul.f32 %v3474, %v3350
        %v3476 = vmul.f32 %v3475, %v3474
        %v3477 = vmul.f32 0.5, %v3476
        %v3478 = vsub.f32 1.5, %v3477
        %v3479 = vmul.f32 %v3474, %v3478
        %vm3480 = vweird.f32 %v3350
        %vm3481 = vweird.f32 %v3474
        %vm3482 = vmor %vm3480, %vm3481
        %v3483 = vsel %vm3482, %v3474, %v3479
        %v3484 = vrsqrt.pop %v3351
        %v3485 = vmul.f32 %v3484, %v3351
        %v3486 = vmul.f32 %v3485, %v3484
        %v3487 = vmul.f32 0.5, %v3486
        %v3488 = vsub.f32 1.5, %v3487
        %v3489 = vmul.f32 %v3484, %v3488
        %vm3490 = vweird.f32 %v3351
        %vm3491 = vweird.f32 %v3484
        %vm3492 = vmor %vm3490, %vm3491
        %v3493 = vsel %vm3492, %v3484, %v3489
        %v3494 = vrsqrt.pop %v3352
        %v3495 = vmul.f32 %v3494, %v3352
        %v3496 = vmul.f32 %v3495, %v3494
        %v3497 = vmul.f32 0.5, %v3496
        %v3498 = vsub.f32 1.5, %v3497
        %v3499 = vmul.f32 %v3494, %v3498
        %vm3500 = vweird.f32 %v3352
        %vm3501 = vweird.f32 %v3494
        %vm3502 = vmor %vm3500, %vm3501
        %v3503 = vsel %vm3502, %v3494, %v3499
        %v3504 = vrsqrt.pop %v3353
        %v3505 = vmul.f32 %v3504, %v3353
        %v3506 = vmul.f32 %v3505, %v3504
        %v3507 = vmul.f32 0.5, %v3506
        %v3508 = vsub.f32 1.5, %v3507
        %v3509 = vmul.f32 %v3504, %v3508
        %vm3510 = vweird.f32 %v3353
        %vm3511 = vweird.f32 %v3504
        %vm3512 = vmor %vm3510, %vm3511
        %v3513 = vsel %vm3512, %v3504, %v3509
        %v3514 = vmul.f32 %v3242, %v3363
        %v3515 = vmul.f32 %v3243, %v3373
        %v3516 = vmul.f32 %v3244, %v3383
        %v3517 = vmul.f32 %v3245, %v3393
        %v3518 = vmul.f32 %v3246, %v3403
        %v3519 = vmul.f32 %v3247, %v3413
        %v3520 = vmul.f32 %v3248, %v3423
        %v3521 = vmul.f32 %v3249, %v3433
        %v3522 = vmul.f32 %v3250, %v3443
        %v3523 = vmul.f32 %v3251, %v3453
        %v3524 = vmul.f32 %v3252, %v3463
        %v3525 = vmul.f32 %v3253, %v3473
        %v3526 = vmul.f32 %v3254, %v3483
        %v3527 = vmul.f32 %v3255, %v3493
        %v3528 = vmul.f32 %v3256, %v3503
        %v3529 = vmul.f32 %v3257, %v3513
        %v3531 = vperm.slane %v3176, 0
        %v3533 = vmul.f32 %v3514, %v3531
        %v3534 = vmul.f32 %v3515, %v3531
        %v3535 = vmul.f32 %v3516, %v3531
        %v3536 = vmul.f32 %v3517, %v3531
        %v3537 = vmul.f32 %v3518, %v3531
        %v3538 = vmul.f32 %v3519, %v3531
        %v3539 = vmul.f32 %v3520, %v3531
        %v3540 = vmul.f32 %v3521, %v3531
        %v3541 = vmul.f32 %v3522, %v3531
        %v3542 = vmul.f32 %v3523, %v3531
        %v3543 = vmul.f32 %v3524, %v3531
        %v3544 = vmul.f32 %v3525, %v3531
        %v3545 = vmul.f32 %v3526, %v3531
        %v3546 = vmul.f32 %v3527, %v3531
        %v3547 = vmul.f32 %v3528, %v3531
        %v3548 = vmul.f32 %v3529, %v3531
        %v3550 = vperm.slane %v3177, 0
        %v3552 = vadd.f32 %v3533, %v3550
        %v3553 = vadd.f32 %v3534, %v3550
        %v3554 = vadd.f32 %v3535, %v3550
        %v3555 = vadd.f32 %v3536, %v3550
        %v3556 = vadd.f32 %v3537, %v3550
        %v3557 = vadd.f32 %v3538, %v3550
        %v3558 = vadd.f32 %v3539, %v3550
        %v3559 = vadd.f32 %v3540, %v3550
        %v3560 = vadd.f32 %v3541, %v3550
        %v3561 = vadd.f32 %v3542, %v3550
        %v3562 = vadd.f32 %v3543, %v3550
        %v3563 = vadd.f32 %v3544, %v3550
        %v3564 = vadd.f32 %v3545, %v3550
        %v3565 = vadd.f32 %v3546, %v3550
        %v3566 = vadd.f32 %v3547, %v3550
        %v3567 = vadd.f32 %v3548, %v3550
        %v3568 = vpack.c.bf16 %v3553, %v3552
        %v3569 = vpack.c.bf16 %v3555, %v3554
        %v3570 = vpack.c.bf16 %v3557, %v3556
        %v3571 = vpack.c.bf16 %v3559, %v3558
        %v3572 = vpack.c.bf16 %v3561, %v3560
        %v3573 = vpack.c.bf16 %v3563, %v3562
        %v3574 = vpack.c.bf16 %v3565, %v3564
        %v3575 = vpack.c.bf16 %v3567, %v3566
        %v3576 = vld [vmem:[%s14] sm:$0xf]
        %v3577 = vld [vmem:[%s14 + $0x4] sm:$0xf]
        %v3578 = vld [vmem:[%s14 + $0x8] sm:$0xf]
        %v3579 = vld [vmem:[%s14 + $0xc] sm:$0xf]
        %v3580 = vld [vmem:[%s15] sm:$0x1]
        %v3582 = vperm.slane %v3580, 0
        %v3588 = vunpack.c.l.b16 %v3576
        %v3589 = vunpack.c.l.b16 %v3577
        %v3590 = vunpack.c.l.b16 %v3578
        %v3591 = vunpack.c.l.b16 %v3579
        %v3592 = vpack.c.b16 %v3589, %v3588
        %v3593 = vpack.c.b16 %v3591, %v3590
        %v3597 = vsel %vm1034, %v3568, 0
        %v3600 = vsel %vm1034, %v3569, 0
        %v3603 = vsel %vm1034, %v3570, 0
        %v3606 = vsel %vm1034, %v3571, 0
        %v3609 = vsel %vm1034, %v3572, 0
        %v3612 = vsel %vm1034, %v3573, 0
        %v3615 = vsel %vm1034, %v3574, 0
        %v3618 = vsel %vm1034, %v3575, 0
        %3620 = vmatpush.bf16.msra.mxu0 0
        %3621 = vmatpush.bf16.msra.mxu0 0
        %3622 = vmatpush.bf16.msra.mxu0 0
        %3623 = vmatpush.bf16.msra.mxu0 0
        %3624 = vmatpush.bf16.msra.mxu0 0
        %3625 = vmatpush.bf16.msra.mxu0 0
        %3626 = vmatpush.bf16.msra.mxu0 %v3593
        %3627 = vmatpush.bf16.msra.mxu0 %v3592
        %3628 = vmatmul.bf16.gmra.mxu0 %v3597
        %v3629 = vpop.f32.mrf.mxu0
        %v3630 = vadd.f32 %v3582, %v3629
        %v3631 = vpop.f32.mrf.mxu0
        %v3632 = vadd.f32 %v3582, %v3631
        %3633 = vmatmul.bf16.gmra.mxu0 %v3600
        %v3634 = vpop.f32.mrf.mxu0
        %v3635 = vadd.f32 %v3582, %v3634
        %v3636 = vpop.f32.mrf.mxu0
        %v3637 = vadd.f32 %v3582, %v3636
        %3638 = vmatmul.bf16.gmra.mxu0 %v3603
        %v3639 = vpop.f32.mrf.mxu0
        %v3640 = vadd.f32 %v3582, %v3639
        %v3641 = vpop.f32.mrf.mxu0
        %v3642 = vadd.f32 %v3582, %v3641
        %3643 = vmatmul.bf16.gmra.mxu0 %v3606
        %v3644 = vpop.f32.mrf.mxu0
        %v3645 = vadd.f32 %v3582, %v3644
        %v3646 = vpop.f32.mrf.mxu0
        %v3647 = vadd.f32 %v3582, %v3646
        %3648 = vmatmul.bf16.gmra.mxu0 %v3609
        %v3649 = vpop.f32.mrf.mxu0
        %v3650 = vadd.f32 %v3582, %v3649
        %v3651 = vpop.f32.mrf.mxu0
        %v3652 = vadd.f32 %v3582, %v3651
        %3653 = vmatmul.bf16.gmra.mxu0 %v3612
        %v3654 = vpop.f32.mrf.mxu0
        %v3655 = vadd.f32 %v3582, %v3654
        %v3656 = vpop.f32.mrf.mxu0
        %v3657 = vadd.f32 %v3582, %v3656
        %3658 = vmatmul.bf16.gmra.mxu0 %v3615
        %v3659 = vpop.f32.mrf.mxu0
        %v3660 = vadd.f32 %v3582, %v3659
        %v3661 = vpop.f32.mrf.mxu0
        %v3662 = vadd.f32 %v3582, %v3661
        %3663 = vmatmul.bf16.gmra.mxu0 %v3618
        %v3664 = vpop.f32.mrf.mxu0
        %v3665 = vadd.f32 %v3582, %v3664
        %v3666 = vpop.f32.mrf.mxu0
        %v3667 = vadd.f32 %v3582, %v3666
        %3668 = vdwg.mxu0
        %v3669 = vmul.f32 %v3630, %v3630
        %v3670 = vmul.f32 %v3632, %v3632
        %v3671 = vmul.f32 %v3635, %v3635
        %v3672 = vmul.f32 %v3637, %v3637
        %v3673 = vmul.f32 %v3640, %v3640
        %v3674 = vmul.f32 %v3642, %v3642
        %v3675 = vmul.f32 %v3645, %v3645
        %v3676 = vmul.f32 %v3647, %v3647
        %v3677 = vmul.f32 %v3650, %v3650
        %v3678 = vmul.f32 %v3652, %v3652
        %v3679 = vmul.f32 %v3655, %v3655
        %v3680 = vmul.f32 %v3657, %v3657
        %v3681 = vmul.f32 %v3660, %v3660
        %v3682 = vmul.f32 %v3662, %v3662
        %v3683 = vmul.f32 %v3665, %v3665
        %v3684 = vmul.f32 %v3667, %v3667
        %v3685 = vmul.f32 %v3630, %v3669
        %v3686 = vmul.f32 %v3632, %v3670
        %v3687 = vmul.f32 %v3635, %v3671
        %v3688 = vmul.f32 %v3637, %v3672
        %v3689 = vmul.f32 %v3640, %v3673
        %v3690 = vmul.f32 %v3642, %v3674
        %v3691 = vmul.f32 %v3645, %v3675
        %v3692 = vmul.f32 %v3647, %v3676
        %v3693 = vmul.f32 %v3650, %v3677
        %v3694 = vmul.f32 %v3652, %v3678
        %v3695 = vmul.f32 %v3655, %v3679
        %v3696 = vmul.f32 %v3657, %v3680
        %v3697 = vmul.f32 %v3660, %v3681
        %v3698 = vmul.f32 %v3662, %v3682
        %v3699 = vmul.f32 %v3665, %v3683
        %v3700 = vmul.f32 %v3667, %v3684
        %v3701 = vmul.f32 %v3685, 0.044715
        %v3702 = vmul.f32 %v3686, 0.044715
        %v3703 = vmul.f32 %v3687, 0.044715
        %v3704 = vmul.f32 %v3688, 0.044715
        %v3705 = vmul.f32 %v3689, 0.044715
        %v3706 = vmul.f32 %v3690, 0.044715
        %v3707 = vmul.f32 %v3691, 0.044715
        %v3708 = vmul.f32 %v3692, 0.044715
        %v3709 = vmul.f32 %v3693, 0.044715
        %v3710 = vmul.f32 %v3694, 0.044715
        %v3711 = vmul.f32 %v3695, 0.044715
        %v3712 = vmul.f32 %v3696, 0.044715
        %v3713 = vmul.f32 %v3697, 0.044715
        %v3714 = vmul.f32 %v3698, 0.044715
        %v3715 = vmul.f32 %v3699, 0.044715
        %v3716 = vmul.f32 %v3700, 0.044715
        %v3717 = vadd.f32 %v3630, %v3701
        %v3718 = vadd.f32 %v3632, %v3702
        %v3719 = vadd.f32 %v3635, %v3703
        %v3720 = vadd.f32 %v3637, %v3704
        %v3721 = vadd.f32 %v3640, %v3705
        %v3722 = vadd.f32 %v3642, %v3706
        %v3723 = vadd.f32 %v3645, %v3707
        %v3724 = vadd.f32 %v3647, %v3708
        %v3725 = vadd.f32 %v3650, %v3709
        %v3726 = vadd.f32 %v3652, %v3710
        %v3727 = vadd.f32 %v3655, %v3711
        %v3728 = vadd.f32 %v3657, %v3712
        %v3729 = vadd.f32 %v3660, %v3713
        %v3730 = vadd.f32 %v3662, %v3714
        %v3731 = vadd.f32 %v3665, %v3715
        %v3732 = vadd.f32 %v3667, %v3716
        %v3733 = vmul.f32 %v3717, 0.7978846
        %v3734 = vmul.f32 %v3718, 0.7978846
        %v3735 = vmul.f32 %v3719, 0.7978846
        %v3736 = vmul.f32 %v3720, 0.7978846
        %v3737 = vmul.f32 %v3721, 0.7978846
        %v3738 = vmul.f32 %v3722, 0.7978846
        %v3739 = vmul.f32 %v3723, 0.7978846
        %v3740 = vmul.f32 %v3724, 0.7978846
        %v3741 = vmul.f32 %v3725, 0.7978846
        %v3742 = vmul.f32 %v3726, 0.7978846
        %v3743 = vmul.f32 %v3727, 0.7978846
        %v3744 = vmul.f32 %v3728, 0.7978846
        %v3745 = vmul.f32 %v3729, 0.7978846
        %v3746 = vmul.f32 %v3730, 0.7978846
        %v3747 = vmul.f32 %v3731, 0.7978846
        %v3748 = vmul.f32 %v3732, 0.7978846
        %v3749 = vtanh.pop %v3733
        %v3750 = vtanh.pop %v3734
        %v3751 = vtanh.pop %v3735
        %v3752 = vtanh.pop %v3736
        %v3753 = vtanh.pop %v3737
        %v3754 = vtanh.pop %v3738
        %v3755 = vtanh.pop %v3739
        %v3756 = vtanh.pop %v3740
        %v3757 = vtanh.pop %v3741
        %v3758 = vtanh.pop %v3742
        %v3759 = vtanh.pop %v3743
        %v3760 = vtanh.pop %v3744
        %v3761 = vtanh.pop %v3745
        %v3762 = vtanh.pop %v3746
        %v3763 = vtanh.pop %v3747
        %v3764 = vtanh.pop %v3748
        %v3765 = vadd.f32 %v3749, 1.0
        %v3766 = vadd.f32 %v3750, 1.0
        %v3767 = vadd.f32 %v3751, 1.0
        %v3768 = vadd.f32 %v3752, 1.0
        %v3769 = vadd.f32 %v3753, 1.0
        %v3770 = vadd.f32 %v3754, 1.0
        %v3771 = vadd.f32 %v3755, 1.0
        %v3772 = vadd.f32 %v3756, 1.0
        %v3773 = vadd.f32 %v3757, 1.0
        %v3774 = vadd.f32 %v3758, 1.0
        %v3775 = vadd.f32 %v3759, 1.0
        %v3776 = vadd.f32 %v3760, 1.0
        %v3777 = vadd.f32 %v3761, 1.0
        %v3778 = vadd.f32 %v3762, 1.0
        %v3779 = vadd.f32 %v3763, 1.0
        %v3780 = vadd.f32 %v3764, 1.0
        %v3781 = vmul.f32 %v3765, 0.5
        %v3782 = vmul.f32 %v3766, 0.5
        %v3783 = vmul.f32 %v3767, 0.5
        %v3784 = vmul.f32 %v3768, 0.5
        %v3785 = vmul.f32 %v3769, 0.5
        %v3786 = vmul.f32 %v3770, 0.5
        %v3787 = vmul.f32 %v3771, 0.5
        %v3788 = vmul.f32 %v3772, 0.5
        %v3789 = vmul.f32 %v3773, 0.5
        %v3790 = vmul.f32 %v3774, 0.5
        %v3791 = vmul.f32 %v3775, 0.5
        %v3792 = vmul.f32 %v3776, 0.5
        %v3793 = vmul.f32 %v3777, 0.5
        %v3794 = vmul.f32 %v3778, 0.5
        %v3795 = vmul.f32 %v3779, 0.5
        %v3796 = vmul.f32 %v3780, 0.5
        %v3797 = vmul.f32 %v3630, %v3781
        %v3798 = vmul.f32 %v3632, %v3782
        %v3799 = vmul.f32 %v3635, %v3783
        %v3800 = vmul.f32 %v3637, %v3784
        %v3801 = vmul.f32 %v3640, %v3785
        %v3802 = vmul.f32 %v3642, %v3786
        %v3803 = vmul.f32 %v3645, %v3787
        %v3804 = vmul.f32 %v3647, %v3788
        %v3805 = vmul.f32 %v3650, %v3789
        %v3806 = vmul.f32 %v3652, %v3790
        %v3807 = vmul.f32 %v3655, %v3791
        %v3808 = vmul.f32 %v3657, %v3792
        %v3809 = vmul.f32 %v3660, %v3793
        %v3810 = vmul.f32 %v3662, %v3794
        %v3811 = vmul.f32 %v3665, %v3795
        %v3812 = vmul.f32 %v3667, %v3796
        %v3813 = vpack.c.bf16 %v3798, %v3797
        %v3814 = vpack.c.bf16 %v3800, %v3799
        %v3815 = vpack.c.bf16 %v3802, %v3801
        %v3816 = vpack.c.bf16 %v3804, %v3803
        %v3817 = vpack.c.bf16 %v3806, %v3805
        %v3818 = vpack.c.bf16 %v3808, %v3807
        %v3819 = vpack.c.bf16 %v3810, %v3809
        %v3820 = vpack.c.bf16 %v3812, %v3811
        %v3821 = vld [vmem:[%s16] sm:$0xf]
        %v3822 = vld [vmem:[%s16 + $0x4] sm:$0xf]
        %v3823 = vld [vmem:[%s16 + $0x8] sm:$0xf]
        %v3824 = vld [vmem:[%s16 + $0xc] sm:$0xf]
        %v3825 = vld [vmem:[%s16 + $0x10] sm:$0xf]
        %v3826 = vld [vmem:[%s16 + $0x14] sm:$0xf]
        %v3827 = vld [vmem:[%s16 + $0x18] sm:$0xf]
        %v3828 = vld [vmem:[%s16 + $0x1c] sm:$0xf]
        %v3829 = vld [vmem:[%s16 + $0x20] sm:$0xf]
        %v3830 = vld [vmem:[%s16 + $0x24] sm:$0xf]
        %v3831 = vld [vmem:[%s16 + $0x28] sm:$0xf]
        %v3832 = vld [vmem:[%s16 + $0x2c] sm:$0xf]
        %v3833 = vld [vmem:[%s16 + $0x30] sm:$0xf]
        %v3834 = vld [vmem:[%s16 + $0x34] sm:$0xf]
        %v3835 = vld [vmem:[%s16 + $0x38] sm:$0xf]
        %v3836 = vld [vmem:[%s16 + $0x3c] sm:$0xf]
        %v3853 = vunpack.c.l.b16 %v3821
        %v3854 = vunpack.c.l.b16 %v3822
        %v3855 = vunpack.c.l.b16 %v3823
        %v3856 = vunpack.c.l.b16 %v3824
        %v3857 = vunpack.c.l.b16 %v3825
        %v3858 = vunpack.c.l.b16 %v3826
        %v3859 = vunpack.c.l.b16 %v3827
        %v3860 = vunpack.c.l.b16 %v3828
        %v3861 = vunpack.c.l.b16 %v3829
        %v3862 = vunpack.c.l.b16 %v3830
        %v3863 = vunpack.c.l.b16 %v3831
        %v3864 = vunpack.c.l.b16 %v3832
        %v3865 = vunpack.c.l.b16 %v3833
        %v3866 = vunpack.c.l.b16 %v3834
        %v3867 = vunpack.c.l.b16 %v3835
        %v3868 = vunpack.c.l.b16 %v3836
        %v3869 = vpack.c.b16 %v3854, %v3853
        %v3870 = vpack.c.b16 %v3856, %v3855
        %v3871 = vpack.c.b16 %v3858, %v3857
        %v3872 = vpack.c.b16 %v3860, %v3859
        %v3873 = vpack.c.b16 %v3862, %v3861
        %v3874 = vpack.c.b16 %v3864, %v3863
        %v3875 = vpack.c.b16 %v3866, %v3865
        %v3876 = vpack.c.b16 %v3868, %v3867
        %3885 = vmatpush.bf16.msra.mxu0 %v3876
        %3886 = vmatpush.bf16.msra.mxu0 %v3875
        %3887 = vmatpush.bf16.msra.mxu0 %v3874
        %3888 = vmatpush.bf16.msra.mxu0 %v3873
        %3889 = vmatpush.bf16.msra.mxu0 %v3872
        %3890 = vmatpush.bf16.msra.mxu0 %v3871
        %3891 = vmatpush.bf16.msra.mxu0 %v3870
        %3892 = vmatpush.bf16.msra.mxu0 %v3869
        %3893 = vmatmul.bf16.gmra.mxu0 %v3813
        %v3894 = vpop.f32.mrf.mxu0
        %v3895 = vadd.f32 0.0, %v3894
        %v3896 = vpop.f32.mrf.mxu0
        %v3897 = vadd.f32 0.0, %v3896
        %3898 = vmatmul.bf16.gmra.mxu0 %v3814
        %v3899 = vpop.f32.mrf.mxu0
        %v3900 = vadd.f32 0.0, %v3899
        %v3901 = vpop.f32.mrf.mxu0
        %v3902 = vadd.f32 0.0, %v3901
        %3903 = vmatmul.bf16.gmra.mxu0 %v3815
        %v3904 = vpop.f32.mrf.mxu0
        %v3905 = vadd.f32 0.0, %v3904
        %v3906 = vpop.f32.mrf.mxu0
        %v3907 = vadd.f32 0.0, %v3906
        %3908 = vmatmul.bf16.gmra.mxu0 %v3816
        %v3909 = vpop.f32.mrf.mxu0
        %v3910 = vadd.f32 0.0, %v3909
        %v3911 = vpop.f32.mrf.mxu0
        %v3912 = vadd.f32 0.0, %v3911
        %3913 = vmatmul.bf16.gmra.mxu0 %v3817
        %v3914 = vpop.f32.mrf.mxu0
        %v3915 = vadd.f32 0.0, %v3914
        %v3916 = vpop.f32.mrf.mxu0
        %v3917 = vadd.f32 0.0, %v3916
        %3918 = vmatmul.bf16.gmra.mxu0 %v3818
        %v3919 = vpop.f32.mrf.mxu0
        %v3920 = vadd.f32 0.0, %v3919
        %v3921 = vpop.f32.mrf.mxu0
        %v3922 = vadd.f32 0.0, %v3921
        %3923 = vmatmul.bf16.gmra.mxu0 %v3819
        %v3924 = vpop.f32.mrf.mxu0
        %v3925 = vadd.f32 0.0, %v3924
        %v3926 = vpop.f32.mrf.mxu0
        %v3927 = vadd.f32 0.0, %v3926
        %3928 = vmatmul.bf16.gmra.mxu0 %v3820
        %v3929 = vpop.f32.mrf.mxu0
        %v3930 = vadd.f32 0.0, %v3929
        %v3931 = vpop.f32.mrf.mxu0
        %v3932 = vadd.f32 0.0, %v3931
        %3933 = vdwg.mxu0
        %v3934 = vadd.f32 %v3160, %v3895
        %v3935 = vadd.f32 %v3161, %v3897
        %v3936 = vadd.f32 %v3162, %v3900
        %v3937 = vadd.f32 %v3163, %v3902
        %v3938 = vadd.f32 %v3164, %v3905
        %v3939 = vadd.f32 %v3165, %v3907
        %v3940 = vadd.f32 %v3166, %v3910
        %v3941 = vadd.f32 %v3167, %v3912
        %v3942 = vadd.f32 %v3168, %v3915
        %v3943 = vadd.f32 %v3169, %v3917
        %v3944 = vadd.f32 %v3170, %v3920
        %v3945 = vadd.f32 %v3171, %v3922
        %v3946 = vadd.f32 %v3172, %v3925
        %v3947 = vadd.f32 %v3173, %v3927
        %v3948 = vadd.f32 %v3174, %v3930
        %v3949 = vadd.f32 %v3175, %v3932
        %v3950 = vld [vmem:[%s17] sm:$0x1]
        %v3952 = vperm.slane %v3950, 0
        %v3954 = vadd.f32 %v3934, %v3952
        %v3955 = vadd.f32 %v3935, %v3952
        %v3956 = vadd.f32 %v3936, %v3952
        %v3957 = vadd.f32 %v3937, %v3952
        %v3958 = vadd.f32 %v3938, %v3952
        %v3959 = vadd.f32 %v3939, %v3952
        %v3960 = vadd.f32 %v3940, %v3952
        %v3961 = vadd.f32 %v3941, %v3952
        %v3962 = vadd.f32 %v3942, %v3952
        %v3963 = vadd.f32 %v3943, %v3952
        %v3964 = vadd.f32 %v3944, %v3952
        %v3965 = vadd.f32 %v3945, %v3952
        %v3966 = vadd.f32 %v3946, %v3952
        %v3967 = vadd.f32 %v3947, %v3952
        %v3968 = vadd.f32 %v3948, %v3952
        %v3969 = vadd.f32 %v3949, %v3952
        %s3970 = scalar_lea.vmem %s6, 1
        %v3971 = vld [vmem:[%s3970] sm:$0x1]
        %s3972 = scalar_lea.vmem %s7, 1
        %v3973 = vld [vmem:[%s3972] sm:$0x1]
        %v3974 = vsel %vm1034, %v3954, 0.0
        %3975 = vadd.xlane.f32.xlu0 %v3974
        %v3976 = vpop.xlane.xlu0 %3975
        %v3977 = vsel %vm1034, %v3955, 0.0
        %3978 = vadd.xlane.f32.xlu0 %v3977
        %v3979 = vpop.xlane.xlu0 %3978
        %v3980 = vsel %vm1034, %v3956, 0.0
        %3981 = vadd.xlane.f32.xlu0 %v3980
        %v3982 = vpop.xlane.xlu0 %3981
        %v3983 = vsel %vm1034, %v3957, 0.0
        %3984 = vadd.xlane.f32.xlu0 %v3983
        %v3985 = vpop.xlane.xlu0 %3984
        %v3986 = vsel %vm1034, %v3958, 0.0
        %3987 = vadd.xlane.f32.xlu0 %v3986
        %v3988 = vpop.xlane.xlu0 %3987
        %v3989 = vsel %vm1034, %v3959, 0.0
        %3990 = vadd.xlane.f32.xlu0 %v3989
        %v3991 = vpop.xlane.xlu0 %3990
        %v3992 = vsel %vm1034, %v3960, 0.0
        %3993 = vadd.xlane.f32.xlu0 %v3992
        %v3994 = vpop.xlane.xlu0 %3993
        %v3995 = vsel %vm1034, %v3961, 0.0
        %3996 = vadd.xlane.f32.xlu0 %v3995
        %v3997 = vpop.xlane.xlu0 %3996
        %v3998 = vsel %vm1034, %v3962, 0.0
        %3999 = vadd.xlane.f32.xlu0 %v3998
        %v4000 = vpop.xlane.xlu0 %3999
        %v4001 = vsel %vm1034, %v3963, 0.0
        %4002 = vadd.xlane.f32.xlu0 %v4001
        %v4003 = vpop.xlane.xlu0 %4002
        %v4004 = vsel %vm1034, %v3964, 0.0
        %4005 = vadd.xlane.f32.xlu0 %v4004
        %v4006 = vpop.xlane.xlu0 %4005
        %v4007 = vsel %vm1034, %v3965, 0.0
        %4008 = vadd.xlane.f32.xlu0 %v4007
        %v4009 = vpop.xlane.xlu0 %4008
        %v4010 = vsel %vm1034, %v3966, 0.0
        %4011 = vadd.xlane.f32.xlu0 %v4010
        %v4012 = vpop.xlane.xlu0 %4011
        %v4013 = vsel %vm1034, %v3967, 0.0
        %4014 = vadd.xlane.f32.xlu0 %v4013
        %v4015 = vpop.xlane.xlu0 %4014
        %v4016 = vsel %vm1034, %v3968, 0.0
        %4017 = vadd.xlane.f32.xlu0 %v4016
        %v4018 = vpop.xlane.xlu0 %4017
        %v4019 = vsel %vm1034, %v3969, 0.0
        %4020 = vadd.xlane.f32.xlu0 %v4019
        %v4021 = vpop.xlane.xlu0 %4020
        %v4022 = vmul.f32 %v3976, %v1089
        %v4023 = vmul.f32 %v3979, %v1089
        %v4024 = vmul.f32 %v3982, %v1089
        %v4025 = vmul.f32 %v3985, %v1089
        %v4026 = vmul.f32 %v3988, %v1089
        %v4027 = vmul.f32 %v3991, %v1089
        %v4028 = vmul.f32 %v3994, %v1089
        %v4029 = vmul.f32 %v3997, %v1089
        %v4030 = vmul.f32 %v4000, %v1089
        %v4031 = vmul.f32 %v4003, %v1089
        %v4032 = vmul.f32 %v4006, %v1089
        %v4033 = vmul.f32 %v4009, %v1089
        %v4034 = vmul.f32 %v4012, %v1089
        %v4035 = vmul.f32 %v4015, %v1089
        %v4036 = vmul.f32 %v4018, %v1089
        %v4037 = vmul.f32 %v4021, %v1089
        %v4038 = vsub.f32 %v3954, %v4022
        %v4039 = vsub.f32 %v3955, %v4023
        %v4040 = vsub.f32 %v3956, %v4024
        %v4041 = vsub.f32 %v3957, %v4025
        %v4042 = vsub.f32 %v3958, %v4026
        %v4043 = vsub.f32 %v3959, %v4027
        %v4044 = vsub.f32 %v3960, %v4028
        %v4045 = vsub.f32 %v3961, %v4029
        %v4046 = vsub.f32 %v3962, %v4030
        %v4047 = vsub.f32 %v3963, %v4031
        %v4048 = vsub.f32 %v3964, %v4032
        %v4049 = vsub.f32 %v3965, %v4033
        %v4050 = vsub.f32 %v3966, %v4034
        %v4051 = vsub.f32 %v3967, %v4035
        %v4052 = vsub.f32 %v3968, %v4036
        %v4053 = vsub.f32 %v3969, %v4037
        %v4054 = vmul.f32 %v4038, %v4038
        %v4055 = vmul.f32 %v4039, %v4039
        %v4056 = vmul.f32 %v4040, %v4040
        %v4057 = vmul.f32 %v4041, %v4041
        %v4058 = vmul.f32 %v4042, %v4042
        %v4059 = vmul.f32 %v4043, %v4043
        %v4060 = vmul.f32 %v4044, %v4044
        %v4061 = vmul.f32 %v4045, %v4045
        %v4062 = vmul.f32 %v4046, %v4046
        %v4063 = vmul.f32 %v4047, %v4047
        %v4064 = vmul.f32 %v4048, %v4048
        %v4065 = vmul.f32 %v4049, %v4049
        %v4066 = vmul.f32 %v4050, %v4050
        %v4067 = vmul.f32 %v4051, %v4051
        %v4068 = vmul.f32 %v4052, %v4052
        %v4069 = vmul.f32 %v4053, %v4053
        %v4070 = vsel %vm1034, %v4054, 0.0
        %4071 = vadd.xlane.f32.xlu0 %v4070
        %v4072 = vpop.xlane.xlu0 %4071
        %v4073 = vsel %vm1034, %v4055, 0.0
        %4074 = vadd.xlane.f32.xlu0 %v4073
        %v4075 = vpop.xlane.xlu0 %4074
        %v4076 = vsel %vm1034, %v4056, 0.0
        %4077 = vadd.xlane.f32.xlu0 %v4076
        %v4078 = vpop.xlane.xlu0 %4077
        %v4079 = vsel %vm1034, %v4057, 0.0
        %4080 = vadd.xlane.f32.xlu0 %v4079
        %v4081 = vpop.xlane.xlu0 %4080
        %v4082 = vsel %vm1034, %v4058, 0.0
        %4083 = vadd.xlane.f32.xlu0 %v4082
        %v4084 = vpop.xlane.xlu0 %4083
        %v4085 = vsel %vm1034, %v4059, 0.0
        %4086 = vadd.xlane.f32.xlu0 %v4085
        %v4087 = vpop.xlane.xlu0 %4086
        %v4088 = vsel %vm1034, %v4060, 0.0
        %4089 = vadd.xlane.f32.xlu0 %v4088
        %v4090 = vpop.xlane.xlu0 %4089
        %v4091 = vsel %vm1034, %v4061, 0.0
        %4092 = vadd.xlane.f32.xlu0 %v4091
        %v4093 = vpop.xlane.xlu0 %4092
        %v4094 = vsel %vm1034, %v4062, 0.0
        %4095 = vadd.xlane.f32.xlu0 %v4094
        %v4096 = vpop.xlane.xlu0 %4095
        %v4097 = vsel %vm1034, %v4063, 0.0
        %4098 = vadd.xlane.f32.xlu0 %v4097
        %v4099 = vpop.xlane.xlu0 %4098
        %v4100 = vsel %vm1034, %v4064, 0.0
        %4101 = vadd.xlane.f32.xlu0 %v4100
        %v4102 = vpop.xlane.xlu0 %4101
        %v4103 = vsel %vm1034, %v4065, 0.0
        %4104 = vadd.xlane.f32.xlu0 %v4103
        %v4105 = vpop.xlane.xlu0 %4104
        %v4106 = vsel %vm1034, %v4066, 0.0
        %4107 = vadd.xlane.f32.xlu0 %v4106
        %v4108 = vpop.xlane.xlu0 %4107
        %v4109 = vsel %vm1034, %v4067, 0.0
        %4110 = vadd.xlane.f32.xlu0 %v4109
        %v4111 = vpop.xlane.xlu0 %4110
        %v4112 = vsel %vm1034, %v4068, 0.0
        %4113 = vadd.xlane.f32.xlu0 %v4112
        %v4114 = vpop.xlane.xlu0 %4113
        %v4115 = vsel %vm1034, %v4069, 0.0
        %4116 = vadd.xlane.f32.xlu0 %v4115
        %v4117 = vpop.xlane.xlu0 %4116
        %v4118 = vmul.f32 %v4072, %v1089
        %v4119 = vmul.f32 %v4075, %v1089
        %v4120 = vmul.f32 %v4078, %v1089
        %v4121 = vmul.f32 %v4081, %v1089
        %v4122 = vmul.f32 %v4084, %v1089
        %v4123 = vmul.f32 %v4087, %v1089
        %v4124 = vmul.f32 %v4090, %v1089
        %v4125 = vmul.f32 %v4093, %v1089
        %v4126 = vmul.f32 %v4096, %v1089
        %v4127 = vmul.f32 %v4099, %v1089
        %v4128 = vmul.f32 %v4102, %v1089
        %v4129 = vmul.f32 %v4105, %v1089
        %v4130 = vmul.f32 %v4108, %v1089
        %v4131 = vmul.f32 %v4111, %v1089
        %v4132 = vmul.f32 %v4114, %v1089
        %v4133 = vmul.f32 %v4117, %v1089
        %v4134 = vadd.f32 %v4118, 1e-05
        %v4135 = vadd.f32 %v4119, 1e-05
        %v4136 = vadd.f32 %v4120, 1e-05
        %v4137 = vadd.f32 %v4121, 1e-05
        %v4138 = vadd.f32 %v4122, 1e-05
        %v4139 = vadd.f32 %v4123, 1e-05
        %v4140 = vadd.f32 %v4124, 1e-05
        %v4141 = vadd.f32 %v4125, 1e-05
        %v4142 = vadd.f32 %v4126, 1e-05
        %v4143 = vadd.f32 %v4127, 1e-05
        %v4144 = vadd.f32 %v4128, 1e-05
        %v4145 = vadd.f32 %v4129, 1e-05
        %v4146 = vadd.f32 %v4130, 1e-05
        %v4147 = vadd.f32 %v4131, 1e-05
        %v4148 = vadd.f32 %v4132, 1e-05
        %v4149 = vadd.f32 %v4133, 1e-05
        %v4150 = vrsqrt.pop %v4134
        %v4151 = vmul.f32 %v4150, %v4134
        %v4152 = vmul.f32 %v4151, %v4150
        %v4153 = vmul.f32 0.5, %v4152
        %v4154 = vsub.f32 1.5, %v4153
        %v4155 = vmul.f32 %v4150, %v4154
        %vm4156 = vweird.f32 %v4134
        %vm4157 = vweird.f32 %v4150
        %vm4158 = vmor %vm4156, %vm4157
        %v4159 = vsel %vm4158, %v4150, %v4155
        %v4160 = vrsqrt.pop %v4135
        %v4161 = vmul.f32 %v4160, %v4135
        %v4162 = vmul.f32 %v4161, %v4160
        %v4163 = vmul.f32 0.5, %v4162
        %v4164 = vsub.f32 1.5, %v4163
        %v4165 = vmul.f32 %v4160, %v4164
        %vm4166 = vweird.f32 %v4135
        %vm4167 = vweird.f32 %v4160
        %vm4168 = vmor %vm4166, %vm4167
        %v4169 = vsel %vm4168, %v4160, %v4165
        %v4170 = vrsqrt.pop %v4136
        %v4171 = vmul.f32 %v4170, %v4136
        %v4172 = vmul.f32 %v4171, %v4170
        %v4173 = vmul.f32 0.5, %v4172
        %v4174 = vsub.f32 1.5, %v4173
        %v4175 = vmul.f32 %v4170, %v4174
        %vm4176 = vweird.f32 %v4136
        %vm4177 = vweird.f32 %v4170
        %vm4178 = vmor %vm4176, %vm4177
        %v4179 = vsel %vm4178, %v4170, %v4175
        %v4180 = vrsqrt.pop %v4137
        %v4181 = vmul.f32 %v4180, %v4137
        %v4182 = vmul.f32 %v4181, %v4180
        %v4183 = vmul.f32 0.5, %v4182
        %v4184 = vsub.f32 1.5, %v4183
        %v4185 = vmul.f32 %v4180, %v4184
        %vm4186 = vweird.f32 %v4137
        %vm4187 = vweird.f32 %v4180
        %vm4188 = vmor %vm4186, %vm4187
        %v4189 = vsel %vm4188, %v4180, %v4185
        %v4190 = vrsqrt.pop %v4138
        %v4191 = vmul.f32 %v4190, %v4138
        %v4192 = vmul.f32 %v4191, %v4190
        %v4193 = vmul.f32 0.5, %v4192
        %v4194 = vsub.f32 1.5, %v4193
        %v4195 = vmul.f32 %v4190, %v4194
        %vm4196 = vweird.f32 %v4138
        %vm4197 = vweird.f32 %v4190
        %vm4198 = vmor %vm4196, %vm4197
        %v4199 = vsel %vm4198, %v4190, %v4195
        %v4200 = vrsqrt.pop %v4139
        %v4201 = vmul.f32 %v4200, %v4139
        %v4202 = vmul.f32 %v4201, %v4200
        %v4203 = vmul.f32 0.5, %v4202
        %v4204 = vsub.f32 1.5, %v4203
        %v4205 = vmul.f32 %v4200, %v4204
        %vm4206 = vweird.f32 %v4139
        %vm4207 = vweird.f32 %v4200
        %vm4208 = vmor %vm4206, %vm4207
        %v4209 = vsel %vm4208, %v4200, %v4205
        %v4210 = vrsqrt.pop %v4140
        %v4211 = vmul.f32 %v4210, %v4140
        %v4212 = vmul.f32 %v4211, %v4210
        %v4213 = vmul.f32 0.5, %v4212
        %v4214 = vsub.f32 1.5, %v4213
        %v4215 = vmul.f32 %v4210, %v4214
        %vm4216 = vweird.f32 %v4140
        %vm4217 = vweird.f32 %v4210
        %vm4218 = vmor %vm4216, %vm4217
        %v4219 = vsel %vm4218, %v4210, %v4215
        %v4220 = vrsqrt.pop %v4141
        %v4221 = vmul.f32 %v4220, %v4141
        %v4222 = vmul.f32 %v4221, %v4220
        %v4223 = vmul.f32 0.5, %v4222
        %v4224 = vsub.f32 1.5, %v4223
        %v4225 = vmul.f32 %v4220, %v4224
        %vm4226 = vweird.f32 %v4141
        %vm4227 = vweird.f32 %v4220
        %vm4228 = vmor %vm4226, %vm4227
        %v4229 = vsel %vm4228, %v4220, %v4225
        %v4230 = vrsqrt.pop %v4142
        %v4231 = vmul.f32 %v4230, %v4142
        %v4232 = vmul.f32 %v4231, %v4230
        %v4233 = vmul.f32 0.5, %v4232
        %v4234 = vsub.f32 1.5, %v4233
        %v4235 = vmul.f32 %v4230, %v4234
        %vm4236 = vweird.f32 %v4142
        %vm4237 = vweird.f32 %v4230
        %vm4238 = vmor %vm4236, %vm4237
        %v4239 = vsel %vm4238, %v4230, %v4235
        %v4240 = vrsqrt.pop %v4143
        %v4241 = vmul.f32 %v4240, %v4143
        %v4242 = vmul.f32 %v4241, %v4240
        %v4243 = vmul.f32 0.5, %v4242
        %v4244 = vsub.f32 1.5, %v4243
        %v4245 = vmul.f32 %v4240, %v4244
        %vm4246 = vweird.f32 %v4143
        %vm4247 = vweird.f32 %v4240
        %vm4248 = vmor %vm4246, %vm4247
        %v4249 = vsel %vm4248, %v4240, %v4245
        %v4250 = vrsqrt.pop %v4144
        %v4251 = vmul.f32 %v4250, %v4144
        %v4252 = vmul.f32 %v4251, %v4250
        %v4253 = vmul.f32 0.5, %v4252
        %v4254 = vsub.f32 1.5, %v4253
        %v4255 = vmul.f32 %v4250, %v4254
        %vm4256 = vweird.f32 %v4144
        %vm4257 = vweird.f32 %v4250
        %vm4258 = vmor %vm4256, %vm4257
        %v4259 = vsel %vm4258, %v4250, %v4255
        %v4260 = vrsqrt.pop %v4145
        %v4261 = vmul.f32 %v4260, %v4145
        %v4262 = vmul.f32 %v4261, %v4260
        %v4263 = vmul.f32 0.5, %v4262
        %v4264 = vsub.f32 1.5, %v4263
        %v4265 = vmul.f32 %v4260, %v4264
        %vm4266 = vweird.f32 %v4145
        %vm4267 = vweird.f32 %v4260
        %vm4268 = vmor %vm4266, %vm4267
        %v4269 = vsel %vm4268, %v4260, %v4265
        %v4270 = vrsqrt.pop %v4146
        %v4271 = vmul.f32 %v4270, %v4146
        %v4272 = vmul.f32 %v4271, %v4270
        %v4273 = vmul.f32 0.5, %v4272
        %v4274 = vsub.f32 1.5, %v4273
        %v4275 = vmul.f32 %v4270, %v4274
        %vm4276 = vweird.f32 %v4146
        %vm4277 = vweird.f32 %v4270
        %vm4278 = vmor %vm4276, %vm4277
        %v4279 = vsel %vm4278, %v4270, %v4275
        %v4280 = vrsqrt.pop %v4147
        %v4281 = vmul.f32 %v4280, %v4147
        %v4282 = vmul.f32 %v4281, %v4280
        %v4283 = vmul.f32 0.5, %v4282
        %v4284 = vsub.f32 1.5, %v4283
        %v4285 = vmul.f32 %v4280, %v4284
        %vm4286 = vweird.f32 %v4147
        %vm4287 = vweird.f32 %v4280
        %vm4288 = vmor %vm4286, %vm4287
        %v4289 = vsel %vm4288, %v4280, %v4285
        %v4290 = vrsqrt.pop %v4148
        %v4291 = vmul.f32 %v4290, %v4148
        %v4292 = vmul.f32 %v4291, %v4290
        %v4293 = vmul.f32 0.5, %v4292
        %v4294 = vsub.f32 1.5, %v4293
        %v4295 = vmul.f32 %v4290, %v4294
        %vm4296 = vweird.f32 %v4148
        %vm4297 = vweird.f32 %v4290
        %vm4298 = vmor %vm4296, %vm4297
        %v4299 = vsel %vm4298, %v4290, %v4295
        %v4300 = vrsqrt.pop %v4149
        %v4301 = vmul.f32 %v4300, %v4149
        %v4302 = vmul.f32 %v4301, %v4300
        %v4303 = vmul.f32 0.5, %v4302
        %v4304 = vsub.f32 1.5, %v4303
        %v4305 = vmul.f32 %v4300, %v4304
        %vm4306 = vweird.f32 %v4149
        %vm4307 = vweird.f32 %v4300
        %vm4308 = vmor %vm4306, %vm4307
        %v4309 = vsel %vm4308, %v4300, %v4305
        %v4310 = vmul.f32 %v4038, %v4159
        %v4311 = vmul.f32 %v4039, %v4169
        %v4312 = vmul.f32 %v4040, %v4179
        %v4313 = vmul.f32 %v4041, %v4189
        %v4314 = vmul.f32 %v4042, %v4199
        %v4315 = vmul.f32 %v4043, %v4209
        %v4316 = vmul.f32 %v4044, %v4219
        %v4317 = vmul.f32 %v4045, %v4229
        %v4318 = vmul.f32 %v4046, %v4239
        %v4319 = vmul.f32 %v4047, %v4249
        %v4320 = vmul.f32 %v4048, %v4259
        %v4321 = vmul.f32 %v4049, %v4269
        %v4322 = vmul.f32 %v4050, %v4279
        %v4323 = vmul.f32 %v4051, %v4289
        %v4324 = vmul.f32 %v4052, %v4299
        %v4325 = vmul.f32 %v4053, %v4309
        %v4327 = vperm.slane %v3971, 0
        %v4329 = vmul.f32 %v4310, %v4327
        %v4330 = vmul.f32 %v4311, %v4327
        %v4331 = vmul.f32 %v4312, %v4327
        %v4332 = vmul.f32 %v4313, %v4327
        %v4333 = vmul.f32 %v4314, %v4327
        %v4334 = vmul.f32 %v4315, %v4327
        %v4335 = vmul.f32 %v4316, %v4327
        %v4336 = vmul.f32 %v4317, %v4327
        %v4337 = vmul.f32 %v4318, %v4327
        %v4338 = vmul.f32 %v4319, %v4327
        %v4339 = vmul.f32 %v4320, %v4327
        %v4340 = vmul.f32 %v4321, %v4327
        %v4341 = vmul.f32 %v4322, %v4327
        %v4342 = vmul.f32 %v4323, %v4327
        %v4343 = vmul.f32 %v4324, %v4327
        %v4344 = vmul.f32 %v4325, %v4327
        %v4346 = vperm.slane %v3973, 0
        %v4348 = vadd.f32 %v4329, %v4346
        %v4349 = vadd.f32 %v4330, %v4346
        %v4350 = vadd.f32 %v4331, %v4346
        %v4351 = vadd.f32 %v4332, %v4346
        %v4352 = vadd.f32 %v4333, %v4346
        %v4353 = vadd.f32 %v4334, %v4346
        %v4354 = vadd.f32 %v4335, %v4346
        %v4355 = vadd.f32 %v4336, %v4346
        %v4356 = vadd.f32 %v4337, %v4346
        %v4357 = vadd.f32 %v4338, %v4346
        %v4358 = vadd.f32 %v4339, %v4346
        %v4359 = vadd.f32 %v4340, %v4346
        %v4360 = vadd.f32 %v4341, %v4346
        %v4361 = vadd.f32 %v4342, %v4346
        %v4362 = vadd.f32 %v4343, %v4346
        %v4363 = vadd.f32 %v4344, %v4346
        %v4364 = vpack.c.bf16 %v4349, %v4348
        %v4365 = vpack.c.bf16 %v4351, %v4350
        %v4366 = vpack.c.bf16 %v4353, %v4352
        %v4367 = vpack.c.bf16 %v4355, %v4354
        %v4368 = vpack.c.bf16 %v4357, %v4356
        %v4369 = vpack.c.bf16 %v4359, %v4358
        %v4370 = vpack.c.bf16 %v4361, %v4360
        %v4371 = vpack.c.bf16 %v4363, %v4362
        %s4372 = scalar_lea.vmem %s8, 48
        %v4373 = vld [vmem:[%s4372] sm:$0xff]
        %v4374 = vld [vmem:[%s4372 + $0x8] sm:$0xf]
        %v4375 = vld [vmem:[%s4372 + $0xc] sm:$0xff]
        %v4376 = vld [vmem:[%s4372 + $0x14] sm:$0xf]
        %v4377 = vld [vmem:[%s4372 + $0x18] sm:$0xff]
        %v4378 = vld [vmem:[%s4372 + $0x20] sm:$0xf]
        %v4379 = vld [vmem:[%s4372 + $0x24] sm:$0xff]
        %v4380 = vld [vmem:[%s4372 + $0x2c] sm:$0xf]
        %s4381 = scalar_lea.vmem %s9, 3
        %v4382 = vld [vmem:[%s4381] sm:$0x7]
        %v4384 = vperm.slane %v4382, 0
        %v4385 = vperm.slane %v4382, 1
        %v4386 = vperm.slane %v4382, 2
        %v4398 = vunpack.c.l.b16 %v4373
        %v4399 = vunpack.c.h.b16 %v4373
        %v4400 = vunpack.c.l.b16 %v4374
        %v4401 = vunpack.c.l.b16 %v4375
        %v4402 = vunpack.c.h.b16 %v4375
        %v4403 = vunpack.c.l.b16 %v4376
        %v4404 = vunpack.c.l.b16 %v4377
        %v4405 = vunpack.c.h.b16 %v4377
        %v4406 = vunpack.c.l.b16 %v4378
        %v4407 = vunpack.c.l.b16 %v4379
        %v4408 = vunpack.c.h.b16 %v4379
        %v4409 = vunpack.c.l.b16 %v4380
        %v4410 = vpack.c.b16 %v4401, %v4398
        %v4411 = vpack.c.b16 %v4402, %v4399
        %v4412 = vpack.c.b16 %v4403, %v4400
        %v4413 = vpack.c.b16 %v4407, %v4404
        %v4414 = vpack.c.b16 %v4408, %v4405
        %v4415 = vpack.c.b16 %v4409, %v4406
        %v4423 = vsel %vm1034, %v4364, 0
        %v4426 = vsel %vm1034, %v4365, 0
        %v4429 = vsel %vm1034, %v4366, 0
        %v4432 = vsel %vm1034, %v4367, 0
        %v4435 = vsel %vm1034, %v4368, 0
        %v4438 = vsel %vm1034, %v4369, 0
        %v4441 = vsel %vm1034, %v4370, 0
        %v4444 = vsel %vm1034, %v4371, 0
        %4446 = vmatpush.bf16.msra.mxu0 0
        %4447 = vmatpush.bf16.msra.mxu0 0
        %4448 = vmatpush.bf16.msra.mxu0 0
        %4449 = vmatpush.bf16.msra.mxu0 0
        %4450 = vmatpush.bf16.msra.mxu0 0
        %4451 = vmatpush.bf16.msra.mxu0 0
        %4452 = vmatpush.bf16.msra.mxu0 %v4413
        %4453 = vmatpush.bf16.msra.mxu0 %v4410
        %4454 = vmatmul.bf16.gmra.mxu0 %v4423
        %v4455 = vpop.f32.mrf.mxu0
        %v4456 = vadd.f32 %v4384, %v4455
        %v4457 = vpop.f32.mrf.mxu0
        %v4458 = vadd.f32 %v4384, %v4457
        %4459 = vmatmul.bf16.gmra.mxu0 %v4426
        %v4460 = vpop.f32.mrf.mxu0
        %v4461 = vadd.f32 %v4384, %v4460
        %v4462 = vpop.f32.mrf.mxu0
        %v4463 = vadd.f32 %v4384, %v4462
        %4464 = vmatmul.bf16.gmra.mxu0 %v4429
        %v4465 = vpop.f32.mrf.mxu0
        %v4466 = vadd.f32 %v4384, %v4465
        %v4467 = vpop.f32.mrf.mxu0
        %v4468 = vadd.f32 %v4384, %v4467
        %4469 = vmatmul.bf16.gmra.mxu0 %v4432
        %v4470 = vpop.f32.mrf.mxu0
        %v4471 = vadd.f32 %v4384, %v4470
        %v4472 = vpop.f32.mrf.mxu0
        %v4473 = vadd.f32 %v4384, %v4472
        %4474 = vmatmul.bf16.gmra.mxu0 %v4435
        %v4475 = vpop.f32.mrf.mxu0
        %v4476 = vadd.f32 %v4384, %v4475
        %v4477 = vpop.f32.mrf.mxu0
        %v4478 = vadd.f32 %v4384, %v4477
        %4479 = vmatmul.bf16.gmra.mxu0 %v4438
        %v4480 = vpop.f32.mrf.mxu0
        %v4481 = vadd.f32 %v4384, %v4480
        %v4482 = vpop.f32.mrf.mxu0
        %v4483 = vadd.f32 %v4384, %v4482
        %4484 = vmatmul.bf16.gmra.mxu0 %v4441
        %v4485 = vpop.f32.mrf.mxu0
        %v4486 = vadd.f32 %v4384, %v4485
        %v4487 = vpop.f32.mrf.mxu0
        %v4488 = vadd.f32 %v4384, %v4487
        %4489 = vmatmul.bf16.gmra.mxu0 %v4444
        %v4490 = vpop.f32.mrf.mxu0
        %v4491 = vadd.f32 %v4384, %v4490
        %v4492 = vpop.f32.mrf.mxu0
        %v4493 = vadd.f32 %v4384, %v4492
        %4494 = vdwg.mxu0
        %4495 = vmatpush.bf16.msra.mxu0 0
        %4496 = vmatpush.bf16.msra.mxu0 0
        %4497 = vmatpush.bf16.msra.mxu0 0
        %4498 = vmatpush.bf16.msra.mxu0 0
        %4499 = vmatpush.bf16.msra.mxu0 0
        %4500 = vmatpush.bf16.msra.mxu0 0
        %4501 = vmatpush.bf16.msra.mxu0 %v4414
        %4502 = vmatpush.bf16.msra.mxu0 %v4411
        %4503 = vmatmul.bf16.gmra.mxu0 %v4423
        %v4504 = vpop.f32.mrf.mxu0
        %v4505 = vadd.f32 %v4385, %v4504
        %v4506 = vpop.f32.mrf.mxu0
        %v4507 = vadd.f32 %v4385, %v4506
        %4508 = vmatmul.bf16.gmra.mxu0 %v4426
        %v4509 = vpop.f32.mrf.mxu0
        %v4510 = vadd.f32 %v4385, %v4509
        %v4511 = vpop.f32.mrf.mxu0
        %v4512 = vadd.f32 %v4385, %v4511
        %4513 = vmatmul.bf16.gmra.mxu0 %v4429
        %v4514 = vpop.f32.mrf.mxu0
        %v4515 = vadd.f32 %v4385, %v4514
        %v4516 = vpop.f32.mrf.mxu0
        %v4517 = vadd.f32 %v4385, %v4516
        %4518 = vmatmul.bf16.gmra.mxu0 %v4432
        %v4519 = vpop.f32.mrf.mxu0
        %v4520 = vadd.f32 %v4385, %v4519
        %v4521 = vpop.f32.mrf.mxu0
        %v4522 = vadd.f32 %v4385, %v4521
        %4523 = vmatmul.bf16.gmra.mxu0 %v4435
        %v4524 = vpop.f32.mrf.mxu0
        %v4525 = vadd.f32 %v4385, %v4524
        %v4526 = vpop.f32.mrf.mxu0
        %v4527 = vadd.f32 %v4385, %v4526
        %4528 = vmatmul.bf16.gmra.mxu0 %v4438
        %v4529 = vpop.f32.mrf.mxu0
        %v4530 = vadd.f32 %v4385, %v4529
        %v4531 = vpop.f32.mrf.mxu0
        %v4532 = vadd.f32 %v4385, %v4531
        %4533 = vmatmul.bf16.gmra.mxu0 %v4441
        %v4534 = vpop.f32.mrf.mxu0
        %v4535 = vadd.f32 %v4385, %v4534
        %v4536 = vpop.f32.mrf.mxu0
        %v4537 = vadd.f32 %v4385, %v4536
        %4538 = vmatmul.bf16.gmra.mxu0 %v4444
        %v4539 = vpop.f32.mrf.mxu0
        %v4540 = vadd.f32 %v4385, %v4539
        %v4541 = vpop.f32.mrf.mxu0
        %v4542 = vadd.f32 %v4385, %v4541
        %4543 = vdwg.mxu0
        %4544 = vmatpush.bf16.msra.mxu0 0
        %4545 = vmatpush.bf16.msra.mxu0 0
        %4546 = vmatpush.bf16.msra.mxu0 0
        %4547 = vmatpush.bf16.msra.mxu0 0
        %4548 = vmatpush.bf16.msra.mxu0 0
        %4549 = vmatpush.bf16.msra.mxu0 0
        %4550 = vmatpush.bf16.msra.mxu0 %v4415
        %4551 = vmatpush.bf16.msra.mxu0 %v4412
        %4552 = vmatmul.bf16.gmra.mxu0 %v4423
        %v4553 = vpop.f32.mrf.mxu0
        %v4554 = vadd.f32 %v4386, %v4553
        %v4555 = vpop.f32.mrf.mxu0
        %v4556 = vadd.f32 %v4386, %v4555
        %4557 = vmatmul.bf16.gmra.mxu0 %v4426
        %v4558 = vpop.f32.mrf.mxu0
        %v4559 = vadd.f32 %v4386, %v4558
        %v4560 = vpop.f32.mrf.mxu0
        %v4561 = vadd.f32 %v4386, %v4560
        %4562 = vmatmul.bf16.gmra.mxu0 %v4429
        %v4563 = vpop.f32.mrf.mxu0
        %v4564 = vadd.f32 %v4386, %v4563
        %v4565 = vpop.f32.mrf.mxu0
        %v4566 = vadd.f32 %v4386, %v4565
        %4567 = vmatmul.bf16.gmra.mxu0 %v4432
        %v4568 = vpop.f32.mrf.mxu0
        %v4569 = vadd.f32 %v4386, %v4568
        %v4570 = vpop.f32.mrf.mxu0
        %v4571 = vadd.f32 %v4386, %v4570
        %4572 = vmatmul.bf16.gmra.mxu0 %v4435
        %v4573 = vpop.f32.mrf.mxu0
        %v4574 = vadd.f32 %v4386, %v4573
        %v4575 = vpop.f32.mrf.mxu0
        %v4576 = vadd.f32 %v4386, %v4575
        %4577 = vmatmul.bf16.gmra.mxu0 %v4438
        %v4578 = vpop.f32.mrf.mxu0
        %v4579 = vadd.f32 %v4386, %v4578
        %v4580 = vpop.f32.mrf.mxu0
        %v4581 = vadd.f32 %v4386, %v4580
        %4582 = vmatmul.bf16.gmra.mxu0 %v4441
        %v4583 = vpop.f32.mrf.mxu0
        %v4584 = vadd.f32 %v4386, %v4583
        %v4585 = vpop.f32.mrf.mxu0
        %v4586 = vadd.f32 %v4386, %v4585
        %4587 = vmatmul.bf16.gmra.mxu0 %v4444
        %v4588 = vpop.f32.mrf.mxu0
        %v4589 = vadd.f32 %v4386, %v4588
        %v4590 = vpop.f32.mrf.mxu0
        %v4591 = vadd.f32 %v4386, %v4590
        %4592 = vdwg.mxu0
        %v4593 = vpack.c.bf16 %v4458, %v4456
        %v4594 = vpack.c.bf16 %v4463, %v4461
        %v4595 = vpack.c.bf16 %v4468, %v4466
        %v4596 = vpack.c.bf16 %v4473, %v4471
        %v4597 = vpack.c.bf16 %v4478, %v4476
        %v4598 = vpack.c.bf16 %v4483, %v4481
        %v4599 = vpack.c.bf16 %v4488, %v4486
        %v4600 = vpack.c.bf16 %v4493, %v4491
        %v4601 = vmul.f32 %v4505, %v1000
        %v4602 = vmul.f32 %v4507, %v1000
        %v4603 = vmul.f32 %v4510, %v1000
        %v4604 = vmul.f32 %v4512, %v1000
        %v4605 = vmul.f32 %v4515, %v1000
        %v4606 = vmul.f32 %v4517, %v1000
        %v4607 = vmul.f32 %v4520, %v1000
        %v4608 = vmul.f32 %v4522, %v1000
        %v4609 = vmul.f32 %v4525, %v1000
        %v4610 = vmul.f32 %v4527, %v1000
        %v4611 = vmul.f32 %v4530, %v1000
        %v4612 = vmul.f32 %v4532, %v1000
        %v4613 = vmul.f32 %v4535, %v1000
        %v4614 = vmul.f32 %v4537, %v1000
        %v4615 = vmul.f32 %v4540, %v1000
        %v4616 = vmul.f32 %v4542, %v1000
        %v4617 = vpack.c.bf16 %v4602, %v4601
        %v4618 = vpack.c.bf16 %v4604, %v4603
        %v4619 = vpack.c.bf16 %v4606, %v4605
        %v4620 = vpack.c.bf16 %v4608, %v4607
        %v4621 = vpack.c.bf16 %v4610, %v4609
        %v4622 = vpack.c.bf16 %v4612, %v4611
        %v4623 = vpack.c.bf16 %v4614, %v4613
        %v4624 = vpack.c.bf16 %v4616, %v4615
        %v4625 = vmul.f32 %v4554, %v1000
        %v4626 = vmul.f32 %v4556, %v1000
        %v4627 = vmul.f32 %v4559, %v1000
        %v4628 = vmul.f32 %v4561, %v1000
        %v4629 = vmul.f32 %v4564, %v1000
        %v4630 = vmul.f32 %v4566, %v1000
        %v4631 = vmul.f32 %v4569, %v1000
        %v4632 = vmul.f32 %v4571, %v1000
        %v4633 = vmul.f32 %v4574, %v1000
        %v4634 = vmul.f32 %v4576, %v1000
        %v4635 = vmul.f32 %v4579, %v1000
        %v4636 = vmul.f32 %v4581, %v1000
        %v4637 = vmul.f32 %v4584, %v1000
        %v4638 = vmul.f32 %v4586, %v1000
        %v4639 = vmul.f32 %v4589, %v1000
        %v4640 = vmul.f32 %v4591, %v1000
        %v4641 = vpack.c.bf16 %v4626, %v4625
        %v4642 = vpack.c.bf16 %v4628, %v4627
        %v4643 = vpack.c.bf16 %v4630, %v4629
        %v4644 = vpack.c.bf16 %v4632, %v4631
        %v4645 = vpack.c.bf16 %v4634, %v4633
        %v4646 = vpack.c.bf16 %v4636, %v4635
        %v4647 = vpack.c.bf16 %v4638, %v4637
        %v4648 = vpack.c.bf16 %v4640, %v4639
        %4649 = vmatpush.bf16.xpose.msra.mxu0 %v4624
        %4650 = vmatpush.bf16.xpose.msra.mxu0 %v4623
        %4651 = vmatpush.bf16.xpose.msra.mxu0 %v4622
        %4652 = vmatpush.bf16.xpose.msra.mxu0 %v4621
        %4653 = vmatpush.bf16.xpose.msra.mxu0 %v4620
        %4654 = vmatpush.bf16.xpose.msra.mxu0 %v4619
        %4655 = vmatpush.bf16.xpose.msra.mxu0 %v4618
        %4656 = vmatpush.bf16.xpose.msra.mxu0 %v4617
        %4657 = vmatmul.bf16.gmra.mxu0 %v4593
        %v4658 = vpop.f32.mrf.mxu0
        %v4659 = vadd.f32 0.0, %v4658
        %v4660 = vpop.f32.mrf.mxu0
        %v4661 = vadd.f32 0.0, %v4660
        %4662 = vmatmul.bf16.gmra.mxu0 %v4594
        %v4663 = vpop.f32.mrf.mxu0
        %v4664 = vadd.f32 0.0, %v4663
        %v4665 = vpop.f32.mrf.mxu0
        %v4666 = vadd.f32 0.0, %v4665
        %4667 = vmatmul.bf16.gmra.mxu0 %v4595
        %v4668 = vpop.f32.mrf.mxu0
        %v4669 = vadd.f32 0.0, %v4668
        %v4670 = vpop.f32.mrf.mxu0
        %v4671 = vadd.f32 0.0, %v4670
        %4672 = vmatmul.bf16.gmra.mxu0 %v4596
        %v4673 = vpop.f32.mrf.mxu0
        %v4674 = vadd.f32 0.0, %v4673
        %v4675 = vpop.f32.mrf.mxu0
        %v4676 = vadd.f32 0.0, %v4675
        %4677 = vmatmul.bf16.gmra.mxu0 %v4597
        %v4678 = vpop.f32.mrf.mxu0
        %v4679 = vadd.f32 0.0, %v4678
        %v4680 = vpop.f32.mrf.mxu0
        %v4681 = vadd.f32 0.0, %v4680
        %4682 = vmatmul.bf16.gmra.mxu0 %v4598
        %v4683 = vpop.f32.mrf.mxu0
        %v4684 = vadd.f32 0.0, %v4683
        %v4685 = vpop.f32.mrf.mxu0
        %v4686 = vadd.f32 0.0, %v4685
        %4687 = vmatmul.bf16.gmra.mxu0 %v4599
        %v4688 = vpop.f32.mrf.mxu0
        %v4689 = vadd.f32 0.0, %v4688
        %v4690 = vpop.f32.mrf.mxu0
        %v4691 = vadd.f32 0.0, %v4690
        %4692 = vmatmul.bf16.gmra.mxu0 %v4600
        %v4693 = vpop.f32.mrf.mxu0
        %v4694 = vadd.f32 0.0, %v4693
        %v4695 = vpop.f32.mrf.mxu0
        %v4696 = vadd.f32 0.0, %v4695
        %4697 = vdwg.mxu0
        %v4698 = vmul.f32 %v4659, 0.35355338
        %v4699 = vmul.f32 %v4661, 0.35355338
        %v4700 = vmul.f32 %v4664, 0.35355338
        %v4701 = vmul.f32 %v4666, 0.35355338
        %v4702 = vmul.f32 %v4669, 0.35355338
        %v4703 = vmul.f32 %v4671, 0.35355338
        %v4704 = vmul.f32 %v4674, 0.35355338
        %v4705 = vmul.f32 %v4676, 0.35355338
        %v4706 = vmul.f32 %v4679, 0.35355338
        %v4707 = vmul.f32 %v4681, 0.35355338
        %v4708 = vmul.f32 %v4684, 0.35355338
        %v4709 = vmul.f32 %v4686, 0.35355338
        %v4710 = vmul.f32 %v4689, 0.35355338
        %v4711 = vmul.f32 %v4691, 0.35355338
        %v4712 = vmul.f32 %v4694, 0.35355338
        %v4713 = vmul.f32 %v4696, 0.35355338
        %v4714 = vadd.f32 %v4698, %v1016
        %v4715 = vadd.f32 %v4699, %v1017
        %v4716 = vadd.f32 %v4700, %v1018
        %v4717 = vadd.f32 %v4701, %v1019
        %v4718 = vadd.f32 %v4702, %v1020
        %v4719 = vadd.f32 %v4703, %v1021
        %v4720 = vadd.f32 %v4704, %v1022
        %v4721 = vadd.f32 %v4705, %v1023
        %v4722 = vadd.f32 %v4706, %v1024
        %v4723 = vadd.f32 %v4707, %v1025
        %v4724 = vadd.f32 %v4708, %v1026
        %v4725 = vadd.f32 %v4709, %v1027
        %v4726 = vadd.f32 %v4710, %v1028
        %v4727 = vadd.f32 %v4711, %v1029
        %v4728 = vadd.f32 %v4712, %v1030
        %v4729 = vadd.f32 %v4713, %v1031
        %4730 = vmax.xlane.f32.xlu0 %v4714
        %v4731 = vpop.xlane.xlu0 %4730
        %4732 = vmax.xlane.f32.xlu0 %v4715
        %v4733 = vpop.xlane.xlu0 %4732
        %4734 = vmax.xlane.f32.xlu0 %v4716
        %v4735 = vpop.xlane.xlu0 %4734
        %4736 = vmax.xlane.f32.xlu0 %v4717
        %v4737 = vpop.xlane.xlu0 %4736
        %4738 = vmax.xlane.f32.xlu0 %v4718
        %v4739 = vpop.xlane.xlu0 %4738
        %4740 = vmax.xlane.f32.xlu0 %v4719
        %v4741 = vpop.xlane.xlu0 %4740
        %4742 = vmax.xlane.f32.xlu0 %v4720
        %v4743 = vpop.xlane.xlu0 %4742
        %4744 = vmax.xlane.f32.xlu0 %v4721
        %v4745 = vpop.xlane.xlu0 %4744
        %4746 = vmax.xlane.f32.xlu0 %v4722
        %v4747 = vpop.xlane.xlu0 %4746
        %4748 = vmax.xlane.f32.xlu0 %v4723
        %v4749 = vpop.xlane.xlu0 %4748
        %4750 = vmax.xlane.f32.xlu0 %v4724
        %v4751 = vpop.xlane.xlu0 %4750
        %4752 = vmax.xlane.f32.xlu0 %v4725
        %v4753 = vpop.xlane.xlu0 %4752
        %4754 = vmax.xlane.f32.xlu0 %v4726
        %v4755 = vpop.xlane.xlu0 %4754
        %4756 = vmax.xlane.f32.xlu0 %v4727
        %v4757 = vpop.xlane.xlu0 %4756
        %4758 = vmax.xlane.f32.xlu0 %v4728
        %v4759 = vpop.xlane.xlu0 %4758
        %4760 = vmax.xlane.f32.xlu0 %v4729
        %v4761 = vpop.xlane.xlu0 %4760
        %v4762 = vsub.f32 %v4714, %v4731
        %v4763 = vsub.f32 %v4715, %v4733
        %v4764 = vsub.f32 %v4716, %v4735
        %v4765 = vsub.f32 %v4717, %v4737
        %v4766 = vsub.f32 %v4718, %v4739
        %v4767 = vsub.f32 %v4719, %v4741
        %v4768 = vsub.f32 %v4720, %v4743
        %v4769 = vsub.f32 %v4721, %v4745
        %v4770 = vsub.f32 %v4722, %v4747
        %v4771 = vsub.f32 %v4723, %v4749
        %v4772 = vsub.f32 %v4724, %v4751
        %v4773 = vsub.f32 %v4725, %v4753
        %v4774 = vsub.f32 %v4726, %v4755
        %v4775 = vsub.f32 %v4727, %v4757
        %v4776 = vsub.f32 %v4728, %v4759
        %v4777 = vsub.f32 %v4729, %v4761
        %v4778 = vmul.f32 %v4762, 1.442695
        %v4779 = vpow.pop %v4778
        %v4780 = vmul.f32 %v4763, 1.442695
        %v4781 = vpow.pop %v4780
        %v4782 = vmul.f32 %v4764, 1.442695
        %v4783 = vpow.pop %v4782
        %v4784 = vmul.f32 %v4765, 1.442695
        %v4785 = vpow.pop %v4784
        %v4786 = vmul.f32 %v4766, 1.442695
        %v4787 = vpow.pop %v4786
        %v4788 = vmul.f32 %v4767, 1.442695
        %v4789 = vpow.pop %v4788
        %v4790 = vmul.f32 %v4768, 1.442695
        %v4791 = vpow.pop %v4790
        %v4792 = vmul.f32 %v4769, 1.442695
        %v4793 = vpow.pop %v4792
        %v4794 = vmul.f32 %v4770, 1.442695
        %v4795 = vpow.pop %v4794
        %v4796 = vmul.f32 %v4771, 1.442695
        %v4797 = vpow.pop %v4796
        %v4798 = vmul.f32 %v4772, 1.442695
        %v4799 = vpow.pop %v4798
        %v4800 = vmul.f32 %v4773, 1.442695
        %v4801 = vpow.pop %v4800
        %v4802 = vmul.f32 %v4774, 1.442695
        %v4803 = vpow.pop %v4802
        %v4804 = vmul.f32 %v4775, 1.442695
        %v4805 = vpow.pop %v4804
        %v4806 = vmul.f32 %v4776, 1.442695
        %v4807 = vpow.pop %v4806
        %v4808 = vmul.f32 %v4777, 1.442695
        %v4809 = vpow.pop %v4808
        %4810 = vadd.xlane.f32.xlu0 %v4779
        %v4811 = vpop.xlane.xlu0 %4810
        %4812 = vadd.xlane.f32.xlu0 %v4781
        %v4813 = vpop.xlane.xlu0 %4812
        %4814 = vadd.xlane.f32.xlu0 %v4783
        %v4815 = vpop.xlane.xlu0 %4814
        %4816 = vadd.xlane.f32.xlu0 %v4785
        %v4817 = vpop.xlane.xlu0 %4816
        %4818 = vadd.xlane.f32.xlu0 %v4787
        %v4819 = vpop.xlane.xlu0 %4818
        %4820 = vadd.xlane.f32.xlu0 %v4789
        %v4821 = vpop.xlane.xlu0 %4820
        %4822 = vadd.xlane.f32.xlu0 %v4791
        %v4823 = vpop.xlane.xlu0 %4822
        %4824 = vadd.xlane.f32.xlu0 %v4793
        %v4825 = vpop.xlane.xlu0 %4824
        %4826 = vadd.xlane.f32.xlu0 %v4795
        %v4827 = vpop.xlane.xlu0 %4826
        %4828 = vadd.xlane.f32.xlu0 %v4797
        %v4829 = vpop.xlane.xlu0 %4828
        %4830 = vadd.xlane.f32.xlu0 %v4799
        %v4831 = vpop.xlane.xlu0 %4830
        %4832 = vadd.xlane.f32.xlu0 %v4801
        %v4833 = vpop.xlane.xlu0 %4832
        %4834 = vadd.xlane.f32.xlu0 %v4803
        %v4835 = vpop.xlane.xlu0 %4834
        %4836 = vadd.xlane.f32.xlu0 %v4805
        %v4837 = vpop.xlane.xlu0 %4836
        %4838 = vadd.xlane.f32.xlu0 %v4807
        %v4839 = vpop.xlane.xlu0 %4838
        %4840 = vadd.xlane.f32.xlu0 %v4809
        %v4841 = vpop.xlane.xlu0 %4840
        %v4842 = vrcp.pop %v4811
        %v4843 = vrcp.pop %v4813
        %v4844 = vrcp.pop %v4815
        %v4845 = vrcp.pop %v4817
        %v4846 = vrcp.pop %v4819
        %v4847 = vrcp.pop %v4821
        %v4848 = vrcp.pop %v4823
        %v4849 = vrcp.pop %v4825
        %v4850 = vrcp.pop %v4827
        %v4851 = vrcp.pop %v4829
        %v4852 = vrcp.pop %v4831
        %v4853 = vrcp.pop %v4833
        %v4854 = vrcp.pop %v4835
        %v4855 = vrcp.pop %v4837
        %v4856 = vrcp.pop %v4839
        %v4857 = vrcp.pop %v4841
        %v4858 = vmul.f32 %v4779, %v4842
        %v4859 = vmul.f32 %v4781, %v4843
        %v4860 = vmul.f32 %v4783, %v4844
        %v4861 = vmul.f32 %v4785, %v4845
        %v4862 = vmul.f32 %v4787, %v4846
        %v4863 = vmul.f32 %v4789, %v4847
        %v4864 = vmul.f32 %v4791, %v4848
        %v4865 = vmul.f32 %v4793, %v4849
        %v4866 = vmul.f32 %v4795, %v4850
        %v4867 = vmul.f32 %v4797, %v4851
        %v4868 = vmul.f32 %v4799, %v4852
        %v4869 = vmul.f32 %v4801, %v4853
        %v4870 = vmul.f32 %v4803, %v4854
        %v4871 = vmul.f32 %v4805, %v4855
        %v4872 = vmul.f32 %v4807, %v4856
        %v4873 = vmul.f32 %v4809, %v4857
        %v4874 = vpack.c.bf16 %v4859, %v4858
        %v4875 = vpack.c.bf16 %v4861, %v4860
        %v4876 = vpack.c.bf16 %v4863, %v4862
        %v4877 = vpack.c.bf16 %v4865, %v4864
        %v4878 = vpack.c.bf16 %v4867, %v4866
        %v4879 = vpack.c.bf16 %v4869, %v4868
        %v4880 = vpack.c.bf16 %v4871, %v4870
        %v4881 = vpack.c.bf16 %v4873, %v4872
        %v4882 = vmul.f32 %v4505, %v1005
        %v4883 = vmul.f32 %v4507, %v1005
        %v4884 = vmul.f32 %v4510, %v1005
        %v4885 = vmul.f32 %v4512, %v1005
        %v4886 = vmul.f32 %v4515, %v1005
        %v4887 = vmul.f32 %v4517, %v1005
        %v4888 = vmul.f32 %v4520, %v1005
        %v4889 = vmul.f32 %v4522, %v1005
        %v4890 = vmul.f32 %v4525, %v1005
        %v4891 = vmul.f32 %v4527, %v1005
        %v4892 = vmul.f32 %v4530, %v1005
        %v4893 = vmul.f32 %v4532, %v1005
        %v4894 = vmul.f32 %v4535, %v1005
        %v4895 = vmul.f32 %v4537, %v1005
        %v4896 = vmul.f32 %v4540, %v1005
        %v4897 = vmul.f32 %v4542, %v1005
        %v4898 = vpack.c.bf16 %v4883, %v4882
        %v4899 = vpack.c.bf16 %v4885, %v4884
        %v4900 = vpack.c.bf16 %v4887, %v4886
        %v4901 = vpack.c.bf16 %v4889, %v4888
        %v4902 = vpack.c.bf16 %v4891, %v4890
        %v4903 = vpack.c.bf16 %v4893, %v4892
        %v4904 = vpack.c.bf16 %v4895, %v4894
        %v4905 = vpack.c.bf16 %v4897, %v4896
        %v4906 = vmul.f32 %v4554, %v1005
        %v4907 = vmul.f32 %v4556, %v1005
        %v4908 = vmul.f32 %v4559, %v1005
        %v4909 = vmul.f32 %v4561, %v1005
        %v4910 = vmul.f32 %v4564, %v1005
        %v4911 = vmul.f32 %v4566, %v1005
        %v4912 = vmul.f32 %v4569, %v1005
        %v4913 = vmul.f32 %v4571, %v1005
        %v4914 = vmul.f32 %v4574, %v1005
        %v4915 = vmul.f32 %v4576, %v1005
        %v4916 = vmul.f32 %v4579, %v1005
        %v4917 = vmul.f32 %v4581, %v1005
        %v4918 = vmul.f32 %v4584, %v1005
        %v4919 = vmul.f32 %v4586, %v1005
        %v4920 = vmul.f32 %v4589, %v1005
        %v4921 = vmul.f32 %v4591, %v1005
        %v4922 = vpack.c.bf16 %v4907, %v4906
        %v4923 = vpack.c.bf16 %v4909, %v4908
        %v4924 = vpack.c.bf16 %v4911, %v4910
        %v4925 = vpack.c.bf16 %v4913, %v4912
        %v4926 = vpack.c.bf16 %v4915, %v4914
        %v4927 = vpack.c.bf16 %v4917, %v4916
        %v4928 = vpack.c.bf16 %v4919, %v4918
        %v4929 = vpack.c.bf16 %v4921, %v4920
        %4930 = vmatpush.bf16.xpose.msra.mxu0 %v4905
        %4931 = vmatpush.bf16.xpose.msra.mxu0 %v4904
        %4932 = vmatpush.bf16.xpose.msra.mxu0 %v4903
        %4933 = vmatpush.bf16.xpose.msra.mxu0 %v4902
        %4934 = vmatpush.bf16.xpose.msra.mxu0 %v4901
        %4935 = vmatpush.bf16.xpose.msra.mxu0 %v4900
        %4936 = vmatpush.bf16.xpose.msra.mxu0 %v4899
        %4937 = vmatpush.bf16.xpose.msra.mxu0 %v4898
        %4938 = vmatmul.bf16.gmra.mxu0 %v4593
        %v4939 = vpop.f32.mrf.mxu0
        %v4940 = vadd.f32 0.0, %v4939
        %v4941 = vpop.f32.mrf.mxu0
        %v4942 = vadd.f32 0.0, %v4941
        %4943 = vmatmul.bf16.gmra.mxu0 %v4594
        %v4944 = vpop.f32.mrf.mxu0
        %v4945 = vadd.f32 0.0, %v4944
        %v4946 = vpop.f32.mrf.mxu0
        %v4947 = vadd.f32 0.0, %v4946
        %4948 = vmatmul.bf16.gmra.mxu0 %v4595
        %v4949 = vpop.f32.mrf.mxu0
        %v4950 = vadd.f32 0.0, %v4949
        %v4951 = vpop.f32.mrf.mxu0
        %v4952 = vadd.f32 0.0, %v4951
        %4953 = vmatmul.bf16.gmra.mxu0 %v4596
        %v4954 = vpop.f32.mrf.mxu0
        %v4955 = vadd.f32 0.0, %v4954
        %v4956 = vpop.f32.mrf.mxu0
        %v4957 = vadd.f32 0.0, %v4956
        %4958 = vmatmul.bf16.gmra.mxu0 %v4597
        %v4959 = vpop.f32.mrf.mxu0
        %v4960 = vadd.f32 0.0, %v4959
        %v4961 = vpop.f32.mrf.mxu0
        %v4962 = vadd.f32 0.0, %v4961
        %4963 = vmatmul.bf16.gmra.mxu0 %v4598
        %v4964 = vpop.f32.mrf.mxu0
        %v4965 = vadd.f32 0.0, %v4964
        %v4966 = vpop.f32.mrf.mxu0
        %v4967 = vadd.f32 0.0, %v4966
        %4968 = vmatmul.bf16.gmra.mxu0 %v4599
        %v4969 = vpop.f32.mrf.mxu0
        %v4970 = vadd.f32 0.0, %v4969
        %v4971 = vpop.f32.mrf.mxu0
        %v4972 = vadd.f32 0.0, %v4971
        %4973 = vmatmul.bf16.gmra.mxu0 %v4600
        %v4974 = vpop.f32.mrf.mxu0
        %v4975 = vadd.f32 0.0, %v4974
        %v4976 = vpop.f32.mrf.mxu0
        %v4977 = vadd.f32 0.0, %v4976
        %4978 = vdwg.mxu0
        %v4979 = vmul.f32 %v4940, 0.35355338
        %v4980 = vmul.f32 %v4942, 0.35355338
        %v4981 = vmul.f32 %v4945, 0.35355338
        %v4982 = vmul.f32 %v4947, 0.35355338
        %v4983 = vmul.f32 %v4950, 0.35355338
        %v4984 = vmul.f32 %v4952, 0.35355338
        %v4985 = vmul.f32 %v4955, 0.35355338
        %v4986 = vmul.f32 %v4957, 0.35355338
        %v4987 = vmul.f32 %v4960, 0.35355338
        %v4988 = vmul.f32 %v4962, 0.35355338
        %v4989 = vmul.f32 %v4965, 0.35355338
        %v4990 = vmul.f32 %v4967, 0.35355338
        %v4991 = vmul.f32 %v4970, 0.35355338
        %v4992 = vmul.f32 %v4972, 0.35355338
        %v4993 = vmul.f32 %v4975, 0.35355338
        %v4994 = vmul.f32 %v4977, 0.35355338
        %v4995 = vadd.f32 %v4979, %v1016
        %v4996 = vadd.f32 %v4980, %v1017
        %v4997 = vadd.f32 %v4981, %v1018
        %v4998 = vadd.f32 %v4982, %v1019
        %v4999 = vadd.f32 %v4983, %v1020
        %v5000 = vadd.f32 %v4984, %v1021
        %v5001 = vadd.f32 %v4985, %v1022
        %v5002 = vadd.f32 %v4986, %v1023
        %v5003 = vadd.f32 %v4987, %v1024
        %v5004 = vadd.f32 %v4988, %v1025
        %v5005 = vadd.f32 %v4989, %v1026
        %v5006 = vadd.f32 %v4990, %v1027
        %v5007 = vadd.f32 %v4991, %v1028
        %v5008 = vadd.f32 %v4992, %v1029
        %v5009 = vadd.f32 %v4993, %v1030
        %v5010 = vadd.f32 %v4994, %v1031
        %5011 = vmax.xlane.f32.xlu0 %v4995
        %v5012 = vpop.xlane.xlu0 %5011
        %5013 = vmax.xlane.f32.xlu0 %v4996
        %v5014 = vpop.xlane.xlu0 %5013
        %5015 = vmax.xlane.f32.xlu0 %v4997
        %v5016 = vpop.xlane.xlu0 %5015
        %5017 = vmax.xlane.f32.xlu0 %v4998
        %v5018 = vpop.xlane.xlu0 %5017
        %5019 = vmax.xlane.f32.xlu0 %v4999
        %v5020 = vpop.xlane.xlu0 %5019
        %5021 = vmax.xlane.f32.xlu0 %v5000
        %v5022 = vpop.xlane.xlu0 %5021
        %5023 = vmax.xlane.f32.xlu0 %v5001
        %v5024 = vpop.xlane.xlu0 %5023
        %5025 = vmax.xlane.f32.xlu0 %v5002
        %v5026 = vpop.xlane.xlu0 %5025
        %5027 = vmax.xlane.f32.xlu0 %v5003
        %v5028 = vpop.xlane.xlu0 %5027
        %5029 = vmax.xlane.f32.xlu0 %v5004
        %v5030 = vpop.xlane.xlu0 %5029
        %5031 = vmax.xlane.f32.xlu0 %v5005
        %v5032 = vpop.xlane.xlu0 %5031
        %5033 = vmax.xlane.f32.xlu0 %v5006
        %v5034 = vpop.xlane.xlu0 %5033
        %5035 = vmax.xlane.f32.xlu0 %v5007
        %v5036 = vpop.xlane.xlu0 %5035
        %5037 = vmax.xlane.f32.xlu0 %v5008
        %v5038 = vpop.xlane.xlu0 %5037
        %5039 = vmax.xlane.f32.xlu0 %v5009
        %v5040 = vpop.xlane.xlu0 %5039
        %5041 = vmax.xlane.f32.xlu0 %v5010
        %v5042 = vpop.xlane.xlu0 %5041
        %v5043 = vsub.f32 %v4995, %v5012
        %v5044 = vsub.f32 %v4996, %v5014
        %v5045 = vsub.f32 %v4997, %v5016
        %v5046 = vsub.f32 %v4998, %v5018
        %v5047 = vsub.f32 %v4999, %v5020
        %v5048 = vsub.f32 %v5000, %v5022
        %v5049 = vsub.f32 %v5001, %v5024
        %v5050 = vsub.f32 %v5002, %v5026
        %v5051 = vsub.f32 %v5003, %v5028
        %v5052 = vsub.f32 %v5004, %v5030
        %v5053 = vsub.f32 %v5005, %v5032
        %v5054 = vsub.f32 %v5006, %v5034
        %v5055 = vsub.f32 %v5007, %v5036
        %v5056 = vsub.f32 %v5008, %v5038
        %v5057 = vsub.f32 %v5009, %v5040
        %v5058 = vsub.f32 %v5010, %v5042
        %v5059 = vmul.f32 %v5043, 1.442695
        %v5060 = vpow.pop %v5059
        %v5061 = vmul.f32 %v5044, 1.442695
        %v5062 = vpow.pop %v5061
        %v5063 = vmul.f32 %v5045, 1.442695
        %v5064 = vpow.pop %v5063
        %v5065 = vmul.f32 %v5046, 1.442695
        %v5066 = vpow.pop %v5065
        %v5067 = vmul.f32 %v5047, 1.442695
        %v5068 = vpow.pop %v5067
        %v5069 = vmul.f32 %v5048, 1.442695
        %v5070 = vpow.pop %v5069
        %v5071 = vmul.f32 %v5049, 1.442695
        %v5072 = vpow.pop %v5071
        %v5073 = vmul.f32 %v5050, 1.442695
        %v5074 = vpow.pop %v5073
        %v5075 = vmul.f32 %v5051, 1.442695
        %v5076 = vpow.pop %v5075
        %v5077 = vmul.f32 %v5052, 1.442695
        %v5078 = vpow.pop %v5077
        %v5079 = vmul.f32 %v5053, 1.442695
        %v5080 = vpow.pop %v5079
        %v5081 = vmul.f32 %v5054, 1.442695
        %v5082 = vpow.pop %v5081
        %v5083 = vmul.f32 %v5055, 1.442695
        %v5084 = vpow.pop %v5083
        %v5085 = vmul.f32 %v5056, 1.442695
        %v5086 = vpow.pop %v5085
        %v5087 = vmul.f32 %v5057, 1.442695
        %v5088 = vpow.pop %v5087
        %v5089 = vmul.f32 %v5058, 1.442695
        %v5090 = vpow.pop %v5089
        %5091 = vadd.xlane.f32.xlu0 %v5060
        %v5092 = vpop.xlane.xlu0 %5091
        %5093 = vadd.xlane.f32.xlu0 %v5062
        %v5094 = vpop.xlane.xlu0 %5093
        %5095 = vadd.xlane.f32.xlu0 %v5064
        %v5096 = vpop.xlane.xlu0 %5095
        %5097 = vadd.xlane.f32.xlu0 %v5066
        %v5098 = vpop.xlane.xlu0 %5097
        %5099 = vadd.xlane.f32.xlu0 %v5068
        %v5100 = vpop.xlane.xlu0 %5099
        %5101 = vadd.xlane.f32.xlu0 %v5070
        %v5102 = vpop.xlane.xlu0 %5101
        %5103 = vadd.xlane.f32.xlu0 %v5072
        %v5104 = vpop.xlane.xlu0 %5103
        %5105 = vadd.xlane.f32.xlu0 %v5074
        %v5106 = vpop.xlane.xlu0 %5105
        %5107 = vadd.xlane.f32.xlu0 %v5076
        %v5108 = vpop.xlane.xlu0 %5107
        %5109 = vadd.xlane.f32.xlu0 %v5078
        %v5110 = vpop.xlane.xlu0 %5109
        %5111 = vadd.xlane.f32.xlu0 %v5080
        %v5112 = vpop.xlane.xlu0 %5111
        %5113 = vadd.xlane.f32.xlu0 %v5082
        %v5114 = vpop.xlane.xlu0 %5113
        %5115 = vadd.xlane.f32.xlu0 %v5084
        %v5116 = vpop.xlane.xlu0 %5115
        %5117 = vadd.xlane.f32.xlu0 %v5086
        %v5118 = vpop.xlane.xlu0 %5117
        %5119 = vadd.xlane.f32.xlu0 %v5088
        %v5120 = vpop.xlane.xlu0 %5119
        %5121 = vadd.xlane.f32.xlu0 %v5090
        %v5122 = vpop.xlane.xlu0 %5121
        %v5123 = vrcp.pop %v5092
        %v5124 = vrcp.pop %v5094
        %v5125 = vrcp.pop %v5096
        %v5126 = vrcp.pop %v5098
        %v5127 = vrcp.pop %v5100
        %v5128 = vrcp.pop %v5102
        %v5129 = vrcp.pop %v5104
        %v5130 = vrcp.pop %v5106
        %v5131 = vrcp.pop %v5108
        %v5132 = vrcp.pop %v5110
        %v5133 = vrcp.pop %v5112
        %v5134 = vrcp.pop %v5114
        %v5135 = vrcp.pop %v5116
        %v5136 = vrcp.pop %v5118
        %v5137 = vrcp.pop %v5120
        %v5138 = vrcp.pop %v5122
        %v5139 = vmul.f32 %v5060, %v5123
        %v5140 = vmul.f32 %v5062, %v5124
        %v5141 = vmul.f32 %v5064, %v5125
        %v5142 = vmul.f32 %v5066, %v5126
        %v5143 = vmul.f32 %v5068, %v5127
        %v5144 = vmul.f32 %v5070, %v5128
        %v5145 = vmul.f32 %v5072, %v5129
        %v5146 = vmul.f32 %v5074, %v5130
        %v5147 = vmul.f32 %v5076, %v5131
        %v5148 = vmul.f32 %v5078, %v5132
        %v5149 = vmul.f32 %v5080, %v5133
        %v5150 = vmul.f32 %v5082, %v5134
        %v5151 = vmul.f32 %v5084, %v5135
        %v5152 = vmul.f32 %v5086, %v5136
        %v5153 = vmul.f32 %v5088, %v5137
        %v5154 = vmul.f32 %v5090, %v5138
        %v5155 = vpack.c.bf16 %v5140, %v5139
        %v5156 = vpack.c.bf16 %v5142, %v5141
        %v5157 = vpack.c.bf16 %v5144, %v5143
        %v5158 = vpack.c.bf16 %v5146, %v5145
        %v5159 = vpack.c.bf16 %v5148, %v5147
        %v5160 = vpack.c.bf16 %v5150, %v5149
        %v5161 = vpack.c.bf16 %v5152, %v5151
        %v5162 = vpack.c.bf16 %v5154, %v5153
        %5163 = vmatpush.bf16.msra.mxu0 %v4929
        %5164 = vmatpush.bf16.msra.mxu0 %v4928
        %5165 = vmatpush.bf16.msra.mxu0 %v4927
        %5166 = vmatpush.bf16.msra.mxu0 %v4926
        %5167 = vmatpush.bf16.msra.mxu0 %v4925
        %5168 = vmatpush.bf16.msra.mxu0 %v4924
        %5169 = vmatpush.bf16.msra.mxu0 %v4923
        %5170 = vmatpush.bf16.msra.mxu0 %v4922
        %5171 = vmatmul.bf16.gmra.mxu0 %v5155
        %v5172 = vpop.f32.mrf.mxu0
        %v5173 = vadd.f32 0.0, %v5172
        %v5174 = vpop.f32.mrf.mxu0
        %v5175 = vadd.f32 0.0, %v5174
        %5176 = vmatmul.bf16.gmra.mxu0 %v5156
        %v5177 = vpop.f32.mrf.mxu0
        %v5178 = vadd.f32 0.0, %v5177
        %v5179 = vpop.f32.mrf.mxu0
        %v5180 = vadd.f32 0.0, %v5179
        %5181 = vmatmul.bf16.gmra.mxu0 %v5157
        %v5182 = vpop.f32.mrf.mxu0
        %v5183 = vadd.f32 0.0, %v5182
        %v5184 = vpop.f32.mrf.mxu0
        %v5185 = vadd.f32 0.0, %v5184
        %5186 = vmatmul.bf16.gmra.mxu0 %v5158
        %v5187 = vpop.f32.mrf.mxu0
        %v5188 = vadd.f32 0.0, %v5187
        %v5189 = vpop.f32.mrf.mxu0
        %v5190 = vadd.f32 0.0, %v5189
        %5191 = vmatmul.bf16.gmra.mxu0 %v5159
        %v5192 = vpop.f32.mrf.mxu0
        %v5193 = vadd.f32 0.0, %v5192
        %v5194 = vpop.f32.mrf.mxu0
        %v5195 = vadd.f32 0.0, %v5194
        %5196 = vmatmul.bf16.gmra.mxu0 %v5160
        %v5197 = vpop.f32.mrf.mxu0
        %v5198 = vadd.f32 0.0, %v5197
        %v5199 = vpop.f32.mrf.mxu0
        %v5200 = vadd.f32 0.0, %v5199
        %5201 = vmatmul.bf16.gmra.mxu0 %v5161
        %v5202 = vpop.f32.mrf.mxu0
        %v5203 = vadd.f32 0.0, %v5202
        %v5204 = vpop.f32.mrf.mxu0
        %v5205 = vadd.f32 0.0, %v5204
        %5206 = vmatmul.bf16.gmra.mxu0 %v5162
        %v5207 = vpop.f32.mrf.mxu0
        %v5208 = vadd.f32 0.0, %v5207
        %v5209 = vpop.f32.mrf.mxu0
        %v5210 = vadd.f32 0.0, %v5209
        %5211 = vdwg.mxu0
        %5212 = vmatpush.bf16.msra.mxu0 %v4648
        %5213 = vmatpush.bf16.msra.mxu0 %v4647
        %5214 = vmatpush.bf16.msra.mxu0 %v4646
        %5215 = vmatpush.bf16.msra.mxu0 %v4645
        %5216 = vmatpush.bf16.msra.mxu0 %v4644
        %5217 = vmatpush.bf16.msra.mxu0 %v4643
        %5218 = vmatpush.bf16.msra.mxu0 %v4642
        %5219 = vmatpush.bf16.msra.mxu0 %v4641
        %5220 = vmatmul.bf16.gmra.mxu0 %v4874
        %v5221 = vpop.f32.mrf.mxu0
        %v5222 = vadd.f32 %v5173, %v5221
        %v5223 = vpop.f32.mrf.mxu0
        %v5224 = vadd.f32 %v5175, %v5223
        %5225 = vmatmul.bf16.gmra.mxu0 %v4875
        %v5226 = vpop.f32.mrf.mxu0
        %v5227 = vadd.f32 %v5178, %v5226
        %v5228 = vpop.f32.mrf.mxu0
        %v5229 = vadd.f32 %v5180, %v5228
        %5230 = vmatmul.bf16.gmra.mxu0 %v4876
        %v5231 = vpop.f32.mrf.mxu0
        %v5232 = vadd.f32 %v5183, %v5231
        %v5233 = vpop.f32.mrf.mxu0
        %v5234 = vadd.f32 %v5185, %v5233
        %5235 = vmatmul.bf16.gmra.mxu0 %v4877
        %v5236 = vpop.f32.mrf.mxu0
        %v5237 = vadd.f32 %v5188, %v5236
        %v5238 = vpop.f32.mrf.mxu0
        %v5239 = vadd.f32 %v5190, %v5238
        %5240 = vmatmul.bf16.gmra.mxu0 %v4878
        %v5241 = vpop.f32.mrf.mxu0
        %v5242 = vadd.f32 %v5193, %v5241
        %v5243 = vpop.f32.mrf.mxu0
        %v5244 = vadd.f32 %v5195, %v5243
        %5245 = vmatmul.bf16.gmra.mxu0 %v4879
        %v5246 = vpop.f32.mrf.mxu0
        %v5247 = vadd.f32 %v5198, %v5246
        %v5248 = vpop.f32.mrf.mxu0
        %v5249 = vadd.f32 %v5200, %v5248
        %5250 = vmatmul.bf16.gmra.mxu0 %v4880
        %v5251 = vpop.f32.mrf.mxu0
        %v5252 = vadd.f32 %v5203, %v5251
        %v5253 = vpop.f32.mrf.mxu0
        %v5254 = vadd.f32 %v5205, %v5253
        %5255 = vmatmul.bf16.gmra.mxu0 %v4881
        %v5256 = vpop.f32.mrf.mxu0
        %v5257 = vadd.f32 %v5208, %v5256
        %v5258 = vpop.f32.mrf.mxu0
        %v5259 = vadd.f32 %v5210, %v5258
        %5260 = vdwg.mxu0
        %v5261 = vmul.f32 %v4505, %v1010
        %v5262 = vmul.f32 %v4507, %v1010
        %v5263 = vmul.f32 %v4510, %v1010
        %v5264 = vmul.f32 %v4512, %v1010
        %v5265 = vmul.f32 %v4515, %v1010
        %v5266 = vmul.f32 %v4517, %v1010
        %v5267 = vmul.f32 %v4520, %v1010
        %v5268 = vmul.f32 %v4522, %v1010
        %v5269 = vmul.f32 %v4525, %v1010
        %v5270 = vmul.f32 %v4527, %v1010
        %v5271 = vmul.f32 %v4530, %v1010
        %v5272 = vmul.f32 %v4532, %v1010
        %v5273 = vmul.f32 %v4535, %v1010
        %v5274 = vmul.f32 %v4537, %v1010
        %v5275 = vmul.f32 %v4540, %v1010
        %v5276 = vmul.f32 %v4542, %v1010
        %v5277 = vpack.c.bf16 %v5262, %v5261
        %v5278 = vpack.c.bf16 %v5264, %v5263
        %v5279 = vpack.c.bf16 %v5266, %v5265
        %v5280 = vpack.c.bf16 %v5268, %v5267
        %v5281 = vpack.c.bf16 %v5270, %v5269
        %v5282 = vpack.c.bf16 %v5272, %v5271
        %v5283 = vpack.c.bf16 %v5274, %v5273
        %v5284 = vpack.c.bf16 %v5276, %v5275
        %v5285 = vmul.f32 %v4554, %v1010
        %v5286 = vmul.f32 %v4556, %v1010
        %v5287 = vmul.f32 %v4559, %v1010
        %v5288 = vmul.f32 %v4561, %v1010
        %v5289 = vmul.f32 %v4564, %v1010
        %v5290 = vmul.f32 %v4566, %v1010
        %v5291 = vmul.f32 %v4569, %v1010
        %v5292 = vmul.f32 %v4571, %v1010
        %v5293 = vmul.f32 %v4574, %v1010
        %v5294 = vmul.f32 %v4576, %v1010
        %v5295 = vmul.f32 %v4579, %v1010
        %v5296 = vmul.f32 %v4581, %v1010
        %v5297 = vmul.f32 %v4584, %v1010
        %v5298 = vmul.f32 %v4586, %v1010
        %v5299 = vmul.f32 %v4589, %v1010
        %v5300 = vmul.f32 %v4591, %v1010
        %v5301 = vpack.c.bf16 %v5286, %v5285
        %v5302 = vpack.c.bf16 %v5288, %v5287
        %v5303 = vpack.c.bf16 %v5290, %v5289
        %v5304 = vpack.c.bf16 %v5292, %v5291
        %v5305 = vpack.c.bf16 %v5294, %v5293
        %v5306 = vpack.c.bf16 %v5296, %v5295
        %v5307 = vpack.c.bf16 %v5298, %v5297
        %v5308 = vpack.c.bf16 %v5300, %v5299
        %5309 = vmatpush.bf16.xpose.msra.mxu0 %v5284
        %5310 = vmatpush.bf16.xpose.msra.mxu0 %v5283
        %5311 = vmatpush.bf16.xpose.msra.mxu0 %v5282
        %5312 = vmatpush.bf16.xpose.msra.mxu0 %v5281
        %5313 = vmatpush.bf16.xpose.msra.mxu0 %v5280
        %5314 = vmatpush.bf16.xpose.msra.mxu0 %v5279
        %5315 = vmatpush.bf16.xpose.msra.mxu0 %v5278
        %5316 = vmatpush.bf16.xpose.msra.mxu0 %v5277
        %5317 = vmatmul.bf16.gmra.mxu0 %v4593
        %v5318 = vpop.f32.mrf.mxu0
        %v5319 = vadd.f32 0.0, %v5318
        %v5320 = vpop.f32.mrf.mxu0
        %v5321 = vadd.f32 0.0, %v5320
        %5322 = vmatmul.bf16.gmra.mxu0 %v4594
        %v5323 = vpop.f32.mrf.mxu0
        %v5324 = vadd.f32 0.0, %v5323
        %v5325 = vpop.f32.mrf.mxu0
        %v5326 = vadd.f32 0.0, %v5325
        %5327 = vmatmul.bf16.gmra.mxu0 %v4595
        %v5328 = vpop.f32.mrf.mxu0
        %v5329 = vadd.f32 0.0, %v5328
        %v5330 = vpop.f32.mrf.mxu0
        %v5331 = vadd.f32 0.0, %v5330
        %5332 = vmatmul.bf16.gmra.mxu0 %v4596
        %v5333 = vpop.f32.mrf.mxu0
        %v5334 = vadd.f32 0.0, %v5333
        %v5335 = vpop.f32.mrf.mxu0
        %v5336 = vadd.f32 0.0, %v5335
        %5337 = vmatmul.bf16.gmra.mxu0 %v4597
        %v5338 = vpop.f32.mrf.mxu0
        %v5339 = vadd.f32 0.0, %v5338
        %v5340 = vpop.f32.mrf.mxu0
        %v5341 = vadd.f32 0.0, %v5340
        %5342 = vmatmul.bf16.gmra.mxu0 %v4598
        %v5343 = vpop.f32.mrf.mxu0
        %v5344 = vadd.f32 0.0, %v5343
        %v5345 = vpop.f32.mrf.mxu0
        %v5346 = vadd.f32 0.0, %v5345
        %5347 = vmatmul.bf16.gmra.mxu0 %v4599
        %v5348 = vpop.f32.mrf.mxu0
        %v5349 = vadd.f32 0.0, %v5348
        %v5350 = vpop.f32.mrf.mxu0
        %v5351 = vadd.f32 0.0, %v5350
        %5352 = vmatmul.bf16.gmra.mxu0 %v4600
        %v5353 = vpop.f32.mrf.mxu0
        %v5354 = vadd.f32 0.0, %v5353
        %v5355 = vpop.f32.mrf.mxu0
        %v5356 = vadd.f32 0.0, %v5355
        %5357 = vdwg.mxu0
        %v5358 = vmul.f32 %v5319, 0.35355338
        %v5359 = vmul.f32 %v5321, 0.35355338
        %v5360 = vmul.f32 %v5324, 0.35355338
        %v5361 = vmul.f32 %v5326, 0.35355338
        %v5362 = vmul.f32 %v5329, 0.35355338
        %v5363 = vmul.f32 %v5331, 0.35355338
        %v5364 = vmul.f32 %v5334, 0.35355338
        %v5365 = vmul.f32 %v5336, 0.35355338
        %v5366 = vmul.f32 %v5339, 0.35355338
        %v5367 = vmul.f32 %v5341, 0.35355338
        %v5368 = vmul.f32 %v5344, 0.35355338
        %v5369 = vmul.f32 %v5346, 0.35355338
        %v5370 = vmul.f32 %v5349, 0.35355338
        %v5371 = vmul.f32 %v5351, 0.35355338
        %v5372 = vmul.f32 %v5354, 0.35355338
        %v5373 = vmul.f32 %v5356, 0.35355338
        %v5374 = vadd.f32 %v5358, %v1016
        %v5375 = vadd.f32 %v5359, %v1017
        %v5376 = vadd.f32 %v5360, %v1018
        %v5377 = vadd.f32 %v5361, %v1019
        %v5378 = vadd.f32 %v5362, %v1020
        %v5379 = vadd.f32 %v5363, %v1021
        %v5380 = vadd.f32 %v5364, %v1022
        %v5381 = vadd.f32 %v5365, %v1023
        %v5382 = vadd.f32 %v5366, %v1024
        %v5383 = vadd.f32 %v5367, %v1025
        %v5384 = vadd.f32 %v5368, %v1026
        %v5385 = vadd.f32 %v5369, %v1027
        %v5386 = vadd.f32 %v5370, %v1028
        %v5387 = vadd.f32 %v5371, %v1029
        %v5388 = vadd.f32 %v5372, %v1030
        %v5389 = vadd.f32 %v5373, %v1031
        %5390 = vmax.xlane.f32.xlu0 %v5374
        %v5391 = vpop.xlane.xlu0 %5390
        %5392 = vmax.xlane.f32.xlu0 %v5375
        %v5393 = vpop.xlane.xlu0 %5392
        %5394 = vmax.xlane.f32.xlu0 %v5376
        %v5395 = vpop.xlane.xlu0 %5394
        %5396 = vmax.xlane.f32.xlu0 %v5377
        %v5397 = vpop.xlane.xlu0 %5396
        %5398 = vmax.xlane.f32.xlu0 %v5378
        %v5399 = vpop.xlane.xlu0 %5398
        %5400 = vmax.xlane.f32.xlu0 %v5379
        %v5401 = vpop.xlane.xlu0 %5400
        %5402 = vmax.xlane.f32.xlu0 %v5380
        %v5403 = vpop.xlane.xlu0 %5402
        %5404 = vmax.xlane.f32.xlu0 %v5381
        %v5405 = vpop.xlane.xlu0 %5404
        %5406 = vmax.xlane.f32.xlu0 %v5382
        %v5407 = vpop.xlane.xlu0 %5406
        %5408 = vmax.xlane.f32.xlu0 %v5383
        %v5409 = vpop.xlane.xlu0 %5408
        %5410 = vmax.xlane.f32.xlu0 %v5384
        %v5411 = vpop.xlane.xlu0 %5410
        %5412 = vmax.xlane.f32.xlu0 %v5385
        %v5413 = vpop.xlane.xlu0 %5412
        %5414 = vmax.xlane.f32.xlu0 %v5386
        %v5415 = vpop.xlane.xlu0 %5414
        %5416 = vmax.xlane.f32.xlu0 %v5387
        %v5417 = vpop.xlane.xlu0 %5416
        %5418 = vmax.xlane.f32.xlu0 %v5388
        %v5419 = vpop.xlane.xlu0 %5418
        %5420 = vmax.xlane.f32.xlu0 %v5389
        %v5421 = vpop.xlane.xlu0 %5420
        %v5422 = vsub.f32 %v5374, %v5391
        %v5423 = vsub.f32 %v5375, %v5393
        %v5424 = vsub.f32 %v5376, %v5395
        %v5425 = vsub.f32 %v5377, %v5397
        %v5426 = vsub.f32 %v5378, %v5399
        %v5427 = vsub.f32 %v5379, %v5401
        %v5428 = vsub.f32 %v5380, %v5403
        %v5429 = vsub.f32 %v5381, %v5405
        %v5430 = vsub.f32 %v5382, %v5407
        %v5431 = vsub.f32 %v5383, %v5409
        %v5432 = vsub.f32 %v5384, %v5411
        %v5433 = vsub.f32 %v5385, %v5413
        %v5434 = vsub.f32 %v5386, %v5415
        %v5435 = vsub.f32 %v5387, %v5417
        %v5436 = vsub.f32 %v5388, %v5419
        %v5437 = vsub.f32 %v5389, %v5421
        %v5438 = vmul.f32 %v5422, 1.442695
        %v5439 = vpow.pop %v5438
        %v5440 = vmul.f32 %v5423, 1.442695
        %v5441 = vpow.pop %v5440
        %v5442 = vmul.f32 %v5424, 1.442695
        %v5443 = vpow.pop %v5442
        %v5444 = vmul.f32 %v5425, 1.442695
        %v5445 = vpow.pop %v5444
        %v5446 = vmul.f32 %v5426, 1.442695
        %v5447 = vpow.pop %v5446
        %v5448 = vmul.f32 %v5427, 1.442695
        %v5449 = vpow.pop %v5448
        %v5450 = vmul.f32 %v5428, 1.442695
        %v5451 = vpow.pop %v5450
        %v5452 = vmul.f32 %v5429, 1.442695
        %v5453 = vpow.pop %v5452
        %v5454 = vmul.f32 %v5430, 1.442695
        %v5455 = vpow.pop %v5454
        %v5456 = vmul.f32 %v5431, 1.442695
        %v5457 = vpow.pop %v5456
        %v5458 = vmul.f32 %v5432, 1.442695
        %v5459 = vpow.pop %v5458
        %v5460 = vmul.f32 %v5433, 1.442695
        %v5461 = vpow.pop %v5460
        %v5462 = vmul.f32 %v5434, 1.442695
        %v5463 = vpow.pop %v5462
        %v5464 = vmul.f32 %v5435, 1.442695
        %v5465 = vpow.pop %v5464
        %v5466 = vmul.f32 %v5436, 1.442695
        %v5467 = vpow.pop %v5466
        %v5468 = vmul.f32 %v5437, 1.442695
        %v5469 = vpow.pop %v5468
        %5470 = vadd.xlane.f32.xlu0 %v5439
        %v5471 = vpop.xlane.xlu0 %5470
        %5472 = vadd.xlane.f32.xlu0 %v5441
        %v5473 = vpop.xlane.xlu0 %5472
        %5474 = vadd.xlane.f32.xlu0 %v5443
        %v5475 = vpop.xlane.xlu0 %5474
        %5476 = vadd.xlane.f32.xlu0 %v5445
        %v5477 = vpop.xlane.xlu0 %5476
        %5478 = vadd.xlane.f32.xlu0 %v5447
        %v5479 = vpop.xlane.xlu0 %5478
        %5480 = vadd.xlane.f32.xlu0 %v5449
        %v5481 = vpop.xlane.xlu0 %5480
        %5482 = vadd.xlane.f32.xlu0 %v5451
        %v5483 = vpop.xlane.xlu0 %5482
        %5484 = vadd.xlane.f32.xlu0 %v5453
        %v5485 = vpop.xlane.xlu0 %5484
        %5486 = vadd.xlane.f32.xlu0 %v5455
        %v5487 = vpop.xlane.xlu0 %5486
        %5488 = vadd.xlane.f32.xlu0 %v5457
        %v5489 = vpop.xlane.xlu0 %5488
        %5490 = vadd.xlane.f32.xlu0 %v5459
        %v5491 = vpop.xlane.xlu0 %5490
        %5492 = vadd.xlane.f32.xlu0 %v5461
        %v5493 = vpop.xlane.xlu0 %5492
        %5494 = vadd.xlane.f32.xlu0 %v5463
        %v5495 = vpop.xlane.xlu0 %5494
        %5496 = vadd.xlane.f32.xlu0 %v5465
        %v5497 = vpop.xlane.xlu0 %5496
        %5498 = vadd.xlane.f32.xlu0 %v5467
        %v5499 = vpop.xlane.xlu0 %5498
        %5500 = vadd.xlane.f32.xlu0 %v5469
        %v5501 = vpop.xlane.xlu0 %5500
        %v5502 = vrcp.pop %v5471
        %v5503 = vrcp.pop %v5473
        %v5504 = vrcp.pop %v5475
        %v5505 = vrcp.pop %v5477
        %v5506 = vrcp.pop %v5479
        %v5507 = vrcp.pop %v5481
        %v5508 = vrcp.pop %v5483
        %v5509 = vrcp.pop %v5485
        %v5510 = vrcp.pop %v5487
        %v5511 = vrcp.pop %v5489
        %v5512 = vrcp.pop %v5491
        %v5513 = vrcp.pop %v5493
        %v5514 = vrcp.pop %v5495
        %v5515 = vrcp.pop %v5497
        %v5516 = vrcp.pop %v5499
        %v5517 = vrcp.pop %v5501
        %v5518 = vmul.f32 %v5439, %v5502
        %v5519 = vmul.f32 %v5441, %v5503
        %v5520 = vmul.f32 %v5443, %v5504
        %v5521 = vmul.f32 %v5445, %v5505
        %v5522 = vmul.f32 %v5447, %v5506
        %v5523 = vmul.f32 %v5449, %v5507
        %v5524 = vmul.f32 %v5451, %v5508
        %v5525 = vmul.f32 %v5453, %v5509
        %v5526 = vmul.f32 %v5455, %v5510
        %v5527 = vmul.f32 %v5457, %v5511
        %v5528 = vmul.f32 %v5459, %v5512
        %v5529 = vmul.f32 %v5461, %v5513
        %v5530 = vmul.f32 %v5463, %v5514
        %v5531 = vmul.f32 %v5465, %v5515
        %v5532 = vmul.f32 %v5467, %v5516
        %v5533 = vmul.f32 %v5469, %v5517
        %v5534 = vpack.c.bf16 %v5519, %v5518
        %v5535 = vpack.c.bf16 %v5521, %v5520
        %v5536 = vpack.c.bf16 %v5523, %v5522
        %v5537 = vpack.c.bf16 %v5525, %v5524
        %v5538 = vpack.c.bf16 %v5527, %v5526
        %v5539 = vpack.c.bf16 %v5529, %v5528
        %v5540 = vpack.c.bf16 %v5531, %v5530
        %v5541 = vpack.c.bf16 %v5533, %v5532
        %5542 = vmatpush.bf16.msra.mxu0 %v5308
        %5543 = vmatpush.bf16.msra.mxu0 %v5307
        %5544 = vmatpush.bf16.msra.mxu0 %v5306
        %5545 = vmatpush.bf16.msra.mxu0 %v5305
        %5546 = vmatpush.bf16.msra.mxu0 %v5304
        %5547 = vmatpush.bf16.msra.mxu0 %v5303
        %5548 = vmatpush.bf16.msra.mxu0 %v5302
        %5549 = vmatpush.bf16.msra.mxu0 %v5301
        %5550 = vmatmul.bf16.gmra.mxu0 %v5534
        %v5551 = vpop.f32.mrf.mxu0
        %v5552 = vadd.f32 0.0, %v5551
        %v5553 = vpop.f32.mrf.mxu0
        %v5554 = vadd.f32 0.0, %v5553
        %5555 = vmatmul.bf16.gmra.mxu0 %v5535
        %v5556 = vpop.f32.mrf.mxu0
        %v5557 = vadd.f32 0.0, %v5556
        %v5558 = vpop.f32.mrf.mxu0
        %v5559 = vadd.f32 0.0, %v5558
        %5560 = vmatmul.bf16.gmra.mxu0 %v5536
        %v5561 = vpop.f32.mrf.mxu0
        %v5562 = vadd.f32 0.0, %v5561
        %v5563 = vpop.f32.mrf.mxu0
        %v5564 = vadd.f32 0.0, %v5563
        %5565 = vmatmul.bf16.gmra.mxu0 %v5537
        %v5566 = vpop.f32.mrf.mxu0
        %v5567 = vadd.f32 0.0, %v5566
        %v5568 = vpop.f32.mrf.mxu0
        %v5569 = vadd.f32 0.0, %v5568
        %5570 = vmatmul.bf16.gmra.mxu0 %v5538
        %v5571 = vpop.f32.mrf.mxu0
        %v5572 = vadd.f32 0.0, %v5571
        %v5573 = vpop.f32.mrf.mxu0
        %v5574 = vadd.f32 0.0, %v5573
        %5575 = vmatmul.bf16.gmra.mxu0 %v5539
        %v5576 = vpop.f32.mrf.mxu0
        %v5577 = vadd.f32 0.0, %v5576
        %v5578 = vpop.f32.mrf.mxu0
        %v5579 = vadd.f32 0.0, %v5578
        %5580 = vmatmul.bf16.gmra.mxu0 %v5540
        %v5581 = vpop.f32.mrf.mxu0
        %v5582 = vadd.f32 0.0, %v5581
        %v5583 = vpop.f32.mrf.mxu0
        %v5584 = vadd.f32 0.0, %v5583
        %5585 = vmatmul.bf16.gmra.mxu0 %v5541
        %v5586 = vpop.f32.mrf.mxu0
        %v5587 = vadd.f32 0.0, %v5586
        %v5588 = vpop.f32.mrf.mxu0
        %v5589 = vadd.f32 0.0, %v5588
        %5590 = vdwg.mxu0
        %v5591 = vadd.f32 %v5222, %v5552
        %v5592 = vadd.f32 %v5224, %v5554
        %v5593 = vadd.f32 %v5227, %v5557
        %v5594 = vadd.f32 %v5229, %v5559
        %v5595 = vadd.f32 %v5232, %v5562
        %v5596 = vadd.f32 %v5234, %v5564
        %v5597 = vadd.f32 %v5237, %v5567
        %v5598 = vadd.f32 %v5239, %v5569
        %v5599 = vadd.f32 %v5242, %v5572
        %v5600 = vadd.f32 %v5244, %v5574
        %v5601 = vadd.f32 %v5247, %v5577
        %v5602 = vadd.f32 %v5249, %v5579
        %v5603 = vadd.f32 %v5252, %v5582
        %v5604 = vadd.f32 %v5254, %v5584
        %v5605 = vadd.f32 %v5257, %v5587
        %v5606 = vadd.f32 %v5259, %v5589
        %v5607 = vmul.f32 %v4505, %v1015
        %v5608 = vmul.f32 %v4507, %v1015
        %v5609 = vmul.f32 %v4510, %v1015
        %v5610 = vmul.f32 %v4512, %v1015
        %v5611 = vmul.f32 %v4515, %v1015
        %v5612 = vmul.f32 %v4517, %v1015
        %v5613 = vmul.f32 %v4520, %v1015
        %v5614 = vmul.f32 %v4522, %v1015
        %v5615 = vmul.f32 %v4525, %v1015
        %v5616 = vmul.f32 %v4527, %v1015
        %v5617 = vmul.f32 %v4530, %v1015
        %v5618 = vmul.f32 %v4532, %v1015
        %v5619 = vmul.f32 %v4535, %v1015
        %v5620 = vmul.f32 %v4537, %v1015
        %v5621 = vmul.f32 %v4540, %v1015
        %v5622 = vmul.f32 %v4542, %v1015
        %v5623 = vpack.c.bf16 %v5608, %v5607
        %v5624 = vpack.c.bf16 %v5610, %v5609
        %v5625 = vpack.c.bf16 %v5612, %v5611
        %v5626 = vpack.c.bf16 %v5614, %v5613
        %v5627 = vpack.c.bf16 %v5616, %v5615
        %v5628 = vpack.c.bf16 %v5618, %v5617
        %v5629 = vpack.c.bf16 %v5620, %v5619
        %v5630 = vpack.c.bf16 %v5622, %v5621
        %v5631 = vmul.f32 %v4554, %v1015
        %v5632 = vmul.f32 %v4556, %v1015
        %v5633 = vmul.f32 %v4559, %v1015
        %v5634 = vmul.f32 %v4561, %v1015
        %v5635 = vmul.f32 %v4564, %v1015
        %v5636 = vmul.f32 %v4566, %v1015
        %v5637 = vmul.f32 %v4569, %v1015
        %v5638 = vmul.f32 %v4571, %v1015
        %v5639 = vmul.f32 %v4574, %v1015
        %v5640 = vmul.f32 %v4576, %v1015
        %v5641 = vmul.f32 %v4579, %v1015
        %v5642 = vmul.f32 %v4581, %v1015
        %v5643 = vmul.f32 %v4584, %v1015
        %v5644 = vmul.f32 %v4586, %v1015
        %v5645 = vmul.f32 %v4589, %v1015
        %v5646 = vmul.f32 %v4591, %v1015
        %v5647 = vpack.c.bf16 %v5632, %v5631
        %v5648 = vpack.c.bf16 %v5634, %v5633
        %v5649 = vpack.c.bf16 %v5636, %v5635
        %v5650 = vpack.c.bf16 %v5638, %v5637
        %v5651 = vpack.c.bf16 %v5640, %v5639
        %v5652 = vpack.c.bf16 %v5642, %v5641
        %v5653 = vpack.c.bf16 %v5644, %v5643
        %v5654 = vpack.c.bf16 %v5646, %v5645
        %5655 = vmatpush.bf16.xpose.msra.mxu0 %v5630
        %5656 = vmatpush.bf16.xpose.msra.mxu0 %v5629
        %5657 = vmatpush.bf16.xpose.msra.mxu0 %v5628
        %5658 = vmatpush.bf16.xpose.msra.mxu0 %v5627
        %5659 = vmatpush.bf16.xpose.msra.mxu0 %v5626
        %5660 = vmatpush.bf16.xpose.msra.mxu0 %v5625
        %5661 = vmatpush.bf16.xpose.msra.mxu0 %v5624
        %5662 = vmatpush.bf16.xpose.msra.mxu0 %v5623
        %5663 = vmatmul.bf16.gmra.mxu0 %v4593
        %v5664 = vpop.f32.mrf.mxu0
        %v5665 = vadd.f32 0.0, %v5664
        %v5666 = vpop.f32.mrf.mxu0
        %v5667 = vadd.f32 0.0, %v5666
        %5668 = vmatmul.bf16.gmra.mxu0 %v4594
        %v5669 = vpop.f32.mrf.mxu0
        %v5670 = vadd.f32 0.0, %v5669
        %v5671 = vpop.f32.mrf.mxu0
        %v5672 = vadd.f32 0.0, %v5671
        %5673 = vmatmul.bf16.gmra.mxu0 %v4595
        %v5674 = vpop.f32.mrf.mxu0
        %v5675 = vadd.f32 0.0, %v5674
        %v5676 = vpop.f32.mrf.mxu0
        %v5677 = vadd.f32 0.0, %v5676
        %5678 = vmatmul.bf16.gmra.mxu0 %v4596
        %v5679 = vpop.f32.mrf.mxu0
        %v5680 = vadd.f32 0.0, %v5679
        %v5681 = vpop.f32.mrf.mxu0
        %v5682 = vadd.f32 0.0, %v5681
        %5683 = vmatmul.bf16.gmra.mxu0 %v4597
        %v5684 = vpop.f32.mrf.mxu0
        %v5685 = vadd.f32 0.0, %v5684
        %v5686 = vpop.f32.mrf.mxu0
        %v5687 = vadd.f32 0.0, %v5686
        %5688 = vmatmul.bf16.gmra.mxu0 %v4598
        %v5689 = vpop.f32.mrf.mxu0
        %v5690 = vadd.f32 0.0, %v5689
        %v5691 = vpop.f32.mrf.mxu0
        %v5692 = vadd.f32 0.0, %v5691
        %5693 = vmatmul.bf16.gmra.mxu0 %v4599
        %v5694 = vpop.f32.mrf.mxu0
        %v5695 = vadd.f32 0.0, %v5694
        %v5696 = vpop.f32.mrf.mxu0
        %v5697 = vadd.f32 0.0, %v5696
        %5698 = vmatmul.bf16.gmra.mxu0 %v4600
        %v5699 = vpop.f32.mrf.mxu0
        %v5700 = vadd.f32 0.0, %v5699
        %v5701 = vpop.f32.mrf.mxu0
        %v5702 = vadd.f32 0.0, %v5701
        %5703 = vdwg.mxu0
        %v5704 = vmul.f32 %v5665, 0.35355338
        %v5705 = vmul.f32 %v5667, 0.35355338
        %v5706 = vmul.f32 %v5670, 0.35355338
        %v5707 = vmul.f32 %v5672, 0.35355338
        %v5708 = vmul.f32 %v5675, 0.35355338
        %v5709 = vmul.f32 %v5677, 0.35355338
        %v5710 = vmul.f32 %v5680, 0.35355338
        %v5711 = vmul.f32 %v5682, 0.35355338
        %v5712 = vmul.f32 %v5685, 0.35355338
        %v5713 = vmul.f32 %v5687, 0.35355338
        %v5714 = vmul.f32 %v5690, 0.35355338
        %v5715 = vmul.f32 %v5692, 0.35355338
        %v5716 = vmul.f32 %v5695, 0.35355338
        %v5717 = vmul.f32 %v5697, 0.35355338
        %v5718 = vmul.f32 %v5700, 0.35355338
        %v5719 = vmul.f32 %v5702, 0.35355338
        %v5720 = vadd.f32 %v5704, %v1016
        %v5721 = vadd.f32 %v5705, %v1017
        %v5722 = vadd.f32 %v5706, %v1018
        %v5723 = vadd.f32 %v5707, %v1019
        %v5724 = vadd.f32 %v5708, %v1020
        %v5725 = vadd.f32 %v5709, %v1021
        %v5726 = vadd.f32 %v5710, %v1022
        %v5727 = vadd.f32 %v5711, %v1023
        %v5728 = vadd.f32 %v5712, %v1024
        %v5729 = vadd.f32 %v5713, %v1025
        %v5730 = vadd.f32 %v5714, %v1026
        %v5731 = vadd.f32 %v5715, %v1027
        %v5732 = vadd.f32 %v5716, %v1028
        %v5733 = vadd.f32 %v5717, %v1029
        %v5734 = vadd.f32 %v5718, %v1030
        %v5735 = vadd.f32 %v5719, %v1031
        %5736 = vmax.xlane.f32.xlu0 %v5720
        %v5737 = vpop.xlane.xlu0 %5736
        %5738 = vmax.xlane.f32.xlu0 %v5721
        %v5739 = vpop.xlane.xlu0 %5738
        %5740 = vmax.xlane.f32.xlu0 %v5722
        %v5741 = vpop.xlane.xlu0 %5740
        %5742 = vmax.xlane.f32.xlu0 %v5723
        %v5743 = vpop.xlane.xlu0 %5742
        %5744 = vmax.xlane.f32.xlu0 %v5724
        %v5745 = vpop.xlane.xlu0 %5744
        %5746 = vmax.xlane.f32.xlu0 %v5725
        %v5747 = vpop.xlane.xlu0 %5746
        %5748 = vmax.xlane.f32.xlu0 %v5726
        %v5749 = vpop.xlane.xlu0 %5748
        %5750 = vmax.xlane.f32.xlu0 %v5727
        %v5751 = vpop.xlane.xlu0 %5750
        %5752 = vmax.xlane.f32.xlu0 %v5728
        %v5753 = vpop.xlane.xlu0 %5752
        %5754 = vmax.xlane.f32.xlu0 %v5729
        %v5755 = vpop.xlane.xlu0 %5754
        %5756 = vmax.xlane.f32.xlu0 %v5730
        %v5757 = vpop.xlane.xlu0 %5756
        %5758 = vmax.xlane.f32.xlu0 %v5731
        %v5759 = vpop.xlane.xlu0 %5758
        %5760 = vmax.xlane.f32.xlu0 %v5732
        %v5761 = vpop.xlane.xlu0 %5760
        %5762 = vmax.xlane.f32.xlu0 %v5733
        %v5763 = vpop.xlane.xlu0 %5762
        %5764 = vmax.xlane.f32.xlu0 %v5734
        %v5765 = vpop.xlane.xlu0 %5764
        %5766 = vmax.xlane.f32.xlu0 %v5735
        %v5767 = vpop.xlane.xlu0 %5766
        %v5768 = vsub.f32 %v5720, %v5737
        %v5769 = vsub.f32 %v5721, %v5739
        %v5770 = vsub.f32 %v5722, %v5741
        %v5771 = vsub.f32 %v5723, %v5743
        %v5772 = vsub.f32 %v5724, %v5745
        %v5773 = vsub.f32 %v5725, %v5747
        %v5774 = vsub.f32 %v5726, %v5749
        %v5775 = vsub.f32 %v5727, %v5751
        %v5776 = vsub.f32 %v5728, %v5753
        %v5777 = vsub.f32 %v5729, %v5755
        %v5778 = vsub.f32 %v5730, %v5757
        %v5779 = vsub.f32 %v5731, %v5759
        %v5780 = vsub.f32 %v5732, %v5761
        %v5781 = vsub.f32 %v5733, %v5763
        %v5782 = vsub.f32 %v5734, %v5765
        %v5783 = vsub.f32 %v5735, %v5767
        %v5784 = vmul.f32 %v5768, 1.442695
        %v5785 = vpow.pop %v5784
        %v5786 = vmul.f32 %v5769, 1.442695
        %v5787 = vpow.pop %v5786
        %v5788 = vmul.f32 %v5770, 1.442695
        %v5789 = vpow.pop %v5788
        %v5790 = vmul.f32 %v5771, 1.442695
        %v5791 = vpow.pop %v5790
        %v5792 = vmul.f32 %v5772, 1.442695
        %v5793 = vpow.pop %v5792
        %v5794 = vmul.f32 %v5773, 1.442695
        %v5795 = vpow.pop %v5794
        %v5796 = vmul.f32 %v5774, 1.442695
        %v5797 = vpow.pop %v5796
        %v5798 = vmul.f32 %v5775, 1.442695
        %v5799 = vpow.pop %v5798
        %v5800 = vmul.f32 %v5776, 1.442695
        %v5801 = vpow.pop %v5800
        %v5802 = vmul.f32 %v5777, 1.442695
        %v5803 = vpow.pop %v5802
        %v5804 = vmul.f32 %v5778, 1.442695
        %v5805 = vpow.pop %v5804
        %v5806 = vmul.f32 %v5779, 1.442695
        %v5807 = vpow.pop %v5806
        %v5808 = vmul.f32 %v5780, 1.442695
        %v5809 = vpow.pop %v5808
        %v5810 = vmul.f32 %v5781, 1.442695
        %v5811 = vpow.pop %v5810
        %v5812 = vmul.f32 %v5782, 1.442695
        %v5813 = vpow.pop %v5812
        %v5814 = vmul.f32 %v5783, 1.442695
        %v5815 = vpow.pop %v5814
        %5816 = vadd.xlane.f32.xlu0 %v5785
        %v5817 = vpop.xlane.xlu0 %5816
        %5818 = vadd.xlane.f32.xlu0 %v5787
        %v5819 = vpop.xlane.xlu0 %5818
        %5820 = vadd.xlane.f32.xlu0 %v5789
        %v5821 = vpop.xlane.xlu0 %5820
        %5822 = vadd.xlane.f32.xlu0 %v5791
        %v5823 = vpop.xlane.xlu0 %5822
        %5824 = vadd.xlane.f32.xlu0 %v5793
        %v5825 = vpop.xlane.xlu0 %5824
        %5826 = vadd.xlane.f32.xlu0 %v5795
        %v5827 = vpop.xlane.xlu0 %5826
        %5828 = vadd.xlane.f32.xlu0 %v5797
        %v5829 = vpop.xlane.xlu0 %5828
        %5830 = vadd.xlane.f32.xlu0 %v5799
        %v5831 = vpop.xlane.xlu0 %5830
        %5832 = vadd.xlane.f32.xlu0 %v5801
        %v5833 = vpop.xlane.xlu0 %5832
        %5834 = vadd.xlane.f32.xlu0 %v5803
        %v5835 = vpop.xlane.xlu0 %5834
        %5836 = vadd.xlane.f32.xlu0 %v5805
        %v5837 = vpop.xlane.xlu0 %5836
        %5838 = vadd.xlane.f32.xlu0 %v5807
        %v5839 = vpop.xlane.xlu0 %5838
        %5840 = vadd.xlane.f32.xlu0 %v5809
        %v5841 = vpop.xlane.xlu0 %5840
        %5842 = vadd.xlane.f32.xlu0 %v5811
        %v5843 = vpop.xlane.xlu0 %5842
        %5844 = vadd.xlane.f32.xlu0 %v5813
        %v5845 = vpop.xlane.xlu0 %5844
        %5846 = vadd.xlane.f32.xlu0 %v5815
        %v5847 = vpop.xlane.xlu0 %5846
        %v5848 = vrcp.pop %v5817
        %v5849 = vrcp.pop %v5819
        %v5850 = vrcp.pop %v5821
        %v5851 = vrcp.pop %v5823
        %v5852 = vrcp.pop %v5825
        %v5853 = vrcp.pop %v5827
        %v5854 = vrcp.pop %v5829
        %v5855 = vrcp.pop %v5831
        %v5856 = vrcp.pop %v5833
        %v5857 = vrcp.pop %v5835
        %v5858 = vrcp.pop %v5837
        %v5859 = vrcp.pop %v5839
        %v5860 = vrcp.pop %v5841
        %v5861 = vrcp.pop %v5843
        %v5862 = vrcp.pop %v5845
        %v5863 = vrcp.pop %v5847
        %v5864 = vmul.f32 %v5785, %v5848
        %v5865 = vmul.f32 %v5787, %v5849
        %v5866 = vmul.f32 %v5789, %v5850
        %v5867 = vmul.f32 %v5791, %v5851
        %v5868 = vmul.f32 %v5793, %v5852
        %v5869 = vmul.f32 %v5795, %v5853
        %v5870 = vmul.f32 %v5797, %v5854
        %v5871 = vmul.f32 %v5799, %v5855
        %v5872 = vmul.f32 %v5801, %v5856
        %v5873 = vmul.f32 %v5803, %v5857
        %v5874 = vmul.f32 %v5805, %v5858
        %v5875 = vmul.f32 %v5807, %v5859
        %v5876 = vmul.f32 %v5809, %v5860
        %v5877 = vmul.f32 %v5811, %v5861
        %v5878 = vmul.f32 %v5813, %v5862
        %v5879 = vmul.f32 %v5815, %v5863
        %v5880 = vpack.c.bf16 %v5865, %v5864
        %v5881 = vpack.c.bf16 %v5867, %v5866
        %v5882 = vpack.c.bf16 %v5869, %v5868
        %v5883 = vpack.c.bf16 %v5871, %v5870
        %v5884 = vpack.c.bf16 %v5873, %v5872
        %v5885 = vpack.c.bf16 %v5875, %v5874
        %v5886 = vpack.c.bf16 %v5877, %v5876
        %v5887 = vpack.c.bf16 %v5879, %v5878
        %5888 = vmatpush.bf16.msra.mxu0 %v5654
        %5889 = vmatpush.bf16.msra.mxu0 %v5653
        %5890 = vmatpush.bf16.msra.mxu0 %v5652
        %5891 = vmatpush.bf16.msra.mxu0 %v5651
        %5892 = vmatpush.bf16.msra.mxu0 %v5650
        %5893 = vmatpush.bf16.msra.mxu0 %v5649
        %5894 = vmatpush.bf16.msra.mxu0 %v5648
        %5895 = vmatpush.bf16.msra.mxu0 %v5647
        %5896 = vmatmul.bf16.gmra.mxu0 %v5880
        %v5897 = vpop.f32.mrf.mxu0
        %v5898 = vadd.f32 0.0, %v5897
        %v5899 = vpop.f32.mrf.mxu0
        %v5900 = vadd.f32 0.0, %v5899
        %5901 = vmatmul.bf16.gmra.mxu0 %v5881
        %v5902 = vpop.f32.mrf.mxu0
        %v5903 = vadd.f32 0.0, %v5902
        %v5904 = vpop.f32.mrf.mxu0
        %v5905 = vadd.f32 0.0, %v5904
        %5906 = vmatmul.bf16.gmra.mxu0 %v5882
        %v5907 = vpop.f32.mrf.mxu0
        %v5908 = vadd.f32 0.0, %v5907
        %v5909 = vpop.f32.mrf.mxu0
        %v5910 = vadd.f32 0.0, %v5909
        %5911 = vmatmul.bf16.gmra.mxu0 %v5883
        %v5912 = vpop.f32.mrf.mxu0
        %v5913 = vadd.f32 0.0, %v5912
        %v5914 = vpop.f32.mrf.mxu0
        %v5915 = vadd.f32 0.0, %v5914
        %5916 = vmatmul.bf16.gmra.mxu0 %v5884
        %v5917 = vpop.f32.mrf.mxu0
        %v5918 = vadd.f32 0.0, %v5917
        %v5919 = vpop.f32.mrf.mxu0
        %v5920 = vadd.f32 0.0, %v5919
        %5921 = vmatmul.bf16.gmra.mxu0 %v5885
        %v5922 = vpop.f32.mrf.mxu0
        %v5923 = vadd.f32 0.0, %v5922
        %v5924 = vpop.f32.mrf.mxu0
        %v5925 = vadd.f32 0.0, %v5924
        %5926 = vmatmul.bf16.gmra.mxu0 %v5886
        %v5927 = vpop.f32.mrf.mxu0
        %v5928 = vadd.f32 0.0, %v5927
        %v5929 = vpop.f32.mrf.mxu0
        %v5930 = vadd.f32 0.0, %v5929
        %5931 = vmatmul.bf16.gmra.mxu0 %v5887
        %v5932 = vpop.f32.mrf.mxu0
        %v5933 = vadd.f32 0.0, %v5932
        %v5934 = vpop.f32.mrf.mxu0
        %v5935 = vadd.f32 0.0, %v5934
        %5936 = vdwg.mxu0
        %v5937 = vadd.f32 %v5591, %v5898
        %v5938 = vadd.f32 %v5592, %v5900
        %v5939 = vadd.f32 %v5593, %v5903
        %v5940 = vadd.f32 %v5594, %v5905
        %v5941 = vadd.f32 %v5595, %v5908
        %v5942 = vadd.f32 %v5596, %v5910
        %v5943 = vadd.f32 %v5597, %v5913
        %v5944 = vadd.f32 %v5598, %v5915
        %v5945 = vadd.f32 %v5599, %v5918
        %v5946 = vadd.f32 %v5600, %v5920
        %v5947 = vadd.f32 %v5601, %v5923
        %v5948 = vadd.f32 %v5602, %v5925
        %v5949 = vadd.f32 %v5603, %v5928
        %v5950 = vadd.f32 %v5604, %v5930
        %v5951 = vadd.f32 %v5605, %v5933
        %v5952 = vadd.f32 %v5606, %v5935
        %v5953 = vpack.c.bf16 %v5938, %v5937
        %v5954 = vpack.c.bf16 %v5940, %v5939
        %v5955 = vpack.c.bf16 %v5942, %v5941
        %v5956 = vpack.c.bf16 %v5944, %v5943
        %v5957 = vpack.c.bf16 %v5946, %v5945
        %v5958 = vpack.c.bf16 %v5948, %v5947
        %v5959 = vpack.c.bf16 %v5950, %v5949
        %v5960 = vpack.c.bf16 %v5952, %v5951
        %s5961 = scalar_lea.vmem %s10, 64
        %v5962 = vld [vmem:[%s5961] sm:$0xf]
        %v5963 = vld [vmem:[%s5961 + $0x4] sm:$0xf]
        %v5964 = vld [vmem:[%s5961 + $0x8] sm:$0xf]
        %v5965 = vld [vmem:[%s5961 + $0xc] sm:$0xf]
        %v5966 = vld [vmem:[%s5961 + $0x10] sm:$0xf]
        %v5967 = vld [vmem:[%s5961 + $0x14] sm:$0xf]
        %v5968 = vld [vmem:[%s5961 + $0x18] sm:$0xf]
        %v5969 = vld [vmem:[%s5961 + $0x1c] sm:$0xf]
        %v5970 = vld [vmem:[%s5961 + $0x20] sm:$0xf]
        %v5971 = vld [vmem:[%s5961 + $0x24] sm:$0xf]
        %v5972 = vld [vmem:[%s5961 + $0x28] sm:$0xf]
        %v5973 = vld [vmem:[%s5961 + $0x2c] sm:$0xf]
        %v5974 = vld [vmem:[%s5961 + $0x30] sm:$0xf]
        %v5975 = vld [vmem:[%s5961 + $0x34] sm:$0xf]
        %v5976 = vld [vmem:[%s5961 + $0x38] sm:$0xf]
        %v5977 = vld [vmem:[%s5961 + $0x3c] sm:$0xf]
        %v5994 = vunpack.c.l.b16 %v5962
        %v5995 = vunpack.c.l.b16 %v5963
        %v5996 = vunpack.c.l.b16 %v5964
        %v5997 = vunpack.c.l.b16 %v5965
        %v5998 = vunpack.c.l.b16 %v5966
        %v5999 = vunpack.c.l.b16 %v5967
        %v6000 = vunpack.c.l.b16 %v5968
        %v6001 = vunpack.c.l.b16 %v5969
        %v6002 = vunpack.c.l.b16 %v5970
        %v6003 = vunpack.c.l.b16 %v5971
        %v6004 = vunpack.c.l.b16 %v5972
        %v6005 = vunpack.c.l.b16 %v5973
        %v6006 = vunpack.c.l.b16 %v5974
        %v6007 = vunpack.c.l.b16 %v5975
        %v6008 = vunpack.c.l.b16 %v5976
        %v6009 = vunpack.c.l.b16 %v5977
        %v6010 = vpack.c.b16 %v5995, %v5994
        %v6011 = vpack.c.b16 %v5997, %v5996
        %v6012 = vpack.c.b16 %v5999, %v5998
        %v6013 = vpack.c.b16 %v6001, %v6000
        %v6014 = vpack.c.b16 %v6003, %v6002
        %v6015 = vpack.c.b16 %v6005, %v6004
        %v6016 = vpack.c.b16 %v6007, %v6006
        %v6017 = vpack.c.b16 %v6009, %v6008
        %6026 = vmatpush.bf16.msra.mxu0 %v6017
        %6027 = vmatpush.bf16.msra.mxu0 %v6016
        %6028 = vmatpush.bf16.msra.mxu0 %v6015
        %6029 = vmatpush.bf16.msra.mxu0 %v6014
        %6030 = vmatpush.bf16.msra.mxu0 %v6013
        %6031 = vmatpush.bf16.msra.mxu0 %v6012
        %6032 = vmatpush.bf16.msra.mxu0 %v6011
        %6033 = vmatpush.bf16.msra.mxu0 %v6010
        %6034 = vmatmul.bf16.gmra.mxu0 %v5953
        %v6035 = vpop.f32.mrf.mxu0
        %v6036 = vadd.f32 0.0, %v6035
        %v6037 = vpop.f32.mrf.mxu0
        %v6038 = vadd.f32 0.0, %v6037
        %6039 = vmatmul.bf16.gmra.mxu0 %v5954
        %v6040 = vpop.f32.mrf.mxu0
        %v6041 = vadd.f32 0.0, %v6040
        %v6042 = vpop.f32.mrf.mxu0
        %v6043 = vadd.f32 0.0, %v6042
        %6044 = vmatmul.bf16.gmra.mxu0 %v5955
        %v6045 = vpop.f32.mrf.mxu0
        %v6046 = vadd.f32 0.0, %v6045
        %v6047 = vpop.f32.mrf.mxu0
        %v6048 = vadd.f32 0.0, %v6047
        %6049 = vmatmul.bf16.gmra.mxu0 %v5956
        %v6050 = vpop.f32.mrf.mxu0
        %v6051 = vadd.f32 0.0, %v6050
        %v6052 = vpop.f32.mrf.mxu0
        %v6053 = vadd.f32 0.0, %v6052
        %6054 = vmatmul.bf16.gmra.mxu0 %v5957
        %v6055 = vpop.f32.mrf.mxu0
        %v6056 = vadd.f32 0.0, %v6055
        %v6057 = vpop.f32.mrf.mxu0
        %v6058 = vadd.f32 0.0, %v6057
        %6059 = vmatmul.bf16.gmra.mxu0 %v5958
        %v6060 = vpop.f32.mrf.mxu0
        %v6061 = vadd.f32 0.0, %v6060
        %v6062 = vpop.f32.mrf.mxu0
        %v6063 = vadd.f32 0.0, %v6062
        %6064 = vmatmul.bf16.gmra.mxu0 %v5959
        %v6065 = vpop.f32.mrf.mxu0
        %v6066 = vadd.f32 0.0, %v6065
        %v6067 = vpop.f32.mrf.mxu0
        %v6068 = vadd.f32 0.0, %v6067
        %6069 = vmatmul.bf16.gmra.mxu0 %v5960
        %v6070 = vpop.f32.mrf.mxu0
        %v6071 = vadd.f32 0.0, %v6070
        %v6072 = vpop.f32.mrf.mxu0
        %v6073 = vadd.f32 0.0, %v6072
        %6074 = vdwg.mxu0
        %v6075 = vadd.f32 %v3954, %v6036
        %v6076 = vadd.f32 %v3955, %v6038
        %v6077 = vadd.f32 %v3956, %v6041
        %v6078 = vadd.f32 %v3957, %v6043
        %v6079 = vadd.f32 %v3958, %v6046
        %v6080 = vadd.f32 %v3959, %v6048
        %v6081 = vadd.f32 %v3960, %v6051
        %v6082 = vadd.f32 %v3961, %v6053
        %v6083 = vadd.f32 %v3962, %v6056
        %v6084 = vadd.f32 %v3963, %v6058
        %v6085 = vadd.f32 %v3964, %v6061
        %v6086 = vadd.f32 %v3965, %v6063
        %v6087 = vadd.f32 %v3966, %v6066
        %v6088 = vadd.f32 %v3967, %v6068
        %v6089 = vadd.f32 %v3968, %v6071
        %v6090 = vadd.f32 %v3969, %v6073
        %s6091 = scalar_lea.vmem %s11, 1
        %v6092 = vld [vmem:[%s6091] sm:$0x1]
        %v6094 = vperm.slane %v6092, 0
        %v6096 = vadd.f32 %v6075, %v6094
        %v6097 = vadd.f32 %v6076, %v6094
        %v6098 = vadd.f32 %v6077, %v6094
        %v6099 = vadd.f32 %v6078, %v6094
        %v6100 = vadd.f32 %v6079, %v6094
        %v6101 = vadd.f32 %v6080, %v6094
        %v6102 = vadd.f32 %v6081, %v6094
        %v6103 = vadd.f32 %v6082, %v6094
        %v6104 = vadd.f32 %v6083, %v6094
        %v6105 = vadd.f32 %v6084, %v6094
        %v6106 = vadd.f32 %v6085, %v6094
        %v6107 = vadd.f32 %v6086, %v6094
        %v6108 = vadd.f32 %v6087, %v6094
        %v6109 = vadd.f32 %v6088, %v6094
        %v6110 = vadd.f32 %v6089, %v6094
        %v6111 = vadd.f32 %v6090, %v6094
        %s6112 = scalar_lea.vmem %s12, 1
        %v6113 = vld [vmem:[%s6112] sm:$0x1]
        %s6114 = scalar_lea.vmem %s13, 1
        %v6115 = vld [vmem:[%s6114] sm:$0x1]
        %v6116 = vsel %vm1034, %v6096, 0.0
        %6117 = vadd.xlane.f32.xlu0 %v6116
        %v6118 = vpop.xlane.xlu0 %6117
        %v6119 = vsel %vm1034, %v6097, 0.0
        %6120 = vadd.xlane.f32.xlu0 %v6119
        %v6121 = vpop.xlane.xlu0 %6120
        %v6122 = vsel %vm1034, %v6098, 0.0
        %6123 = vadd.xlane.f32.xlu0 %v6122
        %v6124 = vpop.xlane.xlu0 %6123
        %v6125 = vsel %vm1034, %v6099, 0.0
        %6126 = vadd.xlane.f32.xlu0 %v6125
        %v6127 = vpop.xlane.xlu0 %6126
        %v6128 = vsel %vm1034, %v6100, 0.0
        %6129 = vadd.xlane.f32.xlu0 %v6128
        %v6130 = vpop.xlane.xlu0 %6129
        %v6131 = vsel %vm1034, %v6101, 0.0
        %6132 = vadd.xlane.f32.xlu0 %v6131
        %v6133 = vpop.xlane.xlu0 %6132
        %v6134 = vsel %vm1034, %v6102, 0.0
        %6135 = vadd.xlane.f32.xlu0 %v6134
        %v6136 = vpop.xlane.xlu0 %6135
        %v6137 = vsel %vm1034, %v6103, 0.0
        %6138 = vadd.xlane.f32.xlu0 %v6137
        %v6139 = vpop.xlane.xlu0 %6138
        %v6140 = vsel %vm1034, %v6104, 0.0
        %6141 = vadd.xlane.f32.xlu0 %v6140
        %v6142 = vpop.xlane.xlu0 %6141
        %v6143 = vsel %vm1034, %v6105, 0.0
        %6144 = vadd.xlane.f32.xlu0 %v6143
        %v6145 = vpop.xlane.xlu0 %6144
        %v6146 = vsel %vm1034, %v6106, 0.0
        %6147 = vadd.xlane.f32.xlu0 %v6146
        %v6148 = vpop.xlane.xlu0 %6147
        %v6149 = vsel %vm1034, %v6107, 0.0
        %6150 = vadd.xlane.f32.xlu0 %v6149
        %v6151 = vpop.xlane.xlu0 %6150
        %v6152 = vsel %vm1034, %v6108, 0.0
        %6153 = vadd.xlane.f32.xlu0 %v6152
        %v6154 = vpop.xlane.xlu0 %6153
        %v6155 = vsel %vm1034, %v6109, 0.0
        %6156 = vadd.xlane.f32.xlu0 %v6155
        %v6157 = vpop.xlane.xlu0 %6156
        %v6158 = vsel %vm1034, %v6110, 0.0
        %6159 = vadd.xlane.f32.xlu0 %v6158
        %v6160 = vpop.xlane.xlu0 %6159
        %v6161 = vsel %vm1034, %v6111, 0.0
        %6162 = vadd.xlane.f32.xlu0 %v6161
        %v6163 = vpop.xlane.xlu0 %6162
        %v6164 = vmul.f32 %v6118, %v1089
        %v6165 = vmul.f32 %v6121, %v1089
        %v6166 = vmul.f32 %v6124, %v1089
        %v6167 = vmul.f32 %v6127, %v1089
        %v6168 = vmul.f32 %v6130, %v1089
        %v6169 = vmul.f32 %v6133, %v1089
        %v6170 = vmul.f32 %v6136, %v1089
        %v6171 = vmul.f32 %v6139, %v1089
        %v6172 = vmul.f32 %v6142, %v1089
        %v6173 = vmul.f32 %v6145, %v1089
        %v6174 = vmul.f32 %v6148, %v1089
        %v6175 = vmul.f32 %v6151, %v1089
        %v6176 = vmul.f32 %v6154, %v1089
        %v6177 = vmul.f32 %v6157, %v1089
        %v6178 = vmul.f32 %v6160, %v1089
        %v6179 = vmul.f32 %v6163, %v1089
        %v6180 = vsub.f32 %v6096, %v6164
        %v6181 = vsub.f32 %v6097, %v6165
        %v6182 = vsub.f32 %v6098, %v6166
        %v6183 = vsub.f32 %v6099, %v6167
        %v6184 = vsub.f32 %v6100, %v6168
        %v6185 = vsub.f32 %v6101, %v6169
        %v6186 = vsub.f32 %v6102, %v6170
        %v6187 = vsub.f32 %v6103, %v6171
        %v6188 = vsub.f32 %v6104, %v6172
        %v6189 = vsub.f32 %v6105, %v6173
        %v6190 = vsub.f32 %v6106, %v6174
        %v6191 = vsub.f32 %v6107, %v6175
        %v6192 = vsub.f32 %v6108, %v6176
        %v6193 = vsub.f32 %v6109, %v6177
        %v6194 = vsub.f32 %v6110, %v6178
        %v6195 = vsub.f32 %v6111, %v6179
        %v6196 = vmul.f32 %v6180, %v6180
        %v6197 = vmul.f32 %v6181, %v6181
        %v6198 = vmul.f32 %v6182, %v6182
        %v6199 = vmul.f32 %v6183, %v6183
        %v6200 = vmul.f32 %v6184, %v6184
        %v6201 = vmul.f32 %v6185, %v6185
        %v6202 = vmul.f32 %v6186, %v6186
        %v6203 = vmul.f32 %v6187, %v6187
        %v6204 = vmul.f32 %v6188, %v6188
        %v6205 = vmul.f32 %v6189, %v6189
        %v6206 = vmul.f32 %v6190, %v6190
        %v6207 = vmul.f32 %v6191, %v6191
        %v6208 = vmul.f32 %v6192, %v6192
        %v6209 = vmul.f32 %v6193, %v6193
        %v6210 = vmul.f32 %v6194, %v6194
        %v6211 = vmul.f32 %v6195, %v6195
        %v6212 = vsel %vm1034, %v6196, 0.0
        %6213 = vadd.xlane.f32.xlu0 %v6212
        %v6214 = vpop.xlane.xlu0 %6213
        %v6215 = vsel %vm1034, %v6197, 0.0
        %6216 = vadd.xlane.f32.xlu0 %v6215
        %v6217 = vpop.xlane.xlu0 %6216
        %v6218 = vsel %vm1034, %v6198, 0.0
        %6219 = vadd.xlane.f32.xlu0 %v6218
        %v6220 = vpop.xlane.xlu0 %6219
        %v6221 = vsel %vm1034, %v6199, 0.0
        %6222 = vadd.xlane.f32.xlu0 %v6221
        %v6223 = vpop.xlane.xlu0 %6222
        %v6224 = vsel %vm1034, %v6200, 0.0
        %6225 = vadd.xlane.f32.xlu0 %v6224
        %v6226 = vpop.xlane.xlu0 %6225
        %v6227 = vsel %vm1034, %v6201, 0.0
        %6228 = vadd.xlane.f32.xlu0 %v6227
        %v6229 = vpop.xlane.xlu0 %6228
        %v6230 = vsel %vm1034, %v6202, 0.0
        %6231 = vadd.xlane.f32.xlu0 %v6230
        %v6232 = vpop.xlane.xlu0 %6231
        %v6233 = vsel %vm1034, %v6203, 0.0
        %6234 = vadd.xlane.f32.xlu0 %v6233
        %v6235 = vpop.xlane.xlu0 %6234
        %v6236 = vsel %vm1034, %v6204, 0.0
        %6237 = vadd.xlane.f32.xlu0 %v6236
        %v6238 = vpop.xlane.xlu0 %6237
        %v6239 = vsel %vm1034, %v6205, 0.0
        %6240 = vadd.xlane.f32.xlu0 %v6239
        %v6241 = vpop.xlane.xlu0 %6240
        %v6242 = vsel %vm1034, %v6206, 0.0
        %6243 = vadd.xlane.f32.xlu0 %v6242
        %v6244 = vpop.xlane.xlu0 %6243
        %v6245 = vsel %vm1034, %v6207, 0.0
        %6246 = vadd.xlane.f32.xlu0 %v6245
        %v6247 = vpop.xlane.xlu0 %6246
        %v6248 = vsel %vm1034, %v6208, 0.0
        %6249 = vadd.xlane.f32.xlu0 %v6248
        %v6250 = vpop.xlane.xlu0 %6249
        %v6251 = vsel %vm1034, %v6209, 0.0
        %6252 = vadd.xlane.f32.xlu0 %v6251
        %v6253 = vpop.xlane.xlu0 %6252
        %v6254 = vsel %vm1034, %v6210, 0.0
        %6255 = vadd.xlane.f32.xlu0 %v6254
        %v6256 = vpop.xlane.xlu0 %6255
        %v6257 = vsel %vm1034, %v6211, 0.0
        %6258 = vadd.xlane.f32.xlu0 %v6257
        %v6259 = vpop.xlane.xlu0 %6258
        %v6260 = vmul.f32 %v6214, %v1089
        %v6261 = vmul.f32 %v6217, %v1089
        %v6262 = vmul.f32 %v6220, %v1089
        %v6263 = vmul.f32 %v6223, %v1089
        %v6264 = vmul.f32 %v6226, %v1089
        %v6265 = vmul.f32 %v6229, %v1089
        %v6266 = vmul.f32 %v6232, %v1089
        %v6267 = vmul.f32 %v6235, %v1089
        %v6268 = vmul.f32 %v6238, %v1089
        %v6269 = vmul.f32 %v6241, %v1089
        %v6270 = vmul.f32 %v6244, %v1089
        %v6271 = vmul.f32 %v6247, %v1089
        %v6272 = vmul.f32 %v6250, %v1089
        %v6273 = vmul.f32 %v6253, %v1089
        %v6274 = vmul.f32 %v6256, %v1089
        %v6275 = vmul.f32 %v6259, %v1089
        %v6276 = vadd.f32 %v6260, 1e-05
        %v6277 = vadd.f32 %v6261, 1e-05
        %v6278 = vadd.f32 %v6262, 1e-05
        %v6279 = vadd.f32 %v6263, 1e-05
        %v6280 = vadd.f32 %v6264, 1e-05
        %v6281 = vadd.f32 %v6265, 1e-05
        %v6282 = vadd.f32 %v6266, 1e-05
        %v6283 = vadd.f32 %v6267, 1e-05
        %v6284 = vadd.f32 %v6268, 1e-05
        %v6285 = vadd.f32 %v6269, 1e-05
        %v6286 = vadd.f32 %v6270, 1e-05
        %v6287 = vadd.f32 %v6271, 1e-05
        %v6288 = vadd.f32 %v6272, 1e-05
        %v6289 = vadd.f32 %v6273, 1e-05
        %v6290 = vadd.f32 %v6274, 1e-05
        %v6291 = vadd.f32 %v6275, 1e-05
        %v6292 = vrsqrt.pop %v6276
        %v6293 = vmul.f32 %v6292, %v6276
        %v6294 = vmul.f32 %v6293, %v6292
        %v6295 = vmul.f32 0.5, %v6294
        %v6296 = vsub.f32 1.5, %v6295
        %v6297 = vmul.f32 %v6292, %v6296
        %vm6298 = vweird.f32 %v6276
        %vm6299 = vweird.f32 %v6292
        %vm6300 = vmor %vm6298, %vm6299
        %v6301 = vsel %vm6300, %v6292, %v6297
        %v6302 = vrsqrt.pop %v6277
        %v6303 = vmul.f32 %v6302, %v6277
        %v6304 = vmul.f32 %v6303, %v6302
        %v6305 = vmul.f32 0.5, %v6304
        %v6306 = vsub.f32 1.5, %v6305
        %v6307 = vmul.f32 %v6302, %v6306
        %vm6308 = vweird.f32 %v6277
        %vm6309 = vweird.f32 %v6302
        %vm6310 = vmor %vm6308, %vm6309
        %v6311 = vsel %vm6310, %v6302, %v6307
        %v6312 = vrsqrt.pop %v6278
        %v6313 = vmul.f32 %v6312, %v6278
        %v6314 = vmul.f32 %v6313, %v6312
        %v6315 = vmul.f32 0.5, %v6314
        %v6316 = vsub.f32 1.5, %v6315
        %v6317 = vmul.f32 %v6312, %v6316
        %vm6318 = vweird.f32 %v6278
        %vm6319 = vweird.f32 %v6312
        %vm6320 = vmor %vm6318, %vm6319
        %v6321 = vsel %vm6320, %v6312, %v6317
        %v6322 = vrsqrt.pop %v6279
        %v6323 = vmul.f32 %v6322, %v6279
        %v6324 = vmul.f32 %v6323, %v6322
        %v6325 = vmul.f32 0.5, %v6324
        %v6326 = vsub.f32 1.5, %v6325
        %v6327 = vmul.f32 %v6322, %v6326
        %vm6328 = vweird.f32 %v6279
        %vm6329 = vweird.f32 %v6322
        %vm6330 = vmor %vm6328, %vm6329
        %v6331 = vsel %vm6330, %v6322, %v6327
        %v6332 = vrsqrt.pop %v6280
        %v6333 = vmul.f32 %v6332, %v6280
        %v6334 = vmul.f32 %v6333, %v6332
        %v6335 = vmul.f32 0.5, %v6334
        %v6336 = vsub.f32 1.5, %v6335
        %v6337 = vmul.f32 %v6332, %v6336
        %vm6338 = vweird.f32 %v6280
        %vm6339 = vweird.f32 %v6332
        %vm6340 = vmor %vm6338, %vm6339
        %v6341 = vsel %vm6340, %v6332, %v6337
        %v6342 = vrsqrt.pop %v6281
        %v6343 = vmul.f32 %v6342, %v6281
        %v6344 = vmul.f32 %v6343, %v6342
        %v6345 = vmul.f32 0.5, %v6344
        %v6346 = vsub.f32 1.5, %v6345
        %v6347 = vmul.f32 %v6342, %v6346
        %vm6348 = vweird.f32 %v6281
        %vm6349 = vweird.f32 %v6342
        %vm6350 = vmor %vm6348, %vm6349
        %v6351 = vsel %vm6350, %v6342, %v6347
        %v6352 = vrsqrt.pop %v6282
        %v6353 = vmul.f32 %v6352, %v6282
        %v6354 = vmul.f32 %v6353, %v6352
        %v6355 = vmul.f32 0.5, %v6354
        %v6356 = vsub.f32 1.5, %v6355
        %v6357 = vmul.f32 %v6352, %v6356
        %vm6358 = vweird.f32 %v6282
        %vm6359 = vweird.f32 %v6352
        %vm6360 = vmor %vm6358, %vm6359
        %v6361 = vsel %vm6360, %v6352, %v6357
        %v6362 = vrsqrt.pop %v6283
        %v6363 = vmul.f32 %v6362, %v6283
        %v6364 = vmul.f32 %v6363, %v6362
        %v6365 = vmul.f32 0.5, %v6364
        %v6366 = vsub.f32 1.5, %v6365
        %v6367 = vmul.f32 %v6362, %v6366
        %vm6368 = vweird.f32 %v6283
        %vm6369 = vweird.f32 %v6362
        %vm6370 = vmor %vm6368, %vm6369
        %v6371 = vsel %vm6370, %v6362, %v6367
        %v6372 = vrsqrt.pop %v6284
        %v6373 = vmul.f32 %v6372, %v6284
        %v6374 = vmul.f32 %v6373, %v6372
        %v6375 = vmul.f32 0.5, %v6374
        %v6376 = vsub.f32 1.5, %v6375
        %v6377 = vmul.f32 %v6372, %v6376
        %vm6378 = vweird.f32 %v6284
        %vm6379 = vweird.f32 %v6372
        %vm6380 = vmor %vm6378, %vm6379
        %v6381 = vsel %vm6380, %v6372, %v6377
        %v6382 = vrsqrt.pop %v6285
        %v6383 = vmul.f32 %v6382, %v6285
        %v6384 = vmul.f32 %v6383, %v6382
        %v6385 = vmul.f32 0.5, %v6384
        %v6386 = vsub.f32 1.5, %v6385
        %v6387 = vmul.f32 %v6382, %v6386
        %vm6388 = vweird.f32 %v6285
        %vm6389 = vweird.f32 %v6382
        %vm6390 = vmor %vm6388, %vm6389
        %v6391 = vsel %vm6390, %v6382, %v6387
        %v6392 = vrsqrt.pop %v6286
        %v6393 = vmul.f32 %v6392, %v6286
        %v6394 = vmul.f32 %v6393, %v6392
        %v6395 = vmul.f32 0.5, %v6394
        %v6396 = vsub.f32 1.5, %v6395
        %v6397 = vmul.f32 %v6392, %v6396
        %vm6398 = vweird.f32 %v6286
        %vm6399 = vweird.f32 %v6392
        %vm6400 = vmor %vm6398, %vm6399
        %v6401 = vsel %vm6400, %v6392, %v6397
        %v6402 = vrsqrt.pop %v6287
        %v6403 = vmul.f32 %v6402, %v6287
        %v6404 = vmul.f32 %v6403, %v6402
        %v6405 = vmul.f32 0.5, %v6404
        %v6406 = vsub.f32 1.5, %v6405
        %v6407 = vmul.f32 %v6402, %v6406
        %vm6408 = vweird.f32 %v6287
        %vm6409 = vweird.f32 %v6402
        %vm6410 = vmor %vm6408, %vm6409
        %v6411 = vsel %vm6410, %v6402, %v6407
        %v6412 = vrsqrt.pop %v6288
        %v6413 = vmul.f32 %v6412, %v6288
        %v6414 = vmul.f32 %v6413, %v6412
        %v6415 = vmul.f32 0.5, %v6414
        %v6416 = vsub.f32 1.5, %v6415
        %v6417 = vmul.f32 %v6412, %v6416
        %vm6418 = vweird.f32 %v6288
        %vm6419 = vweird.f32 %v6412
        %vm6420 = vmor %vm6418, %vm6419
        %v6421 = vsel %vm6420, %v6412, %v6417
        %v6422 = vrsqrt.pop %v6289
        %v6423 = vmul.f32 %v6422, %v6289
        %v6424 = vmul.f32 %v6423, %v6422
        %v6425 = vmul.f32 0.5, %v6424
        %v6426 = vsub.f32 1.5, %v6425
        %v6427 = vmul.f32 %v6422, %v6426
        %vm6428 = vweird.f32 %v6289
        %vm6429 = vweird.f32 %v6422
        %vm6430 = vmor %vm6428, %vm6429
        %v6431 = vsel %vm6430, %v6422, %v6427
        %v6432 = vrsqrt.pop %v6290
        %v6433 = vmul.f32 %v6432, %v6290
        %v6434 = vmul.f32 %v6433, %v6432
        %v6435 = vmul.f32 0.5, %v6434
        %v6436 = vsub.f32 1.5, %v6435
        %v6437 = vmul.f32 %v6432, %v6436
        %vm6438 = vweird.f32 %v6290
        %vm6439 = vweird.f32 %v6432
        %vm6440 = vmor %vm6438, %vm6439
        %v6441 = vsel %vm6440, %v6432, %v6437
        %v6442 = vrsqrt.pop %v6291
        %v6443 = vmul.f32 %v6442, %v6291
        %v6444 = vmul.f32 %v6443, %v6442
        %v6445 = vmul.f32 0.5, %v6444
        %v6446 = vsub.f32 1.5, %v6445
        %v6447 = vmul.f32 %v6442, %v6446
        %vm6448 = vweird.f32 %v6291
        %vm6449 = vweird.f32 %v6442
        %vm6450 = vmor %vm6448, %vm6449
        %v6451 = vsel %vm6450, %v6442, %v6447
        %v6452 = vmul.f32 %v6180, %v6301
        %v6453 = vmul.f32 %v6181, %v6311
        %v6454 = vmul.f32 %v6182, %v6321
        %v6455 = vmul.f32 %v6183, %v6331
        %v6456 = vmul.f32 %v6184, %v6341
        %v6457 = vmul.f32 %v6185, %v6351
        %v6458 = vmul.f32 %v6186, %v6361
        %v6459 = vmul.f32 %v6187, %v6371
        %v6460 = vmul.f32 %v6188, %v6381
        %v6461 = vmul.f32 %v6189, %v6391
        %v6462 = vmul.f32 %v6190, %v6401
        %v6463 = vmul.f32 %v6191, %v6411
        %v6464 = vmul.f32 %v6192, %v6421
        %v6465 = vmul.f32 %v6193, %v6431
        %v6466 = vmul.f32 %v6194, %v6441
        %v6467 = vmul.f32 %v6195, %v6451
        %v6469 = vperm.slane %v6113, 0
        %v6471 = vmul.f32 %v6452, %v6469
        %v6472 = vmul.f32 %v6453, %v6469
        %v6473 = vmul.f32 %v6454, %v6469
        %v6474 = vmul.f32 %v6455, %v6469
        %v6475 = vmul.f32 %v6456, %v6469
        %v6476 = vmul.f32 %v6457, %v6469
        %v6477 = vmul.f32 %v6458, %v6469
        %v6478 = vmul.f32 %v6459, %v6469
        %v6479 = vmul.f32 %v6460, %v6469
        %v6480 = vmul.f32 %v6461, %v6469
        %v6481 = vmul.f32 %v6462, %v6469
        %v6482 = vmul.f32 %v6463, %v6469
        %v6483 = vmul.f32 %v6464, %v6469
        %v6484 = vmul.f32 %v6465, %v6469
        %v6485 = vmul.f32 %v6466, %v6469
        %v6486 = vmul.f32 %v6467, %v6469
        %v6488 = vperm.slane %v6115, 0
        %v6490 = vadd.f32 %v6471, %v6488
        %v6491 = vadd.f32 %v6472, %v6488
        %v6492 = vadd.f32 %v6473, %v6488
        %v6493 = vadd.f32 %v6474, %v6488
        %v6494 = vadd.f32 %v6475, %v6488
        %v6495 = vadd.f32 %v6476, %v6488
        %v6496 = vadd.f32 %v6477, %v6488
        %v6497 = vadd.f32 %v6478, %v6488
        %v6498 = vadd.f32 %v6479, %v6488
        %v6499 = vadd.f32 %v6480, %v6488
        %v6500 = vadd.f32 %v6481, %v6488
        %v6501 = vadd.f32 %v6482, %v6488
        %v6502 = vadd.f32 %v6483, %v6488
        %v6503 = vadd.f32 %v6484, %v6488
        %v6504 = vadd.f32 %v6485, %v6488
        %v6505 = vadd.f32 %v6486, %v6488
        %v6506 = vpack.c.bf16 %v6491, %v6490
        %v6507 = vpack.c.bf16 %v6493, %v6492
        %v6508 = vpack.c.bf16 %v6495, %v6494
        %v6509 = vpack.c.bf16 %v6497, %v6496
        %v6510 = vpack.c.bf16 %v6499, %v6498
        %v6511 = vpack.c.bf16 %v6501, %v6500
        %v6512 = vpack.c.bf16 %v6503, %v6502
        %v6513 = vpack.c.bf16 %v6505, %v6504
        %s6514 = scalar_lea.vmem %s14, 16
        %v6515 = vld [vmem:[%s6514] sm:$0xf]
        %v6516 = vld [vmem:[%s6514 + $0x4] sm:$0xf]
        %v6517 = vld [vmem:[%s6514 + $0x8] sm:$0xf]
        %v6518 = vld [vmem:[%s6514 + $0xc] sm:$0xf]
        %s6519 = scalar_lea.vmem %s15, 1
        %v6520 = vld [vmem:[%s6519] sm:$0x1]
        %v6522 = vperm.slane %v6520, 0
        %v6528 = vunpack.c.l.b16 %v6515
        %v6529 = vunpack.c.l.b16 %v6516
        %v6530 = vunpack.c.l.b16 %v6517
        %v6531 = vunpack.c.l.b16 %v6518
        %v6532 = vpack.c.b16 %v6529, %v6528
        %v6533 = vpack.c.b16 %v6531, %v6530
        %v6537 = vsel %vm1034, %v6506, 0
        %v6540 = vsel %vm1034, %v6507, 0
        %v6543 = vsel %vm1034, %v6508, 0
        %v6546 = vsel %vm1034, %v6509, 0
        %v6549 = vsel %vm1034, %v6510, 0
        %v6552 = vsel %vm1034, %v6511, 0
        %v6555 = vsel %vm1034, %v6512, 0
        %v6558 = vsel %vm1034, %v6513, 0
        %6560 = vmatpush.bf16.msra.mxu0 0
        %6561 = vmatpush.bf16.msra.mxu0 0
        %6562 = vmatpush.bf16.msra.mxu0 0
        %6563 = vmatpush.bf16.msra.mxu0 0
        %6564 = vmatpush.bf16.msra.mxu0 0
        %6565 = vmatpush.bf16.msra.mxu0 0
        %6566 = vmatpush.bf16.msra.mxu0 %v6533
        %6567 = vmatpush.bf16.msra.mxu0 %v6532
        %6568 = vmatmul.bf16.gmra.mxu0 %v6537
        %v6569 = vpop.f32.mrf.mxu0
        %v6570 = vadd.f32 %v6522, %v6569
        %v6571 = vpop.f32.mrf.mxu0
        %v6572 = vadd.f32 %v6522, %v6571
        %6573 = vmatmul.bf16.gmra.mxu0 %v6540
        %v6574 = vpop.f32.mrf.mxu0
        %v6575 = vadd.f32 %v6522, %v6574
        %v6576 = vpop.f32.mrf.mxu0
        %v6577 = vadd.f32 %v6522, %v6576
        %6578 = vmatmul.bf16.gmra.mxu0 %v6543
        %v6579 = vpop.f32.mrf.mxu0
        %v6580 = vadd.f32 %v6522, %v6579
        %v6581 = vpop.f32.mrf.mxu0
        %v6582 = vadd.f32 %v6522, %v6581
        %6583 = vmatmul.bf16.gmra.mxu0 %v6546
        %v6584 = vpop.f32.mrf.mxu0
        %v6585 = vadd.f32 %v6522, %v6584
        %v6586 = vpop.f32.mrf.mxu0
        %v6587 = vadd.f32 %v6522, %v6586
        %6588 = vmatmul.bf16.gmra.mxu0 %v6549
        %v6589 = vpop.f32.mrf.mxu0
        %v6590 = vadd.f32 %v6522, %v6589
        %v6591 = vpop.f32.mrf.mxu0
        %v6592 = vadd.f32 %v6522, %v6591
        %6593 = vmatmul.bf16.gmra.mxu0 %v6552
        %v6594 = vpop.f32.mrf.mxu0
        %v6595 = vadd.f32 %v6522, %v6594
        %v6596 = vpop.f32.mrf.mxu0
        %v6597 = vadd.f32 %v6522, %v6596
        %6598 = vmatmul.bf16.gmra.mxu0 %v6555
        %v6599 = vpop.f32.mrf.mxu0
        %v6600 = vadd.f32 %v6522, %v6599
        %v6601 = vpop.f32.mrf.mxu0
        %v6602 = vadd.f32 %v6522, %v6601
        %6603 = vmatmul.bf16.gmra.mxu0 %v6558
        %v6604 = vpop.f32.mrf.mxu0
        %v6605 = vadd.f32 %v6522, %v6604
        %v6606 = vpop.f32.mrf.mxu0
        %v6607 = vadd.f32 %v6522, %v6606
        %6608 = vdwg.mxu0
        %v6609 = vmul.f32 %v6570, %v6570
        %v6610 = vmul.f32 %v6572, %v6572
        %v6611 = vmul.f32 %v6575, %v6575
        %v6612 = vmul.f32 %v6577, %v6577
        %v6613 = vmul.f32 %v6580, %v6580
        %v6614 = vmul.f32 %v6582, %v6582
        %v6615 = vmul.f32 %v6585, %v6585
        %v6616 = vmul.f32 %v6587, %v6587
        %v6617 = vmul.f32 %v6590, %v6590
        %v6618 = vmul.f32 %v6592, %v6592
        %v6619 = vmul.f32 %v6595, %v6595
        %v6620 = vmul.f32 %v6597, %v6597
        %v6621 = vmul.f32 %v6600, %v6600
        %v6622 = vmul.f32 %v6602, %v6602
        %v6623 = vmul.f32 %v6605, %v6605
        %v6624 = vmul.f32 %v6607, %v6607
        %v6625 = vmul.f32 %v6570, %v6609
        %v6626 = vmul.f32 %v6572, %v6610
        %v6627 = vmul.f32 %v6575, %v6611
        %v6628 = vmul.f32 %v6577, %v6612
        %v6629 = vmul.f32 %v6580, %v6613
        %v6630 = vmul.f32 %v6582, %v6614
        %v6631 = vmul.f32 %v6585, %v6615
        %v6632 = vmul.f32 %v6587, %v6616
        %v6633 = vmul.f32 %v6590, %v6617
        %v6634 = vmul.f32 %v6592, %v6618
        %v6635 = vmul.f32 %v6595, %v6619
        %v6636 = vmul.f32 %v6597, %v6620
        %v6637 = vmul.f32 %v6600, %v6621
        %v6638 = vmul.f32 %v6602, %v6622
        %v6639 = vmul.f32 %v6605, %v6623
        %v6640 = vmul.f32 %v6607, %v6624
        %v6641 = vmul.f32 %v6625, 0.044715
        %v6642 = vmul.f32 %v6626, 0.044715
        %v6643 = vmul.f32 %v6627, 0.044715
        %v6644 = vmul.f32 %v6628, 0.044715
        %v6645 = vmul.f32 %v6629, 0.044715
        %v6646 = vmul.f32 %v6630, 0.044715
        %v6647 = vmul.f32 %v6631, 0.044715
        %v6648 = vmul.f32 %v6632, 0.044715
        %v6649 = vmul.f32 %v6633, 0.044715
        %v6650 = vmul.f32 %v6634, 0.044715
        %v6651 = vmul.f32 %v6635, 0.044715
        %v6652 = vmul.f32 %v6636, 0.044715
        %v6653 = vmul.f32 %v6637, 0.044715
        %v6654 = vmul.f32 %v6638, 0.044715
        %v6655 = vmul.f32 %v6639, 0.044715
        %v6656 = vmul.f32 %v6640, 0.044715
        %v6657 = vadd.f32 %v6570, %v6641
        %v6658 = vadd.f32 %v6572, %v6642
        %v6659 = vadd.f32 %v6575, %v6643
        %v6660 = vadd.f32 %v6577, %v6644
        %v6661 = vadd.f32 %v6580, %v6645
        %v6662 = vadd.f32 %v6582, %v6646
        %v6663 = vadd.f32 %v6585, %v6647
        %v6664 = vadd.f32 %v6587, %v6648
        %v6665 = vadd.f32 %v6590, %v6649
        %v6666 = vadd.f32 %v6592, %v6650
        %v6667 = vadd.f32 %v6595, %v6651
        %v6668 = vadd.f32 %v6597, %v6652
        %v6669 = vadd.f32 %v6600, %v6653
        %v6670 = vadd.f32 %v6602, %v6654
        %v6671 = vadd.f32 %v6605, %v6655
        %v6672 = vadd.f32 %v6607, %v6656
        %v6673 = vmul.f32 %v6657, 0.7978846
        %v6674 = vmul.f32 %v6658, 0.7978846
        %v6675 = vmul.f32 %v6659, 0.7978846
        %v6676 = vmul.f32 %v6660, 0.7978846
        %v6677 = vmul.f32 %v6661, 0.7978846
        %v6678 = vmul.f32 %v6662, 0.7978846
        %v6679 = vmul.f32 %v6663, 0.7978846
        %v6680 = vmul.f32 %v6664, 0.7978846
        %v6681 = vmul.f32 %v6665, 0.7978846
        %v6682 = vmul.f32 %v6666, 0.7978846
        %v6683 = vmul.f32 %v6667, 0.7978846
        %v6684 = vmul.f32 %v6668, 0.7978846
        %v6685 = vmul.f32 %v6669, 0.7978846
        %v6686 = vmul.f32 %v6670, 0.7978846
        %v6687 = vmul.f32 %v6671, 0.7978846
        %v6688 = vmul.f32 %v6672, 0.7978846
        %v6689 = vtanh.pop %v6673
        %v6690 = vtanh.pop %v6674
        %v6691 = vtanh.pop %v6675
        %v6692 = vtanh.pop %v6676
        %v6693 = vtanh.pop %v6677
        %v6694 = vtanh.pop %v6678
        %v6695 = vtanh.pop %v6679
        %v6696 = vtanh.pop %v6680
        %v6697 = vtanh.pop %v6681
        %v6698 = vtanh.pop %v6682
        %v6699 = vtanh.pop %v6683
        %v6700 = vtanh.pop %v6684
        %v6701 = vtanh.pop %v6685
        %v6702 = vtanh.pop %v6686
        %v6703 = vtanh.pop %v6687
        %v6704 = vtanh.pop %v6688
        %v6705 = vadd.f32 %v6689, 1.0
        %v6706 = vadd.f32 %v6690, 1.0
        %v6707 = vadd.f32 %v6691, 1.0
        %v6708 = vadd.f32 %v6692, 1.0
        %v6709 = vadd.f32 %v6693, 1.0
        %v6710 = vadd.f32 %v6694, 1.0
        %v6711 = vadd.f32 %v6695, 1.0
        %v6712 = vadd.f32 %v6696, 1.0
        %v6713 = vadd.f32 %v6697, 1.0
        %v6714 = vadd.f32 %v6698, 1.0
        %v6715 = vadd.f32 %v6699, 1.0
        %v6716 = vadd.f32 %v6700, 1.0
        %v6717 = vadd.f32 %v6701, 1.0
        %v6718 = vadd.f32 %v6702, 1.0
        %v6719 = vadd.f32 %v6703, 1.0
        %v6720 = vadd.f32 %v6704, 1.0
        %v6721 = vmul.f32 %v6705, 0.5
        %v6722 = vmul.f32 %v6706, 0.5
        %v6723 = vmul.f32 %v6707, 0.5
        %v6724 = vmul.f32 %v6708, 0.5
        %v6725 = vmul.f32 %v6709, 0.5
        %v6726 = vmul.f32 %v6710, 0.5
        %v6727 = vmul.f32 %v6711, 0.5
        %v6728 = vmul.f32 %v6712, 0.5
        %v6729 = vmul.f32 %v6713, 0.5
        %v6730 = vmul.f32 %v6714, 0.5
        %v6731 = vmul.f32 %v6715, 0.5
        %v6732 = vmul.f32 %v6716, 0.5
        %v6733 = vmul.f32 %v6717, 0.5
        %v6734 = vmul.f32 %v6718, 0.5
        %v6735 = vmul.f32 %v6719, 0.5
        %v6736 = vmul.f32 %v6720, 0.5
        %v6737 = vmul.f32 %v6570, %v6721
        %v6738 = vmul.f32 %v6572, %v6722
        %v6739 = vmul.f32 %v6575, %v6723
        %v6740 = vmul.f32 %v6577, %v6724
        %v6741 = vmul.f32 %v6580, %v6725
        %v6742 = vmul.f32 %v6582, %v6726
        %v6743 = vmul.f32 %v6585, %v6727
        %v6744 = vmul.f32 %v6587, %v6728
        %v6745 = vmul.f32 %v6590, %v6729
        %v6746 = vmul.f32 %v6592, %v6730
        %v6747 = vmul.f32 %v6595, %v6731
        %v6748 = vmul.f32 %v6597, %v6732
        %v6749 = vmul.f32 %v6600, %v6733
        %v6750 = vmul.f32 %v6602, %v6734
        %v6751 = vmul.f32 %v6605, %v6735
        %v6752 = vmul.f32 %v6607, %v6736
        %v6753 = vpack.c.bf16 %v6738, %v6737
        %v6754 = vpack.c.bf16 %v6740, %v6739
        %v6755 = vpack.c.bf16 %v6742, %v6741
        %v6756 = vpack.c.bf16 %v6744, %v6743
        %v6757 = vpack.c.bf16 %v6746, %v6745
        %v6758 = vpack.c.bf16 %v6748, %v6747
        %v6759 = vpack.c.bf16 %v6750, %v6749
        %v6760 = vpack.c.bf16 %v6752, %v6751
        %s6761 = scalar_lea.vmem %s16, 64
        %v6762 = vld [vmem:[%s6761] sm:$0xf]
        %v6763 = vld [vmem:[%s6761 + $0x4] sm:$0xf]
        %v6764 = vld [vmem:[%s6761 + $0x8] sm:$0xf]
        %v6765 = vld [vmem:[%s6761 + $0xc] sm:$0xf]
        %v6766 = vld [vmem:[%s6761 + $0x10] sm:$0xf]
        %v6767 = vld [vmem:[%s6761 + $0x14] sm:$0xf]
        %v6768 = vld [vmem:[%s6761 + $0x18] sm:$0xf]
        %v6769 = vld [vmem:[%s6761 + $0x1c] sm:$0xf]
        %v6770 = vld [vmem:[%s6761 + $0x20] sm:$0xf]
        %v6771 = vld [vmem:[%s6761 + $0x24] sm:$0xf]
        %v6772 = vld [vmem:[%s6761 + $0x28] sm:$0xf]
        %v6773 = vld [vmem:[%s6761 + $0x2c] sm:$0xf]
        %v6774 = vld [vmem:[%s6761 + $0x30] sm:$0xf]
        %v6775 = vld [vmem:[%s6761 + $0x34] sm:$0xf]
        %v6776 = vld [vmem:[%s6761 + $0x38] sm:$0xf]
        %v6777 = vld [vmem:[%s6761 + $0x3c] sm:$0xf]
        %v6794 = vunpack.c.l.b16 %v6762
        %v6795 = vunpack.c.l.b16 %v6763
        %v6796 = vunpack.c.l.b16 %v6764
        %v6797 = vunpack.c.l.b16 %v6765
        %v6798 = vunpack.c.l.b16 %v6766
        %v6799 = vunpack.c.l.b16 %v6767
        %v6800 = vunpack.c.l.b16 %v6768
        %v6801 = vunpack.c.l.b16 %v6769
        %v6802 = vunpack.c.l.b16 %v6770
        %v6803 = vunpack.c.l.b16 %v6771
        %v6804 = vunpack.c.l.b16 %v6772
        %v6805 = vunpack.c.l.b16 %v6773
        %v6806 = vunpack.c.l.b16 %v6774
        %v6807 = vunpack.c.l.b16 %v6775
        %v6808 = vunpack.c.l.b16 %v6776
        %v6809 = vunpack.c.l.b16 %v6777
        %v6810 = vpack.c.b16 %v6795, %v6794
        %v6811 = vpack.c.b16 %v6797, %v6796
        %v6812 = vpack.c.b16 %v6799, %v6798
        %v6813 = vpack.c.b16 %v6801, %v6800
        %v6814 = vpack.c.b16 %v6803, %v6802
        %v6815 = vpack.c.b16 %v6805, %v6804
        %v6816 = vpack.c.b16 %v6807, %v6806
        %v6817 = vpack.c.b16 %v6809, %v6808
        %6826 = vmatpush.bf16.msra.mxu0 %v6817
        %6827 = vmatpush.bf16.msra.mxu0 %v6816
        %6828 = vmatpush.bf16.msra.mxu0 %v6815
        %6829 = vmatpush.bf16.msra.mxu0 %v6814
        %6830 = vmatpush.bf16.msra.mxu0 %v6813
        %6831 = vmatpush.bf16.msra.mxu0 %v6812
        %6832 = vmatpush.bf16.msra.mxu0 %v6811
        %6833 = vmatpush.bf16.msra.mxu0 %v6810
        %6834 = vmatmul.bf16.gmra.mxu0 %v6753
        %v6835 = vpop.f32.mrf.mxu0
        %v6836 = vadd.f32 0.0, %v6835
        %v6837 = vpop.f32.mrf.mxu0
        %v6838 = vadd.f32 0.0, %v6837
        %6839 = vmatmul.bf16.gmra.mxu0 %v6754
        %v6840 = vpop.f32.mrf.mxu0
        %v6841 = vadd.f32 0.0, %v6840
        %v6842 = vpop.f32.mrf.mxu0
        %v6843 = vadd.f32 0.0, %v6842
        %6844 = vmatmul.bf16.gmra.mxu0 %v6755
        %v6845 = vpop.f32.mrf.mxu0
        %v6846 = vadd.f32 0.0, %v6845
        %v6847 = vpop.f32.mrf.mxu0
        %v6848 = vadd.f32 0.0, %v6847
        %6849 = vmatmul.bf16.gmra.mxu0 %v6756
        %v6850 = vpop.f32.mrf.mxu0
        %v6851 = vadd.f32 0.0, %v6850
        %v6852 = vpop.f32.mrf.mxu0
        %v6853 = vadd.f32 0.0, %v6852
        %6854 = vmatmul.bf16.gmra.mxu0 %v6757
        %v6855 = vpop.f32.mrf.mxu0
        %v6856 = vadd.f32 0.0, %v6855
        %v6857 = vpop.f32.mrf.mxu0
        %v6858 = vadd.f32 0.0, %v6857
        %6859 = vmatmul.bf16.gmra.mxu0 %v6758
        %v6860 = vpop.f32.mrf.mxu0
        %v6861 = vadd.f32 0.0, %v6860
        %v6862 = vpop.f32.mrf.mxu0
        %v6863 = vadd.f32 0.0, %v6862
        %6864 = vmatmul.bf16.gmra.mxu0 %v6759
        %v6865 = vpop.f32.mrf.mxu0
        %v6866 = vadd.f32 0.0, %v6865
        %v6867 = vpop.f32.mrf.mxu0
        %v6868 = vadd.f32 0.0, %v6867
        %6869 = vmatmul.bf16.gmra.mxu0 %v6760
        %v6870 = vpop.f32.mrf.mxu0
        %v6871 = vadd.f32 0.0, %v6870
        %v6872 = vpop.f32.mrf.mxu0
        %v6873 = vadd.f32 0.0, %v6872
        %6874 = vdwg.mxu0
        %v6875 = vadd.f32 %v6096, %v6836
        %v6876 = vadd.f32 %v6097, %v6838
        %v6877 = vadd.f32 %v6098, %v6841
        %v6878 = vadd.f32 %v6099, %v6843
        %v6879 = vadd.f32 %v6100, %v6846
        %v6880 = vadd.f32 %v6101, %v6848
        %v6881 = vadd.f32 %v6102, %v6851
        %v6882 = vadd.f32 %v6103, %v6853
        %v6883 = vadd.f32 %v6104, %v6856
        %v6884 = vadd.f32 %v6105, %v6858
        %v6885 = vadd.f32 %v6106, %v6861
        %v6886 = vadd.f32 %v6107, %v6863
        %v6887 = vadd.f32 %v6108, %v6866
        %v6888 = vadd.f32 %v6109, %v6868
        %v6889 = vadd.f32 %v6110, %v6871
        %v6890 = vadd.f32 %v6111, %v6873
        %s6891 = scalar_lea.vmem %s17, 1
        %v6892 = vld [vmem:[%s6891] sm:$0x1]
        %v6894 = vperm.slane %v6892, 0
        %v6896 = vadd.f32 %v6875, %v6894
        %v6897 = vadd.f32 %v6876, %v6894
        %v6898 = vadd.f32 %v6877, %v6894
        %v6899 = vadd.f32 %v6878, %v6894
        %v6900 = vadd.f32 %v6879, %v6894
        %v6901 = vadd.f32 %v6880, %v6894
        %v6902 = vadd.f32 %v6881, %v6894
        %v6903 = vadd.f32 %v6882, %v6894
        %v6904 = vadd.f32 %v6883, %v6894
        %v6905 = vadd.f32 %v6884, %v6894
        %v6906 = vadd.f32 %v6885, %v6894
        %v6907 = vadd.f32 %v6886, %v6894
        %v6908 = vadd.f32 %v6887, %v6894
        %v6909 = vadd.f32 %v6888, %v6894
        %v6910 = vadd.f32 %v6889, %v6894
        %v6911 = vadd.f32 %v6890, %v6894
        %v6912 = vld [vmem:[%s18] sm:$0x1]
        %v6913 = vld [vmem:[%s19] sm:$0x1]
        %v6914 = vsel %vm1034, %v6896, 0.0
        %6915 = vadd.xlane.f32.xlu0 %v6914
        %v6916 = vpop.xlane.xlu0 %6915
        %v6917 = vsel %vm1034, %v6897, 0.0
        %6918 = vadd.xlane.f32.xlu0 %v6917
        %v6919 = vpop.xlane.xlu0 %6918
        %v6920 = vsel %vm1034, %v6898, 0.0
        %6921 = vadd.xlane.f32.xlu0 %v6920
        %v6922 = vpop.xlane.xlu0 %6921
        %v6923 = vsel %vm1034, %v6899, 0.0
        %6924 = vadd.xlane.f32.xlu0 %v6923
        %v6925 = vpop.xlane.xlu0 %6924
        %v6926 = vsel %vm1034, %v6900, 0.0
        %6927 = vadd.xlane.f32.xlu0 %v6926
        %v6928 = vpop.xlane.xlu0 %6927
        %v6929 = vsel %vm1034, %v6901, 0.0
        %6930 = vadd.xlane.f32.xlu0 %v6929
        %v6931 = vpop.xlane.xlu0 %6930
        %v6932 = vsel %vm1034, %v6902, 0.0
        %6933 = vadd.xlane.f32.xlu0 %v6932
        %v6934 = vpop.xlane.xlu0 %6933
        %v6935 = vsel %vm1034, %v6903, 0.0
        %6936 = vadd.xlane.f32.xlu0 %v6935
        %v6937 = vpop.xlane.xlu0 %6936
        %v6938 = vsel %vm1034, %v6904, 0.0
        %6939 = vadd.xlane.f32.xlu0 %v6938
        %v6940 = vpop.xlane.xlu0 %6939
        %v6941 = vsel %vm1034, %v6905, 0.0
        %6942 = vadd.xlane.f32.xlu0 %v6941
        %v6943 = vpop.xlane.xlu0 %6942
        %v6944 = vsel %vm1034, %v6906, 0.0
        %6945 = vadd.xlane.f32.xlu0 %v6944
        %v6946 = vpop.xlane.xlu0 %6945
        %v6947 = vsel %vm1034, %v6907, 0.0
        %6948 = vadd.xlane.f32.xlu0 %v6947
        %v6949 = vpop.xlane.xlu0 %6948
        %v6950 = vsel %vm1034, %v6908, 0.0
        %6951 = vadd.xlane.f32.xlu0 %v6950
        %v6952 = vpop.xlane.xlu0 %6951
        %v6953 = vsel %vm1034, %v6909, 0.0
        %6954 = vadd.xlane.f32.xlu0 %v6953
        %v6955 = vpop.xlane.xlu0 %6954
        %v6956 = vsel %vm1034, %v6910, 0.0
        %6957 = vadd.xlane.f32.xlu0 %v6956
        %v6958 = vpop.xlane.xlu0 %6957
        %v6959 = vsel %vm1034, %v6911, 0.0
        %6960 = vadd.xlane.f32.xlu0 %v6959
        %v6961 = vpop.xlane.xlu0 %6960
        %v6962 = vmul.f32 %v6916, %v1089
        %v6963 = vmul.f32 %v6919, %v1089
        %v6964 = vmul.f32 %v6922, %v1089
        %v6965 = vmul.f32 %v6925, %v1089
        %v6966 = vmul.f32 %v6928, %v1089
        %v6967 = vmul.f32 %v6931, %v1089
        %v6968 = vmul.f32 %v6934, %v1089
        %v6969 = vmul.f32 %v6937, %v1089
        %v6970 = vmul.f32 %v6940, %v1089
        %v6971 = vmul.f32 %v6943, %v1089
        %v6972 = vmul.f32 %v6946, %v1089
        %v6973 = vmul.f32 %v6949, %v1089
        %v6974 = vmul.f32 %v6952, %v1089
        %v6975 = vmul.f32 %v6955, %v1089
        %v6976 = vmul.f32 %v6958, %v1089
        %v6977 = vmul.f32 %v6961, %v1089
        %v6978 = vsub.f32 %v6896, %v6962
        %v6979 = vsub.f32 %v6897, %v6963
        %v6980 = vsub.f32 %v6898, %v6964
        %v6981 = vsub.f32 %v6899, %v6965
        %v6982 = vsub.f32 %v6900, %v6966
        %v6983 = vsub.f32 %v6901, %v6967
        %v6984 = vsub.f32 %v6902, %v6968
        %v6985 = vsub.f32 %v6903, %v6969
        %v6986 = vsub.f32 %v6904, %v6970
        %v6987 = vsub.f32 %v6905, %v6971
        %v6988 = vsub.f32 %v6906, %v6972
        %v6989 = vsub.f32 %v6907, %v6973
        %v6990 = vsub.f32 %v6908, %v6974
        %v6991 = vsub.f32 %v6909, %v6975
        %v6992 = vsub.f32 %v6910, %v6976
        %v6993 = vsub.f32 %v6911, %v6977
        %v6994 = vmul.f32 %v6978, %v6978
        %v6995 = vmul.f32 %v6979, %v6979
        %v6996 = vmul.f32 %v6980, %v6980
        %v6997 = vmul.f32 %v6981, %v6981
        %v6998 = vmul.f32 %v6982, %v6982
        %v6999 = vmul.f32 %v6983, %v6983
        %v7000 = vmul.f32 %v6984, %v6984
        %v7001 = vmul.f32 %v6985, %v6985
        %v7002 = vmul.f32 %v6986, %v6986
        %v7003 = vmul.f32 %v6987, %v6987
        %v7004 = vmul.f32 %v6988, %v6988
        %v7005 = vmul.f32 %v6989, %v6989
        %v7006 = vmul.f32 %v6990, %v6990
        %v7007 = vmul.f32 %v6991, %v6991
        %v7008 = vmul.f32 %v6992, %v6992
        %v7009 = vmul.f32 %v6993, %v6993
        %v7010 = vsel %vm1034, %v6994, 0.0
        %7011 = vadd.xlane.f32.xlu0 %v7010
        %v7012 = vpop.xlane.xlu0 %7011
        %v7013 = vsel %vm1034, %v6995, 0.0
        %7014 = vadd.xlane.f32.xlu0 %v7013
        %v7015 = vpop.xlane.xlu0 %7014
        %v7016 = vsel %vm1034, %v6996, 0.0
        %7017 = vadd.xlane.f32.xlu0 %v7016
        %v7018 = vpop.xlane.xlu0 %7017
        %v7019 = vsel %vm1034, %v6997, 0.0
        %7020 = vadd.xlane.f32.xlu0 %v7019
        %v7021 = vpop.xlane.xlu0 %7020
        %v7022 = vsel %vm1034, %v6998, 0.0
        %7023 = vadd.xlane.f32.xlu0 %v7022
        %v7024 = vpop.xlane.xlu0 %7023
        %v7025 = vsel %vm1034, %v6999, 0.0
        %7026 = vadd.xlane.f32.xlu0 %v7025
        %v7027 = vpop.xlane.xlu0 %7026
        %v7028 = vsel %vm1034, %v7000, 0.0
        %7029 = vadd.xlane.f32.xlu0 %v7028
        %v7030 = vpop.xlane.xlu0 %7029
        %v7031 = vsel %vm1034, %v7001, 0.0
        %7032 = vadd.xlane.f32.xlu0 %v7031
        %v7033 = vpop.xlane.xlu0 %7032
        %v7034 = vsel %vm1034, %v7002, 0.0
        %7035 = vadd.xlane.f32.xlu0 %v7034
        %v7036 = vpop.xlane.xlu0 %7035
        %v7037 = vsel %vm1034, %v7003, 0.0
        %7038 = vadd.xlane.f32.xlu0 %v7037
        %v7039 = vpop.xlane.xlu0 %7038
        %v7040 = vsel %vm1034, %v7004, 0.0
        %7041 = vadd.xlane.f32.xlu0 %v7040
        %v7042 = vpop.xlane.xlu0 %7041
        %v7043 = vsel %vm1034, %v7005, 0.0
        %7044 = vadd.xlane.f32.xlu0 %v7043
        %v7045 = vpop.xlane.xlu0 %7044
        %v7046 = vsel %vm1034, %v7006, 0.0
        %7047 = vadd.xlane.f32.xlu0 %v7046
        %v7048 = vpop.xlane.xlu0 %7047
        %v7049 = vsel %vm1034, %v7007, 0.0
        %7050 = vadd.xlane.f32.xlu0 %v7049
        %v7051 = vpop.xlane.xlu0 %7050
        %v7052 = vsel %vm1034, %v7008, 0.0
        %7053 = vadd.xlane.f32.xlu0 %v7052
        %v7054 = vpop.xlane.xlu0 %7053
        %v7055 = vsel %vm1034, %v7009, 0.0
        %7056 = vadd.xlane.f32.xlu0 %v7055
        %v7057 = vpop.xlane.xlu0 %7056
        %v7058 = vmul.f32 %v7012, %v1089
        %v7059 = vmul.f32 %v7015, %v1089
        %v7060 = vmul.f32 %v7018, %v1089
        %v7061 = vmul.f32 %v7021, %v1089
        %v7062 = vmul.f32 %v7024, %v1089
        %v7063 = vmul.f32 %v7027, %v1089
        %v7064 = vmul.f32 %v7030, %v1089
        %v7065 = vmul.f32 %v7033, %v1089
        %v7066 = vmul.f32 %v7036, %v1089
        %v7067 = vmul.f32 %v7039, %v1089
        %v7068 = vmul.f32 %v7042, %v1089
        %v7069 = vmul.f32 %v7045, %v1089
        %v7070 = vmul.f32 %v7048, %v1089
        %v7071 = vmul.f32 %v7051, %v1089
        %v7072 = vmul.f32 %v7054, %v1089
        %v7073 = vmul.f32 %v7057, %v1089
        %v7074 = vadd.f32 %v7058, 1e-05
        %v7075 = vadd.f32 %v7059, 1e-05
        %v7076 = vadd.f32 %v7060, 1e-05
        %v7077 = vadd.f32 %v7061, 1e-05
        %v7078 = vadd.f32 %v7062, 1e-05
        %v7079 = vadd.f32 %v7063, 1e-05
        %v7080 = vadd.f32 %v7064, 1e-05
        %v7081 = vadd.f32 %v7065, 1e-05
        %v7082 = vadd.f32 %v7066, 1e-05
        %v7083 = vadd.f32 %v7067, 1e-05
        %v7084 = vadd.f32 %v7068, 1e-05
        %v7085 = vadd.f32 %v7069, 1e-05
        %v7086 = vadd.f32 %v7070, 1e-05
        %v7087 = vadd.f32 %v7071, 1e-05
        %v7088 = vadd.f32 %v7072, 1e-05
        %v7089 = vadd.f32 %v7073, 1e-05
        %v7090 = vrsqrt.pop %v7074
        %v7091 = vmul.f32 %v7090, %v7074
        %v7092 = vmul.f32 %v7091, %v7090
        %v7093 = vmul.f32 0.5, %v7092
        %v7094 = vsub.f32 1.5, %v7093
        %v7095 = vmul.f32 %v7090, %v7094
        %vm7096 = vweird.f32 %v7074
        %vm7097 = vweird.f32 %v7090
        %vm7098 = vmor %vm7096, %vm7097
        %v7099 = vsel %vm7098, %v7090, %v7095
        %v7100 = vrsqrt.pop %v7075
        %v7101 = vmul.f32 %v7100, %v7075
        %v7102 = vmul.f32 %v7101, %v7100
        %v7103 = vmul.f32 0.5, %v7102
        %v7104 = vsub.f32 1.5, %v7103
        %v7105 = vmul.f32 %v7100, %v7104
        %vm7106 = vweird.f32 %v7075
        %vm7107 = vweird.f32 %v7100
        %vm7108 = vmor %vm7106, %vm7107
        %v7109 = vsel %vm7108, %v7100, %v7105
        %v7110 = vrsqrt.pop %v7076
        %v7111 = vmul.f32 %v7110, %v7076
        %v7112 = vmul.f32 %v7111, %v7110
        %v7113 = vmul.f32 0.5, %v7112
        %v7114 = vsub.f32 1.5, %v7113
        %v7115 = vmul.f32 %v7110, %v7114
        %vm7116 = vweird.f32 %v7076
        %vm7117 = vweird.f32 %v7110
        %vm7118 = vmor %vm7116, %vm7117
        %v7119 = vsel %vm7118, %v7110, %v7115
        %v7120 = vrsqrt.pop %v7077
        %v7121 = vmul.f32 %v7120, %v7077
        %v7122 = vmul.f32 %v7121, %v7120
        %v7123 = vmul.f32 0.5, %v7122
        %v7124 = vsub.f32 1.5, %v7123
        %v7125 = vmul.f32 %v7120, %v7124
        %vm7126 = vweird.f32 %v7077
        %vm7127 = vweird.f32 %v7120
        %vm7128 = vmor %vm7126, %vm7127
        %v7129 = vsel %vm7128, %v7120, %v7125
        %v7130 = vrsqrt.pop %v7078
        %v7131 = vmul.f32 %v7130, %v7078
        %v7132 = vmul.f32 %v7131, %v7130
        %v7133 = vmul.f32 0.5, %v7132
        %v7134 = vsub.f32 1.5, %v7133
        %v7135 = vmul.f32 %v7130, %v7134
        %vm7136 = vweird.f32 %v7078
        %vm7137 = vweird.f32 %v7130
        %vm7138 = vmor %vm7136, %vm7137
        %v7139 = vsel %vm7138, %v7130, %v7135
        %v7140 = vrsqrt.pop %v7079
        %v7141 = vmul.f32 %v7140, %v7079
        %v7142 = vmul.f32 %v7141, %v7140
        %v7143 = vmul.f32 0.5, %v7142
        %v7144 = vsub.f32 1.5, %v7143
        %v7145 = vmul.f32 %v7140, %v7144
        %vm7146 = vweird.f32 %v7079
        %vm7147 = vweird.f32 %v7140
        %vm7148 = vmor %vm7146, %vm7147
        %v7149 = vsel %vm7148, %v7140, %v7145
        %v7150 = vrsqrt.pop %v7080
        %v7151 = vmul.f32 %v7150, %v7080
        %v7152 = vmul.f32 %v7151, %v7150
        %v7153 = vmul.f32 0.5, %v7152
        %v7154 = vsub.f32 1.5, %v7153
        %v7155 = vmul.f32 %v7150, %v7154
        %vm7156 = vweird.f32 %v7080
        %vm7157 = vweird.f32 %v7150
        %vm7158 = vmor %vm7156, %vm7157
        %v7159 = vsel %vm7158, %v7150, %v7155
        %v7160 = vrsqrt.pop %v7081
        %v7161 = vmul.f32 %v7160, %v7081
        %v7162 = vmul.f32 %v7161, %v7160
        %v7163 = vmul.f32 0.5, %v7162
        %v7164 = vsub.f32 1.5, %v7163
        %v7165 = vmul.f32 %v7160, %v7164
        %vm7166 = vweird.f32 %v7081
        %vm7167 = vweird.f32 %v7160
        %vm7168 = vmor %vm7166, %vm7167
        %v7169 = vsel %vm7168, %v7160, %v7165
        %v7170 = vrsqrt.pop %v7082
        %v7171 = vmul.f32 %v7170, %v7082
        %v7172 = vmul.f32 %v7171, %v7170
        %v7173 = vmul.f32 0.5, %v7172
        %v7174 = vsub.f32 1.5, %v7173
        %v7175 = vmul.f32 %v7170, %v7174
        %vm7176 = vweird.f32 %v7082
        %vm7177 = vweird.f32 %v7170
        %vm7178 = vmor %vm7176, %vm7177
        %v7179 = vsel %vm7178, %v7170, %v7175
        %v7180 = vrsqrt.pop %v7083
        %v7181 = vmul.f32 %v7180, %v7083
        %v7182 = vmul.f32 %v7181, %v7180
        %v7183 = vmul.f32 0.5, %v7182
        %v7184 = vsub.f32 1.5, %v7183
        %v7185 = vmul.f32 %v7180, %v7184
        %vm7186 = vweird.f32 %v7083
        %vm7187 = vweird.f32 %v7180
        %vm7188 = vmor %vm7186, %vm7187
        %v7189 = vsel %vm7188, %v7180, %v7185
        %v7190 = vrsqrt.pop %v7084
        %v7191 = vmul.f32 %v7190, %v7084
        %v7192 = vmul.f32 %v7191, %v7190
        %v7193 = vmul.f32 0.5, %v7192
        %v7194 = vsub.f32 1.5, %v7193
        %v7195 = vmul.f32 %v7190, %v7194
        %vm7196 = vweird.f32 %v7084
        %vm7197 = vweird.f32 %v7190
        %vm7198 = vmor %vm7196, %vm7197
        %v7199 = vsel %vm7198, %v7190, %v7195
        %v7200 = vrsqrt.pop %v7085
        %v7201 = vmul.f32 %v7200, %v7085
        %v7202 = vmul.f32 %v7201, %v7200
        %v7203 = vmul.f32 0.5, %v7202
        %v7204 = vsub.f32 1.5, %v7203
        %v7205 = vmul.f32 %v7200, %v7204
        %vm7206 = vweird.f32 %v7085
        %vm7207 = vweird.f32 %v7200
        %vm7208 = vmor %vm7206, %vm7207
        %v7209 = vsel %vm7208, %v7200, %v7205
        %v7210 = vrsqrt.pop %v7086
        %v7211 = vmul.f32 %v7210, %v7086
        %v7212 = vmul.f32 %v7211, %v7210
        %v7213 = vmul.f32 0.5, %v7212
        %v7214 = vsub.f32 1.5, %v7213
        %v7215 = vmul.f32 %v7210, %v7214
        %vm7216 = vweird.f32 %v7086
        %vm7217 = vweird.f32 %v7210
        %vm7218 = vmor %vm7216, %vm7217
        %v7219 = vsel %vm7218, %v7210, %v7215
        %v7220 = vrsqrt.pop %v7087
        %v7221 = vmul.f32 %v7220, %v7087
        %v7222 = vmul.f32 %v7221, %v7220
        %v7223 = vmul.f32 0.5, %v7222
        %v7224 = vsub.f32 1.5, %v7223
        %v7225 = vmul.f32 %v7220, %v7224
        %vm7226 = vweird.f32 %v7087
        %vm7227 = vweird.f32 %v7220
        %vm7228 = vmor %vm7226, %vm7227
        %v7229 = vsel %vm7228, %v7220, %v7225
        %v7230 = vrsqrt.pop %v7088
        %v7231 = vmul.f32 %v7230, %v7088
        %v7232 = vmul.f32 %v7231, %v7230
        %v7233 = vmul.f32 0.5, %v7232
        %v7234 = vsub.f32 1.5, %v7233
        %v7235 = vmul.f32 %v7230, %v7234
        %vm7236 = vweird.f32 %v7088
        %vm7237 = vweird.f32 %v7230
        %vm7238 = vmor %vm7236, %vm7237
        %v7239 = vsel %vm7238, %v7230, %v7235
        %v7240 = vrsqrt.pop %v7089
        %v7241 = vmul.f32 %v7240, %v7089
        %v7242 = vmul.f32 %v7241, %v7240
        %v7243 = vmul.f32 0.5, %v7242
        %v7244 = vsub.f32 1.5, %v7243
        %v7245 = vmul.f32 %v7240, %v7244
        %vm7246 = vweird.f32 %v7089
        %vm7247 = vweird.f32 %v7240
        %vm7248 = vmor %vm7246, %vm7247
        %v7249 = vsel %vm7248, %v7240, %v7245
        %v7250 = vmul.f32 %v6978, %v7099
        %v7251 = vmul.f32 %v6979, %v7109
        %v7252 = vmul.f32 %v6980, %v7119
        %v7253 = vmul.f32 %v6981, %v7129
        %v7254 = vmul.f32 %v6982, %v7139
        %v7255 = vmul.f32 %v6983, %v7149
        %v7256 = vmul.f32 %v6984, %v7159
        %v7257 = vmul.f32 %v6985, %v7169
        %v7258 = vmul.f32 %v6986, %v7179
        %v7259 = vmul.f32 %v6987, %v7189
        %v7260 = vmul.f32 %v6988, %v7199
        %v7261 = vmul.f32 %v6989, %v7209
        %v7262 = vmul.f32 %v6990, %v7219
        %v7263 = vmul.f32 %v6991, %v7229
        %v7264 = vmul.f32 %v6992, %v7239
        %v7265 = vmul.f32 %v6993, %v7249
        %v7267 = vperm.slane %v6912, 0
        %v7269 = vmul.f32 %v7250, %v7267
        %v7270 = vmul.f32 %v7251, %v7267
        %v7271 = vmul.f32 %v7252, %v7267
        %v7272 = vmul.f32 %v7253, %v7267
        %v7273 = vmul.f32 %v7254, %v7267
        %v7274 = vmul.f32 %v7255, %v7267
        %v7275 = vmul.f32 %v7256, %v7267
        %v7276 = vmul.f32 %v7257, %v7267
        %v7277 = vmul.f32 %v7258, %v7267
        %v7278 = vmul.f32 %v7259, %v7267
        %v7279 = vmul.f32 %v7260, %v7267
        %v7280 = vmul.f32 %v7261, %v7267
        %v7281 = vmul.f32 %v7262, %v7267
        %v7282 = vmul.f32 %v7263, %v7267
        %v7283 = vmul.f32 %v7264, %v7267
        %v7284 = vmul.f32 %v7265, %v7267
        %v7286 = vperm.slane %v6913, 0
        %v7288 = vadd.f32 %v7269, %v7286
        %v7289 = vadd.f32 %v7270, %v7286
        %v7290 = vadd.f32 %v7271, %v7286
        %v7291 = vadd.f32 %v7272, %v7286
        %v7292 = vadd.f32 %v7273, %v7286
        %v7293 = vadd.f32 %v7274, %v7286
        %v7294 = vadd.f32 %v7275, %v7286
        %v7295 = vadd.f32 %v7276, %v7286
        %v7296 = vadd.f32 %v7277, %v7286
        %v7297 = vadd.f32 %v7278, %v7286
        %v7298 = vadd.f32 %v7279, %v7286
        %v7299 = vadd.f32 %v7280, %v7286
        %v7300 = vadd.f32 %v7281, %v7286
        %v7301 = vadd.f32 %v7282, %v7286
        %v7302 = vadd.f32 %v7283, %v7286
        %v7303 = vadd.f32 %v7284, %v7286
        %v7304 = vpack.c.bf16 %v7289, %v7288
        %v7305 = vpack.c.bf16 %v7291, %v7290
        %v7306 = vpack.c.bf16 %v7293, %v7292
        %v7307 = vpack.c.bf16 %v7295, %v7294
        %v7308 = vpack.c.bf16 %v7297, %v7296
        %v7309 = vpack.c.bf16 %v7299, %v7298
        %v7310 = vpack.c.bf16 %v7301, %v7300
        %v7311 = vpack.c.bf16 %v7303, %v7302
        %v7312 = vld [vmem:[%s20] sm:$0xf]
        %v7313 = vld [vmem:[%s20 + $0x4] sm:$0xf]
        %v7314 = vld [vmem:[%s20 + $0x8] sm:$0xf]
        %v7315 = vld [vmem:[%s20 + $0xc] sm:$0xf]
        %v7316 = vld [vmem:[%s21] sm:$0x1]
        %v7318 = vperm.slane %v7316, 0
        %v7324 = vunpack.c.l.b16 %v7312
        %v7325 = vunpack.c.l.b16 %v7313
        %v7326 = vunpack.c.l.b16 %v7314
        %v7327 = vunpack.c.l.b16 %v7315
        %v7328 = vpack.c.b16 %v7325, %v7324
        %v7329 = vpack.c.b16 %v7327, %v7326
        %v7333 = vsel %vm1034, %v7304, 0
        %v7336 = vsel %vm1034, %v7305, 0
        %v7339 = vsel %vm1034, %v7306, 0
        %v7342 = vsel %vm1034, %v7307, 0
        %v7345 = vsel %vm1034, %v7308, 0
        %v7348 = vsel %vm1034, %v7309, 0
        %v7351 = vsel %vm1034, %v7310, 0
        %v7354 = vsel %vm1034, %v7311, 0
        %7356 = vmatpush.bf16.msra.mxu0 0
        %7357 = vmatpush.bf16.msra.mxu0 0
        %7358 = vmatpush.bf16.msra.mxu0 0
        %7359 = vmatpush.bf16.msra.mxu0 0
        %7360 = vmatpush.bf16.msra.mxu0 0
        %7361 = vmatpush.bf16.msra.mxu0 0
        %7362 = vmatpush.bf16.msra.mxu0 %v7329
        %7363 = vmatpush.bf16.msra.mxu0 %v7328
        %7364 = vmatmul.bf16.gmra.mxu0 %v7333
        %v7365 = vpop.f32.mrf.mxu0
        %v7366 = vadd.f32 %v7318, %v7365
        %v7367 = vpop.f32.mrf.mxu0
        %v7368 = vadd.f32 %v7318, %v7367
        %7369 = vmatmul.bf16.gmra.mxu0 %v7336
        %v7370 = vpop.f32.mrf.mxu0
        %v7371 = vadd.f32 %v7318, %v7370
        %v7372 = vpop.f32.mrf.mxu0
        %v7373 = vadd.f32 %v7318, %v7372
        %7374 = vmatmul.bf16.gmra.mxu0 %v7339
        %v7375 = vpop.f32.mrf.mxu0
        %v7376 = vadd.f32 %v7318, %v7375
        %v7377 = vpop.f32.mrf.mxu0
        %v7378 = vadd.f32 %v7318, %v7377
        %7379 = vmatmul.bf16.gmra.mxu0 %v7342
        %v7380 = vpop.f32.mrf.mxu0
        %v7381 = vadd.f32 %v7318, %v7380
        %v7382 = vpop.f32.mrf.mxu0
        %v7383 = vadd.f32 %v7318, %v7382
        %7384 = vmatmul.bf16.gmra.mxu0 %v7345
        %v7385 = vpop.f32.mrf.mxu0
        %v7386 = vadd.f32 %v7318, %v7385
        %v7387 = vpop.f32.mrf.mxu0
        %v7388 = vadd.f32 %v7318, %v7387
        %7389 = vmatmul.bf16.gmra.mxu0 %v7348
        %v7390 = vpop.f32.mrf.mxu0
        %v7391 = vadd.f32 %v7318, %v7390
        %v7392 = vpop.f32.mrf.mxu0
        %v7393 = vadd.f32 %v7318, %v7392
        %7394 = vmatmul.bf16.gmra.mxu0 %v7351
        %v7395 = vpop.f32.mrf.mxu0
        %v7396 = vadd.f32 %v7318, %v7395
        %v7397 = vpop.f32.mrf.mxu0
        %v7398 = vadd.f32 %v7318, %v7397
        %7399 = vmatmul.bf16.gmra.mxu0 %v7354
        %v7400 = vpop.f32.mrf.mxu0
        %v7401 = vadd.f32 %v7318, %v7400
        %v7402 = vpop.f32.mrf.mxu0
        %v7403 = vadd.f32 %v7318, %v7402
        %7404 = vdwg.mxu0
        %7405 = vst [vmem:[%s693] sm:$0xff] %v7366
        %7406 = vst [vmem:[%s693 + $0x8] sm:$0xff] %v7368
        %7407 = vst [vmem:[%s693 + $0x10] sm:$0xff] %v7371
        %7408 = vst [vmem:[%s693 + $0x18] sm:$0xff] %v7373
        %7409 = vst [vmem:[%s693 + $0x20] sm:$0xff] %v7376
        %7410 = vst [vmem:[%s693 + $0x28] sm:$0xff] %v7378
        %7411 = vst [vmem:[%s693 + $0x30] sm:$0xff] %v7381
        %7412 = vst [vmem:[%s693 + $0x38] sm:$0xff] %v7383
        %7413 = vst [vmem:[%s693 + $0x40] sm:$0xff] %v7386
        %7414 = vst [vmem:[%s693 + $0x48] sm:$0xff] %v7388
        %7415 = vst [vmem:[%s693 + $0x50] sm:$0xff] %v7391
        %7416 = vst [vmem:[%s693 + $0x58] sm:$0xff] %v7393
        %7417 = vst [vmem:[%s693 + $0x60] sm:$0xff] %v7396
        %7418 = vst [vmem:[%s693 + $0x68] sm:$0xff] %v7398
        %7419 = vst [vmem:[%s693 + $0x70] sm:$0xff] %v7401
        %7420 = vst [vmem:[%s693 + $0x78] sm:$0xff] %v7403
        %s7421 = sand.u32 %s516, 1
        %s7422 = scalar_lea.sflag [#allocation3], %s7421
        %s7423 = sand.u32 %s516, 1
        %s7424 = smul.addr %s7423, 128
        %s7425 = scalar_lea.vmem [#allocation2], %s7424
        // Predicated region
        $region109: #{tpu_custom_call.1} parent=107 // pred_check
          %p7426 = pneg %p526
        $region110: #{tpu_custom_call.1} parent=107 // pred_check_branch
          %7428 = sbr.rel (%p7426) target = $region112
        $region111: #{tpu_custom_call.1} parent=107 // pred_region
          %s7429 = smul.u32 16, %s36
          %7431 = vsyncadd %s7422, 0
          %s7432 = smul.addr %s7429, 8
          %s7433 = scalar_lea.hbm %s22, %s7432
          %s7434 = sshll.u32 %s7425, 4
          %s7435 = int_to_ptr.vmem [resolvable:$true] %s7434
          %s7436 = sshll.u32 %s7433, 4
          %s7437 = int_to_ptr.hbm [resolvable:$true] %s7436
          %7442 = dma.vmem_to_hbm [thread:$0]  %s7435, 2048, %s7437, %s7422, 128, 128, 8
        $region112: #{tpu_custom_call.1} parent=107 // pred_fallthru
          _
      $region108: #{tpu_custom_call.1} parent=5 // pred_fallthru
        _
      %p7443 = scmp.le.s32.totalorder 2, %s31
      // Predicated region
      $region113: #{tpu_custom_call.1} parent=5 // pred_check
        %p7444 = pneg %p7443
      $region114: #{tpu_custom_call.1} parent=5 // pred_check_branch
        %7446 = sbr.rel (%p7444) target = $region116
      $region115: #{tpu_custom_call.1} parent=5 // pred_region
        %s7447 = ssub.s32 %s31, 2
        // Predicated region
        $region117: #{tpu_custom_call.1} parent=115 // pred_check
          %p7448 = pneg %p532
        $region118: #{tpu_custom_call.1} parent=115 // pred_check_branch
          %7450 = sbr.rel (%p7448) target = $region120
        $region119: #{tpu_custom_call.1} parent=115 // pred_region
          %s7451 = sand.u32 %s517, 1
          %s7452 = scalar_lea.sflag [#allocation3], %s7451
          %s7453 = sand.u32 %s517, 1
          %s7454 = smul.addr %s7453, 128
          %s7455 = scalar_lea.vmem [#allocation2], %s7454
          %7457 = dma.done %s7452, 2048
        $region120: #{tpu_custom_call.1} parent=115 // pred_fallthru
          _
      $region116: #{tpu_custom_call.1} parent=5 // pred_fallthru
        _
    $region6: #{tpu_custom_call.1} parent=1 // loop_footer
      %s35 = sadd.s32 1, %s31
    $region7: #{tpu_custom_call.1} parent=1 // loop_footer_branch
      %30 = sbr.rel target = $region3
    $region8: #{tpu_custom_call.1} parent=1 // loop_exit
      _
    %7458 = vsyncpa [#allocation3], 1
    %s7459 = scalar_lea.sflag [#allocation3], 1
    %7460 = vsyncpa %s7459, 1

</llo_original>
